<compile_context>
chip_gen: v7x
topology: tpu7x:2x2x1
jax: 0.10.0
libtpu: 0.0.40
codegen_flags: <defaults>
</compile_context>

<pallas_src>
import jax
import jax.numpy as jnp
from jax.experimental import pallas as pl
from jax.experimental.pallas import tpu as pltpu


# ----------------------------------------------------------------------------
# Kernel 1: tiled matmul + bias (ConvTranspose2d k=2, s=2 == one matmul/pixel)
# ----------------------------------------------------------------------------
def _matmul_bias_kernel(x_ref, w_ref, b_ref, o_ref):
    acc = jnp.dot(x_ref[...], w_ref[...], preferred_element_type=jnp.float32)
    o_ref[...] = (acc + b_ref[...]).astype(o_ref.dtype)


def conv_transpose_2x2_s2(x_nhwc, wt, bt, *, tm=1024):
    """ConvTranspose2d(k=2, s=2) with bias.  wt: (Cin, Co, 2, 2), bt: (Co,)."""
    N, H, W, Cin = x_nhwc.shape
    Co = wt.shape[1]
    # columns ordered (kh, kw, co)
    wmat = jnp.transpose(wt, (0, 2, 3, 1)).reshape(Cin, 4 * Co).astype(jnp.bfloat16)
    bmat = jnp.broadcast_to(bt, (2, 2, Co)).reshape(1, 4 * Co).astype(jnp.float32)

    M = N * H * W
    xf = x_nhwc.reshape(M, Cin).astype(jnp.bfloat16)
    # Rows are independent -> M-tiled grid; TM multiple of 8 (larger on v5e/v6e).
    TM = M if M <= tm else tm

    y = pl.pallas_call(
        _matmul_bias_kernel,
        out_shape=jax.ShapeDtypeStruct((M, 4 * Co), jnp.bfloat16),
        grid=(pl.cdiv(M, TM),),
        in_specs=[
            pl.BlockSpec((TM, Cin), lambda i: (i, 0)),
            pl.BlockSpec((Cin, 4 * Co), lambda i: (0, 0)),
            pl.BlockSpec((1, 4 * Co), lambda i: (0, 0)),
        ],
        out_specs=pl.BlockSpec((TM, 4 * Co), lambda i: (i, 0)),
        compiler_params=pltpu.CompilerParams(dimension_semantics=("parallel",)),
    )(xf, wmat, bmat)

    # (N,H,W,kh,kw,Co) -> (N,H,kh,W,kw,Co) -> (N,2H,2W,Co)
    # TODO(synk): fold this pixel-unshuffle into the consumer kernel's index_map
    # to save one XLA HBM pass over the upsampled (half-channel) tensor.
    y = y.reshape(N, H, W, 2, 2, Co).transpose(0, 1, 3, 2, 4, 5)
    return y.reshape(N, 2 * H, 2 * W, Co)


# ----------------------------------------------------------------------------
# Kernel 2: fused 3x3 conv (no bias, pad=1) + BatchNorm(scale/shift) + ReLU
# over an implicit channel-concat of several input slabs (concat folded in by
# splitting the weight).  Halo handled in-kernel with a padded VMEM accumulator.
# ----------------------------------------------------------------------------
def _make_conv3x3_kernel(n_slabs, H, W, Cout):
    def kernel(*refs):
        x_refs = refs[:n_slabs]
        w_refs = refs[n_slabs:2 * n_slabs]
        scale_ref, shift_ref, o_ref, acc_ref = refs[2 * n_slabs:]

        acc_ref[...] = jnp.zeros_like(acc_ref)
        # Load + flatten each input slab ONCE; reused (same MXU LHS) for all 9 taps.
        xs = [r[0].reshape(H * W, r.shape[-1]) for r in x_refs]

        for kh in range(3):
            for kw in range(3):
                t = kh * 3 + kw
                contrib = jnp.dot(xs[0], w_refs[0][t],
                                  preferred_element_type=jnp.float32)
                for s in range(1, n_slabs):
                    contrib = contrib + jnp.dot(
                        xs[s], w_refs[s][t], preferred_element_type=jnp.float32)
                # Input pixel (i, j) contributes via tap (kh, kw) to output pixel
                # (i+1-kh, j+1-kw); in padded-accumulator coords that window is
                # rows [2-kh, 2-kh+H), cols [2-kw, 2-kw+W).  Border rows/cols of
                # the accumulator collect the out-of-range taps and are dropped.
                acc_ref[2 - kh:2 - kh + H, 2 - kw:2 - kw + W, :] += (
                    contrib.reshape(H, W, Cout))

        y = acc_ref[1:H + 1, 1:W + 1, :]
        y = jnp.maximum(y * scale_ref[...] + shift_ref[...], 0.0)
        o_ref[0] = y.astype(o_ref.dtype)

    return kernel


def conv3x3_bn_relu(x_slabs, w_slabs, scale, shift, *, out_dtype=jnp.float32):
    """conv3x3(pad=1, no bias) + BN(eval) + ReLU over concat(x_slabs, channel).

    x_slabs: list of NHWC arrays (same N, H, W).
    w_slabs: matching list of (Cout, C_slab, 3, 3) PyTorch-layout weights.
    """
    n_slabs = len(x_slabs)
    N, H, W = x_slabs[0].shape[:3]
    Cout = w_slabs[0].shape[0]

    xs = [x.astype(jnp.bfloat16) for x in x_slabs]
    # (Cout, Cs, 3, 3) -> (kh, kw, Cs, Cout) -> (9, Cs, Cout), taps t = kh*3+kw
    ws = [jnp.transpose(w, (2, 3, 1, 0)).reshape(9, w.shape[1], Cout).astype(jnp.bfloat16)
          for w in w_slabs]
    scale3 = scale.reshape(1, 1, Cout).astype(jnp.float32)
    shift3 = shift.reshape(1, 1, Cout).astype(jnp.float32)

    in_specs = (
        [pl.BlockSpec((1, H, W, x.shape[-1]), lambda n: (n, 0, 0, 0)) for x in xs]
        + [pl.BlockSpec((9, w.shape[1], Cout), lambda n: (0, 0, 0)) for w in ws]
        + [pl.BlockSpec((1, 1, Cout), lambda n: (0, 0, 0)),
           pl.BlockSpec((1, 1, Cout), lambda n: (0, 0, 0))]
    )

    # TODO(synk): add a spatial row-tile grid axis (manual halo DMA / pl.Element
    # windows) so each block fits v7x's 64 MiB VMEM at real U-Net sizes; the
    # per-batch full-image block is fine at these shapes.
    return pl.pallas_call(
        _make_conv3x3_kernel(n_slabs, H, W, Cout),
        out_shape=jax.ShapeDtypeStruct((N, H, W, Cout), out_dtype),
        grid=(N,),
        in_specs=in_specs,
        out_specs=pl.BlockSpec((1, H, W, Cout), lambda n: (n, 0, 0, 0)),
        scratch_shapes=[pltpu.VMEM((H + 2, W + 2, Cout), jnp.float32)],
        compiler_params=pltpu.CompilerParams(dimension_semantics=("parallel",)),
    )(*xs, *ws, scale3, shift3)


# ----------------------------------------------------------------------------
# Parameters (deterministic, matching PyTorch shapes)
# ----------------------------------------------------------------------------
def make_params(in_channels, out_channels, key):
    c_half = in_channels // 2
    ks = jax.random.split(key, 14)
    eps = 1e-5

    def bn_fold(kg, kb, km, kv, c):
        gamma = 1.0 + 0.1 * jax.random.normal(kg, (c,), jnp.float32)
        beta = 0.1 * jax.random.normal(kb, (c,), jnp.float32)
        rmean = 0.1 * jax.random.normal(km, (c,), jnp.float32)
        rvar = 0.5 + jax.random.uniform(kv, (c,), jnp.float32)
        scale = gamma / jnp.sqrt(rvar + eps)
        shift = beta - rmean * scale
        return scale, shift

    p = {
        # ConvTranspose2d weight: (in_channels, in_channels//2, 2, 2), bias: (in//2,)
        "wt": 0.2 * jax.random.normal(ks[0], (in_channels, c_half, 2, 2), jnp.float32),
        "bt": 0.1 * jax.random.normal(ks[1], (c_half,), jnp.float32),
        # conv_double, first conv: (out, in, 3, 3)
        "w1": 0.2 * jax.random.normal(ks[2], (out_channels, in_channels, 3, 3), jnp.float32),
        # conv_double, second conv: (out, out, 3, 3)
        "w2": 0.2 * jax.random.normal(ks[3], (out_channels, out_channels, 3, 3), jnp.float32),
    }
    p["bn1_scale"], p["bn1_shift"] = bn_fold(ks[4], ks[5], ks[6], ks[7], out_channels)
    p["bn2_scale"], p["bn2_shift"] = bn_fold(ks[8], ks[9], ks[10], ks[11], out_channels)
    return p


# ----------------------------------------------------------------------------
# Forward pass (inputs/outputs NCHW, like PyTorch)
# ----------------------------------------------------------------------------
def upsampling_forward(x1_nchw, x2_nchw, params):
    x1 = jnp.transpose(x1_nchw, (0, 2, 3, 1))                       # NHWC, f32
    x2 = jnp.transpose(x2_nchw, (0, 2, 3, 1)).astype(jnp.bfloat16)  # NHWC, bf16

    # 1) ConvTranspose2d(k=2, s=2) as a tiled MXU matmul (bf16 in, f32 acc)
    x1u = conv_transpose_2x2_s2(x1, params["wt"], params["bt"])

    # 2) pad x1u to x2's spatial size (F.pad order: [left,right,top,bottom])
    diffY = x2.shape[1] - x1u.shape[1]
    diffX = x2.shape[2] - x1u.shape[2]
    x1u = jnp.pad(
        x1u,
        ((0, 0),
         (diffY // 2, diffY - diffY // 2),
         (diffX // 2, diffX - diffX // 2),
         (0, 0)))

    # 3)+4) torch.cat([x2, x1], 1) folded into the first fused conv3x3+BN+ReLU
    #        kernel by splitting w1 along its input-channel axis.
    c_half = x2.shape[-1]
    h = conv3x3_bn_relu(
        [x2, x1u],
        [params["w1"][:, :c_half], params["w1"][:, c_half:]],
        params["bn1_scale"], params["bn1_shift"],
        out_dtype=jnp.bfloat16)
    out = conv3x3_bn_relu(
        [h], [params["w2"]],
        params["bn2_scale"], params["bn2_shift"],
        out_dtype=jnp.float32)

    return jnp.transpose(out, (0, 3, 1, 2))  # back to NCHW


# ----------------------------------------------------------------------------
# Pure-JAX f32 reference (for a loose numerical self-check)
# ----------------------------------------------------------------------------
def reference_forward(x1_nchw, x2_nchw, p):
    x1 = jnp.transpose(x1_nchw, (0, 2, 3, 1)).astype(jnp.float32)
    x2 = jnp.transpose(x2_nchw, (0, 2, 3, 1)).astype(jnp.float32)
    N, H1, W1, Cin = x1.shape
    Co = Cin // 2
    y = jnp.einsum("nhwc,cdab->nhawbd", x1, p["wt"]).reshape(N, 2 * H1, 2 * W1, Co)
    y = y + p["bt"]
    dY = x2.shape[1] - y.shape[1]
    dX = x2.shape[2] - y.shape[2]
    y = jnp.pad(y, ((0, 0), (dY // 2, dY - dY // 2), (dX // 2, dX - dX // 2), (0, 0)))
    x = jnp.concatenate([x2, y], axis=-1)

    def conv_bn_relu(x, w, sc, sh):
        H, W = x.shape[1], x.shape[2]
        xp = jnp.pad(x, ((0, 0), (1, 1), (1, 1), (0, 0)))
        out = jnp.zeros(x.shape[:3] + (w.shape[0],), jnp.float32)
        for kh in range(3):
            for kw in range(3):
                out = out + jnp.einsum("nhwc,oc->nhwo",
                                       xp[:, kh:kh + H, kw:kw + W, :], w[:, :, kh, kw])
        return jnp.maximum(out * sc + sh, 0.0)

    x = conv_bn_relu(x, p["w1"], p["bn1_scale"], p["bn1_shift"])
    x = conv_bn_relu(x, p["w2"], p["bn2_scale"], p["bn2_shift"])
    return jnp.transpose(x, (0, 3, 1, 2))


if __name__ == "__main__":
    in_channels, out_channels = 8, 4
    N, H1, W1 = 2, 8, 8                 # x1: deep feature map
    H2, W2 = 2 * H1, 2 * W1             # x2: skip connection

    key = jax.random.PRNGKey(0)
    k1, k2, kp = jax.random.split(key, 3)
    x1 = jax.random.normal(k1, (N, in_channels, H1, W1), jnp.float32)
    x2 = jax.random.normal(k2, (N, in_channels // 2, H2, W2), jnp.float32)
    params = make_params(in_channels, out_channels, kp)

    out = jax.jit(upsampling_forward)(x1, x2, params)
    out = jax.block_until_ready(out)
    assert out.shape == (N, out_channels, H2, W2)
    assert bool(jnp.all(jnp.isfinite(out)))

    # loose tolerance: Pallas path uses bf16 matmul operands with f32 accumulation
    ref = reference_forward(x1, x2, params)
    err = float(jnp.max(jnp.abs(out.astype(jnp.float32) - ref)))
    tol = 5e-2 * float(jnp.max(jnp.abs(ref))) + 5e-2
    assert err <= tol, f"mismatch vs reference: max|diff|={err:.4f} > tol={tol:.4f}"

    print("KERNEL_OK")
</pallas_src>

<mosaic_0001>
module attributes {stable_mosaic.version = 11 : i64} {
  func.func @_matmul_bias_kernel(%arg0: i32, %arg1: memref<128x8xbf16, #tpu.memory_space<vmem>>, %arg2: memref<8x16xbf16, #tpu.memory_space<vmem>>, %arg3: memref<1x16xf32, #tpu.memory_space<vmem>>, %arg4: memref<128x16xbf16, #tpu.memory_space<vmem>>) attributes {dimension_semantics = [#tpu.dimension_semantics<parallel>], iteration_bounds = array<i64: 1>, scalar_prefetch = 0 : i64, scratch_operands = 0 : i64, tpu.core_type = #tpu.core_type<tc>, window_params = [{transform_indices = @transform_0, window_bounds = array<i64: 128, 8>}, {pipeline_mode = #tpu.pipeline_mode<synchronous>, transform_indices = @transform_1, window_bounds = array<i64: 8, 16>}, {pipeline_mode = #tpu.pipeline_mode<synchronous>, transform_indices = @transform_2, window_bounds = array<i64: 1, 16>}, {transform_indices = @transform_3, window_bounds = array<i64: 128, 16>}]} {
    %c0 = arith.constant 0 : index
    %c0_0 = arith.constant 0 : index
    %0 = vector.load %arg1[%c0, %c0_0] : memref<128x8xbf16, #tpu.memory_space<vmem>>, vector<128x8xbf16>
    %c0_1 = arith.constant 0 : index
    %c0_2 = arith.constant 0 : index
    %1 = vector.load %arg2[%c0_1, %c0_2] : memref<8x16xbf16, #tpu.memory_space<vmem>>, vector<8x16xbf16>
    %cst = arith.constant dense<0.000000e+00> : vector<128x16xf32>
    %2 = tpu.matmul %0, %1, %cst {dimension_numbers = #tpu.dot_dimension_numbers<[1], [0], [0], [1], [0, 0, 1, 1], [], []>} : vector<128x8xbf16>, vector<8x16xbf16>, vector<128x16xf32> -> vector<128x16xf32>
    %c0_3 = arith.constant 0 : index
    %c0_4 = arith.constant 0 : index
    %3 = vector.load %arg3[%c0_3, %c0_4] : memref<1x16xf32, #tpu.memory_space<vmem>>, vector<1x16xf32>
    %4 = vector.broadcast %3 : vector<1x16xf32> to vector<128x16xf32>
    %5 = arith.addf %2, %4 : vector<128x16xf32>
    %6 = arith.truncf %5 : vector<128x16xf32> to vector<128x16xbf16>
    %c0_5 = arith.constant 0 : index
    %c0_6 = arith.constant 0 : index
    %7 = vector.load %arg4[%c0_5, %c0_6] : memref<128x16xbf16, #tpu.memory_space<vmem>>, vector<128x16xbf16>
    tpu.vector_store %arg4[%c0_5, %c0_6], %6 {strides = array<i32>} : memref<128x16xbf16, #tpu.memory_space<vmem>>, vector<128x16xbf16>,
    return
  }
  func.func @transform_0(%arg0: i32) -> (i32, i32) {
    %c0_i32 = arith.constant 0 : i32
    %c0_i32_0 = arith.constant 0 : i32
    return %arg0, %c0_i32 : i32, i32
  }
  func.func @transform_1(%arg0: i32) -> (i32, i32) {
    %c0_i32 = arith.constant 0 : i32
    %c0_i32_0 = arith.constant 0 : i32
    %c0_i32_1 = arith.constant 0 : i32
    return %c0_i32, %c0_i32_0 : i32, i32
  }
  func.func @transform_2(%arg0: i32) -> (i32, i32) {
    %c0_i32 = arith.constant 0 : i32
    %c0_i32_0 = arith.constant 0 : i32
    %c0_i32_1 = arith.constant 0 : i32
    return %c0_i32, %c0_i32_0 : i32, i32
  }
  func.func @transform_3(%arg0: i32) -> (i32, i32) {
    %c0_i32 = arith.constant 0 : i32
    %c0_i32_0 = arith.constant 0 : i32
    return %arg0, %c0_i32 : i32, i32
  }
}

module attributes {stable_mosaic.version = 11 : i64} {
  func.func @kernel(%arg0: i32, %arg1: memref<1x16x16x4xbf16, #tpu.memory_space<vmem>>, %arg2: memref<1x16x16x4xbf16, #tpu.memory_space<vmem>>, %arg3: memref<9x4x4xbf16, #tpu.memory_space<vmem>>, %arg4: memref<9x4x4xbf16, #tpu.memory_space<vmem>>, %arg5: memref<1x1x4xf32, #tpu.memory_space<vmem>>, %arg6: memref<1x1x4xf32, #tpu.memory_space<vmem>>, %arg7: memref<1x16x16x4xbf16, #tpu.memory_space<vmem>>, %arg8: memref<18x18x4xf32, #tpu.memory_space<vmem>>) attributes {dimension_semantics = [#tpu.dimension_semantics<parallel>], iteration_bounds = array<i64: 2>, scalar_prefetch = 0 : i64, scratch_operands = 1 : i64, tpu.core_type = #tpu.core_type<tc>, window_params = [{transform_indices = @transform_0, window_bounds = array<i64: 1, 16, 16, 4>}, {transform_indices = @transform_1, window_bounds = array<i64: 1, 16, 16, 4>}, {pipeline_mode = #tpu.pipeline_mode<synchronous>, transform_indices = @transform_2, window_bounds = array<i64: 9, 4, 4>}, {pipeline_mode = #tpu.pipeline_mode<synchronous>, transform_indices = @transform_3, window_bounds = array<i64: 9, 4, 4>}, {pipeline_mode = #tpu.pipeline_mode<synchronous>, transform_indices = @transform_4, window_bounds = array<i64: 1, 1, 4>}, {pipeline_mode = #tpu.pipeline_mode<synchronous>, transform_indices = @transform_5, window_bounds = array<i64: 1, 1, 4>}, {transform_indices = @transform_6, window_bounds = array<i64: 1, 16, 16, 4>}]} {
    %cst = arith.constant 0.000000e+00 : f32
    %0 = vector.broadcast %cst : f32 to vector<18x18x4xf32>
    %c0 = arith.constant 0 : index
    %c0_0 = arith.constant 0 : index
    %c0_1 = arith.constant 0 : index
    %1 = vector.load %arg8[%c0, %c0_0, %c0_1] : memref<18x18x4xf32, #tpu.memory_space<vmem>>, vector<18x18x4xf32>
    tpu.vector_store %arg8[%c0, %c0_0, %c0_1], %0 {strides = array<i32>} : memref<18x18x4xf32, #tpu.memory_space<vmem>>, vector<18x18x4xf32>,
    %c0_2 = arith.constant 0 : index
    %c0_3 = arith.constant 0 : index
    %c0_4 = arith.constant 0 : index
    %c0_5 = arith.constant 0 : index
    %2 = vector.load %arg1[%c0_2, %c0_3, %c0_4, %c0_5] : memref<1x16x16x4xbf16, #tpu.memory_space<vmem>>, vector<1x16x16x4xbf16>
    %3 = vector.shape_cast %2 : vector<1x16x16x4xbf16> to vector<16x16x4xbf16>
    %4 = vector.shape_cast %3 : vector<16x16x4xbf16> to vector<256x4xbf16>
    %c0_6 = arith.constant 0 : index
    %c0_7 = arith.constant 0 : index
    %c0_8 = arith.constant 0 : index
    %c0_9 = arith.constant 0 : index
    %5 = vector.load %arg2[%c0_6, %c0_7, %c0_8, %c0_9] : memref<1x16x16x4xbf16, #tpu.memory_space<vmem>>, vector<1x16x16x4xbf16>
    %6 = vector.shape_cast %5 : vector<1x16x16x4xbf16> to vector<16x16x4xbf16>
    %7 = vector.shape_cast %6 : vector<16x16x4xbf16> to vector<256x4xbf16>
    %c0_10 = arith.constant 0 : index
    %c0_11 = arith.constant 0 : index
    %c0_12 = arith.constant 0 : index
    %8 = vector.load %arg3[%c0_10, %c0_11, %c0_12] : memref<9x4x4xbf16, #tpu.memory_space<vmem>>, vector<1x4x4xbf16>
    %9 = vector.shape_cast %8 : vector<1x4x4xbf16> to vector<4x4xbf16>
    %cst_13 = arith.constant dense<0.000000e+00> : vector<256x4xf32>
    %10 = tpu.matmul %4, %9, %cst_13 {dimension_numbers = #tpu.dot_dimension_numbers<[1], [0], [0], [1], [0, 0, 1, 1], [], []>} : vector<256x4xbf16>, vector<4x4xbf16>, vector<256x4xf32> -> vector<256x4xf32>
    %c0_14 = arith.constant 0 : index
    %c0_15 = arith.constant 0 : index
    %c0_16 = arith.constant 0 : index
    %11 = vector.load %arg4[%c0_14, %c0_15, %c0_16] : memref<9x4x4xbf16, #tpu.memory_space<vmem>>, vector<1x4x4xbf16>
    %12 = vector.shape_cast %11 : vector<1x4x4xbf16> to vector<4x4xbf16>
    %cst_17 = arith.constant dense<0.000000e+00> : vector<256x4xf32>
    %13 = tpu.matmul %7, %12, %cst_17 {dimension_numbers = #tpu.dot_dimension_numbers<[1], [0], [0], [1], [0, 0, 1, 1], [], []>} : vector<256x4xbf16>, vector<4x4xbf16>, vector<256x4xf32> -> vector<256x4xf32>
    %14 = arith.addf %10, %13 : vector<256x4xf32>
    %c2 = arith.constant 2 : index
    %c2_18 = arith.constant 2 : index
    %c0_19 = arith.constant 0 : index
    %15 = vector.load %arg8[%c2, %c2_18, %c0_19] : memref<18x18x4xf32, #tpu.memory_space<vmem>>, vector<16x16x4xf32>
    %16 = vector.shape_cast %14 : vector<256x4xf32> to vector<16x16x4xf32>
    %17 = arith.addf %15, %16 : vector<16x16x4xf32>
    %c2_20 = arith.constant 2 : index
    %c2_21 = arith.constant 2 : index
    %c0_22 = arith.constant 0 : index
    %18 = vector.load %arg8[%c2_20, %c2_21, %c0_22] : memref<18x18x4xf32, #tpu.memory_space<vmem>>, vector<16x16x4xf32>
    tpu.vector_store %arg8[%c2_20, %c2_21, %c0_22], %17 {strides = array<i32>} : memref<18x18x4xf32, #tpu.memory_space<vmem>>, vector<16x16x4xf32>,
    %c1 = arith.constant 1 : index
    %c0_23 = arith.constant 0 : index
    %c0_24 = arith.constant 0 : index
    %19 = vector.load %arg3[%c1, %c0_23, %c0_24] : memref<9x4x4xbf16, #tpu.memory_space<vmem>>, vector<1x4x4xbf16>
    %20 = vector.shape_cast %19 : vector<1x4x4xbf16> to vector<4x4xbf16>
    %cst_25 = arith.constant dense<0.000000e+00> : vector<256x4xf32>
    %21 = tpu.matmul %4, %20, %cst_25 {dimension_numbers = #tpu.dot_dimension_numbers<[1], [0], [0], [1], [0, 0, 1, 1], [], []>} : vector<256x4xbf16>, vector<4x4xbf16>, vector<256x4xf32> -> vector<256x4xf32>
    %c1_26 = arith.constant 1 : index
    %c0_27 = arith.constant 0 : index
    %c0_28 = arith.constant 0 : index
    %22 = vector.load %arg4[%c1_26, %c0_27, %c0_28] : memref<9x4x4xbf16, #tpu.memory_space<vmem>>, vector<1x4x4xbf16>
    %23 = vector.shape_cast %22 : vector<1x4x4xbf16> to vector<4x4xbf16>
    %cst_29 = arith.constant dense<0.000000e+00> : vector<256x4xf32>
    %24 = tpu.matmul %7, %23, %cst_29 {dimension_numbers = #tpu.dot_dimension_numbers<[1], [0], [0], [1], [0, 0, 1, 1], [], []>} : vector<256x4xbf16>, vector<4x4xbf16>, vector<256x4xf32> -> vector<256x4xf32>
    %25 = arith.addf %21, %24 : vector<256x4xf32>
    %c2_30 = arith.constant 2 : index
    %c1_31 = arith.constant 1 : index
    %c0_32 = arith.constant 0 : index
    %26 = vector.load %arg8[%c2_30, %c1_31, %c0_32] : memref<18x18x4xf32, #tpu.memory_space<vmem>>, vector<16x16x4xf32>
    %27 = vector.shape_cast %25 : vector<256x4xf32> to vector<16x16x4xf32>
    %28 = arith.addf %26, %27 : vector<16x16x4xf32>
    %c2_33 = arith.constant 2 : index
    %c1_34 = arith.constant 1 : index
    %c0_35 = arith.constant 0 : index
    %29 = vector.load %arg8[%c2_33, %c1_34, %c0_35] : memref<18x18x4xf32, #tpu.memory_space<vmem>>, vector<16x16x4xf32>
    tpu.vector_store %arg8[%c2_33, %c1_34, %c0_35], %28 {strides = array<i32>} : memref<18x18x4xf32, #tpu.memory_space<vmem>>, vector<16x16x4xf32>,
    %c2_36 = arith.constant 2 : index
    %c0_37 = arith.constant 0 : index
    %c0_38 = arith.constant 0 : index
    %30 = vector.load %arg3[%c2_36, %c0_37, %c0_38] : memref<9x4x4xbf16, #tpu.memory_space<vmem>>, vector<1x4x4xbf16>
    %31 = vector.shape_cast %30 : vector<1x4x4xbf16> to vector<4x4xbf16>
    %cst_39 = arith.constant dense<0.000000e+00> : vector<256x4xf32>
    %32 = tpu.matmul %4, %31, %cst_39 {dimension_numbers = #tpu.dot_dimension_numbers<[1], [0], [0], [1], [0, 0, 1, 1], [], []>} : vector<256x4xbf16>, vector<4x4xbf16>, vector<256x4xf32> -> vector<256x4xf32>
    %c2_40 = arith.constant 2 : index
    %c0_41 = arith.constant 0 : index
    %c0_42 = arith.constant 0 : index
    %33 = vector.load %arg4[%c2_40, %c0_41, %c0_42] : memref<9x4x4xbf16, #tpu.memory_space<vmem>>, vector<1x4x4xbf16>
    %34 = vector.shape_cast %33 : vector<1x4x4xbf16> to vector<4x4xbf16>
    %cst_43 = arith.constant dense<0.000000e+00> : vector<256x4xf32>
    %35 = tpu.matmul %7, %34, %cst_43 {dimension_numbers = #tpu.dot_dimension_numbers<[1], [0], [0], [1], [0, 0, 1, 1], [], []>} : vector<256x4xbf16>, vector<4x4xbf16>, vector<256x4xf32> -> vector<256x4xf32>
    %36 = arith.addf %32, %35 : vector<256x4xf32>
    %c2_44 = arith.constant 2 : index
    %c0_45 = arith.constant 0 : index
    %c0_46 = arith.constant 0 : index
    %37 = vector.load %arg8[%c2_44, %c0_45, %c0_46] : memref<18x18x4xf32, #tpu.memory_space<vmem>>, vector<16x16x4xf32>
    %38 = vector.shape_cast %36 : vector<256x4xf32> to vector<16x16x4xf32>
    %39 = arith.addf %37, %38 : vector<16x16x4xf32>
    %c2_47 = arith.constant 2 : index
    %c0_48 = arith.constant 0 : index
    %c0_49 = arith.constant 0 : index
    %40 = vector.load %arg8[%c2_47, %c0_48, %c0_49] : memref<18x18x4xf32, #tpu.memory_space<vmem>>, vector<16x16x4xf32>
    tpu.vector_store %arg8[%c2_47, %c0_48, %c0_49], %39 {strides = array<i32>} : memref<18x18x4xf32, #tpu.memory_space<vmem>>, vector<16x16x4xf32>,
    %c3 = arith.constant 3 : index
    %c0_50 = arith.constant 0 : index
    %c0_51 = arith.constant 0 : index
    %41 = vector.load %arg3[%c3, %c0_50, %c0_51] : memref<9x4x4xbf16, #tpu.memory_space<vmem>>, vector<1x4x4xbf16>
    %42 = vector.shape_cast %41 : vector<1x4x4xbf16> to vector<4x4xbf16>
    %cst_52 = arith.constant dense<0.000000e+00> : vector<256x4xf32>
    %43 = tpu.matmul %4, %42, %cst_52 {dimension_numbers = #tpu.dot_dimension_numbers<[1], [0], [0], [1], [0, 0, 1, 1], [], []>} : vector<256x4xbf16>, vector<4x4xbf16>, vector<256x4xf32> -> vector<256x4xf32>
    %c3_53 = arith.constant 3 : index
    %c0_54 = arith.constant 0 : index
    %c0_55 = arith.constant 0 : index
    %44 = vector.load %arg4[%c3_53, %c0_54, %c0_55] : memref<9x4x4xbf16, #tpu.memory_space<vmem>>, vector<1x4x4xbf16>
    %45 = vector.shape_cast %44 : vector<1x4x4xbf16> to vector<4x4xbf16>
    %cst_56 = arith.constant dense<0.000000e+00> : vector<256x4xf32>
    %46 = tpu.matmul %7, %45, %cst_56 {dimension_numbers = #tpu.dot_dimension_numbers<[1], [0], [0], [1], [0, 0, 1, 1], [], []>} : vector<256x4xbf16>, vector<4x4xbf16>, vector<256x4xf32> -> vector<256x4xf32>
    %47 = arith.addf %43, %46 : vector<256x4xf32>
    %c1_57 = arith.constant 1 : index
    %c2_58 = arith.constant 2 : index
    %c0_59 = arith.constant 0 : index
    %48 = vector.load %arg8[%c1_57, %c2_58, %c0_59] : memref<18x18x4xf32, #tpu.memory_space<vmem>>, vector<16x16x4xf32>
    %49 = vector.shape_cast %47 : vector<256x4xf32> to vector<16x16x4xf32>
    %50 = arith.addf %48, %49 : vector<16x16x4xf32>
    %c1_60 = arith.constant 1 : index
    %c2_61 = arith.constant 2 : index
    %c0_62 = arith.constant 0 : index
    %51 = vector.load %arg8[%c1_60, %c2_61, %c0_62] : memref<18x18x4xf32, #tpu.memory_space<vmem>>, vector<16x16x4xf32>
    tpu.vector_store %arg8[%c1_60, %c2_61, %c0_62], %50 {strides = array<i32>} : memref<18x18x4xf32, #tpu.memory_space<vmem>>, vector<16x16x4xf32>,
    %c4 = arith.constant 4 : index
    %c0_63 = arith.constant 0 : index
    %c0_64 = arith.constant 0 : index
    %52 = vector.load %arg3[%c4, %c0_63, %c0_64] : memref<9x4x4xbf16, #tpu.memory_space<vmem>>, vector<1x4x4xbf16>
    %53 = vector.shape_cast %52 : vector<1x4x4xbf16> to vector<4x4xbf16>
    %cst_65 = arith.constant dense<0.000000e+00> : vector<256x4xf32>
    %54 = tpu.matmul %4, %53, %cst_65 {dimension_numbers = #tpu.dot_dimension_numbers<[1], [0], [0], [1], [0, 0, 1, 1], [], []>} : vector<256x4xbf16>, vector<4x4xbf16>, vector<256x4xf32> -> vector<256x4xf32>
    %c4_66 = arith.constant 4 : index
    %c0_67 = arith.constant 0 : index
    %c0_68 = arith.constant 0 : index
    %55 = vector.load %arg4[%c4_66, %c0_67, %c0_68] : memref<9x4x4xbf16, #tpu.memory_space<vmem>>, vector<1x4x4xbf16>
    %56 = vector.shape_cast %55 : vector<1x4x4xbf16> to vector<4x4xbf16>
    %cst_69 = arith.constant dense<0.000000e+00> : vector<256x4xf32>
    %57 = tpu.matmul %7, %56, %cst_69 {dimension_numbers = #tpu.dot_dimension_numbers<[1], [0], [0], [1], [0, 0, 1, 1], [], []>} : vector<256x4xbf16>, vector<4x4xbf16>, vector<256x4xf32> -> vector<256x4xf32>
    %58 = arith.addf %54, %57 : vector<256x4xf32>
    %c1_70 = arith.constant 1 : index
    %c1_71 = arith.constant 1 : index
    %c0_72 = arith.constant 0 : index
    %59 = vector.load %arg8[%c1_70, %c1_71, %c0_72] : memref<18x18x4xf32, #tpu.memory_space<vmem>>, vector<16x16x4xf32>
    %60 = vector.shape_cast %58 : vector<256x4xf32> to vector<16x16x4xf32>
    %61 = arith.addf %59, %60 : vector<16x16x4xf32>
    %c1_73 = arith.constant 1 : index
    %c1_74 = arith.constant 1 : index
    %c0_75 = arith.constant 0 : index
    %62 = vector.load %arg8[%c1_73, %c1_74, %c0_75] : memref<18x18x4xf32, #tpu.memory_space<vmem>>, vector<16x16x4xf32>
    tpu.vector_store %arg8[%c1_73, %c1_74, %c0_75], %61 {strides = array<i32>} : memref<18x18x4xf32, #tpu.memory_space<vmem>>, vector<16x16x4xf32>,
    %c5 = arith.constant 5 : index
    %c0_76 = arith.constant 0 : index
    %c0_77 = arith.constant 0 : index
    %63 = vector.load %arg3[%c5, %c0_76, %c0_77] : memref<9x4x4xbf16, #tpu.memory_space<vmem>>, vector<1x4x4xbf16>
    %64 = vector.shape_cast %63 : vector<1x4x4xbf16> to vector<4x4xbf16>
    %cst_78 = arith.constant dense<0.000000e+00> : vector<256x4xf32>
    %65 = tpu.matmul %4, %64, %cst_78 {dimension_numbers = #tpu.dot_dimension_numbers<[1], [0], [0], [1], [0, 0, 1, 1], [], []>} : vector<256x4xbf16>, vector<4x4xbf16>, vector<256x4xf32> -> vector<256x4xf32>
    %c5_79 = arith.constant 5 : index
    %c0_80 = arith.constant 0 : index
    %c0_81 = arith.constant 0 : index
    %66 = vector.load %arg4[%c5_79, %c0_80, %c0_81] : memref<9x4x4xbf16, #tpu.memory_space<vmem>>, vector<1x4x4xbf16>
    %67 = vector.shape_cast %66 : vector<1x4x4xbf16> to vector<4x4xbf16>
    %cst_82 = arith.constant dense<0.000000e+00> : vector<256x4xf32>
    %68 = tpu.matmul %7, %67, %cst_82 {dimension_numbers = #tpu.dot_dimension_numbers<[1], [0], [0], [1], [0, 0, 1, 1], [], []>} : vector<256x4xbf16>, vector<4x4xbf16>, vector<256x4xf32> -> vector<256x4xf32>
    %69 = arith.addf %65, %68 : vector<256x4xf32>
    %c1_83 = arith.constant 1 : index
    %c0_84 = arith.constant 0 : index
    %c0_85 = arith.constant 0 : index
    %70 = vector.load %arg8[%c1_83, %c0_84, %c0_85] : memref<18x18x4xf32, #tpu.memory_space<vmem>>, vector<16x16x4xf32>
    %71 = vector.shape_cast %69 : vector<256x4xf32> to vector<16x16x4xf32>
    %72 = arith.addf %70, %71 : vector<16x16x4xf32>
    %c1_86 = arith.constant 1 : index
    %c0_87 = arith.constant 0 : index
    %c0_88 = arith.constant 0 : index
    %73 = vector.load %arg8[%c1_86, %c0_87, %c0_88] : memref<18x18x4xf32, #tpu.memory_space<vmem>>, vector<16x16x4xf32>
    tpu.vector_store %arg8[%c1_86, %c0_87, %c0_88], %72 {strides = array<i32>} : memref<18x18x4xf32, #tpu.memory_space<vmem>>, vector<16x16x4xf32>,
    %c6 = arith.constant 6 : index
    %c0_89 = arith.constant 0 : index
    %c0_90 = arith.constant 0 : index
    %74 = vector.load %arg3[%c6, %c0_89, %c0_90] : memref<9x4x4xbf16, #tpu.memory_space<vmem>>, vector<1x4x4xbf16>
    %75 = vector.shape_cast %74 : vector<1x4x4xbf16> to vector<4x4xbf16>
    %cst_91 = arith.constant dense<0.000000e+00> : vector<256x4xf32>
    %76 = tpu.matmul %4, %75, %cst_91 {dimension_numbers = #tpu.dot_dimension_numbers<[1], [0], [0], [1], [0, 0, 1, 1], [], []>} : vector<256x4xbf16>, vector<4x4xbf16>, vector<256x4xf32> -> vector<256x4xf32>
    %c6_92 = arith.constant 6 : index
    %c0_93 = arith.constant 0 : index
    %c0_94 = arith.constant 0 : index
    %77 = vector.load %arg4[%c6_92, %c0_93, %c0_94] : memref<9x4x4xbf16, #tpu.memory_space<vmem>>, vector<1x4x4xbf16>
    %78 = vector.shape_cast %77 : vector<1x4x4xbf16> to vector<4x4xbf16>
    %cst_95 = arith.constant dense<0.000000e+00> : vector<256x4xf32>
    %79 = tpu.matmul %7, %78, %cst_95 {dimension_numbers = #tpu.dot_dimension_numbers<[1], [0], [0], [1], [0, 0, 1, 1], [], []>} : vector<256x4xbf16>, vector<4x4xbf16>, vector<256x4xf32> -> vector<256x4xf32>
    %80 = arith.addf %76, %79 : vector<256x4xf32>
    %c0_96 = arith.constant 0 : index
    %c2_97 = arith.constant 2 : index
    %c0_98 = arith.constant 0 : index
    %81 = vector.load %arg8[%c0_96, %c2_97, %c0_98] : memref<18x18x4xf32, #tpu.memory_space<vmem>>, vector<16x16x4xf32>
    %82 = vector.shape_cast %80 : vector<256x4xf32> to vector<16x16x4xf32>
    %83 = arith.addf %81, %82 : vector<16x16x4xf32>
    %c0_99 = arith.constant 0 : index
    %c2_100 = arith.constant 2 : index
    %c0_101 = arith.constant 0 : index
    %84 = vector.load %arg8[%c0_99, %c2_100, %c0_101] : memref<18x18x4xf32, #tpu.memory_space<vmem>>, vector<16x16x4xf32>
    tpu.vector_store %arg8[%c0_99, %c2_100, %c0_101], %83 {strides = array<i32>} : memref<18x18x4xf32, #tpu.memory_space<vmem>>, vector<16x16x4xf32>,
    %c7 = arith.constant 7 : index
    %c0_102 = arith.constant 0 : index
    %c0_103 = arith.constant 0 : index
    %85 = vector.load %arg3[%c7, %c0_102, %c0_103] : memref<9x4x4xbf16, #tpu.memory_space<vmem>>, vector<1x4x4xbf16>
    %86 = vector.shape_cast %85 : vector<1x4x4xbf16> to vector<4x4xbf16>
    %cst_104 = arith.constant dense<0.000000e+00> : vector<256x4xf32>
    %87 = tpu.matmul %4, %86, %cst_104 {dimension_numbers = #tpu.dot_dimension_numbers<[1], [0], [0], [1], [0, 0, 1, 1], [], []>} : vector<256x4xbf16>, vector<4x4xbf16>, vector<256x4xf32> -> vector<256x4xf32>
    %c7_105 = arith.constant 7 : index
    %c0_106 = arith.constant 0 : index
    %c0_107 = arith.constant 0 : index
    %88 = vector.load %arg4[%c7_105, %c0_106, %c0_107] : memref<9x4x4xbf16, #tpu.memory_space<vmem>>, vector<1x4x4xbf16>
    %89 = vector.shape_cast %88 : vector<1x4x4xbf16> to vector<4x4xbf16>
    %cst_108 = arith.constant dense<0.000000e+00> : vector<256x4xf32>
    %90 = tpu.matmul %7, %89, %cst_108 {dimension_numbers = #tpu.dot_dimension_numbers<[1], [0], [0], [1], [0, 0, 1, 1], [], []>} : vector<256x4xbf16>, vector<4x4xbf16>, vector<256x4xf32> -> vector<256x4xf32>
    %91 = arith.addf %87, %90 : vector<256x4xf32>
    %c0_109 = arith.constant 0 : index
    %c1_110 = arith.constant 1 : index
    %c0_111 = arith.constant 0 : index
    %92 = vector.load %arg8[%c0_109, %c1_110, %c0_111] : memref<18x18x4xf32, #tpu.memory_space<vmem>>, vector<16x16x4xf32>
    %93 = vector.shape_cast %91 : vector<256x4xf32> to vector<16x16x4xf32>
    %94 = arith.addf %92, %93 : vector<16x16x4xf32>
    %c0_112 = arith.constant 0 : index
    %c1_113 = arith.constant 1 : index
    %c0_114 = arith.constant 0 : index
    %95 = vector.load %arg8[%c0_112, %c1_113, %c0_114] : memref<18x18x4xf32, #tpu.memory_space<vmem>>, vector<16x16x4xf32>
    tpu.vector_store %arg8[%c0_112, %c1_113, %c0_114], %94 {strides = array<i32>} : memref<18x18x4xf32, #tpu.memory_space<vmem>>, vector<16x16x4xf32>,
    %c8 = arith.constant 8 : index
    %c0_115 = arith.constant 0 : index
    %c0_116 = arith.constant 0 : index
    %96 = vector.load %arg3[%c8, %c0_115, %c0_116] : memref<9x4x4xbf16, #tpu.memory_space<vmem>>, vector<1x4x4xbf16>
    %97 = vector.shape_cast %96 : vector<1x4x4xbf16> to vector<4x4xbf16>
    %cst_117 = arith.constant dense<0.000000e+00> : vector<256x4xf32>
    %98 = tpu.matmul %4, %97, %cst_117 {dimension_numbers = #tpu.dot_dimension_numbers<[1], [0], [0], [1], [0, 0, 1, 1], [], []>} : vector<256x4xbf16>, vector<4x4xbf16>, vector<256x4xf32> -> vector<256x4xf32>
    %c8_118 = arith.constant 8 : index
    %c0_119 = arith.constant 0 : index
    %c0_120 = arith.constant 0 : index
    %99 = vector.load %arg4[%c8_118, %c0_119, %c0_120] : memref<9x4x4xbf16, #tpu.memory_space<vmem>>, vector<1x4x4xbf16>
    %100 = vector.shape_cast %99 : vector<1x4x4xbf16> to vector<4x4xbf16>
    %cst_121 = arith.constant dense<0.000000e+00> : vector<256x4xf32>
    %101 = tpu.matmul %7, %100, %cst_121 {dimension_numbers = #tpu.dot_dimension_numbers<[1], [0], [0], [1], [0, 0, 1, 1], [], []>} : vector<256x4xbf16>, vector<4x4xbf16>, vector<256x4xf32> -> vector<256x4xf32>
    %102 = arith.addf %98, %101 : vector<256x4xf32>
    %c0_122 = arith.constant 0 : index
    %c0_123 = arith.constant 0 : index
    %c0_124 = arith.constant 0 : index
    %103 = vector.load %arg8[%c0_122, %c0_123, %c0_124] : memref<18x18x4xf32, #tpu.memory_space<vmem>>, vector<16x16x4xf32>
    %104 = vector.shape_cast %102 : vector<256x4xf32> to vector<16x16x4xf32>
    %105 = arith.addf %103, %104 : vector<16x16x4xf32>
    %c0_125 = arith.constant 0 : index
    %c0_126 = arith.constant 0 : index
    %c0_127 = arith.constant 0 : index
    %106 = vector.load %arg8[%c0_125, %c0_126, %c0_127] : memref<18x18x4xf32, #tpu.memory_space<vmem>>, vector<16x16x4xf32>
    tpu.vector_store %arg8[%c0_125, %c0_126, %c0_127], %105 {strides = array<i32>} : memref<18x18x4xf32, #tpu.memory_space<vmem>>, vector<16x16x4xf32>,
    %c1_128 = arith.constant 1 : index
    %c1_129 = arith.constant 1 : index
    %c0_130 = arith.constant 0 : index
    %107 = vector.load %arg8[%c1_128, %c1_129, %c0_130] : memref<18x18x4xf32, #tpu.memory_space<vmem>>, vector<16x16x4xf32>
    %c0_131 = arith.constant 0 : index
    %c0_132 = arith.constant 0 : index
    %c0_133 = arith.constant 0 : index
    %108 = vector.load %arg5[%c0_131, %c0_132, %c0_133] : memref<1x1x4xf32, #tpu.memory_space<vmem>>, vector<1x1x4xf32>
    %109 = vector.broadcast %108 : vector<1x1x4xf32> to vector<16x16x4xf32>
    %110 = arith.mulf %107, %109 : vector<16x16x4xf32>
    %c0_134 = arith.constant 0 : index
    %c0_135 = arith.constant 0 : index
    %c0_136 = arith.constant 0 : index
    %111 = vector.load %arg6[%c0_134, %c0_135, %c0_136] : memref<1x1x4xf32, #tpu.memory_space<vmem>>, vector<1x1x4xf32>
    %112 = vector.broadcast %111 : vector<1x1x4xf32> to vector<16x16x4xf32>
    %113 = arith.addf %110, %112 : vector<16x16x4xf32>
    %cst_137 = arith.constant 0.000000e+00 : f32
    %114 = vector.broadcast %cst_137 : f32 to vector<16x16x4xf32>
    %115 = arith.maximumf %113, %114 : vector<16x16x4xf32>
    %116 = arith.truncf %115 : vector<16x16x4xf32> to vector<16x16x4xbf16>
    %c0_138 = arith.constant 0 : index
    %c0_139 = arith.constant 0 : index
    %c0_140 = arith.constant 0 : index
    %c0_141 = arith.constant 0 : index
    %117 = vector.load %arg7[%c0_138, %c0_139, %c0_140, %c0_141] : memref<1x16x16x4xbf16, #tpu.memory_space<vmem>>, vector<1x16x16x4xbf16>
    %118 = vector.shape_cast %117 : vector<1x16x16x4xbf16> to vector<16x16x4xbf16>
    %119 = vector.shape_cast %116 : vector<16x16x4xbf16> to vector<1x16x16x4xbf16>
    tpu.vector_store %arg7[%c0_138, %c0_139, %c0_140, %c0_141], %119 {strides = array<i32>} : memref<1x16x16x4xbf16, #tpu.memory_space<vmem>>, vector<1x16x16x4xbf16>,
    return
  }
  func.func @transform_0(%arg0: i32) -> (i32, i32, i32, i32) {
    %c0_i32 = arith.constant 0 : i32
    %c0_i32_0 = arith.constant 0 : i32
    %c0_i32_1 = arith.constant 0 : i32
    %c0_i32_2 = arith.constant 0 : i32
    return %arg0, %c0_i32, %c0_i32_0, %c0_i32_1 : i32, i32, i32, i32
  }
  func.func @transform_1(%arg0: i32) -> (i32, i32, i32, i32) {
    %c0_i32 = arith.constant 0 : i32
    %c0_i32_0 = arith.constant 0 : i32
    %c0_i32_1 = arith.constant 0 : i32
    %c0_i32_2 = arith.constant 0 : i32
    return %arg0, %c0_i32, %c0_i32_0, %c0_i32_1 : i32, i32, i32, i32
  }
  func.func @transform_2(%arg0: i32) -> (i32, i32, i32) {
    %c0_i32 = arith.constant 0 : i32
    %c0_i32_0 = arith.constant 0 : i32
    %c0_i32_1 = arith.constant 0 : i32
    %c0_i32_2 = arith.constant 0 : i32
    return %c0_i32, %c0_i32_0, %c0_i32_1 : i32, i32, i32
  }
  func.func @transform_3(%arg0: i32) -> (i32, i32, i32) {
    %c0_i32 = arith.constant 0 : i32
    %c0_i32_0 = arith.constant 0 : i32
    %c0_i32_1 = arith.constant 0 : i32
    %c0_i32_2 = arith.constant 0 : i32
    return %c0_i32, %c0_i32_0, %c0_i32_1 : i32, i32, i32
  }
  func.func @transform_4(%arg0: i32) -> (i32, i32, i32) {
    %c0_i32 = arith.constant 0 : i32
    %c0_i32_0 = arith.constant 0 : i32
    %c0_i32_1 = arith.constant 0 : i32
    %c0_i32_2 = arith.constant 0 : i32
    return %c0_i32, %c0_i32_0, %c0_i32_1 : i32, i32, i32
  }
  func.func @transform_5(%arg0: i32) -> (i32, i32, i32) {
    %c0_i32 = arith.constant 0 : i32
    %c0_i32_0 = arith.constant 0 : i32
    %c0_i32_1 = arith.constant 0 : i32
    %c0_i32_2 = arith.constant 0 : i32
    return %c0_i32, %c0_i32_0, %c0_i32_1 : i32, i32, i32
  }
  func.func @transform_6(%arg0: i32) -> (i32, i32, i32, i32) {
    %c0_i32 = arith.constant 0 : i32
    %c0_i32_0 = arith.constant 0 : i32
    %c0_i32_1 = arith.constant 0 : i32
    %c0_i32_2 = arith.constant 0 : i32
    return %arg0, %c0_i32, %c0_i32_0, %c0_i32_1 : i32, i32, i32, i32
  }
}

module attributes {stable_mosaic.version = 11 : i64} {
  func.func @kernel(%arg0: i32, %arg1: memref<1x16x16x4xbf16, #tpu.memory_space<vmem>>, %arg2: memref<9x4x4xbf16, #tpu.memory_space<vmem>>, %arg3: memref<1x1x4xf32, #tpu.memory_space<vmem>>, %arg4: memref<1x1x4xf32, #tpu.memory_space<vmem>>, %arg5: memref<1x16x16x4xf32, #tpu.memory_space<vmem>>, %arg6: memref<18x18x4xf32, #tpu.memory_space<vmem>>) attributes {dimension_semantics = [#tpu.dimension_semantics<parallel>], iteration_bounds = array<i64: 2>, scalar_prefetch = 0 : i64, scratch_operands = 1 : i64, tpu.core_type = #tpu.core_type<tc>, window_params = [{transform_indices = @transform_0, window_bounds = array<i64: 1, 16, 16, 4>}, {pipeline_mode = #tpu.pipeline_mode<synchronous>, transform_indices = @transform_1, window_bounds = array<i64: 9, 4, 4>}, {pipeline_mode = #tpu.pipeline_mode<synchronous>, transform_indices = @transform_2, window_bounds = array<i64: 1, 1, 4>}, {pipeline_mode = #tpu.pipeline_mode<synchronous>, transform_indices = @transform_3, window_bounds = array<i64: 1, 1, 4>}, {transform_indices = @transform_4, window_bounds = array<i64: 1, 16, 16, 4>}]} {
    %cst = arith.constant 0.000000e+00 : f32
    %0 = vector.broadcast %cst : f32 to vector<18x18x4xf32>
    %c0 = arith.constant 0 : index
    %c0_0 = arith.constant 0 : index
    %c0_1 = arith.constant 0 : index
    %1 = vector.load %arg6[%c0, %c0_0, %c0_1] : memref<18x18x4xf32, #tpu.memory_space<vmem>>, vector<18x18x4xf32>
    tpu.vector_store %arg6[%c0, %c0_0, %c0_1], %0 {strides = array<i32>} : memref<18x18x4xf32, #tpu.memory_space<vmem>>, vector<18x18x4xf32>,
    %c0_2 = arith.constant 0 : index
    %c0_3 = arith.constant 0 : index
    %c0_4 = arith.constant 0 : index
    %c0_5 = arith.constant 0 : index
    %2 = vector.load %arg1[%c0_2, %c0_3, %c0_4, %c0_5] : memref<1x16x16x4xbf16, #tpu.memory_space<vmem>>, vector<1x16x16x4xbf16>
    %3 = vector.shape_cast %2 : vector<1x16x16x4xbf16> to vector<16x16x4xbf16>
    %4 = vector.shape_cast %3 : vector<16x16x4xbf16> to vector<256x4xbf16>
    %c0_6 = arith.constant 0 : index
    %c0_7 = arith.constant 0 : index
    %c0_8 = arith.constant 0 : index
    %5 = vector.load %arg2[%c0_6, %c0_7, %c0_8] : memref<9x4x4xbf16, #tpu.memory_space<vmem>>, vector<1x4x4xbf16>
    %6 = vector.shape_cast %5 : vector<1x4x4xbf16> to vector<4x4xbf16>
    %cst_9 = arith.constant dense<0.000000e+00> : vector<256x4xf32>
    %7 = tpu.matmul %4, %6, %cst_9 {dimension_numbers = #tpu.dot_dimension_numbers<[1], [0], [0], [1], [0, 0, 1, 1], [], []>} : vector<256x4xbf16>, vector<4x4xbf16>, vector<256x4xf32> -> vector<256x4xf32>
    %c2 = arith.constant 2 : index
    %c2_10 = arith.constant 2 : index
    %c0_11 = arith.constant 0 : index
    %8 = vector.load %arg6[%c2, %c2_10, %c0_11] : memref<18x18x4xf32, #tpu.memory_space<vmem>>, vector<16x16x4xf32>
    %9 = vector.shape_cast %7 : vector<256x4xf32> to vector<16x16x4xf32>
    %10 = arith.addf %8, %9 : vector<16x16x4xf32>
    %c2_12 = arith.constant 2 : index
    %c2_13 = arith.constant 2 : index
    %c0_14 = arith.constant 0 : index
    %11 = vector.load %arg6[%c2_12, %c2_13, %c0_14] : memref<18x18x4xf32, #tpu.memory_space<vmem>>, vector<16x16x4xf32>
    tpu.vector_store %arg6[%c2_12, %c2_13, %c0_14], %10 {strides = array<i32>} : memref<18x18x4xf32, #tpu.memory_space<vmem>>, vector<16x16x4xf32>,
    %c1 = arith.constant 1 : index
    %c0_15 = arith.constant 0 : index
    %c0_16 = arith.constant 0 : index
    %12 = vector.load %arg2[%c1, %c0_15, %c0_16] : memref<9x4x4xbf16, #tpu.memory_space<vmem>>, vector<1x4x4xbf16>
    %13 = vector.shape_cast %12 : vector<1x4x4xbf16> to vector<4x4xbf16>
    %cst_17 = arith.constant dense<0.000000e+00> : vector<256x4xf32>
    %14 = tpu.matmul %4, %13, %cst_17 {dimension_numbers = #tpu.dot_dimension_numbers<[1], [0], [0], [1], [0, 0, 1, 1], [], []>} : vector<256x4xbf16>, vector<4x4xbf16>, vector<256x4xf32> -> vector<256x4xf32>
    %c2_18 = arith.constant 2 : index
    %c1_19 = arith.constant 1 : index
    %c0_20 = arith.constant 0 : index
    %15 = vector.load %arg6[%c2_18, %c1_19, %c0_20] : memref<18x18x4xf32, #tpu.memory_space<vmem>>, vector<16x16x4xf32>
    %16 = vector.shape_cast %14 : vector<256x4xf32> to vector<16x16x4xf32>
    %17 = arith.addf %15, %16 : vector<16x16x4xf32>
    %c2_21 = arith.constant 2 : index
    %c1_22 = arith.constant 1 : index
    %c0_23 = arith.constant 0 : index
    %18 = vector.load %arg6[%c2_21, %c1_22, %c0_23] : memref<18x18x4xf32, #tpu.memory_space<vmem>>, vector<16x16x4xf32>
    tpu.vector_store %arg6[%c2_21, %c1_22, %c0_23], %17 {strides = array<i32>} : memref<18x18x4xf32, #tpu.memory_space<vmem>>, vector<16x16x4xf32>,
    %c2_24 = arith.constant 2 : index
    %c0_25 = arith.constant 0 : index
    %c0_26 = arith.constant 0 : index
    %19 = vector.load %arg2[%c2_24, %c0_25, %c0_26] : memref<9x4x4xbf16, #tpu.memory_space<vmem>>, vector<1x4x4xbf16>
    %20 = vector.shape_cast %19 : vector<1x4x4xbf16> to vector<4x4xbf16>
    %cst_27 = arith.constant dense<0.000000e+00> : vector<256x4xf32>
    %21 = tpu.matmul %4, %20, %cst_27 {dimension_numbers = #tpu.dot_dimension_numbers<[1], [0], [0], [1], [0, 0, 1, 1], [], []>} : vector<256x4xbf16>, vector<4x4xbf16>, vector<256x4xf32> -> vector<256x4xf32>
    %c2_28 = arith.constant 2 : index
    %c0_29 = arith.constant 0 : index
    %c0_30 = arith.constant 0 : index
    %22 = vector.load %arg6[%c2_28, %c0_29, %c0_30] : memref<18x18x4xf32, #tpu.memory_space<vmem>>, vector<16x16x4xf32>
    %23 = vector.shape_cast %21 : vector<256x4xf32> to vector<16x16x4xf32>
    %24 = arith.addf %22, %23 : vector<16x16x4xf32>
    %c2_31 = arith.constant 2 : index
    %c0_32 = arith.constant 0 : index
    %c0_33 = arith.constant 0 : index
    %25 = vector.load %arg6[%c2_31, %c0_32, %c0_33] : memref<18x18x4xf32, #tpu.memory_space<vmem>>, vector<16x16x4xf32>
    tpu.vector_store %arg6[%c2_31, %c0_32, %c0_33], %24 {strides = array<i32>} : memref<18x18x4xf32, #tpu.memory_space<vmem>>, vector<16x16x4xf32>,
    %c3 = arith.constant 3 : index
    %c0_34 = arith.constant 0 : index
    %c0_35 = arith.constant 0 : index
    %26 = vector.load %arg2[%c3, %c0_34, %c0_35] : memref<9x4x4xbf16, #tpu.memory_space<vmem>>, vector<1x4x4xbf16>
    %27 = vector.shape_cast %26 : vector<1x4x4xbf16> to vector<4x4xbf16>
    %cst_36 = arith.constant dense<0.000000e+00> : vector<256x4xf32>
    %28 = tpu.matmul %4, %27, %cst_36 {dimension_numbers = #tpu.dot_dimension_numbers<[1], [0], [0], [1], [0, 0, 1, 1], [], []>} : vector<256x4xbf16>, vector<4x4xbf16>, vector<256x4xf32> -> vector<256x4xf32>
    %c1_37 = arith.constant 1 : index
    %c2_38 = arith.constant 2 : index
    %c0_39 = arith.constant 0 : index
    %29 = vector.load %arg6[%c1_37, %c2_38, %c0_39] : memref<18x18x4xf32, #tpu.memory_space<vmem>>, vector<16x16x4xf32>
    %30 = vector.shape_cast %28 : vector<256x4xf32> to vector<16x16x4xf32>
    %31 = arith.addf %29, %30 : vector<16x16x4xf32>
    %c1_40 = arith.constant 1 : index
    %c2_41 = arith.constant 2 : index
    %c0_42 = arith.constant 0 : index
    %32 = vector.load %arg6[%c1_40, %c2_41, %c0_42] : memref<18x18x4xf32, #tpu.memory_space<vmem>>, vector<16x16x4xf32>
    tpu.vector_store %arg6[%c1_40, %c2_41, %c0_42], %31 {strides = array<i32>} : memref<18x18x4xf32, #tpu.memory_space<vmem>>, vector<16x16x4xf32>,
    %c4 = arith.constant 4 : index
    %c0_43 = arith.constant 0 : index
    %c0_44 = arith.constant 0 : index
    %33 = vector.load %arg2[%c4, %c0_43, %c0_44] : memref<9x4x4xbf16, #tpu.memory_space<vmem>>, vector<1x4x4xbf16>
    %34 = vector.shape_cast %33 : vector<1x4x4xbf16> to vector<4x4xbf16>
    %cst_45 = arith.constant dense<0.000000e+00> : vector<256x4xf32>
    %35 = tpu.matmul %4, %34, %cst_45 {dimension_numbers = #tpu.dot_dimension_numbers<[1], [0], [0], [1], [0, 0, 1, 1], [], []>} : vector<256x4xbf16>, vector<4x4xbf16>, vector<256x4xf32> -> vector<256x4xf32>
    %c1_46 = arith.constant 1 : index
    %c1_47 = arith.constant 1 : index
    %c0_48 = arith.constant 0 : index
    %36 = vector.load %arg6[%c1_46, %c1_47, %c0_48] : memref<18x18x4xf32, #tpu.memory_space<vmem>>, vector<16x16x4xf32>
    %37 = vector.shape_cast %35 : vector<256x4xf32> to vector<16x16x4xf32>
    %38 = arith.addf %36, %37 : vector<16x16x4xf32>
    %c1_49 = arith.constant 1 : index
    %c1_50 = arith.constant 1 : index
    %c0_51 = arith.constant 0 : index
    %39 = vector.load %arg6[%c1_49, %c1_50, %c0_51] : memref<18x18x4xf32, #tpu.memory_space<vmem>>, vector<16x16x4xf32>
    tpu.vector_store %arg6[%c1_49, %c1_50, %c0_51], %38 {strides = array<i32>} : memref<18x18x4xf32, #tpu.memory_space<vmem>>, vector<16x16x4xf32>,
    %c5 = arith.constant 5 : index
    %c0_52 = arith.constant 0 : index
    %c0_53 = arith.constant 0 : index
    %40 = vector.load %arg2[%c5, %c0_52, %c0_53] : memref<9x4x4xbf16, #tpu.memory_space<vmem>>, vector<1x4x4xbf16>
    %41 = vector.shape_cast %40 : vector<1x4x4xbf16> to vector<4x4xbf16>
    %cst_54 = arith.constant dense<0.000000e+00> : vector<256x4xf32>
    %42 = tpu.matmul %4, %41, %cst_54 {dimension_numbers = #tpu.dot_dimension_numbers<[1], [0], [0], [1], [0, 0, 1, 1], [], []>} : vector<256x4xbf16>, vector<4x4xbf16>, vector<256x4xf32> -> vector<256x4xf32>
    %c1_55 = arith.constant 1 : index
    %c0_56 = arith.constant 0 : index
    %c0_57 = arith.constant 0 : index
    %43 = vector.load %arg6[%c1_55, %c0_56, %c0_57] : memref<18x18x4xf32, #tpu.memory_space<vmem>>, vector<16x16x4xf32>
    %44 = vector.shape_cast %42 : vector<256x4xf32> to vector<16x16x4xf32>
    %45 = arith.addf %43, %44 : vector<16x16x4xf32>
    %c1_58 = arith.constant 1 : index
    %c0_59 = arith.constant 0 : index
    %c0_60 = arith.constant 0 : index
    %46 = vector.load %arg6[%c1_58, %c0_59, %c0_60] : memref<18x18x4xf32, #tpu.memory_space<vmem>>, vector<16x16x4xf32>
    tpu.vector_store %arg6[%c1_58, %c0_59, %c0_60], %45 {strides = array<i32>} : memref<18x18x4xf32, #tpu.memory_space<vmem>>, vector<16x16x4xf32>,
    %c6 = arith.constant 6 : index
    %c0_61 = arith.constant 0 : index
    %c0_62 = arith.constant 0 : index
    %47 = vector.load %arg2[%c6, %c0_61, %c0_62] : memref<9x4x4xbf16, #tpu.memory_space<vmem>>, vector<1x4x4xbf16>
    %48 = vector.shape_cast %47 : vector<1x4x4xbf16> to vector<4x4xbf16>
    %cst_63 = arith.constant dense<0.000000e+00> : vector<256x4xf32>
    %49 = tpu.matmul %4, %48, %cst_63 {dimension_numbers = #tpu.dot_dimension_numbers<[1], [0], [0], [1], [0, 0, 1, 1], [], []>} : vector<256x4xbf16>, vector<4x4xbf16>, vector<256x4xf32> -> vector<256x4xf32>
    %c0_64 = arith.constant 0 : index
    %c2_65 = arith.constant 2 : index
    %c0_66 = arith.constant 0 : index
    %50 = vector.load %arg6[%c0_64, %c2_65, %c0_66] : memref<18x18x4xf32, #tpu.memory_space<vmem>>, vector<16x16x4xf32>
    %51 = vector.shape_cast %49 : vector<256x4xf32> to vector<16x16x4xf32>
    %52 = arith.addf %50, %51 : vector<16x16x4xf32>
    %c0_67 = arith.constant 0 : index
    %c2_68 = arith.constant 2 : index
    %c0_69 = arith.constant 0 : index
    %53 = vector.load %arg6[%c0_67, %c2_68, %c0_69] : memref<18x18x4xf32, #tpu.memory_space<vmem>>, vector<16x16x4xf32>
    tpu.vector_store %arg6[%c0_67, %c2_68, %c0_69], %52 {strides = array<i32>} : memref<18x18x4xf32, #tpu.memory_space<vmem>>, vector<16x16x4xf32>,
    %c7 = arith.constant 7 : index
    %c0_70 = arith.constant 0 : index
    %c0_71 = arith.constant 0 : index
    %54 = vector.load %arg2[%c7, %c0_70, %c0_71] : memref<9x4x4xbf16, #tpu.memory_space<vmem>>, vector<1x4x4xbf16>
    %55 = vector.shape_cast %54 : vector<1x4x4xbf16> to vector<4x4xbf16>
    %cst_72 = arith.constant dense<0.000000e+00> : vector<256x4xf32>
    %56 = tpu.matmul %4, %55, %cst_72 {dimension_numbers = #tpu.dot_dimension_numbers<[1], [0], [0], [1], [0, 0, 1, 1], [], []>} : vector<256x4xbf16>, vector<4x4xbf16>, vector<256x4xf32> -> vector<256x4xf32>
    %c0_73 = arith.constant 0 : index
    %c1_74 = arith.constant 1 : index
    %c0_75 = arith.constant 0 : index
    %57 = vector.load %arg6[%c0_73, %c1_74, %c0_75] : memref<18x18x4xf32, #tpu.memory_space<vmem>>, vector<16x16x4xf32>
    %58 = vector.shape_cast %56 : vector<256x4xf32> to vector<16x16x4xf32>
    %59 = arith.addf %57, %58 : vector<16x16x4xf32>
    %c0_76 = arith.constant 0 : index
    %c1_77 = arith.constant 1 : index
    %c0_78 = arith.constant 0 : index
    %60 = vector.load %arg6[%c0_76, %c1_77, %c0_78] : memref<18x18x4xf32, #tpu.memory_space<vmem>>, vector<16x16x4xf32>
    tpu.vector_store %arg6[%c0_76, %c1_77, %c0_78], %59 {strides = array<i32>} : memref<18x18x4xf32, #tpu.memory_space<vmem>>, vector<16x16x4xf32>,
    %c8 = arith.constant 8 : index
    %c0_79 = arith.constant 0 : index
    %c0_80 = arith.constant 0 : index
    %61 = vector.load %arg2[%c8, %c0_79, %c0_80] : memref<9x4x4xbf16, #tpu.memory_space<vmem>>, vector<1x4x4xbf16>
    %62 = vector.shape_cast %61 : vector<1x4x4xbf16> to vector<4x4xbf16>
    %cst_81 = arith.constant dense<0.000000e+00> : vector<256x4xf32>
    %63 = tpu.matmul %4, %62, %cst_81 {dimension_numbers = #tpu.dot_dimension_numbers<[1], [0], [0], [1], [0, 0, 1, 1], [], []>} : vector<256x4xbf16>, vector<4x4xbf16>, vector<256x4xf32> -> vector<256x4xf32>
    %c0_82 = arith.constant 0 : index
    %c0_83 = arith.constant 0 : index
    %c0_84 = arith.constant 0 : index
    %64 = vector.load %arg6[%c0_82, %c0_83, %c0_84] : memref<18x18x4xf32, #tpu.memory_space<vmem>>, vector<16x16x4xf32>
    %65 = vector.shape_cast %63 : vector<256x4xf32> to vector<16x16x4xf32>
    %66 = arith.addf %64, %65 : vector<16x16x4xf32>
    %c0_85 = arith.constant 0 : index
    %c0_86 = arith.constant 0 : index
    %c0_87 = arith.constant 0 : index
    %67 = vector.load %arg6[%c0_85, %c0_86, %c0_87] : memref<18x18x4xf32, #tpu.memory_space<vmem>>, vector<16x16x4xf32>
    tpu.vector_store %arg6[%c0_85, %c0_86, %c0_87], %66 {strides = array<i32>} : memref<18x18x4xf32, #tpu.memory_space<vmem>>, vector<16x16x4xf32>,
    %c1_88 = arith.constant 1 : index
    %c1_89 = arith.constant 1 : index
    %c0_90 = arith.constant 0 : index
    %68 = vector.load %arg6[%c1_88, %c1_89, %c0_90] : memref<18x18x4xf32, #tpu.memory_space<vmem>>, vector<16x16x4xf32>
    %c0_91 = arith.constant 0 : index
    %c0_92 = arith.constant 0 : index
    %c0_93 = arith.constant 0 : index
    %69 = vector.load %arg3[%c0_91, %c0_92, %c0_93] : memref<1x1x4xf32, #tpu.memory_space<vmem>>, vector<1x1x4xf32>
    %70 = vector.broadcast %69 : vector<1x1x4xf32> to vector<16x16x4xf32>
    %71 = arith.mulf %68, %70 : vector<16x16x4xf32>
    %c0_94 = arith.constant 0 : index
    %c0_95 = arith.constant 0 : index
    %c0_96 = arith.constant 0 : index
    %72 = vector.load %arg4[%c0_94, %c0_95, %c0_96] : memref<1x1x4xf32, #tpu.memory_space<vmem>>, vector<1x1x4xf32>
    %73 = vector.broadcast %72 : vector<1x1x4xf32> to vector<16x16x4xf32>
    %74 = arith.addf %71, %73 : vector<16x16x4xf32>
    %cst_97 = arith.constant 0.000000e+00 : f32
    %75 = vector.broadcast %cst_97 : f32 to vector<16x16x4xf32>
    %76 = arith.maximumf %74, %75 : vector<16x16x4xf32>
    %c0_98 = arith.constant 0 : index
    %c0_99 = arith.constant 0 : index
    %c0_100 = arith.constant 0 : index
    %c0_101 = arith.constant 0 : index
    %77 = vector.load %arg5[%c0_98, %c0_99, %c0_100, %c0_101] : memref<1x16x16x4xf32, #tpu.memory_space<vmem>>, vector<1x16x16x4xf32>
    %78 = vector.shape_cast %77 : vector<1x16x16x4xf32> to vector<16x16x4xf32>
    %79 = vector.shape_cast %76 : vector<16x16x4xf32> to vector<1x16x16x4xf32>
    tpu.vector_store %arg5[%c0_98, %c0_99, %c0_100, %c0_101], %79 {strides = array<i32>} : memref<1x16x16x4xf32, #tpu.memory_space<vmem>>, vector<1x16x16x4xf32>,
    return
  }
  func.func @transform_0(%arg0: i32) -> (i32, i32, i32, i32) {
    %c0_i32 = arith.constant 0 : i32
    %c0_i32_0 = arith.constant 0 : i32
    %c0_i32_1 = arith.constant 0 : i32
    %c0_i32_2 = arith.constant 0 : i32
    return %arg0, %c0_i32, %c0_i32_0, %c0_i32_1 : i32, i32, i32, i32
  }
  func.func @transform_1(%arg0: i32) -> (i32, i32, i32) {
    %c0_i32 = arith.constant 0 : i32
    %c0_i32_0 = arith.constant 0 : i32
    %c0_i32_1 = arith.constant 0 : i32
    %c0_i32_2 = arith.constant 0 : i32
    return %c0_i32, %c0_i32_0, %c0_i32_1 : i32, i32, i32
  }
  func.func @transform_2(%arg0: i32) -> (i32, i32, i32) {
    %c0_i32 = arith.constant 0 : i32
    %c0_i32_0 = arith.constant 0 : i32
    %c0_i32_1 = arith.constant 0 : i32
    %c0_i32_2 = arith.constant 0 : i32
    return %c0_i32, %c0_i32_0, %c0_i32_1 : i32, i32, i32
  }
  func.func @transform_3(%arg0: i32) -> (i32, i32, i32) {
    %c0_i32 = arith.constant 0 : i32
    %c0_i32_0 = arith.constant 0 : i32
    %c0_i32_1 = arith.constant 0 : i32
    %c0_i32_2 = arith.constant 0 : i32
    return %c0_i32, %c0_i32_0, %c0_i32_1 : i32, i32, i32
  }
  func.func @transform_4(%arg0: i32) -> (i32, i32, i32, i32) {
    %c0_i32 = arith.constant 0 : i32
    %c0_i32_0 = arith.constant 0 : i32
    %c0_i32_1 = arith.constant 0 : i32
    %c0_i32_2 = arith.constant 0 : i32
    return %arg0, %c0_i32, %c0_i32_0, %c0_i32_1 : i32, i32, i32, i32
  }
}

</mosaic_0001>

<llo_original>
// kernel: upsampling_forward.3
$region0: #{upsampling_forward.3}
  #allocation0 [shape = 'u32[]', space=smem, size = 0x4, offset = 0x4, fixed_abs, tag = 'smem constant byte address 0x4 - core index']
  #allocation1 [shape = 'u32[144,128]{1,0:T(1,128)}', space=vmem, size = 0x12000, scoped, tag = 'internal scratch']
  %s0 = inlined_call_operand.vmem [shape: bf16[128,8], index: 0, kind: input, shape index: {}]
  %s1 = inlined_call_operand.vmem [shape: bf16[8,16], index: 1, kind: input, shape index: {}]
  %s2 = inlined_call_operand.vmem [shape: f32[1,16], index: 2, kind: input, shape index: {}]
  %s3 = inlined_call_operand.vmem [shape: bf16[128,16], index: 3, kind: output, shape index: {}]
  %s4 = sld [smem:[#allocation0]]
  $region22: #{upsampling_forward.3} parent=0
    _
  %s6 = ssub.s32 1, %s4
  %s7 = scalar_select 0, %s6, %s4
  // Predicated region
  $region2: #{upsampling_forward.3} parent=0 // pred_check
    _
  $region3: #{upsampling_forward.3} parent=0 // pred_check_branch
    %9 = sbr.rel (0) target = $region5
  $region4: #{upsampling_forward.3} parent=0 // pred_region
    _
  $region5: #{upsampling_forward.3} parent=0 // pred_fallthru
    _
  // Predicated region
  $region6: #{upsampling_forward.3} parent=0 // pred_check
    _
  $region7: #{upsampling_forward.3} parent=0 // pred_check_branch
    %11 = sbr.rel (0) target = $region9
  $region8: #{upsampling_forward.3} parent=0 // pred_region
    _
  $region9: #{upsampling_forward.3} parent=0 // pred_fallthru
    _
  // Predicated region
  $region10: #{upsampling_forward.3} parent=0 // pred_check
    _
  $region11: #{upsampling_forward.3} parent=0 // pred_check_branch
    %13 = sbr.rel (0) target = $region13
  $region12: #{upsampling_forward.3} parent=0 // pred_region
    _
  $region13: #{upsampling_forward.3} parent=0 // pred_fallthru
    _
  %v15 = vld [vmem:[%s0] sm:$0xf]
  %v16 = vld [vmem:[%s0 + $0x4] sm:$0xf]
  %v17 = vld [vmem:[%s0 + $0x8] sm:$0xf]
  %v18 = vld [vmem:[%s0 + $0xc] sm:$0xf]
  %v19 = vld [vmem:[%s0 + $0x10] sm:$0xf]
  %v20 = vld [vmem:[%s0 + $0x14] sm:$0xf]
  %v21 = vld [vmem:[%s0 + $0x18] sm:$0xf]
  %v22 = vld [vmem:[%s0 + $0x1c] sm:$0xf]
  %v23 = vld [vmem:[%s0 + $0x20] sm:$0xf]
  %v24 = vld [vmem:[%s0 + $0x24] sm:$0xf]
  %v25 = vld [vmem:[%s0 + $0x28] sm:$0xf]
  %v26 = vld [vmem:[%s0 + $0x2c] sm:$0xf]
  %v27 = vld [vmem:[%s0 + $0x30] sm:$0xf]
  %v28 = vld [vmem:[%s0 + $0x34] sm:$0xf]
  %v29 = vld [vmem:[%s0 + $0x38] sm:$0xf]
  %v30 = vld [vmem:[%s0 + $0x3c] sm:$0xf]
  %v31 = vld [vmem:[%s1] sm:$0xf]
  %v32 = vld [vmem:[%s2] sm:$0x1]
  %v34 = vlaneseq
  %v35 = vshrl.u32 %v34, 7
  %v36 = vsub.s32 0, %v35
  %v37 = vrot.slane %v32, %v36
  %v55 = vunpack.c.l.b16 %v15
  %v56 = vunpack.c.l.b16 %v16
  %v57 = vunpack.c.l.b16 %v17
  %v58 = vunpack.c.l.b16 %v18
  %v59 = vunpack.c.l.b16 %v19
  %v60 = vunpack.c.l.b16 %v20
  %v61 = vunpack.c.l.b16 %v21
  %v62 = vunpack.c.l.b16 %v22
  %v63 = vunpack.c.l.b16 %v23
  %v64 = vunpack.c.l.b16 %v24
  %v65 = vunpack.c.l.b16 %v25
  %v66 = vunpack.c.l.b16 %v26
  %v67 = vunpack.c.l.b16 %v27
  %v68 = vunpack.c.l.b16 %v28
  %v69 = vunpack.c.l.b16 %v29
  %v70 = vunpack.c.l.b16 %v30
  %v71 = vpack.c.b16 %v56, %v55
  %v72 = vpack.c.b16 %v58, %v57
  %v73 = vpack.c.b16 %v60, %v59
  %v74 = vpack.c.b16 %v62, %v61
  %v75 = vpack.c.b16 %v64, %v63
  %v76 = vpack.c.b16 %v66, %v65
  %v77 = vpack.c.b16 %v68, %v67
  %v78 = vpack.c.b16 %v70, %v69
  %vm79 = vcmask 64512
  %v81 = vsel %vm79, %v71, 0
  %v84 = vsel %vm79, %v72, 0
  %v87 = vsel %vm79, %v73, 0
  %v90 = vsel %vm79, %v74, 0
  %v93 = vsel %vm79, %v75, 0
  %v96 = vsel %vm79, %v76, 0
  %v99 = vsel %vm79, %v77, 0
  %v102 = vsel %vm79, %v78, 0
  %vm104 = vcmask 1043456
  %v106 = vsel %vm104, %v31, 0
  %108 = vmatprep.subr.bf16.mxu0 0
  %109 = vmatpush1.bf16.msra.mxu0 %v106
  %110 = vmatprep.subr.bf16.mxu0 0
  %111 = vmatpush1.bf16.msra.mxu0 0
  %112 = vmatprep.subr.bf16.mxu0 0
  %113 = vmatpush1.bf16.msra.mxu0 0
  %114 = vmatprep.subr.bf16.mxu0 0
  %115 = vmatpush1.bf16.msra.mxu0 0
  %116 = vmatprep.subr.bf16.mxu0 0
  %117 = vmatpush1.bf16.msra.mxu0 0
  %118 = vmatprep.subr.bf16.mxu0 0
  %119 = vmatpush1.bf16.msra.mxu0 0
  %120 = vmatprep.subr.bf16.mxu0 0
  %121 = vmatpush1.bf16.msra.mxu0 0
  %122 = vmatprep.subr.bf16.mxu0 0
  %123 = vmatpush1.bf16.msra.mxu0 0
  %124 = vmatprep.subr.bf16.mxu0 0
  %125 = vmatpush1.bf16.msra.mxu0 0
  %126 = vmatprep.subr.bf16.mxu0 0
  %127 = vmatpush1.bf16.msra.mxu0 0
  %128 = vmatprep.subr.bf16.mxu0 0
  %129 = vmatpush1.bf16.msra.mxu0 0
  %130 = vmatprep.subr.bf16.mxu0 0
  %131 = vmatpush1.bf16.msra.mxu0 0
  %132 = vmatprep.subr.bf16.mxu0 0
  %133 = vmatpush1.bf16.msra.mxu0 0
  %134 = vmatprep.subr.bf16.mxu0 0
  %135 = vmatpush1.bf16.msra.mxu0 0
  %136 = vmatprep.subr.bf16.mxu0 0
  %137 = vmatpush1.bf16.msra.mxu0 0
  %138 = vmatprep.subr.bf16.mxu0 0
  %139 = vmatpush1.bf16.msra.mxu0 0
  %140 = vmatprep.mubr.bf16.mxu0 0
  %141 = vmatmul.mubr.bf16.gmra.mrb[0].mxu0 %v81
  %v142 = vpop.f32.mrb[0].mxu0
  %v143 = vadd.f32 %v37, %v142
  %v144 = vpop.f32.mrb[0].mxu0
  %v145 = vpop.f32.mrb[0].mxu0
  %v146 = vadd.f32 %v37, %v145
  %v147 = vpop.f32.mrb[0].mxu0
  %148 = vmatprep.mubr.bf16.mxu0 0
  %149 = vmatmul.mubr.bf16.gmra.mrb[0].mxu0 %v84
  %v150 = vpop.f32.mrb[0].mxu0
  %v151 = vadd.f32 %v37, %v150
  %v152 = vpop.f32.mrb[0].mxu0
  %v153 = vpop.f32.mrb[0].mxu0
  %v154 = vadd.f32 %v37, %v153
  %v155 = vpop.f32.mrb[0].mxu0
  %156 = vmatprep.mubr.bf16.mxu0 0
  %157 = vmatmul.mubr.bf16.gmra.mrb[0].mxu0 %v87
  %v158 = vpop.f32.mrb[0].mxu0
  %v159 = vadd.f32 %v37, %v158
  %v160 = vpop.f32.mrb[0].mxu0
  %v161 = vpop.f32.mrb[0].mxu0
  %v162 = vadd.f32 %v37, %v161
  %v163 = vpop.f32.mrb[0].mxu0
  %164 = vmatprep.mubr.bf16.mxu0 0
  %165 = vmatmul.mubr.bf16.gmra.mrb[0].mxu0 %v90
  %v166 = vpop.f32.mrb[0].mxu0
  %v167 = vadd.f32 %v37, %v166
  %v168 = vpop.f32.mrb[0].mxu0
  %v169 = vpop.f32.mrb[0].mxu0
  %v170 = vadd.f32 %v37, %v169
  %v171 = vpop.f32.mrb[0].mxu0
  %172 = vmatprep.mubr.bf16.mxu0 0
  %173 = vmatmul.mubr.bf16.gmra.mrb[0].mxu0 %v93
  %v174 = vpop.f32.mrb[0].mxu0
  %v175 = vadd.f32 %v37, %v174
  %v176 = vpop.f32.mrb[0].mxu0
  %v177 = vpop.f32.mrb[0].mxu0
  %v178 = vadd.f32 %v37, %v177
  %v179 = vpop.f32.mrb[0].mxu0
  %180 = vmatprep.mubr.bf16.mxu0 0
  %181 = vmatmul.mubr.bf16.gmra.mrb[0].mxu0 %v96
  %v182 = vpop.f32.mrb[0].mxu0
  %v183 = vadd.f32 %v37, %v182
  %v184 = vpop.f32.mrb[0].mxu0
  %v185 = vpop.f32.mrb[0].mxu0
  %v186 = vadd.f32 %v37, %v185
  %v187 = vpop.f32.mrb[0].mxu0
  %188 = vmatprep.mubr.bf16.mxu0 0
  %189 = vmatmul.mubr.bf16.gmra.mrb[0].mxu0 %v99
  %v190 = vpop.f32.mrb[0].mxu0
  %v191 = vadd.f32 %v37, %v190
  %v192 = vpop.f32.mrb[0].mxu0
  %v193 = vpop.f32.mrb[0].mxu0
  %v194 = vadd.f32 %v37, %v193
  %v195 = vpop.f32.mrb[0].mxu0
  %196 = vmatprep.mubr.bf16.mxu0 0
  %197 = vmatmul.mubr.bf16.gmra.mrb[0].mxu0 %v102
  %v198 = vpop.f32.mrb[0].mxu0
  %v199 = vadd.f32 %v37, %v198
  %v200 = vpop.f32.mrb[0].mxu0
  %v201 = vpop.f32.mrb[0].mxu0
  %v202 = vadd.f32 %v37, %v201
  %v203 = vpop.f32.mrb[0].mxu0
  %204 = vdwg.mxu0
  %v205 = vpack.c.bf16 %v146, %v143
  %v206 = vpack.c.bf16 %v154, %v151
  %v207 = vpack.c.bf16 %v162, %v159
  %v208 = vpack.c.bf16 %v170, %v167
  %v209 = vpack.c.bf16 %v178, %v175
  %v210 = vpack.c.bf16 %v186, %v183
  %v211 = vpack.c.bf16 %v194, %v191
  %v212 = vpack.c.bf16 %v202, %v199
  %v221 = vunpack.c.l.b16 %v205
  %v222 = vunpack.c.h.b16 %v205
  %v223 = vunpack.c.l.b16 %v206
  %v224 = vunpack.c.h.b16 %v206
  %v225 = vunpack.c.l.b16 %v207
  %v226 = vunpack.c.h.b16 %v207
  %v227 = vunpack.c.l.b16 %v208
  %v228 = vunpack.c.h.b16 %v208
  %v229 = vunpack.c.l.b16 %v209
  %v230 = vunpack.c.h.b16 %v209
  %v231 = vunpack.c.l.b16 %v210
  %v232 = vunpack.c.h.b16 %v210
  %v233 = vunpack.c.l.b16 %v211
  %v234 = vunpack.c.h.b16 %v211
  %v235 = vunpack.c.l.b16 %v212
  %v236 = vunpack.c.h.b16 %v212
  %v237 = vpack.c.b16 %v221, %v221
  %v238 = vpack.c.b16 %v222, %v222
  %v239 = vpack.c.b16 %v223, %v223
  %v240 = vpack.c.b16 %v224, %v224
  %v241 = vpack.c.b16 %v225, %v225
  %v242 = vpack.c.b16 %v226, %v226
  %v243 = vpack.c.b16 %v227, %v227
  %v244 = vpack.c.b16 %v228, %v228
  %v245 = vpack.c.b16 %v229, %v229
  %v246 = vpack.c.b16 %v230, %v230
  %v247 = vpack.c.b16 %v231, %v231
  %v248 = vpack.c.b16 %v232, %v232
  %v249 = vpack.c.b16 %v233, %v233
  %v250 = vpack.c.b16 %v234, %v234
  %v251 = vpack.c.b16 %v235, %v235
  %v252 = vpack.c.b16 %v236, %v236
  %vm269 = vcmask 125952
  %270 = vst.msk [vmem:[%s3] sm:$0xf] %vm269, %v237
  %271 = vst.msk [vmem:[%s3 + $0x4] sm:$0xf] %vm269, %v238
  %272 = vst.msk [vmem:[%s3 + $0x8] sm:$0xf] %vm269, %v239
  %273 = vst.msk [vmem:[%s3 + $0xc] sm:$0xf] %vm269, %v240
  %274 = vst.msk [vmem:[%s3 + $0x10] sm:$0xf] %vm269, %v241
  %275 = vst.msk [vmem:[%s3 + $0x14] sm:$0xf] %vm269, %v242
  %276 = vst.msk [vmem:[%s3 + $0x18] sm:$0xf] %vm269, %v243
  %277 = vst.msk [vmem:[%s3 + $0x1c] sm:$0xf] %vm269, %v244
  %278 = vst.msk [vmem:[%s3 + $0x20] sm:$0xf] %vm269, %v245
  %279 = vst.msk [vmem:[%s3 + $0x24] sm:$0xf] %vm269, %v246
  %280 = vst.msk [vmem:[%s3 + $0x28] sm:$0xf] %vm269, %v247
  %281 = vst.msk [vmem:[%s3 + $0x2c] sm:$0xf] %vm269, %v248
  %282 = vst.msk [vmem:[%s3 + $0x30] sm:$0xf] %vm269, %v249
  %283 = vst.msk [vmem:[%s3 + $0x34] sm:$0xf] %vm269, %v250
  %284 = vst.msk [vmem:[%s3 + $0x38] sm:$0xf] %vm269, %v251
  %285 = vst.msk [vmem:[%s3 + $0x3c] sm:$0xf] %vm269, %v252
  // Predicated region
  $region14: #{upsampling_forward.3} parent=0 // pred_check
    _
  $region15: #{upsampling_forward.3} parent=0 // pred_check_branch
    %287 = sbr.rel (0) target = $region17
  $region16: #{upsampling_forward.3} parent=0 // pred_region
    _
  $region17: #{upsampling_forward.3} parent=0 // pred_fallthru
    _
  // Predicated region
  $region18: #{upsampling_forward.3} parent=0 // pred_check
    _
  $region19: #{upsampling_forward.3} parent=0 // pred_check_branch
    %289 = sbr.rel (0) target = $region21
  $region20: #{upsampling_forward.3} parent=0 // pred_region
    _
  $region21: #{upsampling_forward.3} parent=0 // pred_fallthru
    _

// kernel: upsampling_forward.5
$region0: #{upsampling_forward.5}
  #allocation0 [shape = 'u32[]', space=smem, size = 0x4, offset = 0x4, fixed_abs, tag = 'smem constant byte address 0x4 - core index']
  #allocation1 [shape = 'u32[144,128]{1,0:T(1,128)}', space=vmem, size = 0x12000, scoped, tag = 'internal scratch']
  #allocation2 [shape = 'f32[18,18,4]{2,1,0:T(8,128)}', space=vmem, size = 0x36000, scoped, tag = 'scratch operand']
  %s0 = inlined_call_operand.vmem [shape: bf16[2,16,16,4], index: 0, kind: input, shape index: {}]
  %s1 = inlined_call_operand.vmem [shape: bf16[9,4,4], index: 1, kind: input, shape index: {}]
  %s2 = inlined_call_operand.vmem [shape: f32[1,1,4], index: 2, kind: input, shape index: {}]
  %s3 = inlined_call_operand.vmem [shape: f32[1,1,4], index: 3, kind: input, shape index: {}]
  %s4 = inlined_call_operand.vmem [shape: f32[2,16,16,4], index: 4, kind: output, shape index: {}]
  %s5 = sld [smem:[#allocation0]]
  $region49: #{upsampling_forward.5} parent=0
    _
  %s7 = ssub.s32 1, %s5
  %s8 = scalar_select 0, %s7, %s5
  loop: start=0, step=1, limit=4
  $region2: #{upsampling_forward.5} parent=0 // loop_pre_header
    _
  $region3: #{upsampling_forward.5} parent=0 // loop_header
    %s10 = sphi 0, %s14
    %p11 = scmp.ge.s32.totalorder %s10, 4
    %s20 = sphi 0, %s22
    %s23 = sphi 0, %s20
    %s24 = sphi 0, %s23
    %s40 = sphi 0, %s24
    %s44 = sphi 0, %s44
    %s46 = sphi 0, %s44
    %s47 = sphi 0, %s46
    %s61 = sphi 0, %s47
    %s65 = sphi 0, %s65
    %s67 = sphi 0, %s65
    %s68 = sphi 0, %s67
    %s82 = sphi 0, %s68
    %s86 = sphi 0, %s86
    %s88 = sphi 0, %s86
    %s89 = sphi 0, %s88
    %s103 = sphi 0, %s89
    %s109 = sphi 0, %s111
    %s112 = sphi 0, %s109
    %s113 = sphi 0, %s112
    %s129 = sphi 0, %s113
  $region4: #{upsampling_forward.5} parent=0 // loop_header_branch
    %13 = sbr.rel (%p11) target = $region8
  $region5: #{upsampling_forward.5} parent=0 // loop_body
    %s15 = ssub.s32 %s10, 1
    %s16 = ssub.s32 %s10, 2
    %s17 = sadd.s32 %s10, 1
    %s18 = ssub.s32 %s10, %s17
    %p19 = scmp.eq.s32.totalorder %s18, 0
    %s21 = sadd.s32 %s20, 1
    %s22 = scalar_select %p19, %s20, %s21
    %p25 = pneg %p19
    %p26 = scmp.eq.s32.totalorder %s10, 1
    %p27 = por %p25, %p26
    %p28 = scmp.ne.s32.totalorder %s20, %s23
    %p29 = scmp.eq.s32.totalorder %s10, 0
    %p30 = por %p28, %p29
    %p31 = scmp.ne.s32.totalorder %s20, %s23
    %p32 = scmp.eq.s32.totalorder %s15, 1
    %p33 = por %p31, %p32
    %p34 = scmp.ne.s32.totalorder %s23, %s24
    %p35 = scmp.eq.s32.totalorder %s15, 0
    %p36 = por %p34, %p35
    %p37 = scmp.ne.s32.totalorder %s23, %s24
    %p38 = scmp.eq.s32.totalorder %s16, 1
    %p39 = por %p37, %p38
    %p41 = scmp.ne.s32.totalorder %s24, %s40
    %p42 = scmp.eq.s32.totalorder %s16, 0
    %p43 = por %p41, %p42
    %s45 = sadd.s32 %s44, 1
    %p48 = scmp.eq.s32.totalorder %s10, 1
    %p49 = scmp.ne.s32.totalorder %s44, %s46
    %p50 = scmp.eq.s32.totalorder %s10, 0
    %p51 = por %p49, %p50
    %p52 = scmp.ne.s32.totalorder %s44, %s46
    %p53 = scmp.eq.s32.totalorder %s15, 1
    %p54 = por %p52, %p53
    %p55 = scmp.ne.s32.totalorder %s46, %s47
    %p56 = scmp.eq.s32.totalorder %s15, 0
    %p57 = por %p55, %p56
    %p58 = scmp.ne.s32.totalorder %s46, %s47
    %p59 = scmp.eq.s32.totalorder %s16, 1
    %p60 = por %p58, %p59
    %p62 = scmp.ne.s32.totalorder %s47, %s61
    %p63 = scmp.eq.s32.totalorder %s16, 0
    %p64 = por %p62, %p63
    %s66 = sadd.s32 %s65, 1
    %p69 = scmp.eq.s32.totalorder %s10, 1
    %p70 = scmp.ne.s32.totalorder %s65, %s67
    %p71 = scmp.eq.s32.totalorder %s10, 0
    %p72 = por %p70, %p71
    %p73 = scmp.ne.s32.totalorder %s65, %s67
    %p74 = scmp.eq.s32.totalorder %s15, 1
    %p75 = por %p73, %p74
    %p76 = scmp.ne.s32.totalorder %s67, %s68
    %p77 = scmp.eq.s32.totalorder %s15, 0
    %p78 = por %p76, %p77
    %p79 = scmp.ne.s32.totalorder %s67, %s68
    %p80 = scmp.eq.s32.totalorder %s16, 1
    %p81 = por %p79, %p80
    %p83 = scmp.ne.s32.totalorder %s68, %s82
    %p84 = scmp.eq.s32.totalorder %s16, 0
    %p85 = por %p83, %p84
    %s87 = sadd.s32 %s86, 1
    %p90 = scmp.eq.s32.totalorder %s10, 1
    %p91 = scmp.ne.s32.totalorder %s86, %s88
    %p92 = scmp.eq.s32.totalorder %s10, 0
    %p93 = por %p91, %p92
    %p94 = scmp.ne.s32.totalorder %s86, %s88
    %p95 = scmp.eq.s32.totalorder %s15, 1
    %p96 = por %p94, %p95
    %p97 = scmp.ne.s32.totalorder %s88, %s89
    %p98 = scmp.eq.s32.totalorder %s15, 0
    %p99 = por %p97, %p98
    %p100 = scmp.ne.s32.totalorder %s88, %s89
    %p101 = scmp.eq.s32.totalorder %s16, 1
    %p102 = por %p100, %p101
    %p104 = scmp.ne.s32.totalorder %s89, %s103
    %p105 = scmp.eq.s32.totalorder %s16, 0
    %p106 = por %p104, %p105
    %s107 = ssub.s32 %s10, %s17
    %p108 = scmp.eq.s32.totalorder %s107, 0
    %s110 = sadd.s32 %s109, 1
    %s111 = scalar_select %p108, %s109, %s110
    %p114 = pneg %p108
    %p115 = scmp.eq.s32.totalorder %s10, 1
    %p116 = por %p114, %p115
    %p117 = scmp.ne.s32.totalorder %s109, %s112
    %p118 = scmp.eq.s32.totalorder %s10, 0
    %p119 = por %p117, %p118
    %p120 = scmp.ne.s32.totalorder %s109, %s112
    %p121 = scmp.eq.s32.totalorder %s15, 1
    %p122 = por %p120, %p121
    %p123 = scmp.ne.s32.totalorder %s112, %s113
    %p124 = scmp.eq.s32.totalorder %s15, 0
    %p125 = por %p123, %p124
    %p126 = scmp.ne.s32.totalorder %s112, %s113
    %p127 = scmp.eq.s32.totalorder %s16, 1
    %p128 = por %p126, %p127
    %p130 = scmp.ne.s32.totalorder %s113, %s129
    %p131 = scmp.eq.s32.totalorder %s16, 0
    %p132 = por %p130, %p131
    %p133 = scmp.le.s32.totalorder 1, %s10
    %p134 = scmp.lt.s32.totalorder %s10, 3
    %p135 = pnand %p133, %p134
    %p136 = pneg %p135
    // Predicated region
    $region9: #{upsampling_forward.5} parent=5 // pred_check
      _
    $region10: #{upsampling_forward.5} parent=5 // pred_check_branch
      %138 = sbr.rel (%p135) target = $region12
    $region11: #{upsampling_forward.5} parent=5 // pred_region
      %s139 = ssub.s32 %s10, 1
      // Predicated region
      $region13: #{upsampling_forward.5} parent=11 // pred_check
        %p140 = pneg %p57
      $region14: #{upsampling_forward.5} parent=11 // pred_check_branch
        %142 = sbr.rel (%p140) target = $region16
      $region15: #{upsampling_forward.5} parent=11 // pred_region
        _
      $region16: #{upsampling_forward.5} parent=11 // pred_fallthru
        _
      // Predicated region
      $region17: #{upsampling_forward.5} parent=11 // pred_check
        %p143 = pneg %p78
      $region18: #{upsampling_forward.5} parent=11 // pred_check_branch
        %145 = sbr.rel (%p143) target = $region20
      $region19: #{upsampling_forward.5} parent=11 // pred_region
        _
      $region20: #{upsampling_forward.5} parent=11 // pred_fallthru
        _
      // Predicated region
      $region21: #{upsampling_forward.5} parent=11 // pred_check
        %p146 = pneg %p99
      $region22: #{upsampling_forward.5} parent=11 // pred_check_branch
        %148 = sbr.rel (%p146) target = $region24
      $region23: #{upsampling_forward.5} parent=11 // pred_region
        _
      $region24: #{upsampling_forward.5} parent=11 // pred_fallthru
        _
    $region12: #{upsampling_forward.5} parent=5 // pred_fallthru
      _
    %p149 = scmp.lt.s32.totalorder %s10, 2
    // Predicated region
    $region25: #{upsampling_forward.5} parent=5 // pred_check
      %p150 = pneg %p149
    $region26: #{upsampling_forward.5} parent=5 // pred_check_branch
      %152 = sbr.rel (%p150) target = $region28
    $region27: #{upsampling_forward.5} parent=5 // pred_region
      // Predicated region
      $region29: #{upsampling_forward.5} parent=27 // pred_check
        %p153 = pneg %p30
      $region30: #{upsampling_forward.5} parent=27 // pred_check_branch
        %155 = sbr.rel (%p153) target = $region32
      $region31: #{upsampling_forward.5} parent=27 // pred_region
        %p156 = scmp.lt.s32.totalorder %s10, 1
        %s157 = scalar_select %p156, %s10, 1
        %s158 = smul.addr %s157, 32
        %s159 = smul.addr %s158, 4
        %s160 = scalar_lea.vmem %s0, %s159
      $region32: #{upsampling_forward.5} parent=27 // pred_fallthru
        _
    $region28: #{upsampling_forward.5} parent=5 // pred_fallthru
      _
    %p161 = scmp.le.s32.totalorder 1, %s10
    %p162 = scmp.lt.s32.totalorder %s10, 3
    %p163 = pnand %p161, %p162
    %p164 = pneg %p163
    // Predicated region
    $region33: #{upsampling_forward.5} parent=5 // pred_check
      _
    $region34: #{upsampling_forward.5} parent=5 // pred_check_branch
      %166 = sbr.rel (%p163) target = $region36
    $region35: #{upsampling_forward.5} parent=5 // pred_region
      %s167 = ssub.s32 %s10, 1
      %p168 = scmp.lt.s32.totalorder %s15, 1
      %s169 = scalar_select %p168, %s15, 1
      %s170 = smul.addr %s169, 32
      %s171 = smul.addr %s170, 4
      %s172 = scalar_lea.vmem %s0, %s171
      %p173 = pneg %p36
      %p174 = pneg %p33
      %p175 = pneg %p57
      %p176 = pneg %p54
      %p177 = pneg %p78
      %p178 = pneg %p75
      %p179 = pneg %p99
      %p180 = pneg %p96
      %p181 = pneg %p125
      %p182 = pneg %p122
      %p183 = scmp.lt.s32.totalorder %s15, 1
      %s184 = scalar_select %p183, %s15, 1
      %s185 = smul.addr %s184, 32
      %s186 = smul.addr %s185, 8
      %s187 = scalar_lea.vmem %s4, %s186
      %p188 = scmp.lt.s32.totalorder %s15, 1
      %s189 = scalar_select %p188, %s15, 1
      %s190 = smul.addr %s189, 32
      %s191 = smul.addr %s190, 4
      %s192 = scalar_lea.vmem %s0, %s191
      %p193 = scmp.lt.s32.totalorder %s15, 1
      %s194 = scalar_select %p193, %s15, 1
      %s195 = smul.addr %s194, 32
      %s196 = smul.addr %s195, 8
      %s197 = scalar_lea.vmem %s4, %s196
      %vm199 = vcmask 31744
      %200 = vst.msk [vmem:[#allocation2] sm:$0xff] %vm199, 0.0
      %201 = vst.msk [vmem:[#allocation2 + $0x8] sm:$0xff] %vm199, 0.0
      %vm202 = vcmask 25600
      %203 = vst.msk [vmem:[#allocation2 + $0x10] sm:$0x3] %vm202, 0.0
      %204 = vst.msk [vmem:[#allocation2 + $0x18] sm:$0xff] %vm199, 0.0
      %205 = vst.msk [vmem:[#allocation2 + $0x20] sm:$0xff] %vm199, 0.0
      %206 = vst.msk [vmem:[#allocation2 + $0x28] sm:$0x3] %vm202, 0.0
      %207 = vst.msk [vmem:[#allocation2 + $0x30] sm:$0xff] %vm199, 0.0
      %208 = vst.msk [vmem:[#allocation2 + $0x38] sm:$0xff] %vm199, 0.0
      %209 = vst.msk [vmem:[#allocation2 + $0x40] sm:$0x3] %vm202, 0.0
      %210 = vst.msk [vmem:[#allocation2 + $0x48] sm:$0xff] %vm199, 0.0
      %211 = vst.msk [vmem:[#allocation2 + $0x50] sm:$0xff] %vm199, 0.0
      %212 = vst.msk [vmem:[#allocation2 + $0x58] sm:$0x3] %vm202, 0.0
      %213 = vst.msk [vmem:[#allocation2 + $0x60] sm:$0xff] %vm199, 0.0
      %214 = vst.msk [vmem:[#allocation2 + $0x68] sm:$0xff] %vm199, 0.0
      %215 = vst.msk [vmem:[#allocation2 + $0x70] sm:$0x3] %vm202, 0.0
      %216 = vst.msk [vmem:[#allocation2 + $0x78] sm:$0xff] %vm199, 0.0
      %217 = vst.msk [vmem:[#allocation2 + $0x80] sm:$0xff] %vm199, 0.0
      %218 = vst.msk [vmem:[#allocation2 + $0x88] sm:$0x3] %vm202, 0.0
      %219 = vst.msk [vmem:[#allocation2 + $0x90] sm:$0xff] %vm199, 0.0
      %220 = vst.msk [vmem:[#allocation2 + $0x98] sm:$0xff] %vm199, 0.0
      %221 = vst.msk [vmem:[#allocation2 + $0xa0] sm:$0x3] %vm202, 0.0
      %222 = vst.msk [vmem:[#allocation2 + $0xa8] sm:$0xff] %vm199, 0.0
      %223 = vst.msk [vmem:[#allocation2 + $0xb0] sm:$0xff] %vm199, 0.0
      %224 = vst.msk [vmem:[#allocation2 + $0xb8] sm:$0x3] %vm202, 0.0
      %225 = vst.msk [vmem:[#allocation2 + $0xc0] sm:$0xff] %vm199, 0.0
      %226 = vst.msk [vmem:[#allocation2 + $0xc8] sm:$0xff] %vm199, 0.0
      %227 = vst.msk [vmem:[#allocation2 + $0xd0] sm:$0x3] %vm202, 0.0
      %228 = vst.msk [vmem:[#allocation2 + $0xd8] sm:$0xff] %vm199, 0.0
      %229 = vst.msk [vmem:[#allocation2 + $0xe0] sm:$0xff] %vm199, 0.0
      %230 = vst.msk [vmem:[#allocation2 + $0xe8] sm:$0x3] %vm202, 0.0
      %231 = vst.msk [vmem:[#allocation2 + $0xf0] sm:$0xff] %vm199, 0.0
      %232 = vst.msk [vmem:[#allocation2 + $0xf8] sm:$0xff] %vm199, 0.0
      %233 = vst.msk [vmem:[#allocation2 + $0x100] sm:$0x3] %vm202, 0.0
      %234 = vst.msk [vmem:[#allocation2 + $0x108] sm:$0xff] %vm199, 0.0
      %235 = vst.msk [vmem:[#allocation2 + $0x110] sm:$0xff] %vm199, 0.0
      %236 = vst.msk [vmem:[#allocation2 + $0x118] sm:$0x3] %vm202, 0.0
      %237 = vst.msk [vmem:[#allocation2 + $0x120] sm:$0xff] %vm199, 0.0
      %238 = vst.msk [vmem:[#allocation2 + $0x128] sm:$0xff] %vm199, 0.0
      %239 = vst.msk [vmem:[#allocation2 + $0x130] sm:$0x3] %vm202, 0.0
      %240 = vst.msk [vmem:[#allocation2 + $0x138] sm:$0xff] %vm199, 0.0
      %241 = vst.msk [vmem:[#allocation2 + $0x140] sm:$0xff] %vm199, 0.0
      %242 = vst.msk [vmem:[#allocation2 + $0x148] sm:$0x3] %vm202, 0.0
      %243 = vst.msk [vmem:[#allocation2 + $0x150] sm:$0xff] %vm199, 0.0
      %244 = vst.msk [vmem:[#allocation2 + $0x158] sm:$0xff] %vm199, 0.0
      %245 = vst.msk [vmem:[#allocation2 + $0x160] sm:$0x3] %vm202, 0.0
      %246 = vst.msk [vmem:[#allocation2 + $0x168] sm:$0xff] %vm199, 0.0
      %247 = vst.msk [vmem:[#allocation2 + $0x170] sm:$0xff] %vm199, 0.0
      %248 = vst.msk [vmem:[#allocation2 + $0x178] sm:$0x3] %vm202, 0.0
      %249 = vst.msk [vmem:[#allocation2 + $0x180] sm:$0xff] %vm199, 0.0
      %250 = vst.msk [vmem:[#allocation2 + $0x188] sm:$0xff] %vm199, 0.0
      %251 = vst.msk [vmem:[#allocation2 + $0x190] sm:$0x3] %vm202, 0.0
      %252 = vst.msk [vmem:[#allocation2 + $0x198] sm:$0xff] %vm199, 0.0
      %253 = vst.msk [vmem:[#allocation2 + $0x1a0] sm:$0xff] %vm199, 0.0
      %254 = vst.msk [vmem:[#allocation2 + $0x1a8] sm:$0x3] %vm202, 0.0
      %v255 = vld [vmem:[%s192] sm:$0xf]
      %v256 = vld [vmem:[%s192 + $0x4] sm:$0xf]
      %v257 = vld [vmem:[%s192 + $0x8] sm:$0xf]
      %v258 = vld [vmem:[%s192 + $0xc] sm:$0xf]
      %v259 = vld [vmem:[%s192 + $0x10] sm:$0xf]
      %v260 = vld [vmem:[%s192 + $0x14] sm:$0xf]
      %v261 = vld [vmem:[%s192 + $0x18] sm:$0xf]
      %v262 = vld [vmem:[%s192 + $0x1c] sm:$0xf]
      %v263 = vld [vmem:[%s192 + $0x20] sm:$0xf]
      %v264 = vld [vmem:[%s192 + $0x24] sm:$0xf]
      %v265 = vld [vmem:[%s192 + $0x28] sm:$0xf]
      %v266 = vld [vmem:[%s192 + $0x2c] sm:$0xf]
      %v267 = vld [vmem:[%s192 + $0x30] sm:$0xf]
      %v268 = vld [vmem:[%s192 + $0x34] sm:$0xf]
      %v269 = vld [vmem:[%s192 + $0x38] sm:$0xf]
      %v270 = vld [vmem:[%s192 + $0x3c] sm:$0xf]
      %v271 = vld [vmem:[%s192 + $0x40] sm:$0xf]
      %v272 = vld [vmem:[%s192 + $0x44] sm:$0xf]
      %v273 = vld [vmem:[%s192 + $0x48] sm:$0xf]
      %v274 = vld [vmem:[%s192 + $0x4c] sm:$0xf]
      %v275 = vld [vmem:[%s192 + $0x50] sm:$0xf]
      %v276 = vld [vmem:[%s192 + $0x54] sm:$0xf]
      %v277 = vld [vmem:[%s192 + $0x58] sm:$0xf]
      %v278 = vld [vmem:[%s192 + $0x5c] sm:$0xf]
      %v279 = vld [vmem:[%s192 + $0x60] sm:$0xf]
      %v280 = vld [vmem:[%s192 + $0x64] sm:$0xf]
      %v281 = vld [vmem:[%s192 + $0x68] sm:$0xf]
      %v282 = vld [vmem:[%s192 + $0x6c] sm:$0xf]
      %v283 = vld [vmem:[%s192 + $0x70] sm:$0xf]
      %v284 = vld [vmem:[%s192 + $0x74] sm:$0xf]
      %v285 = vld [vmem:[%s192 + $0x78] sm:$0xf]
      %v286 = vld [vmem:[%s192 + $0x7c] sm:$0xf]
      %v287 = vld [vmem:[%s1] sm:$0x3]
      %v320 = vunpack.c.l.b16 %v255
      %v321 = vunpack.c.l.b16 %v256
      %v322 = vunpack.c.l.b16 %v257
      %v323 = vunpack.c.l.b16 %v258
      %v324 = vunpack.c.l.b16 %v259
      %v325 = vunpack.c.l.b16 %v260
      %v326 = vunpack.c.l.b16 %v261
      %v327 = vunpack.c.l.b16 %v262
      %v328 = vunpack.c.l.b16 %v263
      %v329 = vunpack.c.l.b16 %v264
      %v330 = vunpack.c.l.b16 %v265
      %v331 = vunpack.c.l.b16 %v266
      %v332 = vunpack.c.l.b16 %v267
      %v333 = vunpack.c.l.b16 %v268
      %v334 = vunpack.c.l.b16 %v269
      %v335 = vunpack.c.l.b16 %v270
      %v336 = vunpack.c.l.b16 %v271
      %v337 = vunpack.c.l.b16 %v272
      %v338 = vunpack.c.l.b16 %v273
      %v339 = vunpack.c.l.b16 %v274
      %v340 = vunpack.c.l.b16 %v275
      %v341 = vunpack.c.l.b16 %v276
      %v342 = vunpack.c.l.b16 %v277
      %v343 = vunpack.c.l.b16 %v278
      %v344 = vunpack.c.l.b16 %v279
      %v345 = vunpack.c.l.b16 %v280
      %v346 = vunpack.c.l.b16 %v281
      %v347 = vunpack.c.l.b16 %v282
      %v348 = vunpack.c.l.b16 %v283
      %v349 = vunpack.c.l.b16 %v284
      %v350 = vunpack.c.l.b16 %v285
      %v351 = vunpack.c.l.b16 %v286
      %v352 = vpack.c.b16 %v321, %v320
      %v353 = vpack.c.b16 %v323, %v322
      %v354 = vpack.c.b16 %v325, %v324
      %v355 = vpack.c.b16 %v327, %v326
      %v356 = vpack.c.b16 %v329, %v328
      %v357 = vpack.c.b16 %v331, %v330
      %v358 = vpack.c.b16 %v333, %v332
      %v359 = vpack.c.b16 %v335, %v334
      %v360 = vpack.c.b16 %v337, %v336
      %v361 = vpack.c.b16 %v339, %v338
      %v362 = vpack.c.b16 %v341, %v340
      %v363 = vpack.c.b16 %v343, %v342
      %v364 = vpack.c.b16 %v345, %v344
      %v365 = vpack.c.b16 %v347, %v346
      %v366 = vpack.c.b16 %v349, %v348
      %v367 = vpack.c.b16 %v351, %v350
      %v369 = vsel %vm199, %v352, 0
      %v372 = vsel %vm199, %v353, 0
      %v375 = vsel %vm199, %v354, 0
      %v378 = vsel %vm199, %v355, 0
      %v381 = vsel %vm199, %v356, 0
      %v384 = vsel %vm199, %v357, 0
      %v387 = vsel %vm199, %v358, 0
      %v390 = vsel %vm199, %v359, 0
      %v393 = vsel %vm199, %v360, 0
      %v396 = vsel %vm199, %v361, 0
      %v399 = vsel %vm199, %v362, 0
      %v402 = vsel %vm199, %v363, 0
      %v405 = vsel %vm199, %v364, 0
      %v408 = vsel %vm199, %v365, 0
      %v411 = vsel %vm199, %v366, 0
      %v414 = vsel %vm199, %v367, 0
      %vm416 = vcmask 1041408
      %v418 = vsel %vm416, %v287, 0
      %420 = vmatprep.subr.bf16.mxu0 0
      %421 = vmatpush1.bf16.msra.mxu0 %v418
      %422 = vmatprep.subr.bf16.mxu0 0
      %423 = vmatpush1.bf16.msra.mxu0 0
      %424 = vmatprep.subr.bf16.mxu0 0
      %425 = vmatpush1.bf16.msra.mxu0 0
      %426 = vmatprep.subr.bf16.mxu0 0
      %427 = vmatpush1.bf16.msra.mxu0 0
      %428 = vmatprep.subr.bf16.mxu0 0
      %429 = vmatpush1.bf16.msra.mxu0 0
      %430 = vmatprep.subr.bf16.mxu0 0
      %431 = vmatpush1.bf16.msra.mxu0 0
      %432 = vmatprep.subr.bf16.mxu0 0
      %433 = vmatpush1.bf16.msra.mxu0 0
      %434 = vmatprep.subr.bf16.mxu0 0
      %435 = vmatpush1.bf16.msra.mxu0 0
      %436 = vmatprep.subr.bf16.mxu0 0
      %437 = vmatpush1.bf16.msra.mxu0 0
      %438 = vmatprep.subr.bf16.mxu0 0
      %439 = vmatpush1.bf16.msra.mxu0 0
      %440 = vmatprep.subr.bf16.mxu0 0
      %441 = vmatpush1.bf16.msra.mxu0 0
      %442 = vmatprep.subr.bf16.mxu0 0
      %443 = vmatpush1.bf16.msra.mxu0 0
      %444 = vmatprep.subr.bf16.mxu0 0
      %445 = vmatpush1.bf16.msra.mxu0 0
      %446 = vmatprep.subr.bf16.mxu0 0
      %447 = vmatpush1.bf16.msra.mxu0 0
      %448 = vmatprep.subr.bf16.mxu0 0
      %449 = vmatpush1.bf16.msra.mxu0 0
      %450 = vmatprep.subr.bf16.mxu0 0
      %451 = vmatpush1.bf16.msra.mxu0 0
      %452 = vmatprep.mubr.bf16.mxu0 0
      %453 = vmatmul.mubr.bf16.gmra.mrb[0].mxu0 %v369
      %v454 = vpop.f32.mrb[0].mxu0
      %v455 = vadd.f32 0.0, %v454
      %v456 = vpop.f32.mrb[0].mxu0
      %v457 = vpop.f32.mrb[0].mxu0
      %v458 = vadd.f32 0.0, %v457
      %v459 = vpop.f32.mrb[0].mxu0
      %460 = vmatprep.mubr.bf16.mxu0 0
      %461 = vmatmul.mubr.bf16.gmra.mrb[0].mxu0 %v372
      %v462 = vpop.f32.mrb[0].mxu0
      %v463 = vadd.f32 0.0, %v462
      %v464 = vpop.f32.mrb[0].mxu0
      %v465 = vpop.f32.mrb[0].mxu0
      %v466 = vadd.f32 0.0, %v465
      %v467 = vpop.f32.mrb[0].mxu0
      %468 = vmatprep.mubr.bf16.mxu0 0
      %469 = vmatmul.mubr.bf16.gmra.mrb[0].mxu0 %v375
      %v470 = vpop.f32.mrb[0].mxu0
      %v471 = vadd.f32 0.0, %v470
      %v472 = vpop.f32.mrb[0].mxu0
      %v473 = vpop.f32.mrb[0].mxu0
      %v474 = vadd.f32 0.0, %v473
      %v475 = vpop.f32.mrb[0].mxu0
      %476 = vmatprep.mubr.bf16.mxu0 0
      %477 = vmatmul.mubr.bf16.gmra.mrb[0].mxu0 %v378
      %v478 = vpop.f32.mrb[0].mxu0
      %v479 = vadd.f32 0.0, %v478
      %v480 = vpop.f32.mrb[0].mxu0
      %v481 = vpop.f32.mrb[0].mxu0
      %v482 = vadd.f32 0.0, %v481
      %v483 = vpop.f32.mrb[0].mxu0
      %484 = vmatprep.mubr.bf16.mxu0 0
      %485 = vmatmul.mubr.bf16.gmra.mrb[0].mxu0 %v381
      %v486 = vpop.f32.mrb[0].mxu0
      %v487 = vadd.f32 0.0, %v486
      %v488 = vpop.f32.mrb[0].mxu0
      %v489 = vpop.f32.mrb[0].mxu0
      %v490 = vadd.f32 0.0, %v489
      %v491 = vpop.f32.mrb[0].mxu0
      %492 = vmatprep.mubr.bf16.mxu0 0
      %493 = vmatmul.mubr.bf16.gmra.mrb[0].mxu0 %v384
      %v494 = vpop.f32.mrb[0].mxu0
      %v495 = vadd.f32 0.0, %v494
      %v496 = vpop.f32.mrb[0].mxu0
      %v497 = vpop.f32.mrb[0].mxu0
      %v498 = vadd.f32 0.0, %v497
      %v499 = vpop.f32.mrb[0].mxu0
      %500 = vmatprep.mubr.bf16.mxu0 0
      %501 = vmatmul.mubr.bf16.gmra.mrb[0].mxu0 %v387
      %v502 = vpop.f32.mrb[0].mxu0
      %v503 = vadd.f32 0.0, %v502
      %v504 = vpop.f32.mrb[0].mxu0
      %v505 = vpop.f32.mrb[0].mxu0
      %v506 = vadd.f32 0.0, %v505
      %v507 = vpop.f32.mrb[0].mxu0
      %508 = vmatprep.mubr.bf16.mxu0 0
      %509 = vmatmul.mubr.bf16.gmra.mrb[0].mxu0 %v390
      %v510 = vpop.f32.mrb[0].mxu0
      %v511 = vadd.f32 0.0, %v510
      %v512 = vpop.f32.mrb[0].mxu0
      %v513 = vpop.f32.mrb[0].mxu0
      %v514 = vadd.f32 0.0, %v513
      %v515 = vpop.f32.mrb[0].mxu0
      %516 = vmatprep.mubr.bf16.mxu0 0
      %517 = vmatmul.mubr.bf16.gmra.mrb[0].mxu0 %v393
      %v518 = vpop.f32.mrb[0].mxu0
      %v519 = vadd.f32 0.0, %v518
      %v520 = vpop.f32.mrb[0].mxu0
      %v521 = vpop.f32.mrb[0].mxu0
      %v522 = vadd.f32 0.0, %v521
      %v523 = vpop.f32.mrb[0].mxu0
      %524 = vmatprep.mubr.bf16.mxu0 0
      %525 = vmatmul.mubr.bf16.gmra.mrb[0].mxu0 %v396
      %v526 = vpop.f32.mrb[0].mxu0
      %v527 = vadd.f32 0.0, %v526
      %v528 = vpop.f32.mrb[0].mxu0
      %v529 = vpop.f32.mrb[0].mxu0
      %v530 = vadd.f32 0.0, %v529
      %v531 = vpop.f32.mrb[0].mxu0
      %532 = vmatprep.mubr.bf16.mxu0 0
      %533 = vmatmul.mubr.bf16.gmra.mrb[0].mxu0 %v399
      %v534 = vpop.f32.mrb[0].mxu0
      %v535 = vadd.f32 0.0, %v534
      %v536 = vpop.f32.mrb[0].mxu0
      %v537 = vpop.f32.mrb[0].mxu0
      %v538 = vadd.f32 0.0, %v537
      %v539 = vpop.f32.mrb[0].mxu0
      %540 = vmatprep.mubr.bf16.mxu0 0
      %541 = vmatmul.mubr.bf16.gmra.mrb[0].mxu0 %v402
      %v542 = vpop.f32.mrb[0].mxu0
      %v543 = vadd.f32 0.0, %v542
      %v544 = vpop.f32.mrb[0].mxu0
      %v545 = vpop.f32.mrb[0].mxu0
      %v546 = vadd.f32 0.0, %v545
      %v547 = vpop.f32.mrb[0].mxu0
      %548 = vmatprep.mubr.bf16.mxu0 0
      %549 = vmatmul.mubr.bf16.gmra.mrb[0].mxu0 %v405
      %v550 = vpop.f32.mrb[0].mxu0
      %v551 = vadd.f32 0.0, %v550
      %v552 = vpop.f32.mrb[0].mxu0
      %v553 = vpop.f32.mrb[0].mxu0
      %v554 = vadd.f32 0.0, %v553
      %v555 = vpop.f32.mrb[0].mxu0
      %556 = vmatprep.mubr.bf16.mxu0 0
      %557 = vmatmul.mubr.bf16.gmra.mrb[0].mxu0 %v408
      %v558 = vpop.f32.mrb[0].mxu0
      %v559 = vadd.f32 0.0, %v558
      %v560 = vpop.f32.mrb[0].mxu0
      %v561 = vpop.f32.mrb[0].mxu0
      %v562 = vadd.f32 0.0, %v561
      %v563 = vpop.f32.mrb[0].mxu0
      %564 = vmatprep.mubr.bf16.mxu0 0
      %565 = vmatmul.mubr.bf16.gmra.mrb[0].mxu0 %v411
      %v566 = vpop.f32.mrb[0].mxu0
      %v567 = vadd.f32 0.0, %v566
      %v568 = vpop.f32.mrb[0].mxu0
      %v569 = vpop.f32.mrb[0].mxu0
      %v570 = vadd.f32 0.0, %v569
      %v571 = vpop.f32.mrb[0].mxu0
      %572 = vmatprep.mubr.bf16.mxu0 0
      %573 = vmatmul.mubr.bf16.gmra.mrb[0].mxu0 %v414
      %v574 = vpop.f32.mrb[0].mxu0
      %v575 = vadd.f32 0.0, %v574
      %v576 = vpop.f32.mrb[0].mxu0
      %v577 = vpop.f32.mrb[0].mxu0
      %v578 = vadd.f32 0.0, %v577
      %v579 = vpop.f32.mrb[0].mxu0
      %580 = vdwg.mxu0
      %s581 = scalar_lea.vmem [#allocation2], 48
      %v582 = vld [vmem:[%s581 + $0x2] sm:$0xff]
      %v583 = vld [vmem:[%s581 + $0xa] sm:$0xff]
      %v584 = vld [vmem:[%s581 + $0x1a] sm:$0xff]
      %v585 = vld [vmem:[%s581 + $0x22] sm:$0xff]
      %v586 = vld [vmem:[%s581 + $0x32] sm:$0xff]
      %v587 = vld [vmem:[%s581 + $0x3a] sm:$0xff]
      %v588 = vld [vmem:[%s581 + $0x4a] sm:$0xff]
      %v589 = vld [vmem:[%s581 + $0x52] sm:$0xff]
      %v590 = vld [vmem:[%s581 + $0x62] sm:$0xff]
      %v591 = vld [vmem:[%s581 + $0x6a] sm:$0xff]
      %v592 = vld [vmem:[%s581 + $0x7a] sm:$0xff]
      %v593 = vld [vmem:[%s581 + $0x82] sm:$0xff]
      %v594 = vld [vmem:[%s581 + $0x92] sm:$0xff]
      %v595 = vld [vmem:[%s581 + $0x9a] sm:$0xff]
      %v596 = vld [vmem:[%s581 + $0xaa] sm:$0xff]
      %v597 = vld [vmem:[%s581 + $0xb2] sm:$0xff]
      %v598 = vld [vmem:[%s581 + $0xc2] sm:$0xff]
      %v599 = vld [vmem:[%s581 + $0xca] sm:$0xff]
      %v600 = vld [vmem:[%s581 + $0xda] sm:$0xff]
      %v601 = vld [vmem:[%s581 + $0xe2] sm:$0xff]
      %v602 = vld [vmem:[%s581 + $0xf2] sm:$0xff]
      %v603 = vld [vmem:[%s581 + $0xfa] sm:$0xff]
      %v604 = vld [vmem:[%s581 + $0x10a] sm:$0xff]
      %v605 = vld [vmem:[%s581 + $0x112] sm:$0xff]
      %v606 = vld [vmem:[%s581 + $0x122] sm:$0xff]
      %v607 = vld [vmem:[%s581 + $0x12a] sm:$0xff]
      %v608 = vld [vmem:[%s581 + $0x13a] sm:$0xff]
      %v609 = vld [vmem:[%s581 + $0x142] sm:$0xff]
      %v610 = vld [vmem:[%s581 + $0x152] sm:$0xff]
      %v611 = vld [vmem:[%s581 + $0x15a] sm:$0xff]
      %v612 = vld [vmem:[%s581 + $0x16a] sm:$0xff]
      %v613 = vld [vmem:[%s581 + $0x172] sm:$0xff]
      %v614 = vadd.f32 %v582, %v455
      %v615 = vadd.f32 %v583, %v458
      %v616 = vadd.f32 %v584, %v463
      %v617 = vadd.f32 %v585, %v466
      %v618 = vadd.f32 %v586, %v471
      %v619 = vadd.f32 %v587, %v474
      %v620 = vadd.f32 %v588, %v479
      %v621 = vadd.f32 %v589, %v482
      %v622 = vadd.f32 %v590, %v487
      %v623 = vadd.f32 %v591, %v490
      %v624 = vadd.f32 %v592, %v495
      %v625 = vadd.f32 %v593, %v498
      %v626 = vadd.f32 %v594, %v503
      %v627 = vadd.f32 %v595, %v506
      %v628 = vadd.f32 %v596, %v511
      %v629 = vadd.f32 %v597, %v514
      %v630 = vadd.f32 %v598, %v519
      %v631 = vadd.f32 %v599, %v522
      %v632 = vadd.f32 %v600, %v527
      %v633 = vadd.f32 %v601, %v530
      %v634 = vadd.f32 %v602, %v535
      %v635 = vadd.f32 %v603, %v538
      %v636 = vadd.f32 %v604, %v543
      %v637 = vadd.f32 %v605, %v546
      %v638 = vadd.f32 %v606, %v551
      %v639 = vadd.f32 %v607, %v554
      %v640 = vadd.f32 %v608, %v559
      %v641 = vadd.f32 %v609, %v562
      %v642 = vadd.f32 %v610, %v567
      %v643 = vadd.f32 %v611, %v570
      %v644 = vadd.f32 %v612, %v575
      %v645 = vadd.f32 %v613, %v578
      %646 = vst.msk [vmem:[%s581 + $0x2] sm:$0xff] %vm199, %v614
      %647 = vst.msk [vmem:[%s581 + $0xa] sm:$0xff] %vm199, %v615
      %648 = vst.msk [vmem:[%s581 + $0x1a] sm:$0xff] %vm199, %v616
      %649 = vst.msk [vmem:[%s581 + $0x22] sm:$0xff] %vm199, %v617
      %650 = vst.msk [vmem:[%s581 + $0x32] sm:$0xff] %vm199, %v618
      %651 = vst.msk [vmem:[%s581 + $0x3a] sm:$0xff] %vm199, %v619
      %652 = vst.msk [vmem:[%s581 + $0x4a] sm:$0xff] %vm199, %v620
      %653 = vst.msk [vmem:[%s581 + $0x52] sm:$0xff] %vm199, %v621
      %654 = vst.msk [vmem:[%s581 + $0x62] sm:$0xff] %vm199, %v622
      %655 = vst.msk [vmem:[%s581 + $0x6a] sm:$0xff] %vm199, %v623
      %656 = vst.msk [vmem:[%s581 + $0x7a] sm:$0xff] %vm199, %v624
      %657 = vst.msk [vmem:[%s581 + $0x82] sm:$0xff] %vm199, %v625
      %658 = vst.msk [vmem:[%s581 + $0x92] sm:$0xff] %vm199, %v626
      %659 = vst.msk [vmem:[%s581 + $0x9a] sm:$0xff] %vm199, %v627
      %660 = vst.msk [vmem:[%s581 + $0xaa] sm:$0xff] %vm199, %v628
      %661 = vst.msk [vmem:[%s581 + $0xb2] sm:$0xff] %vm199, %v629
      %662 = vst.msk [vmem:[%s581 + $0xc2] sm:$0xff] %vm199, %v630
      %663 = vst.msk [vmem:[%s581 + $0xca] sm:$0xff] %vm199, %v631
      %664 = vst.msk [vmem:[%s581 + $0xda] sm:$0xff] %vm199, %v632
      %665 = vst.msk [vmem:[%s581 + $0xe2] sm:$0xff] %vm199, %v633
      %666 = vst.msk [vmem:[%s581 + $0xf2] sm:$0xff] %vm199, %v634
      %667 = vst.msk [vmem:[%s581 + $0xfa] sm:$0xff] %vm199, %v635
      %668 = vst.msk [vmem:[%s581 + $0x10a] sm:$0xff] %vm199, %v636
      %669 = vst.msk [vmem:[%s581 + $0x112] sm:$0xff] %vm199, %v637
      %670 = vst.msk [vmem:[%s581 + $0x122] sm:$0xff] %vm199, %v638
      %671 = vst.msk [vmem:[%s581 + $0x12a] sm:$0xff] %vm199, %v639
      %672 = vst.msk [vmem:[%s581 + $0x13a] sm:$0xff] %vm199, %v640
      %673 = vst.msk [vmem:[%s581 + $0x142] sm:$0xff] %vm199, %v641
      %674 = vst.msk [vmem:[%s581 + $0x152] sm:$0xff] %vm199, %v642
      %675 = vst.msk [vmem:[%s581 + $0x15a] sm:$0xff] %vm199, %v643
      %676 = vst.msk [vmem:[%s581 + $0x16a] sm:$0xff] %vm199, %v644
      %677 = vst.msk [vmem:[%s581 + $0x172] sm:$0xff] %vm199, %v645
      %s678 = scalar_lea.vmem %s1, 2
      %v679 = vld [vmem:[%s678] sm:$0x3]
      %v681 = vsel %vm416, %v679, 0
      %683 = vmatprep.subr.bf16.mxu0 0
      %684 = vmatpush1.bf16.msra.mxu0 %v681
      %685 = vmatprep.subr.bf16.mxu0 0
      %686 = vmatpush1.bf16.msra.mxu0 0
      %687 = vmatprep.subr.bf16.mxu0 0
      %688 = vmatpush1.bf16.msra.mxu0 0
      %689 = vmatprep.subr.bf16.mxu0 0
      %690 = vmatpush1.bf16.msra.mxu0 0
      %691 = vmatprep.subr.bf16.mxu0 0
      %692 = vmatpush1.bf16.msra.mxu0 0
      %693 = vmatprep.subr.bf16.mxu0 0
      %694 = vmatpush1.bf16.msra.mxu0 0
      %695 = vmatprep.subr.bf16.mxu0 0
      %696 = vmatpush1.bf16.msra.mxu0 0
      %697 = vmatprep.subr.bf16.mxu0 0
      %698 = vmatpush1.bf16.msra.mxu0 0
      %699 = vmatprep.subr.bf16.mxu0 0
      %700 = vmatpush1.bf16.msra.mxu0 0
      %701 = vmatprep.subr.bf16.mxu0 0
      %702 = vmatpush1.bf16.msra.mxu0 0
      %703 = vmatprep.subr.bf16.mxu0 0
      %704 = vmatpush1.bf16.msra.mxu0 0
      %705 = vmatprep.subr.bf16.mxu0 0
      %706 = vmatpush1.bf16.msra.mxu0 0
      %707 = vmatprep.subr.bf16.mxu0 0
      %708 = vmatpush1.bf16.msra.mxu0 0
      %709 = vmatprep.subr.bf16.mxu0 0
      %710 = vmatpush1.bf16.msra.mxu0 0
      %711 = vmatprep.subr.bf16.mxu0 0
      %712 = vmatpush1.bf16.msra.mxu0 0
      %713 = vmatprep.subr.bf16.mxu0 0
      %714 = vmatpush1.bf16.msra.mxu0 0
      %715 = vmatprep.mubr.bf16.mxu0 0
      %716 = vmatmul.mubr.bf16.gmra.mrb[0].mxu0 %v369
      %v717 = vpop.f32.mrb[0].mxu0
      %v718 = vadd.f32 0.0, %v717
      %v719 = vpop.f32.mrb[0].mxu0
      %v720 = vpop.f32.mrb[0].mxu0
      %v721 = vadd.f32 0.0, %v720
      %v722 = vpop.f32.mrb[0].mxu0
      %723 = vmatprep.mubr.bf16.mxu0 0
      %724 = vmatmul.mubr.bf16.gmra.mrb[0].mxu0 %v372
      %v725 = vpop.f32.mrb[0].mxu0
      %v726 = vadd.f32 0.0, %v725
      %v727 = vpop.f32.mrb[0].mxu0
      %v728 = vpop.f32.mrb[0].mxu0
      %v729 = vadd.f32 0.0, %v728
      %v730 = vpop.f32.mrb[0].mxu0
      %731 = vmatprep.mubr.bf16.mxu0 0
      %732 = vmatmul.mubr.bf16.gmra.mrb[0].mxu0 %v375
      %v733 = vpop.f32.mrb[0].mxu0
      %v734 = vadd.f32 0.0, %v733
      %v735 = vpop.f32.mrb[0].mxu0
      %v736 = vpop.f32.mrb[0].mxu0
      %v737 = vadd.f32 0.0, %v736
      %v738 = vpop.f32.mrb[0].mxu0
      %739 = vmatprep.mubr.bf16.mxu0 0
      %740 = vmatmul.mubr.bf16.gmra.mrb[0].mxu0 %v378
      %v741 = vpop.f32.mrb[0].mxu0
      %v742 = vadd.f32 0.0, %v741
      %v743 = vpop.f32.mrb[0].mxu0
      %v744 = vpop.f32.mrb[0].mxu0
      %v745 = vadd.f32 0.0, %v744
      %v746 = vpop.f32.mrb[0].mxu0
      %747 = vmatprep.mubr.bf16.mxu0 0
      %748 = vmatmul.mubr.bf16.gmra.mrb[0].mxu0 %v381
      %v749 = vpop.f32.mrb[0].mxu0
      %v750 = vadd.f32 0.0, %v749
      %v751 = vpop.f32.mrb[0].mxu0
      %v752 = vpop.f32.mrb[0].mxu0
      %v753 = vadd.f32 0.0, %v752
      %v754 = vpop.f32.mrb[0].mxu0
      %755 = vmatprep.mubr.bf16.mxu0 0
      %756 = vmatmul.mubr.bf16.gmra.mrb[0].mxu0 %v384
      %v757 = vpop.f32.mrb[0].mxu0
      %v758 = vadd.f32 0.0, %v757
      %v759 = vpop.f32.mrb[0].mxu0
      %v760 = vpop.f32.mrb[0].mxu0
      %v761 = vadd.f32 0.0, %v760
      %v762 = vpop.f32.mrb[0].mxu0
      %763 = vmatprep.mubr.bf16.mxu0 0
      %764 = vmatmul.mubr.bf16.gmra.mrb[0].mxu0 %v387
      %v765 = vpop.f32.mrb[0].mxu0
      %v766 = vadd.f32 0.0, %v765
      %v767 = vpop.f32.mrb[0].mxu0
      %v768 = vpop.f32.mrb[0].mxu0
      %v769 = vadd.f32 0.0, %v768
      %v770 = vpop.f32.mrb[0].mxu0
      %771 = vmatprep.mubr.bf16.mxu0 0
      %772 = vmatmul.mubr.bf16.gmra.mrb[0].mxu0 %v390
      %v773 = vpop.f32.mrb[0].mxu0
      %v774 = vadd.f32 0.0, %v773
      %v775 = vpop.f32.mrb[0].mxu0
      %v776 = vpop.f32.mrb[0].mxu0
      %v777 = vadd.f32 0.0, %v776
      %v778 = vpop.f32.mrb[0].mxu0
      %779 = vmatprep.mubr.bf16.mxu0 0
      %780 = vmatmul.mubr.bf16.gmra.mrb[0].mxu0 %v393
      %v781 = vpop.f32.mrb[0].mxu0
      %v782 = vadd.f32 0.0, %v781
      %v783 = vpop.f32.mrb[0].mxu0
      %v784 = vpop.f32.mrb[0].mxu0
      %v785 = vadd.f32 0.0, %v784
      %v786 = vpop.f32.mrb[0].mxu0
      %787 = vmatprep.mubr.bf16.mxu0 0
      %788 = vmatmul.mubr.bf16.gmra.mrb[0].mxu0 %v396
      %v789 = vpop.f32.mrb[0].mxu0
      %v790 = vadd.f32 0.0, %v789
      %v791 = vpop.f32.mrb[0].mxu0
      %v792 = vpop.f32.mrb[0].mxu0
      %v793 = vadd.f32 0.0, %v792
      %v794 = vpop.f32.mrb[0].mxu0
      %795 = vmatprep.mubr.bf16.mxu0 0
      %796 = vmatmul.mubr.bf16.gmra.mrb[0].mxu0 %v399
      %v797 = vpop.f32.mrb[0].mxu0
      %v798 = vadd.f32 0.0, %v797
      %v799 = vpop.f32.mrb[0].mxu0
      %v800 = vpop.f32.mrb[0].mxu0
      %v801 = vadd.f32 0.0, %v800
      %v802 = vpop.f32.mrb[0].mxu0
      %803 = vmatprep.mubr.bf16.mxu0 0
      %804 = vmatmul.mubr.bf16.gmra.mrb[0].mxu0 %v402
      %v805 = vpop.f32.mrb[0].mxu0
      %v806 = vadd.f32 0.0, %v805
      %v807 = vpop.f32.mrb[0].mxu0
      %v808 = vpop.f32.mrb[0].mxu0
      %v809 = vadd.f32 0.0, %v808
      %v810 = vpop.f32.mrb[0].mxu0
      %811 = vmatprep.mubr.bf16.mxu0 0
      %812 = vmatmul.mubr.bf16.gmra.mrb[0].mxu0 %v405
      %v813 = vpop.f32.mrb[0].mxu0
      %v814 = vadd.f32 0.0, %v813
      %v815 = vpop.f32.mrb[0].mxu0
      %v816 = vpop.f32.mrb[0].mxu0
      %v817 = vadd.f32 0.0, %v816
      %v818 = vpop.f32.mrb[0].mxu0
      %819 = vmatprep.mubr.bf16.mxu0 0
      %820 = vmatmul.mubr.bf16.gmra.mrb[0].mxu0 %v408
      %v821 = vpop.f32.mrb[0].mxu0
      %v822 = vadd.f32 0.0, %v821
      %v823 = vpop.f32.mrb[0].mxu0
      %v824 = vpop.f32.mrb[0].mxu0
      %v825 = vadd.f32 0.0, %v824
      %v826 = vpop.f32.mrb[0].mxu0
      %827 = vmatprep.mubr.bf16.mxu0 0
      %828 = vmatmul.mubr.bf16.gmra.mrb[0].mxu0 %v411
      %v829 = vpop.f32.mrb[0].mxu0
      %v830 = vadd.f32 0.0, %v829
      %v831 = vpop.f32.mrb[0].mxu0
      %v832 = vpop.f32.mrb[0].mxu0
      %v833 = vadd.f32 0.0, %v832
      %v834 = vpop.f32.mrb[0].mxu0
      %835 = vmatprep.mubr.bf16.mxu0 0
      %836 = vmatmul.mubr.bf16.gmra.mrb[0].mxu0 %v414
      %v837 = vpop.f32.mrb[0].mxu0
      %v838 = vadd.f32 0.0, %v837
      %v839 = vpop.f32.mrb[0].mxu0
      %v840 = vpop.f32.mrb[0].mxu0
      %v841 = vadd.f32 0.0, %v840
      %v842 = vpop.f32.mrb[0].mxu0
      %843 = vdwg.mxu0
      %v844 = vld [vmem:[%s581 + $0x1] sm:$0xff]
      %v845 = vld [vmem:[%s581 + $0x9] sm:$0xff]
      %v846 = vld [vmem:[%s581 + $0x19] sm:$0xff]
      %v847 = vld [vmem:[%s581 + $0x21] sm:$0xff]
      %v848 = vld [vmem:[%s581 + $0x31] sm:$0xff]
      %v849 = vld [vmem:[%s581 + $0x39] sm:$0xff]
      %v850 = vld [vmem:[%s581 + $0x49] sm:$0xff]
      %v851 = vld [vmem:[%s581 + $0x51] sm:$0xff]
      %v852 = vld [vmem:[%s581 + $0x61] sm:$0xff]
      %v853 = vld [vmem:[%s581 + $0x69] sm:$0xff]
      %v854 = vld [vmem:[%s581 + $0x79] sm:$0xff]
      %v855 = vld [vmem:[%s581 + $0x81] sm:$0xff]
      %v856 = vld [vmem:[%s581 + $0x91] sm:$0xff]
      %v857 = vld [vmem:[%s581 + $0x99] sm:$0xff]
      %v858 = vld [vmem:[%s581 + $0xa9] sm:$0xff]
      %v859 = vld [vmem:[%s581 + $0xb1] sm:$0xff]
      %v860 = vld [vmem:[%s581 + $0xc1] sm:$0xff]
      %v861 = vld [vmem:[%s581 + $0xc9] sm:$0xff]
      %v862 = vld [vmem:[%s581 + $0xd9] sm:$0xff]
      %v863 = vld [vmem:[%s581 + $0xe1] sm:$0xff]
      %v864 = vld [vmem:[%s581 + $0xf1] sm:$0xff]
      %v865 = vld [vmem:[%s581 + $0xf9] sm:$0xff]
      %v866 = vld [vmem:[%s581 + $0x109] sm:$0xff]
      %v867 = vld [vmem:[%s581 + $0x111] sm:$0xff]
      %v868 = vld [vmem:[%s581 + $0x121] sm:$0xff]
      %v869 = vld [vmem:[%s581 + $0x129] sm:$0xff]
      %v870 = vld [vmem:[%s581 + $0x139] sm:$0xff]
      %v871 = vld [vmem:[%s581 + $0x141] sm:$0xff]
      %v872 = vld [vmem:[%s581 + $0x151] sm:$0xff]
      %v873 = vld [vmem:[%s581 + $0x159] sm:$0xff]
      %v874 = vld [vmem:[%s581 + $0x169] sm:$0xff]
      %v875 = vld [vmem:[%s581 + $0x171] sm:$0xff]
      %v876 = vadd.f32 %v844, %v718
      %v877 = vadd.f32 %v845, %v721
      %v878 = vadd.f32 %v846, %v726
      %v879 = vadd.f32 %v847, %v729
      %v880 = vadd.f32 %v848, %v734
      %v881 = vadd.f32 %v849, %v737
      %v882 = vadd.f32 %v850, %v742
      %v883 = vadd.f32 %v851, %v745
      %v884 = vadd.f32 %v852, %v750
      %v885 = vadd.f32 %v853, %v753
      %v886 = vadd.f32 %v854, %v758
      %v887 = vadd.f32 %v855, %v761
      %v888 = vadd.f32 %v856, %v766
      %v889 = vadd.f32 %v857, %v769
      %v890 = vadd.f32 %v858, %v774
      %v891 = vadd.f32 %v859, %v777
      %v892 = vadd.f32 %v860, %v782
      %v893 = vadd.f32 %v861, %v785
      %v894 = vadd.f32 %v862, %v790
      %v895 = vadd.f32 %v863, %v793
      %v896 = vadd.f32 %v864, %v798
      %v897 = vadd.f32 %v865, %v801
      %v898 = vadd.f32 %v866, %v806
      %v899 = vadd.f32 %v867, %v809
      %v900 = vadd.f32 %v868, %v814
      %v901 = vadd.f32 %v869, %v817
      %v902 = vadd.f32 %v870, %v822
      %v903 = vadd.f32 %v871, %v825
      %v904 = vadd.f32 %v872, %v830
      %v905 = vadd.f32 %v873, %v833
      %v906 = vadd.f32 %v874, %v838
      %v907 = vadd.f32 %v875, %v841
      %908 = vst.msk [vmem:[%s581 + $0x1] sm:$0xff] %vm199, %v876
      %909 = vst.msk [vmem:[%s581 + $0x9] sm:$0xff] %vm199, %v877
      %910 = vst.msk [vmem:[%s581 + $0x19] sm:$0xff] %vm199, %v878
      %911 = vst.msk [vmem:[%s581 + $0x21] sm:$0xff] %vm199, %v879
      %912 = vst.msk [vmem:[%s581 + $0x31] sm:$0xff] %vm199, %v880
      %913 = vst.msk [vmem:[%s581 + $0x39] sm:$0xff] %vm199, %v881
      %914 = vst.msk [vmem:[%s581 + $0x49] sm:$0xff] %vm199, %v882
      %915 = vst.msk [vmem:[%s581 + $0x51] sm:$0xff] %vm199, %v883
      %916 = vst.msk [vmem:[%s581 + $0x61] sm:$0xff] %vm199, %v884
      %917 = vst.msk [vmem:[%s581 + $0x69] sm:$0xff] %vm199, %v885
      %918 = vst.msk [vmem:[%s581 + $0x79] sm:$0xff] %vm199, %v886
      %919 = vst.msk [vmem:[%s581 + $0x81] sm:$0xff] %vm199, %v887
      %920 = vst.msk [vmem:[%s581 + $0x91] sm:$0xff] %vm199, %v888
      %921 = vst.msk [vmem:[%s581 + $0x99] sm:$0xff] %vm199, %v889
      %922 = vst.msk [vmem:[%s581 + $0xa9] sm:$0xff] %vm199, %v890
      %923 = vst.msk [vmem:[%s581 + $0xb1] sm:$0xff] %vm199, %v891
      %924 = vst.msk [vmem:[%s581 + $0xc1] sm:$0xff] %vm199, %v892
      %925 = vst.msk [vmem:[%s581 + $0xc9] sm:$0xff] %vm199, %v893
      %926 = vst.msk [vmem:[%s581 + $0xd9] sm:$0xff] %vm199, %v894
      %927 = vst.msk [vmem:[%s581 + $0xe1] sm:$0xff] %vm199, %v895
      %928 = vst.msk [vmem:[%s581 + $0xf1] sm:$0xff] %vm199, %v896
      %929 = vst.msk [vmem:[%s581 + $0xf9] sm:$0xff] %vm199, %v897
      %930 = vst.msk [vmem:[%s581 + $0x109] sm:$0xff] %vm199, %v898
      %931 = vst.msk [vmem:[%s581 + $0x111] sm:$0xff] %vm199, %v899
      %932 = vst.msk [vmem:[%s581 + $0x121] sm:$0xff] %vm199, %v900
      %933 = vst.msk [vmem:[%s581 + $0x129] sm:$0xff] %vm199, %v901
      %934 = vst.msk [vmem:[%s581 + $0x139] sm:$0xff] %vm199, %v902
      %935 = vst.msk [vmem:[%s581 + $0x141] sm:$0xff] %vm199, %v903
      %936 = vst.msk [vmem:[%s581 + $0x151] sm:$0xff] %vm199, %v904
      %937 = vst.msk [vmem:[%s581 + $0x159] sm:$0xff] %vm199, %v905
      %938 = vst.msk [vmem:[%s581 + $0x169] sm:$0xff] %vm199, %v906
      %939 = vst.msk [vmem:[%s581 + $0x171] sm:$0xff] %vm199, %v907
      %s940 = scalar_lea.vmem %s1, 4
      %v941 = vld [vmem:[%s940] sm:$0x3]
      %v943 = vsel %vm416, %v941, 0
      %945 = vmatprep.subr.bf16.mxu0 0
      %946 = vmatpush1.bf16.msra.mxu0 %v943
      %947 = vmatprep.subr.bf16.mxu0 0
      %948 = vmatpush1.bf16.msra.mxu0 0
      %949 = vmatprep.subr.bf16.mxu0 0
      %950 = vmatpush1.bf16.msra.mxu0 0
      %951 = vmatprep.subr.bf16.mxu0 0
      %952 = vmatpush1.bf16.msra.mxu0 0
      %953 = vmatprep.subr.bf16.mxu0 0
      %954 = vmatpush1.bf16.msra.mxu0 0
      %955 = vmatprep.subr.bf16.mxu0 0
      %956 = vmatpush1.bf16.msra.mxu0 0
      %957 = vmatprep.subr.bf16.mxu0 0
      %958 = vmatpush1.bf16.msra.mxu0 0
      %959 = vmatprep.subr.bf16.mxu0 0
      %960 = vmatpush1.bf16.msra.mxu0 0
      %961 = vmatprep.subr.bf16.mxu0 0
      %962 = vmatpush1.bf16.msra.mxu0 0
      %963 = vmatprep.subr.bf16.mxu0 0
      %964 = vmatpush1.bf16.msra.mxu0 0
      %965 = vmatprep.subr.bf16.mxu0 0
      %966 = vmatpush1.bf16.msra.mxu0 0
      %967 = vmatprep.subr.bf16.mxu0 0
      %968 = vmatpush1.bf16.msra.mxu0 0
      %969 = vmatprep.subr.bf16.mxu0 0
      %970 = vmatpush1.bf16.msra.mxu0 0
      %971 = vmatprep.subr.bf16.mxu0 0
      %972 = vmatpush1.bf16.msra.mxu0 0
      %973 = vmatprep.subr.bf16.mxu0 0
      %974 = vmatpush1.bf16.msra.mxu0 0
      %975 = vmatprep.subr.bf16.mxu0 0
      %976 = vmatpush1.bf16.msra.mxu0 0
      %977 = vmatprep.mubr.bf16.mxu0 0
      %978 = vmatmul.mubr.bf16.gmra.mrb[0].mxu0 %v369
      %v979 = vpop.f32.mrb[0].mxu0
      %v980 = vadd.f32 0.0, %v979
      %v981 = vpop.f32.mrb[0].mxu0
      %v982 = vpop.f32.mrb[0].mxu0
      %v983 = vadd.f32 0.0, %v982
      %v984 = vpop.f32.mrb[0].mxu0
      %985 = vmatprep.mubr.bf16.mxu0 0
      %986 = vmatmul.mubr.bf16.gmra.mrb[0].mxu0 %v372
      %v987 = vpop.f32.mrb[0].mxu0
      %v988 = vadd.f32 0.0, %v987
      %v989 = vpop.f32.mrb[0].mxu0
      %v990 = vpop.f32.mrb[0].mxu0
      %v991 = vadd.f32 0.0, %v990
      %v992 = vpop.f32.mrb[0].mxu0
      %993 = vmatprep.mubr.bf16.mxu0 0
      %994 = vmatmul.mubr.bf16.gmra.mrb[0].mxu0 %v375
      %v995 = vpop.f32.mrb[0].mxu0
      %v996 = vadd.f32 0.0, %v995
      %v997 = vpop.f32.mrb[0].mxu0
      %v998 = vpop.f32.mrb[0].mxu0
      %v999 = vadd.f32 0.0, %v998
      %v1000 = vpop.f32.mrb[0].mxu0
      %1001 = vmatprep.mubr.bf16.mxu0 0
      %1002 = vmatmul.mubr.bf16.gmra.mrb[0].mxu0 %v378
      %v1003 = vpop.f32.mrb[0].mxu0
      %v1004 = vadd.f32 0.0, %v1003
      %v1005 = vpop.f32.mrb[0].mxu0
      %v1006 = vpop.f32.mrb[0].mxu0
      %v1007 = vadd.f32 0.0, %v1006
      %v1008 = vpop.f32.mrb[0].mxu0
      %1009 = vmatprep.mubr.bf16.mxu0 0
      %1010 = vmatmul.mubr.bf16.gmra.mrb[0].mxu0 %v381
      %v1011 = vpop.f32.mrb[0].mxu0
      %v1012 = vadd.f32 0.0, %v1011
      %v1013 = vpop.f32.mrb[0].mxu0
      %v1014 = vpop.f32.mrb[0].mxu0
      %v1015 = vadd.f32 0.0, %v1014
      %v1016 = vpop.f32.mrb[0].mxu0
      %1017 = vmatprep.mubr.bf16.mxu0 0
      %1018 = vmatmul.mubr.bf16.gmra.mrb[0].mxu0 %v384
      %v1019 = vpop.f32.mrb[0].mxu0
      %v1020 = vadd.f32 0.0, %v1019
      %v1021 = vpop.f32.mrb[0].mxu0
      %v1022 = vpop.f32.mrb[0].mxu0
      %v1023 = vadd.f32 0.0, %v1022
      %v1024 = vpop.f32.mrb[0].mxu0
      %1025 = vmatprep.mubr.bf16.mxu0 0
      %1026 = vmatmul.mubr.bf16.gmra.mrb[0].mxu0 %v387
      %v1027 = vpop.f32.mrb[0].mxu0
      %v1028 = vadd.f32 0.0, %v1027
      %v1029 = vpop.f32.mrb[0].mxu0
      %v1030 = vpop.f32.mrb[0].mxu0
      %v1031 = vadd.f32 0.0, %v1030
      %v1032 = vpop.f32.mrb[0].mxu0
      %1033 = vmatprep.mubr.bf16.mxu0 0
      %1034 = vmatmul.mubr.bf16.gmra.mrb[0].mxu0 %v390
      %v1035 = vpop.f32.mrb[0].mxu0
      %v1036 = vadd.f32 0.0, %v1035
      %v1037 = vpop.f32.mrb[0].mxu0
      %v1038 = vpop.f32.mrb[0].mxu0
      %v1039 = vadd.f32 0.0, %v1038
      %v1040 = vpop.f32.mrb[0].mxu0
      %1041 = vmatprep.mubr.bf16.mxu0 0
      %1042 = vmatmul.mubr.bf16.gmra.mrb[0].mxu0 %v393
      %v1043 = vpop.f32.mrb[0].mxu0
      %v1044 = vadd.f32 0.0, %v1043
      %v1045 = vpop.f32.mrb[0].mxu0
      %v1046 = vpop.f32.mrb[0].mxu0
      %v1047 = vadd.f32 0.0, %v1046
      %v1048 = vpop.f32.mrb[0].mxu0
      %1049 = vmatprep.mubr.bf16.mxu0 0
      %1050 = vmatmul.mubr.bf16.gmra.mrb[0].mxu0 %v396
      %v1051 = vpop.f32.mrb[0].mxu0
      %v1052 = vadd.f32 0.0, %v1051
      %v1053 = vpop.f32.mrb[0].mxu0
      %v1054 = vpop.f32.mrb[0].mxu0
      %v1055 = vadd.f32 0.0, %v1054
      %v1056 = vpop.f32.mrb[0].mxu0
      %1057 = vmatprep.mubr.bf16.mxu0 0
      %1058 = vmatmul.mubr.bf16.gmra.mrb[0].mxu0 %v399
      %v1059 = vpop.f32.mrb[0].mxu0
      %v1060 = vadd.f32 0.0, %v1059
      %v1061 = vpop.f32.mrb[0].mxu0
      %v1062 = vpop.f32.mrb[0].mxu0
      %v1063 = vadd.f32 0.0, %v1062
      %v1064 = vpop.f32.mrb[0].mxu0
      %1065 = vmatprep.mubr.bf16.mxu0 0
      %1066 = vmatmul.mubr.bf16.gmra.mrb[0].mxu0 %v402
      %v1067 = vpop.f32.mrb[0].mxu0
      %v1068 = vadd.f32 0.0, %v1067
      %v1069 = vpop.f32.mrb[0].mxu0
      %v1070 = vpop.f32.mrb[0].mxu0
      %v1071 = vadd.f32 0.0, %v1070
      %v1072 = vpop.f32.mrb[0].mxu0
      %1073 = vmatprep.mubr.bf16.mxu0 0
      %1074 = vmatmul.mubr.bf16.gmra.mrb[0].mxu0 %v405
      %v1075 = vpop.f32.mrb[0].mxu0
      %v1076 = vadd.f32 0.0, %v1075
      %v1077 = vpop.f32.mrb[0].mxu0
      %v1078 = vpop.f32.mrb[0].mxu0
      %v1079 = vadd.f32 0.0, %v1078
      %v1080 = vpop.f32.mrb[0].mxu0
      %1081 = vmatprep.mubr.bf16.mxu0 0
      %1082 = vmatmul.mubr.bf16.gmra.mrb[0].mxu0 %v408
      %v1083 = vpop.f32.mrb[0].mxu0
      %v1084 = vadd.f32 0.0, %v1083
      %v1085 = vpop.f32.mrb[0].mxu0
      %v1086 = vpop.f32.mrb[0].mxu0
      %v1087 = vadd.f32 0.0, %v1086
      %v1088 = vpop.f32.mrb[0].mxu0
      %1089 = vmatprep.mubr.bf16.mxu0 0
      %1090 = vmatmul.mubr.bf16.gmra.mrb[0].mxu0 %v411
      %v1091 = vpop.f32.mrb[0].mxu0
      %v1092 = vadd.f32 0.0, %v1091
      %v1093 = vpop.f32.mrb[0].mxu0
      %v1094 = vpop.f32.mrb[0].mxu0
      %v1095 = vadd.f32 0.0, %v1094
      %v1096 = vpop.f32.mrb[0].mxu0
      %1097 = vmatprep.mubr.bf16.mxu0 0
      %1098 = vmatmul.mubr.bf16.gmra.mrb[0].mxu0 %v414
      %v1099 = vpop.f32.mrb[0].mxu0
      %v1100 = vadd.f32 0.0, %v1099
      %v1101 = vpop.f32.mrb[0].mxu0
      %v1102 = vpop.f32.mrb[0].mxu0
      %v1103 = vadd.f32 0.0, %v1102
      %v1104 = vpop.f32.mrb[0].mxu0
      %1105 = vdwg.mxu0
      %v1106 = vld [vmem:[%s581] sm:$0xff]
      %v1107 = vld [vmem:[%s581 + $0x8] sm:$0xff]
      %v1108 = vld [vmem:[%s581 + $0x18] sm:$0xff]
      %v1109 = vld [vmem:[%s581 + $0x20] sm:$0xff]
      %v1110 = vld [vmem:[%s581 + $0x30] sm:$0xff]
      %v1111 = vld [vmem:[%s581 + $0x38] sm:$0xff]
      %v1112 = vld [vmem:[%s581 + $0x48] sm:$0xff]
      %v1113 = vld [vmem:[%s581 + $0x50] sm:$0xff]
      %v1114 = vld [vmem:[%s581 + $0x60] sm:$0xff]
      %v1115 = vld [vmem:[%s581 + $0x68] sm:$0xff]
      %v1116 = vld [vmem:[%s581 + $0x78] sm:$0xff]
      %v1117 = vld [vmem:[%s581 + $0x80] sm:$0xff]
      %v1118 = vld [vmem:[%s581 + $0x90] sm:$0xff]
      %v1119 = vld [vmem:[%s581 + $0x98] sm:$0xff]
      %v1120 = vld [vmem:[%s581 + $0xa8] sm:$0xff]
      %v1121 = vld [vmem:[%s581 + $0xb0] sm:$0xff]
      %v1122 = vld [vmem:[%s581 + $0xc0] sm:$0xff]
      %v1123 = vld [vmem:[%s581 + $0xc8] sm:$0xff]
      %v1124 = vld [vmem:[%s581 + $0xd8] sm:$0xff]
      %v1125 = vld [vmem:[%s581 + $0xe0] sm:$0xff]
      %v1126 = vld [vmem:[%s581 + $0xf0] sm:$0xff]
      %v1127 = vld [vmem:[%s581 + $0xf8] sm:$0xff]
      %v1128 = vld [vmem:[%s581 + $0x108] sm:$0xff]
      %v1129 = vld [vmem:[%s581 + $0x110] sm:$0xff]
      %v1130 = vld [vmem:[%s581 + $0x120] sm:$0xff]
      %v1131 = vld [vmem:[%s581 + $0x128] sm:$0xff]
      %v1132 = vld [vmem:[%s581 + $0x138] sm:$0xff]
      %v1133 = vld [vmem:[%s581 + $0x140] sm:$0xff]
      %v1134 = vld [vmem:[%s581 + $0x150] sm:$0xff]
      %v1135 = vld [vmem:[%s581 + $0x158] sm:$0xff]
      %v1136 = vld [vmem:[%s581 + $0x168] sm:$0xff]
      %v1137 = vld [vmem:[%s581 + $0x170] sm:$0xff]
      %v1138 = vadd.f32 %v1106, %v980
      %v1139 = vadd.f32 %v1107, %v983
      %v1140 = vadd.f32 %v1108, %v988
      %v1141 = vadd.f32 %v1109, %v991
      %v1142 = vadd.f32 %v1110, %v996
      %v1143 = vadd.f32 %v1111, %v999
      %v1144 = vadd.f32 %v1112, %v1004
      %v1145 = vadd.f32 %v1113, %v1007
      %v1146 = vadd.f32 %v1114, %v1012
      %v1147 = vadd.f32 %v1115, %v1015
      %v1148 = vadd.f32 %v1116, %v1020
      %v1149 = vadd.f32 %v1117, %v1023
      %v1150 = vadd.f32 %v1118, %v1028
      %v1151 = vadd.f32 %v1119, %v1031
      %v1152 = vadd.f32 %v1120, %v1036
      %v1153 = vadd.f32 %v1121, %v1039
      %v1154 = vadd.f32 %v1122, %v1044
      %v1155 = vadd.f32 %v1123, %v1047
      %v1156 = vadd.f32 %v1124, %v1052
      %v1157 = vadd.f32 %v1125, %v1055
      %v1158 = vadd.f32 %v1126, %v1060
      %v1159 = vadd.f32 %v1127, %v1063
      %v1160 = vadd.f32 %v1128, %v1068
      %v1161 = vadd.f32 %v1129, %v1071
      %v1162 = vadd.f32 %v1130, %v1076
      %v1163 = vadd.f32 %v1131, %v1079
      %v1164 = vadd.f32 %v1132, %v1084
      %v1165 = vadd.f32 %v1133, %v1087
      %v1166 = vadd.f32 %v1134, %v1092
      %v1167 = vadd.f32 %v1135, %v1095
      %v1168 = vadd.f32 %v1136, %v1100
      %v1169 = vadd.f32 %v1137, %v1103
      %1170 = vst.msk [vmem:[%s581] sm:$0xff] %vm199, %v1138
      %1171 = vst.msk [vmem:[%s581 + $0x8] sm:$0xff] %vm199, %v1139
      %1172 = vst.msk [vmem:[%s581 + $0x18] sm:$0xff] %vm199, %v1140
      %1173 = vst.msk [vmem:[%s581 + $0x20] sm:$0xff] %vm199, %v1141
      %1174 = vst.msk [vmem:[%s581 + $0x30] sm:$0xff] %vm199, %v1142
      %1175 = vst.msk [vmem:[%s581 + $0x38] sm:$0xff] %vm199, %v1143
      %1176 = vst.msk [vmem:[%s581 + $0x48] sm:$0xff] %vm199, %v1144
      %1177 = vst.msk [vmem:[%s581 + $0x50] sm:$0xff] %vm199, %v1145
      %1178 = vst.msk [vmem:[%s581 + $0x60] sm:$0xff] %vm199, %v1146
      %1179 = vst.msk [vmem:[%s581 + $0x68] sm:$0xff] %vm199, %v1147
      %1180 = vst.msk [vmem:[%s581 + $0x78] sm:$0xff] %vm199, %v1148
      %1181 = vst.msk [vmem:[%s581 + $0x80] sm:$0xff] %vm199, %v1149
      %1182 = vst.msk [vmem:[%s581 + $0x90] sm:$0xff] %vm199, %v1150
      %1183 = vst.msk [vmem:[%s581 + $0x98] sm:$0xff] %vm199, %v1151
      %1184 = vst.msk [vmem:[%s581 + $0xa8] sm:$0xff] %vm199, %v1152
      %1185 = vst.msk [vmem:[%s581 + $0xb0] sm:$0xff] %vm199, %v1153
      %1186 = vst.msk [vmem:[%s581 + $0xc0] sm:$0xff] %vm199, %v1154
      %1187 = vst.msk [vmem:[%s581 + $0xc8] sm:$0xff] %vm199, %v1155
      %1188 = vst.msk [vmem:[%s581 + $0xd8] sm:$0xff] %vm199, %v1156
      %1189 = vst.msk [vmem:[%s581 + $0xe0] sm:$0xff] %vm199, %v1157
      %1190 = vst.msk [vmem:[%s581 + $0xf0] sm:$0xff] %vm199, %v1158
      %1191 = vst.msk [vmem:[%s581 + $0xf8] sm:$0xff] %vm199, %v1159
      %1192 = vst.msk [vmem:[%s581 + $0x108] sm:$0xff] %vm199, %v1160
      %1193 = vst.msk [vmem:[%s581 + $0x110] sm:$0xff] %vm199, %v1161
      %1194 = vst.msk [vmem:[%s581 + $0x120] sm:$0xff] %vm199, %v1162
      %1195 = vst.msk [vmem:[%s581 + $0x128] sm:$0xff] %vm199, %v1163
      %1196 = vst.msk [vmem:[%s581 + $0x138] sm:$0xff] %vm199, %v1164
      %1197 = vst.msk [vmem:[%s581 + $0x140] sm:$0xff] %vm199, %v1165
      %1198 = vst.msk [vmem:[%s581 + $0x150] sm:$0xff] %vm199, %v1166
      %1199 = vst.msk [vmem:[%s581 + $0x158] sm:$0xff] %vm199, %v1167
      %1200 = vst.msk [vmem:[%s581 + $0x168] sm:$0xff] %vm199, %v1168
      %1201 = vst.msk [vmem:[%s581 + $0x170] sm:$0xff] %vm199, %v1169
      %s1202 = scalar_lea.vmem %s1, 6
      %v1203 = vld [vmem:[%s1202] sm:$0x3]
      %v1205 = vsel %vm416, %v1203, 0
      %1207 = vmatprep.subr.bf16.mxu0 0
      %1208 = vmatpush1.bf16.msra.mxu0 %v1205
      %1209 = vmatprep.subr.bf16.mxu0 0
      %1210 = vmatpush1.bf16.msra.mxu0 0
      %1211 = vmatprep.subr.bf16.mxu0 0
      %1212 = vmatpush1.bf16.msra.mxu0 0
      %1213 = vmatprep.subr.bf16.mxu0 0
      %1214 = vmatpush1.bf16.msra.mxu0 0
      %1215 = vmatprep.subr.bf16.mxu0 0
      %1216 = vmatpush1.bf16.msra.mxu0 0
      %1217 = vmatprep.subr.bf16.mxu0 0
      %1218 = vmatpush1.bf16.msra.mxu0 0
      %1219 = vmatprep.subr.bf16.mxu0 0
      %1220 = vmatpush1.bf16.msra.mxu0 0
      %1221 = vmatprep.subr.bf16.mxu0 0
      %1222 = vmatpush1.bf16.msra.mxu0 0
      %1223 = vmatprep.subr.bf16.mxu0 0
      %1224 = vmatpush1.bf16.msra.mxu0 0
      %1225 = vmatprep.subr.bf16.mxu0 0
      %1226 = vmatpush1.bf16.msra.mxu0 0
      %1227 = vmatprep.subr.bf16.mxu0 0
      %1228 = vmatpush1.bf16.msra.mxu0 0
      %1229 = vmatprep.subr.bf16.mxu0 0
      %1230 = vmatpush1.bf16.msra.mxu0 0
      %1231 = vmatprep.subr.bf16.mxu0 0
      %1232 = vmatpush1.bf16.msra.mxu0 0
      %1233 = vmatprep.subr.bf16.mxu0 0
      %1234 = vmatpush1.bf16.msra.mxu0 0
      %1235 = vmatprep.subr.bf16.mxu0 0
      %1236 = vmatpush1.bf16.msra.mxu0 0
      %1237 = vmatprep.subr.bf16.mxu0 0
      %1238 = vmatpush1.bf16.msra.mxu0 0
      %1239 = vmatprep.mubr.bf16.mxu0 0
      %1240 = vmatmul.mubr.bf16.gmra.mrb[0].mxu0 %v369
      %v1241 = vpop.f32.mrb[0].mxu0
      %v1242 = vadd.f32 0.0, %v1241
      %v1243 = vpop.f32.mrb[0].mxu0
      %v1244 = vpop.f32.mrb[0].mxu0
      %v1245 = vadd.f32 0.0, %v1244
      %v1246 = vpop.f32.mrb[0].mxu0
      %1247 = vmatprep.mubr.bf16.mxu0 0
      %1248 = vmatmul.mubr.bf16.gmra.mrb[0].mxu0 %v372
      %v1249 = vpop.f32.mrb[0].mxu0
      %v1250 = vadd.f32 0.0, %v1249
      %v1251 = vpop.f32.mrb[0].mxu0
      %v1252 = vpop.f32.mrb[0].mxu0
      %v1253 = vadd.f32 0.0, %v1252
      %v1254 = vpop.f32.mrb[0].mxu0
      %1255 = vmatprep.mubr.bf16.mxu0 0
      %1256 = vmatmul.mubr.bf16.gmra.mrb[0].mxu0 %v375
      %v1257 = vpop.f32.mrb[0].mxu0
      %v1258 = vadd.f32 0.0, %v1257
      %v1259 = vpop.f32.mrb[0].mxu0
      %v1260 = vpop.f32.mrb[0].mxu0
      %v1261 = vadd.f32 0.0, %v1260
      %v1262 = vpop.f32.mrb[0].mxu0
      %1263 = vmatprep.mubr.bf16.mxu0 0
      %1264 = vmatmul.mubr.bf16.gmra.mrb[0].mxu0 %v378
      %v1265 = vpop.f32.mrb[0].mxu0
      %v1266 = vadd.f32 0.0, %v1265
      %v1267 = vpop.f32.mrb[0].mxu0
      %v1268 = vpop.f32.mrb[0].mxu0
      %v1269 = vadd.f32 0.0, %v1268
      %v1270 = vpop.f32.mrb[0].mxu0
      %1271 = vmatprep.mubr.bf16.mxu0 0
      %1272 = vmatmul.mubr.bf16.gmra.mrb[0].mxu0 %v381
      %v1273 = vpop.f32.mrb[0].mxu0
      %v1274 = vadd.f32 0.0, %v1273
      %v1275 = vpop.f32.mrb[0].mxu0
      %v1276 = vpop.f32.mrb[0].mxu0
      %v1277 = vadd.f32 0.0, %v1276
      %v1278 = vpop.f32.mrb[0].mxu0
      %1279 = vmatprep.mubr.bf16.mxu0 0
      %1280 = vmatmul.mubr.bf16.gmra.mrb[0].mxu0 %v384
      %v1281 = vpop.f32.mrb[0].mxu0
      %v1282 = vadd.f32 0.0, %v1281
      %v1283 = vpop.f32.mrb[0].mxu0
      %v1284 = vpop.f32.mrb[0].mxu0
      %v1285 = vadd.f32 0.0, %v1284
      %v1286 = vpop.f32.mrb[0].mxu0
      %1287 = vmatprep.mubr.bf16.mxu0 0
      %1288 = vmatmul.mubr.bf16.gmra.mrb[0].mxu0 %v387
      %v1289 = vpop.f32.mrb[0].mxu0
      %v1290 = vadd.f32 0.0, %v1289
      %v1291 = vpop.f32.mrb[0].mxu0
      %v1292 = vpop.f32.mrb[0].mxu0
      %v1293 = vadd.f32 0.0, %v1292
      %v1294 = vpop.f32.mrb[0].mxu0
      %1295 = vmatprep.mubr.bf16.mxu0 0
      %1296 = vmatmul.mubr.bf16.gmra.mrb[0].mxu0 %v390
      %v1297 = vpop.f32.mrb[0].mxu0
      %v1298 = vadd.f32 0.0, %v1297
      %v1299 = vpop.f32.mrb[0].mxu0
      %v1300 = vpop.f32.mrb[0].mxu0
      %v1301 = vadd.f32 0.0, %v1300
      %v1302 = vpop.f32.mrb[0].mxu0
      %1303 = vmatprep.mubr.bf16.mxu0 0
      %1304 = vmatmul.mubr.bf16.gmra.mrb[0].mxu0 %v393
      %v1305 = vpop.f32.mrb[0].mxu0
      %v1306 = vadd.f32 0.0, %v1305
      %v1307 = vpop.f32.mrb[0].mxu0
      %v1308 = vpop.f32.mrb[0].mxu0
      %v1309 = vadd.f32 0.0, %v1308
      %v1310 = vpop.f32.mrb[0].mxu0
      %1311 = vmatprep.mubr.bf16.mxu0 0
      %1312 = vmatmul.mubr.bf16.gmra.mrb[0].mxu0 %v396
      %v1313 = vpop.f32.mrb[0].mxu0
      %v1314 = vadd.f32 0.0, %v1313
      %v1315 = vpop.f32.mrb[0].mxu0
      %v1316 = vpop.f32.mrb[0].mxu0
      %v1317 = vadd.f32 0.0, %v1316
      %v1318 = vpop.f32.mrb[0].mxu0
      %1319 = vmatprep.mubr.bf16.mxu0 0
      %1320 = vmatmul.mubr.bf16.gmra.mrb[0].mxu0 %v399
      %v1321 = vpop.f32.mrb[0].mxu0
      %v1322 = vadd.f32 0.0, %v1321
      %v1323 = vpop.f32.mrb[0].mxu0
      %v1324 = vpop.f32.mrb[0].mxu0
      %v1325 = vadd.f32 0.0, %v1324
      %v1326 = vpop.f32.mrb[0].mxu0
      %1327 = vmatprep.mubr.bf16.mxu0 0
      %1328 = vmatmul.mubr.bf16.gmra.mrb[0].mxu0 %v402
      %v1329 = vpop.f32.mrb[0].mxu0
      %v1330 = vadd.f32 0.0, %v1329
      %v1331 = vpop.f32.mrb[0].mxu0
      %v1332 = vpop.f32.mrb[0].mxu0
      %v1333 = vadd.f32 0.0, %v1332
      %v1334 = vpop.f32.mrb[0].mxu0
      %1335 = vmatprep.mubr.bf16.mxu0 0
      %1336 = vmatmul.mubr.bf16.gmra.mrb[0].mxu0 %v405
      %v1337 = vpop.f32.mrb[0].mxu0
      %v1338 = vadd.f32 0.0, %v1337
      %v1339 = vpop.f32.mrb[0].mxu0
      %v1340 = vpop.f32.mrb[0].mxu0
      %v1341 = vadd.f32 0.0, %v1340
      %v1342 = vpop.f32.mrb[0].mxu0
      %1343 = vmatprep.mubr.bf16.mxu0 0
      %1344 = vmatmul.mubr.bf16.gmra.mrb[0].mxu0 %v408
      %v1345 = vpop.f32.mrb[0].mxu0
      %v1346 = vadd.f32 0.0, %v1345
      %v1347 = vpop.f32.mrb[0].mxu0
      %v1348 = vpop.f32.mrb[0].mxu0
      %v1349 = vadd.f32 0.0, %v1348
      %v1350 = vpop.f32.mrb[0].mxu0
      %1351 = vmatprep.mubr.bf16.mxu0 0
      %1352 = vmatmul.mubr.bf16.gmra.mrb[0].mxu0 %v411
      %v1353 = vpop.f32.mrb[0].mxu0
      %v1354 = vadd.f32 0.0, %v1353
      %v1355 = vpop.f32.mrb[0].mxu0
      %v1356 = vpop.f32.mrb[0].mxu0
      %v1357 = vadd.f32 0.0, %v1356
      %v1358 = vpop.f32.mrb[0].mxu0
      %1359 = vmatprep.mubr.bf16.mxu0 0
      %1360 = vmatmul.mubr.bf16.gmra.mrb[0].mxu0 %v414
      %v1361 = vpop.f32.mrb[0].mxu0
      %v1362 = vadd.f32 0.0, %v1361
      %v1363 = vpop.f32.mrb[0].mxu0
      %v1364 = vpop.f32.mrb[0].mxu0
      %v1365 = vadd.f32 0.0, %v1364
      %v1366 = vpop.f32.mrb[0].mxu0
      %1367 = vdwg.mxu0
      %s1368 = scalar_lea.vmem [#allocation2], 24
      %v1369 = vld [vmem:[%s1368 + $0x2] sm:$0xff]
      %v1370 = vld [vmem:[%s1368 + $0xa] sm:$0xff]
      %v1371 = vld [vmem:[%s1368 + $0x1a] sm:$0xff]
      %v1372 = vld [vmem:[%s1368 + $0x22] sm:$0xff]
      %v1373 = vld [vmem:[%s1368 + $0x32] sm:$0xff]
      %v1374 = vld [vmem:[%s1368 + $0x3a] sm:$0xff]
      %v1375 = vld [vmem:[%s1368 + $0x4a] sm:$0xff]
      %v1376 = vld [vmem:[%s1368 + $0x52] sm:$0xff]
      %v1377 = vld [vmem:[%s1368 + $0x62] sm:$0xff]
      %v1378 = vld [vmem:[%s1368 + $0x6a] sm:$0xff]
      %v1379 = vld [vmem:[%s1368 + $0x7a] sm:$0xff]
      %v1380 = vld [vmem:[%s1368 + $0x82] sm:$0xff]
      %v1381 = vld [vmem:[%s1368 + $0x92] sm:$0xff]
      %v1382 = vld [vmem:[%s1368 + $0x9a] sm:$0xff]
      %v1383 = vld [vmem:[%s1368 + $0xaa] sm:$0xff]
      %v1384 = vld [vmem:[%s1368 + $0xb2] sm:$0xff]
      %v1385 = vld [vmem:[%s1368 + $0xc2] sm:$0xff]
      %v1386 = vld [vmem:[%s1368 + $0xca] sm:$0xff]
      %v1387 = vld [vmem:[%s1368 + $0xda] sm:$0xff]
      %v1388 = vld [vmem:[%s1368 + $0xe2] sm:$0xff]
      %v1389 = vld [vmem:[%s1368 + $0xf2] sm:$0xff]
      %v1390 = vld [vmem:[%s1368 + $0xfa] sm:$0xff]
      %v1391 = vld [vmem:[%s1368 + $0x10a] sm:$0xff]
      %v1392 = vld [vmem:[%s1368 + $0x112] sm:$0xff]
      %v1393 = vld [vmem:[%s1368 + $0x122] sm:$0xff]
      %v1394 = vld [vmem:[%s1368 + $0x12a] sm:$0xff]
      %v1395 = vld [vmem:[%s1368 + $0x13a] sm:$0xff]
      %v1396 = vld [vmem:[%s1368 + $0x142] sm:$0xff]
      %v1397 = vld [vmem:[%s1368 + $0x152] sm:$0xff]
      %v1398 = vld [vmem:[%s1368 + $0x15a] sm:$0xff]
      %v1399 = vld [vmem:[%s1368 + $0x16a] sm:$0xff]
      %v1400 = vld [vmem:[%s1368 + $0x172] sm:$0xff]
      %v1401 = vadd.f32 %v1369, %v1242
      %v1402 = vadd.f32 %v1370, %v1245
      %v1403 = vadd.f32 %v1371, %v1250
      %v1404 = vadd.f32 %v1372, %v1253
      %v1405 = vadd.f32 %v1373, %v1258
      %v1406 = vadd.f32 %v1374, %v1261
      %v1407 = vadd.f32 %v1375, %v1266
      %v1408 = vadd.f32 %v1376, %v1269
      %v1409 = vadd.f32 %v1377, %v1274
      %v1410 = vadd.f32 %v1378, %v1277
      %v1411 = vadd.f32 %v1379, %v1282
      %v1412 = vadd.f32 %v1380, %v1285
      %v1413 = vadd.f32 %v1381, %v1290
      %v1414 = vadd.f32 %v1382, %v1293
      %v1415 = vadd.f32 %v1383, %v1298
      %v1416 = vadd.f32 %v1384, %v1301
      %v1417 = vadd.f32 %v1385, %v1306
      %v1418 = vadd.f32 %v1386, %v1309
      %v1419 = vadd.f32 %v1387, %v1314
      %v1420 = vadd.f32 %v1388, %v1317
      %v1421 = vadd.f32 %v1389, %v1322
      %v1422 = vadd.f32 %v1390, %v1325
      %v1423 = vadd.f32 %v1391, %v1330
      %v1424 = vadd.f32 %v1392, %v1333
      %v1425 = vadd.f32 %v1393, %v1338
      %v1426 = vadd.f32 %v1394, %v1341
      %v1427 = vadd.f32 %v1395, %v1346
      %v1428 = vadd.f32 %v1396, %v1349
      %v1429 = vadd.f32 %v1397, %v1354
      %v1430 = vadd.f32 %v1398, %v1357
      %v1431 = vadd.f32 %v1399, %v1362
      %v1432 = vadd.f32 %v1400, %v1365
      %1433 = vst.msk [vmem:[%s1368 + $0x2] sm:$0xff] %vm199, %v1401
      %1434 = vst.msk [vmem:[%s1368 + $0xa] sm:$0xff] %vm199, %v1402
      %1435 = vst.msk [vmem:[%s1368 + $0x1a] sm:$0xff] %vm199, %v1403
      %1436 = vst.msk [vmem:[%s1368 + $0x22] sm:$0xff] %vm199, %v1404
      %1437 = vst.msk [vmem:[%s1368 + $0x32] sm:$0xff] %vm199, %v1405
      %1438 = vst.msk [vmem:[%s1368 + $0x3a] sm:$0xff] %vm199, %v1406
      %1439 = vst.msk [vmem:[%s1368 + $0x4a] sm:$0xff] %vm199, %v1407
      %1440 = vst.msk [vmem:[%s1368 + $0x52] sm:$0xff] %vm199, %v1408
      %1441 = vst.msk [vmem:[%s1368 + $0x62] sm:$0xff] %vm199, %v1409
      %1442 = vst.msk [vmem:[%s1368 + $0x6a] sm:$0xff] %vm199, %v1410
      %1443 = vst.msk [vmem:[%s1368 + $0x7a] sm:$0xff] %vm199, %v1411
      %1444 = vst.msk [vmem:[%s1368 + $0x82] sm:$0xff] %vm199, %v1412
      %1445 = vst.msk [vmem:[%s1368 + $0x92] sm:$0xff] %vm199, %v1413
      %1446 = vst.msk [vmem:[%s1368 + $0x9a] sm:$0xff] %vm199, %v1414
      %1447 = vst.msk [vmem:[%s1368 + $0xaa] sm:$0xff] %vm199, %v1415
      %1448 = vst.msk [vmem:[%s1368 + $0xb2] sm:$0xff] %vm199, %v1416
      %1449 = vst.msk [vmem:[%s1368 + $0xc2] sm:$0xff] %vm199, %v1417
      %1450 = vst.msk [vmem:[%s1368 + $0xca] sm:$0xff] %vm199, %v1418
      %1451 = vst.msk [vmem:[%s1368 + $0xda] sm:$0xff] %vm199, %v1419
      %1452 = vst.msk [vmem:[%s1368 + $0xe2] sm:$0xff] %vm199, %v1420
      %1453 = vst.msk [vmem:[%s1368 + $0xf2] sm:$0xff] %vm199, %v1421
      %1454 = vst.msk [vmem:[%s1368 + $0xfa] sm:$0xff] %vm199, %v1422
      %1455 = vst.msk [vmem:[%s1368 + $0x10a] sm:$0xff] %vm199, %v1423
      %1456 = vst.msk [vmem:[%s1368 + $0x112] sm:$0xff] %vm199, %v1424
      %1457 = vst.msk [vmem:[%s1368 + $0x122] sm:$0xff] %vm199, %v1425
      %1458 = vst.msk [vmem:[%s1368 + $0x12a] sm:$0xff] %vm199, %v1426
      %1459 = vst.msk [vmem:[%s1368 + $0x13a] sm:$0xff] %vm199, %v1427
      %1460 = vst.msk [vmem:[%s1368 + $0x142] sm:$0xff] %vm199, %v1428
      %1461 = vst.msk [vmem:[%s1368 + $0x152] sm:$0xff] %vm199, %v1429
      %1462 = vst.msk [vmem:[%s1368 + $0x15a] sm:$0xff] %vm199, %v1430
      %1463 = vst.msk [vmem:[%s1368 + $0x16a] sm:$0xff] %vm199, %v1431
      %1464 = vst.msk [vmem:[%s1368 + $0x172] sm:$0xff] %vm199, %v1432
      %s1465 = scalar_lea.vmem %s1, 8
      %v1466 = vld [vmem:[%s1465] sm:$0x3]
      %v1468 = vsel %vm416, %v1466, 0
      %1470 = vmatprep.subr.bf16.mxu0 0
      %1471 = vmatpush1.bf16.msra.mxu0 %v1468
      %1472 = vmatprep.subr.bf16.mxu0 0
      %1473 = vmatpush1.bf16.msra.mxu0 0
      %1474 = vmatprep.subr.bf16.mxu0 0
      %1475 = vmatpush1.bf16.msra.mxu0 0
      %1476 = vmatprep.subr.bf16.mxu0 0
      %1477 = vmatpush1.bf16.msra.mxu0 0
      %1478 = vmatprep.subr.bf16.mxu0 0
      %1479 = vmatpush1.bf16.msra.mxu0 0
      %1480 = vmatprep.subr.bf16.mxu0 0
      %1481 = vmatpush1.bf16.msra.mxu0 0
      %1482 = vmatprep.subr.bf16.mxu0 0
      %1483 = vmatpush1.bf16.msra.mxu0 0
      %1484 = vmatprep.subr.bf16.mxu0 0
      %1485 = vmatpush1.bf16.msra.mxu0 0
      %1486 = vmatprep.subr.bf16.mxu0 0
      %1487 = vmatpush1.bf16.msra.mxu0 0
      %1488 = vmatprep.subr.bf16.mxu0 0
      %1489 = vmatpush1.bf16.msra.mxu0 0
      %1490 = vmatprep.subr.bf16.mxu0 0
      %1491 = vmatpush1.bf16.msra.mxu0 0
      %1492 = vmatprep.subr.bf16.mxu0 0
      %1493 = vmatpush1.bf16.msra.mxu0 0
      %1494 = vmatprep.subr.bf16.mxu0 0
      %1495 = vmatpush1.bf16.msra.mxu0 0
      %1496 = vmatprep.subr.bf16.mxu0 0
      %1497 = vmatpush1.bf16.msra.mxu0 0
      %1498 = vmatprep.subr.bf16.mxu0 0
      %1499 = vmatpush1.bf16.msra.mxu0 0
      %1500 = vmatprep.subr.bf16.mxu0 0
      %1501 = vmatpush1.bf16.msra.mxu0 0
      %1502 = vmatprep.mubr.bf16.mxu0 0
      %1503 = vmatmul.mubr.bf16.gmra.mrb[0].mxu0 %v369
      %v1504 = vpop.f32.mrb[0].mxu0
      %v1505 = vadd.f32 0.0, %v1504
      %v1506 = vpop.f32.mrb[0].mxu0
      %v1507 = vpop.f32.mrb[0].mxu0
      %v1508 = vadd.f32 0.0, %v1507
      %v1509 = vpop.f32.mrb[0].mxu0
      %1510 = vmatprep.mubr.bf16.mxu0 0
      %1511 = vmatmul.mubr.bf16.gmra.mrb[0].mxu0 %v372
      %v1512 = vpop.f32.mrb[0].mxu0
      %v1513 = vadd.f32 0.0, %v1512
      %v1514 = vpop.f32.mrb[0].mxu0
      %v1515 = vpop.f32.mrb[0].mxu0
      %v1516 = vadd.f32 0.0, %v1515
      %v1517 = vpop.f32.mrb[0].mxu0
      %1518 = vmatprep.mubr.bf16.mxu0 0
      %1519 = vmatmul.mubr.bf16.gmra.mrb[0].mxu0 %v375
      %v1520 = vpop.f32.mrb[0].mxu0
      %v1521 = vadd.f32 0.0, %v1520
      %v1522 = vpop.f32.mrb[0].mxu0
      %v1523 = vpop.f32.mrb[0].mxu0
      %v1524 = vadd.f32 0.0, %v1523
      %v1525 = vpop.f32.mrb[0].mxu0
      %1526 = vmatprep.mubr.bf16.mxu0 0
      %1527 = vmatmul.mubr.bf16.gmra.mrb[0].mxu0 %v378
      %v1528 = vpop.f32.mrb[0].mxu0
      %v1529 = vadd.f32 0.0, %v1528
      %v1530 = vpop.f32.mrb[0].mxu0
      %v1531 = vpop.f32.mrb[0].mxu0
      %v1532 = vadd.f32 0.0, %v1531
      %v1533 = vpop.f32.mrb[0].mxu0
      %1534 = vmatprep.mubr.bf16.mxu0 0
      %1535 = vmatmul.mubr.bf16.gmra.mrb[0].mxu0 %v381
      %v1536 = vpop.f32.mrb[0].mxu0
      %v1537 = vadd.f32 0.0, %v1536
      %v1538 = vpop.f32.mrb[0].mxu0
      %v1539 = vpop.f32.mrb[0].mxu0
      %v1540 = vadd.f32 0.0, %v1539
      %v1541 = vpop.f32.mrb[0].mxu0
      %1542 = vmatprep.mubr.bf16.mxu0 0
      %1543 = vmatmul.mubr.bf16.gmra.mrb[0].mxu0 %v384
      %v1544 = vpop.f32.mrb[0].mxu0
      %v1545 = vadd.f32 0.0, %v1544
      %v1546 = vpop.f32.mrb[0].mxu0
      %v1547 = vpop.f32.mrb[0].mxu0
      %v1548 = vadd.f32 0.0, %v1547
      %v1549 = vpop.f32.mrb[0].mxu0
      %1550 = vmatprep.mubr.bf16.mxu0 0
      %1551 = vmatmul.mubr.bf16.gmra.mrb[0].mxu0 %v387
      %v1552 = vpop.f32.mrb[0].mxu0
      %v1553 = vadd.f32 0.0, %v1552
      %v1554 = vpop.f32.mrb[0].mxu0
      %v1555 = vpop.f32.mrb[0].mxu0
      %v1556 = vadd.f32 0.0, %v1555
      %v1557 = vpop.f32.mrb[0].mxu0
      %1558 = vmatprep.mubr.bf16.mxu0 0
      %1559 = vmatmul.mubr.bf16.gmra.mrb[0].mxu0 %v390
      %v1560 = vpop.f32.mrb[0].mxu0
      %v1561 = vadd.f32 0.0, %v1560
      %v1562 = vpop.f32.mrb[0].mxu0
      %v1563 = vpop.f32.mrb[0].mxu0
      %v1564 = vadd.f32 0.0, %v1563
      %v1565 = vpop.f32.mrb[0].mxu0
      %1566 = vmatprep.mubr.bf16.mxu0 0
      %1567 = vmatmul.mubr.bf16.gmra.mrb[0].mxu0 %v393
      %v1568 = vpop.f32.mrb[0].mxu0
      %v1569 = vadd.f32 0.0, %v1568
      %v1570 = vpop.f32.mrb[0].mxu0
      %v1571 = vpop.f32.mrb[0].mxu0
      %v1572 = vadd.f32 0.0, %v1571
      %v1573 = vpop.f32.mrb[0].mxu0
      %1574 = vmatprep.mubr.bf16.mxu0 0
      %1575 = vmatmul.mubr.bf16.gmra.mrb[0].mxu0 %v396
      %v1576 = vpop.f32.mrb[0].mxu0
      %v1577 = vadd.f32 0.0, %v1576
      %v1578 = vpop.f32.mrb[0].mxu0
      %v1579 = vpop.f32.mrb[0].mxu0
      %v1580 = vadd.f32 0.0, %v1579
      %v1581 = vpop.f32.mrb[0].mxu0
      %1582 = vmatprep.mubr.bf16.mxu0 0
      %1583 = vmatmul.mubr.bf16.gmra.mrb[0].mxu0 %v399
      %v1584 = vpop.f32.mrb[0].mxu0
      %v1585 = vadd.f32 0.0, %v1584
      %v1586 = vpop.f32.mrb[0].mxu0
      %v1587 = vpop.f32.mrb[0].mxu0
      %v1588 = vadd.f32 0.0, %v1587
      %v1589 = vpop.f32.mrb[0].mxu0
      %1590 = vmatprep.mubr.bf16.mxu0 0
      %1591 = vmatmul.mubr.bf16.gmra.mrb[0].mxu0 %v402
      %v1592 = vpop.f32.mrb[0].mxu0
      %v1593 = vadd.f32 0.0, %v1592
      %v1594 = vpop.f32.mrb[0].mxu0
      %v1595 = vpop.f32.mrb[0].mxu0
      %v1596 = vadd.f32 0.0, %v1595
      %v1597 = vpop.f32.mrb[0].mxu0
      %1598 = vmatprep.mubr.bf16.mxu0 0
      %1599 = vmatmul.mubr.bf16.gmra.mrb[0].mxu0 %v405
      %v1600 = vpop.f32.mrb[0].mxu0
      %v1601 = vadd.f32 0.0, %v1600
      %v1602 = vpop.f32.mrb[0].mxu0
      %v1603 = vpop.f32.mrb[0].mxu0
      %v1604 = vadd.f32 0.0, %v1603
      %v1605 = vpop.f32.mrb[0].mxu0
      %1606 = vmatprep.mubr.bf16.mxu0 0
      %1607 = vmatmul.mubr.bf16.gmra.mrb[0].mxu0 %v408
      %v1608 = vpop.f32.mrb[0].mxu0
      %v1609 = vadd.f32 0.0, %v1608
      %v1610 = vpop.f32.mrb[0].mxu0
      %v1611 = vpop.f32.mrb[0].mxu0
      %v1612 = vadd.f32 0.0, %v1611
      %v1613 = vpop.f32.mrb[0].mxu0
      %1614 = vmatprep.mubr.bf16.mxu0 0
      %1615 = vmatmul.mubr.bf16.gmra.mrb[0].mxu0 %v411
      %v1616 = vpop.f32.mrb[0].mxu0
      %v1617 = vadd.f32 0.0, %v1616
      %v1618 = vpop.f32.mrb[0].mxu0
      %v1619 = vpop.f32.mrb[0].mxu0
      %v1620 = vadd.f32 0.0, %v1619
      %v1621 = vpop.f32.mrb[0].mxu0
      %1622 = vmatprep.mubr.bf16.mxu0 0
      %1623 = vmatmul.mubr.bf16.gmra.mrb[0].mxu0 %v414
      %v1624 = vpop.f32.mrb[0].mxu0
      %v1625 = vadd.f32 0.0, %v1624
      %v1626 = vpop.f32.mrb[0].mxu0
      %v1627 = vpop.f32.mrb[0].mxu0
      %v1628 = vadd.f32 0.0, %v1627
      %v1629 = vpop.f32.mrb[0].mxu0
      %1630 = vdwg.mxu0
      %v1631 = vld [vmem:[%s1368 + $0x1] sm:$0xff]
      %v1632 = vld [vmem:[%s1368 + $0x9] sm:$0xff]
      %v1633 = vld [vmem:[%s1368 + $0x19] sm:$0xff]
      %v1634 = vld [vmem:[%s1368 + $0x21] sm:$0xff]
      %v1635 = vld [vmem:[%s1368 + $0x31] sm:$0xff]
      %v1636 = vld [vmem:[%s1368 + $0x39] sm:$0xff]
      %v1637 = vld [vmem:[%s1368 + $0x49] sm:$0xff]
      %v1638 = vld [vmem:[%s1368 + $0x51] sm:$0xff]
      %v1639 = vld [vmem:[%s1368 + $0x61] sm:$0xff]
      %v1640 = vld [vmem:[%s1368 + $0x69] sm:$0xff]
      %v1641 = vld [vmem:[%s1368 + $0x79] sm:$0xff]
      %v1642 = vld [vmem:[%s1368 + $0x81] sm:$0xff]
      %v1643 = vld [vmem:[%s1368 + $0x91] sm:$0xff]
      %v1644 = vld [vmem:[%s1368 + $0x99] sm:$0xff]
      %v1645 = vld [vmem:[%s1368 + $0xa9] sm:$0xff]
      %v1646 = vld [vmem:[%s1368 + $0xb1] sm:$0xff]
      %v1647 = vld [vmem:[%s1368 + $0xc1] sm:$0xff]
      %v1648 = vld [vmem:[%s1368 + $0xc9] sm:$0xff]
      %v1649 = vld [vmem:[%s1368 + $0xd9] sm:$0xff]
      %v1650 = vld [vmem:[%s1368 + $0xe1] sm:$0xff]
      %v1651 = vld [vmem:[%s1368 + $0xf1] sm:$0xff]
      %v1652 = vld [vmem:[%s1368 + $0xf9] sm:$0xff]
      %v1653 = vld [vmem:[%s1368 + $0x109] sm:$0xff]
      %v1654 = vld [vmem:[%s1368 + $0x111] sm:$0xff]
      %v1655 = vld [vmem:[%s1368 + $0x121] sm:$0xff]
      %v1656 = vld [vmem:[%s1368 + $0x129] sm:$0xff]
      %v1657 = vld [vmem:[%s1368 + $0x139] sm:$0xff]
      %v1658 = vld [vmem:[%s1368 + $0x141] sm:$0xff]
      %v1659 = vld [vmem:[%s1368 + $0x151] sm:$0xff]
      %v1660 = vld [vmem:[%s1368 + $0x159] sm:$0xff]
      %v1661 = vld [vmem:[%s1368 + $0x169] sm:$0xff]
      %v1662 = vld [vmem:[%s1368 + $0x171] sm:$0xff]
      %v1663 = vadd.f32 %v1631, %v1505
      %v1664 = vadd.f32 %v1632, %v1508
      %v1665 = vadd.f32 %v1633, %v1513
      %v1666 = vadd.f32 %v1634, %v1516
      %v1667 = vadd.f32 %v1635, %v1521
      %v1668 = vadd.f32 %v1636, %v1524
      %v1669 = vadd.f32 %v1637, %v1529
      %v1670 = vadd.f32 %v1638, %v1532
      %v1671 = vadd.f32 %v1639, %v1537
      %v1672 = vadd.f32 %v1640, %v1540
      %v1673 = vadd.f32 %v1641, %v1545
      %v1674 = vadd.f32 %v1642, %v1548
      %v1675 = vadd.f32 %v1643, %v1553
      %v1676 = vadd.f32 %v1644, %v1556
      %v1677 = vadd.f32 %v1645, %v1561
      %v1678 = vadd.f32 %v1646, %v1564
      %v1679 = vadd.f32 %v1647, %v1569
      %v1680 = vadd.f32 %v1648, %v1572
      %v1681 = vadd.f32 %v1649, %v1577
      %v1682 = vadd.f32 %v1650, %v1580
      %v1683 = vadd.f32 %v1651, %v1585
      %v1684 = vadd.f32 %v1652, %v1588
      %v1685 = vadd.f32 %v1653, %v1593
      %v1686 = vadd.f32 %v1654, %v1596
      %v1687 = vadd.f32 %v1655, %v1601
      %v1688 = vadd.f32 %v1656, %v1604
      %v1689 = vadd.f32 %v1657, %v1609
      %v1690 = vadd.f32 %v1658, %v1612
      %v1691 = vadd.f32 %v1659, %v1617
      %v1692 = vadd.f32 %v1660, %v1620
      %v1693 = vadd.f32 %v1661, %v1625
      %v1694 = vadd.f32 %v1662, %v1628
      %1695 = vst.msk [vmem:[%s1368 + $0x1] sm:$0xff] %vm199, %v1663
      %1696 = vst.msk [vmem:[%s1368 + $0x9] sm:$0xff] %vm199, %v1664
      %1697 = vst.msk [vmem:[%s1368 + $0x19] sm:$0xff] %vm199, %v1665
      %1698 = vst.msk [vmem:[%s1368 + $0x21] sm:$0xff] %vm199, %v1666
      %1699 = vst.msk [vmem:[%s1368 + $0x31] sm:$0xff] %vm199, %v1667
      %1700 = vst.msk [vmem:[%s1368 + $0x39] sm:$0xff] %vm199, %v1668
      %1701 = vst.msk [vmem:[%s1368 + $0x49] sm:$0xff] %vm199, %v1669
      %1702 = vst.msk [vmem:[%s1368 + $0x51] sm:$0xff] %vm199, %v1670
      %1703 = vst.msk [vmem:[%s1368 + $0x61] sm:$0xff] %vm199, %v1671
      %1704 = vst.msk [vmem:[%s1368 + $0x69] sm:$0xff] %vm199, %v1672
      %1705 = vst.msk [vmem:[%s1368 + $0x79] sm:$0xff] %vm199, %v1673
      %1706 = vst.msk [vmem:[%s1368 + $0x81] sm:$0xff] %vm199, %v1674
      %1707 = vst.msk [vmem:[%s1368 + $0x91] sm:$0xff] %vm199, %v1675
      %1708 = vst.msk [vmem:[%s1368 + $0x99] sm:$0xff] %vm199, %v1676
      %1709 = vst.msk [vmem:[%s1368 + $0xa9] sm:$0xff] %vm199, %v1677
      %1710 = vst.msk [vmem:[%s1368 + $0xb1] sm:$0xff] %vm199, %v1678
      %1711 = vst.msk [vmem:[%s1368 + $0xc1] sm:$0xff] %vm199, %v1679
      %1712 = vst.msk [vmem:[%s1368 + $0xc9] sm:$0xff] %vm199, %v1680
      %1713 = vst.msk [vmem:[%s1368 + $0xd9] sm:$0xff] %vm199, %v1681
      %1714 = vst.msk [vmem:[%s1368 + $0xe1] sm:$0xff] %vm199, %v1682
      %1715 = vst.msk [vmem:[%s1368 + $0xf1] sm:$0xff] %vm199, %v1683
      %1716 = vst.msk [vmem:[%s1368 + $0xf9] sm:$0xff] %vm199, %v1684
      %1717 = vst.msk [vmem:[%s1368 + $0x109] sm:$0xff] %vm199, %v1685
      %1718 = vst.msk [vmem:[%s1368 + $0x111] sm:$0xff] %vm199, %v1686
      %1719 = vst.msk [vmem:[%s1368 + $0x121] sm:$0xff] %vm199, %v1687
      %1720 = vst.msk [vmem:[%s1368 + $0x129] sm:$0xff] %vm199, %v1688
      %1721 = vst.msk [vmem:[%s1368 + $0x139] sm:$0xff] %vm199, %v1689
      %1722 = vst.msk [vmem:[%s1368 + $0x141] sm:$0xff] %vm199, %v1690
      %1723 = vst.msk [vmem:[%s1368 + $0x151] sm:$0xff] %vm199, %v1691
      %1724 = vst.msk [vmem:[%s1368 + $0x159] sm:$0xff] %vm199, %v1692
      %1725 = vst.msk [vmem:[%s1368 + $0x169] sm:$0xff] %vm199, %v1693
      %1726 = vst.msk [vmem:[%s1368 + $0x171] sm:$0xff] %vm199, %v1694
      %s1727 = scalar_lea.vmem %s1, 10
      %v1728 = vld [vmem:[%s1727] sm:$0x3]
      %v1730 = vsel %vm416, %v1728, 0
      %1732 = vmatprep.subr.bf16.mxu0 0
      %1733 = vmatpush1.bf16.msra.mxu0 %v1730
      %1734 = vmatprep.subr.bf16.mxu0 0
      %1735 = vmatpush1.bf16.msra.mxu0 0
      %1736 = vmatprep.subr.bf16.mxu0 0
      %1737 = vmatpush1.bf16.msra.mxu0 0
      %1738 = vmatprep.subr.bf16.mxu0 0
      %1739 = vmatpush1.bf16.msra.mxu0 0
      %1740 = vmatprep.subr.bf16.mxu0 0
      %1741 = vmatpush1.bf16.msra.mxu0 0
      %1742 = vmatprep.subr.bf16.mxu0 0
      %1743 = vmatpush1.bf16.msra.mxu0 0
      %1744 = vmatprep.subr.bf16.mxu0 0
      %1745 = vmatpush1.bf16.msra.mxu0 0
      %1746 = vmatprep.subr.bf16.mxu0 0
      %1747 = vmatpush1.bf16.msra.mxu0 0
      %1748 = vmatprep.subr.bf16.mxu0 0
      %1749 = vmatpush1.bf16.msra.mxu0 0
      %1750 = vmatprep.subr.bf16.mxu0 0
      %1751 = vmatpush1.bf16.msra.mxu0 0
      %1752 = vmatprep.subr.bf16.mxu0 0
      %1753 = vmatpush1.bf16.msra.mxu0 0
      %1754 = vmatprep.subr.bf16.mxu0 0
      %1755 = vmatpush1.bf16.msra.mxu0 0
      %1756 = vmatprep.subr.bf16.mxu0 0
      %1757 = vmatpush1.bf16.msra.mxu0 0
      %1758 = vmatprep.subr.bf16.mxu0 0
      %1759 = vmatpush1.bf16.msra.mxu0 0
      %1760 = vmatprep.subr.bf16.mxu0 0
      %1761 = vmatpush1.bf16.msra.mxu0 0
      %1762 = vmatprep.subr.bf16.mxu0 0
      %1763 = vmatpush1.bf16.msra.mxu0 0
      %1764 = vmatprep.mubr.bf16.mxu0 0
      %1765 = vmatmul.mubr.bf16.gmra.mrb[0].mxu0 %v369
      %v1766 = vpop.f32.mrb[0].mxu0
      %v1767 = vadd.f32 0.0, %v1766
      %v1768 = vpop.f32.mrb[0].mxu0
      %v1769 = vpop.f32.mrb[0].mxu0
      %v1770 = vadd.f32 0.0, %v1769
      %v1771 = vpop.f32.mrb[0].mxu0
      %1772 = vmatprep.mubr.bf16.mxu0 0
      %1773 = vmatmul.mubr.bf16.gmra.mrb[0].mxu0 %v372
      %v1774 = vpop.f32.mrb[0].mxu0
      %v1775 = vadd.f32 0.0, %v1774
      %v1776 = vpop.f32.mrb[0].mxu0
      %v1777 = vpop.f32.mrb[0].mxu0
      %v1778 = vadd.f32 0.0, %v1777
      %v1779 = vpop.f32.mrb[0].mxu0
      %1780 = vmatprep.mubr.bf16.mxu0 0
      %1781 = vmatmul.mubr.bf16.gmra.mrb[0].mxu0 %v375
      %v1782 = vpop.f32.mrb[0].mxu0
      %v1783 = vadd.f32 0.0, %v1782
      %v1784 = vpop.f32.mrb[0].mxu0
      %v1785 = vpop.f32.mrb[0].mxu0
      %v1786 = vadd.f32 0.0, %v1785
      %v1787 = vpop.f32.mrb[0].mxu0
      %1788 = vmatprep.mubr.bf16.mxu0 0
      %1789 = vmatmul.mubr.bf16.gmra.mrb[0].mxu0 %v378
      %v1790 = vpop.f32.mrb[0].mxu0
      %v1791 = vadd.f32 0.0, %v1790
      %v1792 = vpop.f32.mrb[0].mxu0
      %v1793 = vpop.f32.mrb[0].mxu0
      %v1794 = vadd.f32 0.0, %v1793
      %v1795 = vpop.f32.mrb[0].mxu0
      %1796 = vmatprep.mubr.bf16.mxu0 0
      %1797 = vmatmul.mubr.bf16.gmra.mrb[0].mxu0 %v381
      %v1798 = vpop.f32.mrb[0].mxu0
      %v1799 = vadd.f32 0.0, %v1798
      %v1800 = vpop.f32.mrb[0].mxu0
      %v1801 = vpop.f32.mrb[0].mxu0
      %v1802 = vadd.f32 0.0, %v1801
      %v1803 = vpop.f32.mrb[0].mxu0
      %1804 = vmatprep.mubr.bf16.mxu0 0
      %1805 = vmatmul.mubr.bf16.gmra.mrb[0].mxu0 %v384
      %v1806 = vpop.f32.mrb[0].mxu0
      %v1807 = vadd.f32 0.0, %v1806
      %v1808 = vpop.f32.mrb[0].mxu0
      %v1809 = vpop.f32.mrb[0].mxu0
      %v1810 = vadd.f32 0.0, %v1809
      %v1811 = vpop.f32.mrb[0].mxu0
      %1812 = vmatprep.mubr.bf16.mxu0 0
      %1813 = vmatmul.mubr.bf16.gmra.mrb[0].mxu0 %v387
      %v1814 = vpop.f32.mrb[0].mxu0
      %v1815 = vadd.f32 0.0, %v1814
      %v1816 = vpop.f32.mrb[0].mxu0
      %v1817 = vpop.f32.mrb[0].mxu0
      %v1818 = vadd.f32 0.0, %v1817
      %v1819 = vpop.f32.mrb[0].mxu0
      %1820 = vmatprep.mubr.bf16.mxu0 0
      %1821 = vmatmul.mubr.bf16.gmra.mrb[0].mxu0 %v390
      %v1822 = vpop.f32.mrb[0].mxu0
      %v1823 = vadd.f32 0.0, %v1822
      %v1824 = vpop.f32.mrb[0].mxu0
      %v1825 = vpop.f32.mrb[0].mxu0
      %v1826 = vadd.f32 0.0, %v1825
      %v1827 = vpop.f32.mrb[0].mxu0
      %1828 = vmatprep.mubr.bf16.mxu0 0
      %1829 = vmatmul.mubr.bf16.gmra.mrb[0].mxu0 %v393
      %v1830 = vpop.f32.mrb[0].mxu0
      %v1831 = vadd.f32 0.0, %v1830
      %v1832 = vpop.f32.mrb[0].mxu0
      %v1833 = vpop.f32.mrb[0].mxu0
      %v1834 = vadd.f32 0.0, %v1833
      %v1835 = vpop.f32.mrb[0].mxu0
      %1836 = vmatprep.mubr.bf16.mxu0 0
      %1837 = vmatmul.mubr.bf16.gmra.mrb[0].mxu0 %v396
      %v1838 = vpop.f32.mrb[0].mxu0
      %v1839 = vadd.f32 0.0, %v1838
      %v1840 = vpop.f32.mrb[0].mxu0
      %v1841 = vpop.f32.mrb[0].mxu0
      %v1842 = vadd.f32 0.0, %v1841
      %v1843 = vpop.f32.mrb[0].mxu0
      %1844 = vmatprep.mubr.bf16.mxu0 0
      %1845 = vmatmul.mubr.bf16.gmra.mrb[0].mxu0 %v399
      %v1846 = vpop.f32.mrb[0].mxu0
      %v1847 = vadd.f32 0.0, %v1846
      %v1848 = vpop.f32.mrb[0].mxu0
      %v1849 = vpop.f32.mrb[0].mxu0
      %v1850 = vadd.f32 0.0, %v1849
      %v1851 = vpop.f32.mrb[0].mxu0
      %1852 = vmatprep.mubr.bf16.mxu0 0
      %1853 = vmatmul.mubr.bf16.gmra.mrb[0].mxu0 %v402
      %v1854 = vpop.f32.mrb[0].mxu0
      %v1855 = vadd.f32 0.0, %v1854
      %v1856 = vpop.f32.mrb[0].mxu0
      %v1857 = vpop.f32.mrb[0].mxu0
      %v1858 = vadd.f32 0.0, %v1857
      %v1859 = vpop.f32.mrb[0].mxu0
      %1860 = vmatprep.mubr.bf16.mxu0 0
      %1861 = vmatmul.mubr.bf16.gmra.mrb[0].mxu0 %v405
      %v1862 = vpop.f32.mrb[0].mxu0
      %v1863 = vadd.f32 0.0, %v1862
      %v1864 = vpop.f32.mrb[0].mxu0
      %v1865 = vpop.f32.mrb[0].mxu0
      %v1866 = vadd.f32 0.0, %v1865
      %v1867 = vpop.f32.mrb[0].mxu0
      %1868 = vmatprep.mubr.bf16.mxu0 0
      %1869 = vmatmul.mubr.bf16.gmra.mrb[0].mxu0 %v408
      %v1870 = vpop.f32.mrb[0].mxu0
      %v1871 = vadd.f32 0.0, %v1870
      %v1872 = vpop.f32.mrb[0].mxu0
      %v1873 = vpop.f32.mrb[0].mxu0
      %v1874 = vadd.f32 0.0, %v1873
      %v1875 = vpop.f32.mrb[0].mxu0
      %1876 = vmatprep.mubr.bf16.mxu0 0
      %1877 = vmatmul.mubr.bf16.gmra.mrb[0].mxu0 %v411
      %v1878 = vpop.f32.mrb[0].mxu0
      %v1879 = vadd.f32 0.0, %v1878
      %v1880 = vpop.f32.mrb[0].mxu0
      %v1881 = vpop.f32.mrb[0].mxu0
      %v1882 = vadd.f32 0.0, %v1881
      %v1883 = vpop.f32.mrb[0].mxu0
      %1884 = vmatprep.mubr.bf16.mxu0 0
      %1885 = vmatmul.mubr.bf16.gmra.mrb[0].mxu0 %v414
      %v1886 = vpop.f32.mrb[0].mxu0
      %v1887 = vadd.f32 0.0, %v1886
      %v1888 = vpop.f32.mrb[0].mxu0
      %v1889 = vpop.f32.mrb[0].mxu0
      %v1890 = vadd.f32 0.0, %v1889
      %v1891 = vpop.f32.mrb[0].mxu0
      %1892 = vdwg.mxu0
      %v1893 = vld [vmem:[%s1368] sm:$0xff]
      %v1894 = vld [vmem:[%s1368 + $0x8] sm:$0xff]
      %v1895 = vld [vmem:[%s1368 + $0x18] sm:$0xff]
      %v1896 = vld [vmem:[%s1368 + $0x20] sm:$0xff]
      %v1897 = vld [vmem:[%s1368 + $0x30] sm:$0xff]
      %v1898 = vld [vmem:[%s1368 + $0x38] sm:$0xff]
      %v1899 = vld [vmem:[%s1368 + $0x48] sm:$0xff]
      %v1900 = vld [vmem:[%s1368 + $0x50] sm:$0xff]
      %v1901 = vld [vmem:[%s1368 + $0x60] sm:$0xff]
      %v1902 = vld [vmem:[%s1368 + $0x68] sm:$0xff]
      %v1903 = vld [vmem:[%s1368 + $0x78] sm:$0xff]
      %v1904 = vld [vmem:[%s1368 + $0x80] sm:$0xff]
      %v1905 = vld [vmem:[%s1368 + $0x90] sm:$0xff]
      %v1906 = vld [vmem:[%s1368 + $0x98] sm:$0xff]
      %v1907 = vld [vmem:[%s1368 + $0xa8] sm:$0xff]
      %v1908 = vld [vmem:[%s1368 + $0xb0] sm:$0xff]
      %v1909 = vld [vmem:[%s1368 + $0xc0] sm:$0xff]
      %v1910 = vld [vmem:[%s1368 + $0xc8] sm:$0xff]
      %v1911 = vld [vmem:[%s1368 + $0xd8] sm:$0xff]
      %v1912 = vld [vmem:[%s1368 + $0xe0] sm:$0xff]
      %v1913 = vld [vmem:[%s1368 + $0xf0] sm:$0xff]
      %v1914 = vld [vmem:[%s1368 + $0xf8] sm:$0xff]
      %v1915 = vld [vmem:[%s1368 + $0x108] sm:$0xff]
      %v1916 = vld [vmem:[%s1368 + $0x110] sm:$0xff]
      %v1917 = vld [vmem:[%s1368 + $0x120] sm:$0xff]
      %v1918 = vld [vmem:[%s1368 + $0x128] sm:$0xff]
      %v1919 = vld [vmem:[%s1368 + $0x138] sm:$0xff]
      %v1920 = vld [vmem:[%s1368 + $0x140] sm:$0xff]
      %v1921 = vld [vmem:[%s1368 + $0x150] sm:$0xff]
      %v1922 = vld [vmem:[%s1368 + $0x158] sm:$0xff]
      %v1923 = vld [vmem:[%s1368 + $0x168] sm:$0xff]
      %v1924 = vld [vmem:[%s1368 + $0x170] sm:$0xff]
      %v1925 = vadd.f32 %v1893, %v1767
      %v1926 = vadd.f32 %v1894, %v1770
      %v1927 = vadd.f32 %v1895, %v1775
      %v1928 = vadd.f32 %v1896, %v1778
      %v1929 = vadd.f32 %v1897, %v1783
      %v1930 = vadd.f32 %v1898, %v1786
      %v1931 = vadd.f32 %v1899, %v1791
      %v1932 = vadd.f32 %v1900, %v1794
      %v1933 = vadd.f32 %v1901, %v1799
      %v1934 = vadd.f32 %v1902, %v1802
      %v1935 = vadd.f32 %v1903, %v1807
      %v1936 = vadd.f32 %v1904, %v1810
      %v1937 = vadd.f32 %v1905, %v1815
      %v1938 = vadd.f32 %v1906, %v1818
      %v1939 = vadd.f32 %v1907, %v1823
      %v1940 = vadd.f32 %v1908, %v1826
      %v1941 = vadd.f32 %v1909, %v1831
      %v1942 = vadd.f32 %v1910, %v1834
      %v1943 = vadd.f32 %v1911, %v1839
      %v1944 = vadd.f32 %v1912, %v1842
      %v1945 = vadd.f32 %v1913, %v1847
      %v1946 = vadd.f32 %v1914, %v1850
      %v1947 = vadd.f32 %v1915, %v1855
      %v1948 = vadd.f32 %v1916, %v1858
      %v1949 = vadd.f32 %v1917, %v1863
      %v1950 = vadd.f32 %v1918, %v1866
      %v1951 = vadd.f32 %v1919, %v1871
      %v1952 = vadd.f32 %v1920, %v1874
      %v1953 = vadd.f32 %v1921, %v1879
      %v1954 = vadd.f32 %v1922, %v1882
      %v1955 = vadd.f32 %v1923, %v1887
      %v1956 = vadd.f32 %v1924, %v1890
      %1957 = vst.msk [vmem:[%s1368] sm:$0xff] %vm199, %v1925
      %1958 = vst.msk [vmem:[%s1368 + $0x8] sm:$0xff] %vm199, %v1926
      %1959 = vst.msk [vmem:[%s1368 + $0x18] sm:$0xff] %vm199, %v1927
      %1960 = vst.msk [vmem:[%s1368 + $0x20] sm:$0xff] %vm199, %v1928
      %1961 = vst.msk [vmem:[%s1368 + $0x30] sm:$0xff] %vm199, %v1929
      %1962 = vst.msk [vmem:[%s1368 + $0x38] sm:$0xff] %vm199, %v1930
      %1963 = vst.msk [vmem:[%s1368 + $0x48] sm:$0xff] %vm199, %v1931
      %1964 = vst.msk [vmem:[%s1368 + $0x50] sm:$0xff] %vm199, %v1932
      %1965 = vst.msk [vmem:[%s1368 + $0x60] sm:$0xff] %vm199, %v1933
      %1966 = vst.msk [vmem:[%s1368 + $0x68] sm:$0xff] %vm199, %v1934
      %1967 = vst.msk [vmem:[%s1368 + $0x78] sm:$0xff] %vm199, %v1935
      %1968 = vst.msk [vmem:[%s1368 + $0x80] sm:$0xff] %vm199, %v1936
      %1969 = vst.msk [vmem:[%s1368 + $0x90] sm:$0xff] %vm199, %v1937
      %1970 = vst.msk [vmem:[%s1368 + $0x98] sm:$0xff] %vm199, %v1938
      %1971 = vst.msk [vmem:[%s1368 + $0xa8] sm:$0xff] %vm199, %v1939
      %1972 = vst.msk [vmem:[%s1368 + $0xb0] sm:$0xff] %vm199, %v1940
      %1973 = vst.msk [vmem:[%s1368 + $0xc0] sm:$0xff] %vm199, %v1941
      %1974 = vst.msk [vmem:[%s1368 + $0xc8] sm:$0xff] %vm199, %v1942
      %1975 = vst.msk [vmem:[%s1368 + $0xd8] sm:$0xff] %vm199, %v1943
      %1976 = vst.msk [vmem:[%s1368 + $0xe0] sm:$0xff] %vm199, %v1944
      %1977 = vst.msk [vmem:[%s1368 + $0xf0] sm:$0xff] %vm199, %v1945
      %1978 = vst.msk [vmem:[%s1368 + $0xf8] sm:$0xff] %vm199, %v1946
      %1979 = vst.msk [vmem:[%s1368 + $0x108] sm:$0xff] %vm199, %v1947
      %1980 = vst.msk [vmem:[%s1368 + $0x110] sm:$0xff] %vm199, %v1948
      %1981 = vst.msk [vmem:[%s1368 + $0x120] sm:$0xff] %vm199, %v1949
      %1982 = vst.msk [vmem:[%s1368 + $0x128] sm:$0xff] %vm199, %v1950
      %1983 = vst.msk [vmem:[%s1368 + $0x138] sm:$0xff] %vm199, %v1951
      %1984 = vst.msk [vmem:[%s1368 + $0x140] sm:$0xff] %vm199, %v1952
      %1985 = vst.msk [vmem:[%s1368 + $0x150] sm:$0xff] %vm199, %v1953
      %1986 = vst.msk [vmem:[%s1368 + $0x158] sm:$0xff] %vm199, %v1954
      %1987 = vst.msk [vmem:[%s1368 + $0x168] sm:$0xff] %vm199, %v1955
      %1988 = vst.msk [vmem:[%s1368 + $0x170] sm:$0xff] %vm199, %v1956
      %s1989 = scalar_lea.vmem %s1, 12
      %v1990 = vld [vmem:[%s1989] sm:$0x3]
      %v1992 = vsel %vm416, %v1990, 0
      %1994 = vmatprep.subr.bf16.mxu0 0
      %1995 = vmatpush1.bf16.msra.mxu0 %v1992
      %1996 = vmatprep.subr.bf16.mxu0 0
      %1997 = vmatpush1.bf16.msra.mxu0 0
      %1998 = vmatprep.subr.bf16.mxu0 0
      %1999 = vmatpush1.bf16.msra.mxu0 0
      %2000 = vmatprep.subr.bf16.mxu0 0
      %2001 = vmatpush1.bf16.msra.mxu0 0
      %2002 = vmatprep.subr.bf16.mxu0 0
      %2003 = vmatpush1.bf16.msra.mxu0 0
      %2004 = vmatprep.subr.bf16.mxu0 0
      %2005 = vmatpush1.bf16.msra.mxu0 0
      %2006 = vmatprep.subr.bf16.mxu0 0
      %2007 = vmatpush1.bf16.msra.mxu0 0
      %2008 = vmatprep.subr.bf16.mxu0 0
      %2009 = vmatpush1.bf16.msra.mxu0 0
      %2010 = vmatprep.subr.bf16.mxu0 0
      %2011 = vmatpush1.bf16.msra.mxu0 0
      %2012 = vmatprep.subr.bf16.mxu0 0
      %2013 = vmatpush1.bf16.msra.mxu0 0
      %2014 = vmatprep.subr.bf16.mxu0 0
      %2015 = vmatpush1.bf16.msra.mxu0 0
      %2016 = vmatprep.subr.bf16.mxu0 0
      %2017 = vmatpush1.bf16.msra.mxu0 0
      %2018 = vmatprep.subr.bf16.mxu0 0
      %2019 = vmatpush1.bf16.msra.mxu0 0
      %2020 = vmatprep.subr.bf16.mxu0 0
      %2021 = vmatpush1.bf16.msra.mxu0 0
      %2022 = vmatprep.subr.bf16.mxu0 0
      %2023 = vmatpush1.bf16.msra.mxu0 0
      %2024 = vmatprep.subr.bf16.mxu0 0
      %2025 = vmatpush1.bf16.msra.mxu0 0
      %2026 = vmatprep.mubr.bf16.mxu0 0
      %2027 = vmatmul.mubr.bf16.gmra.mrb[0].mxu0 %v369
      %v2028 = vpop.f32.mrb[0].mxu0
      %v2029 = vadd.f32 0.0, %v2028
      %v2030 = vpop.f32.mrb[0].mxu0
      %v2031 = vpop.f32.mrb[0].mxu0
      %v2032 = vadd.f32 0.0, %v2031
      %v2033 = vpop.f32.mrb[0].mxu0
      %2034 = vmatprep.mubr.bf16.mxu0 0
      %2035 = vmatmul.mubr.bf16.gmra.mrb[0].mxu0 %v372
      %v2036 = vpop.f32.mrb[0].mxu0
      %v2037 = vadd.f32 0.0, %v2036
      %v2038 = vpop.f32.mrb[0].mxu0
      %v2039 = vpop.f32.mrb[0].mxu0
      %v2040 = vadd.f32 0.0, %v2039
      %v2041 = vpop.f32.mrb[0].mxu0
      %2042 = vmatprep.mubr.bf16.mxu0 0
      %2043 = vmatmul.mubr.bf16.gmra.mrb[0].mxu0 %v375
      %v2044 = vpop.f32.mrb[0].mxu0
      %v2045 = vadd.f32 0.0, %v2044
      %v2046 = vpop.f32.mrb[0].mxu0
      %v2047 = vpop.f32.mrb[0].mxu0
      %v2048 = vadd.f32 0.0, %v2047
      %v2049 = vpop.f32.mrb[0].mxu0
      %2050 = vmatprep.mubr.bf16.mxu0 0
      %2051 = vmatmul.mubr.bf16.gmra.mrb[0].mxu0 %v378
      %v2052 = vpop.f32.mrb[0].mxu0
      %v2053 = vadd.f32 0.0, %v2052
      %v2054 = vpop.f32.mrb[0].mxu0
      %v2055 = vpop.f32.mrb[0].mxu0
      %v2056 = vadd.f32 0.0, %v2055
      %v2057 = vpop.f32.mrb[0].mxu0
      %2058 = vmatprep.mubr.bf16.mxu0 0
      %2059 = vmatmul.mubr.bf16.gmra.mrb[0].mxu0 %v381
      %v2060 = vpop.f32.mrb[0].mxu0
      %v2061 = vadd.f32 0.0, %v2060
      %v2062 = vpop.f32.mrb[0].mxu0
      %v2063 = vpop.f32.mrb[0].mxu0
      %v2064 = vadd.f32 0.0, %v2063
      %v2065 = vpop.f32.mrb[0].mxu0
      %2066 = vmatprep.mubr.bf16.mxu0 0
      %2067 = vmatmul.mubr.bf16.gmra.mrb[0].mxu0 %v384
      %v2068 = vpop.f32.mrb[0].mxu0
      %v2069 = vadd.f32 0.0, %v2068
      %v2070 = vpop.f32.mrb[0].mxu0
      %v2071 = vpop.f32.mrb[0].mxu0
      %v2072 = vadd.f32 0.0, %v2071
      %v2073 = vpop.f32.mrb[0].mxu0
      %2074 = vmatprep.mubr.bf16.mxu0 0
      %2075 = vmatmul.mubr.bf16.gmra.mrb[0].mxu0 %v387
      %v2076 = vpop.f32.mrb[0].mxu0
      %v2077 = vadd.f32 0.0, %v2076
      %v2078 = vpop.f32.mrb[0].mxu0
      %v2079 = vpop.f32.mrb[0].mxu0
      %v2080 = vadd.f32 0.0, %v2079
      %v2081 = vpop.f32.mrb[0].mxu0
      %2082 = vmatprep.mubr.bf16.mxu0 0
      %2083 = vmatmul.mubr.bf16.gmra.mrb[0].mxu0 %v390
      %v2084 = vpop.f32.mrb[0].mxu0
      %v2085 = vadd.f32 0.0, %v2084
      %v2086 = vpop.f32.mrb[0].mxu0
      %v2087 = vpop.f32.mrb[0].mxu0
      %v2088 = vadd.f32 0.0, %v2087
      %v2089 = vpop.f32.mrb[0].mxu0
      %2090 = vmatprep.mubr.bf16.mxu0 0
      %2091 = vmatmul.mubr.bf16.gmra.mrb[0].mxu0 %v393
      %v2092 = vpop.f32.mrb[0].mxu0
      %v2093 = vadd.f32 0.0, %v2092
      %v2094 = vpop.f32.mrb[0].mxu0
      %v2095 = vpop.f32.mrb[0].mxu0
      %v2096 = vadd.f32 0.0, %v2095
      %v2097 = vpop.f32.mrb[0].mxu0
      %2098 = vmatprep.mubr.bf16.mxu0 0
      %2099 = vmatmul.mubr.bf16.gmra.mrb[0].mxu0 %v396
      %v2100 = vpop.f32.mrb[0].mxu0
      %v2101 = vadd.f32 0.0, %v2100
      %v2102 = vpop.f32.mrb[0].mxu0
      %v2103 = vpop.f32.mrb[0].mxu0
      %v2104 = vadd.f32 0.0, %v2103
      %v2105 = vpop.f32.mrb[0].mxu0
      %2106 = vmatprep.mubr.bf16.mxu0 0
      %2107 = vmatmul.mubr.bf16.gmra.mrb[0].mxu0 %v399
      %v2108 = vpop.f32.mrb[0].mxu0
      %v2109 = vadd.f32 0.0, %v2108
      %v2110 = vpop.f32.mrb[0].mxu0
      %v2111 = vpop.f32.mrb[0].mxu0
      %v2112 = vadd.f32 0.0, %v2111
      %v2113 = vpop.f32.mrb[0].mxu0
      %2114 = vmatprep.mubr.bf16.mxu0 0
      %2115 = vmatmul.mubr.bf16.gmra.mrb[0].mxu0 %v402
      %v2116 = vpop.f32.mrb[0].mxu0
      %v2117 = vadd.f32 0.0, %v2116
      %v2118 = vpop.f32.mrb[0].mxu0
      %v2119 = vpop.f32.mrb[0].mxu0
      %v2120 = vadd.f32 0.0, %v2119
      %v2121 = vpop.f32.mrb[0].mxu0
      %2122 = vmatprep.mubr.bf16.mxu0 0
      %2123 = vmatmul.mubr.bf16.gmra.mrb[0].mxu0 %v405
      %v2124 = vpop.f32.mrb[0].mxu0
      %v2125 = vadd.f32 0.0, %v2124
      %v2126 = vpop.f32.mrb[0].mxu0
      %v2127 = vpop.f32.mrb[0].mxu0
      %v2128 = vadd.f32 0.0, %v2127
      %v2129 = vpop.f32.mrb[0].mxu0
      %2130 = vmatprep.mubr.bf16.mxu0 0
      %2131 = vmatmul.mubr.bf16.gmra.mrb[0].mxu0 %v408
      %v2132 = vpop.f32.mrb[0].mxu0
      %v2133 = vadd.f32 0.0, %v2132
      %v2134 = vpop.f32.mrb[0].mxu0
      %v2135 = vpop.f32.mrb[0].mxu0
      %v2136 = vadd.f32 0.0, %v2135
      %v2137 = vpop.f32.mrb[0].mxu0
      %2138 = vmatprep.mubr.bf16.mxu0 0
      %2139 = vmatmul.mubr.bf16.gmra.mrb[0].mxu0 %v411
      %v2140 = vpop.f32.mrb[0].mxu0
      %v2141 = vadd.f32 0.0, %v2140
      %v2142 = vpop.f32.mrb[0].mxu0
      %v2143 = vpop.f32.mrb[0].mxu0
      %v2144 = vadd.f32 0.0, %v2143
      %v2145 = vpop.f32.mrb[0].mxu0
      %2146 = vmatprep.mubr.bf16.mxu0 0
      %2147 = vmatmul.mubr.bf16.gmra.mrb[0].mxu0 %v414
      %v2148 = vpop.f32.mrb[0].mxu0
      %v2149 = vadd.f32 0.0, %v2148
      %v2150 = vpop.f32.mrb[0].mxu0
      %v2151 = vpop.f32.mrb[0].mxu0
      %v2152 = vadd.f32 0.0, %v2151
      %v2153 = vpop.f32.mrb[0].mxu0
      %2154 = vdwg.mxu0
      %v2155 = vld [vmem:[#allocation2 + $0x2] sm:$0xff]
      %v2156 = vld [vmem:[#allocation2 + $0xa] sm:$0xff]
      %v2157 = vld [vmem:[#allocation2 + $0x1a] sm:$0xff]
      %v2158 = vld [vmem:[#allocation2 + $0x22] sm:$0xff]
      %v2159 = vld [vmem:[#allocation2 + $0x32] sm:$0xff]
      %v2160 = vld [vmem:[#allocation2 + $0x3a] sm:$0xff]
      %v2161 = vld [vmem:[#allocation2 + $0x4a] sm:$0xff]
      %v2162 = vld [vmem:[#allocation2 + $0x52] sm:$0xff]
      %v2163 = vld [vmem:[#allocation2 + $0x62] sm:$0xff]
      %v2164 = vld [vmem:[#allocation2 + $0x6a] sm:$0xff]
      %v2165 = vld [vmem:[#allocation2 + $0x7a] sm:$0xff]
      %v2166 = vld [vmem:[#allocation2 + $0x82] sm:$0xff]
      %v2167 = vld [vmem:[#allocation2 + $0x92] sm:$0xff]
      %v2168 = vld [vmem:[#allocation2 + $0x9a] sm:$0xff]
      %v2169 = vld [vmem:[#allocation2 + $0xaa] sm:$0xff]
      %v2170 = vld [vmem:[#allocation2 + $0xb2] sm:$0xff]
      %v2171 = vld [vmem:[#allocation2 + $0xc2] sm:$0xff]
      %v2172 = vld [vmem:[#allocation2 + $0xca] sm:$0xff]
      %v2173 = vld [vmem:[#allocation2 + $0xda] sm:$0xff]
      %v2174 = vld [vmem:[#allocation2 + $0xe2] sm:$0xff]
      %v2175 = vld [vmem:[#allocation2 + $0xf2] sm:$0xff]
      %v2176 = vld [vmem:[#allocation2 + $0xfa] sm:$0xff]
      %v2177 = vld [vmem:[#allocation2 + $0x10a] sm:$0xff]
      %v2178 = vld [vmem:[#allocation2 + $0x112] sm:$0xff]
      %v2179 = vld [vmem:[#allocation2 + $0x122] sm:$0xff]
      %v2180 = vld [vmem:[#allocation2 + $0x12a] sm:$0xff]
      %v2181 = vld [vmem:[#allocation2 + $0x13a] sm:$0xff]
      %v2182 = vld [vmem:[#allocation2 + $0x142] sm:$0xff]
      %v2183 = vld [vmem:[#allocation2 + $0x152] sm:$0xff]
      %v2184 = vld [vmem:[#allocation2 + $0x15a] sm:$0xff]
      %v2185 = vld [vmem:[#allocation2 + $0x16a] sm:$0xff]
      %v2186 = vld [vmem:[#allocation2 + $0x172] sm:$0xff]
      %v2187 = vadd.f32 %v2155, %v2029
      %v2188 = vadd.f32 %v2156, %v2032
      %v2189 = vadd.f32 %v2157, %v2037
      %v2190 = vadd.f32 %v2158, %v2040
      %v2191 = vadd.f32 %v2159, %v2045
      %v2192 = vadd.f32 %v2160, %v2048
      %v2193 = vadd.f32 %v2161, %v2053
      %v2194 = vadd.f32 %v2162, %v2056
      %v2195 = vadd.f32 %v2163, %v2061
      %v2196 = vadd.f32 %v2164, %v2064
      %v2197 = vadd.f32 %v2165, %v2069
      %v2198 = vadd.f32 %v2166, %v2072
      %v2199 = vadd.f32 %v2167, %v2077
      %v2200 = vadd.f32 %v2168, %v2080
      %v2201 = vadd.f32 %v2169, %v2085
      %v2202 = vadd.f32 %v2170, %v2088
      %v2203 = vadd.f32 %v2171, %v2093
      %v2204 = vadd.f32 %v2172, %v2096
      %v2205 = vadd.f32 %v2173, %v2101
      %v2206 = vadd.f32 %v2174, %v2104
      %v2207 = vadd.f32 %v2175, %v2109
      %v2208 = vadd.f32 %v2176, %v2112
      %v2209 = vadd.f32 %v2177, %v2117
      %v2210 = vadd.f32 %v2178, %v2120
      %v2211 = vadd.f32 %v2179, %v2125
      %v2212 = vadd.f32 %v2180, %v2128
      %v2213 = vadd.f32 %v2181, %v2133
      %v2214 = vadd.f32 %v2182, %v2136
      %v2215 = vadd.f32 %v2183, %v2141
      %v2216 = vadd.f32 %v2184, %v2144
      %v2217 = vadd.f32 %v2185, %v2149
      %v2218 = vadd.f32 %v2186, %v2152
      %2219 = vst.msk [vmem:[#allocation2 + $0x2] sm:$0xff] %vm199, %v2187
      %2220 = vst.msk [vmem:[#allocation2 + $0xa] sm:$0xff] %vm199, %v2188
      %2221 = vst.msk [vmem:[#allocation2 + $0x1a] sm:$0xff] %vm199, %v2189
      %2222 = vst.msk [vmem:[#allocation2 + $0x22] sm:$0xff] %vm199, %v2190
      %2223 = vst.msk [vmem:[#allocation2 + $0x32] sm:$0xff] %vm199, %v2191
      %2224 = vst.msk [vmem:[#allocation2 + $0x3a] sm:$0xff] %vm199, %v2192
      %2225 = vst.msk [vmem:[#allocation2 + $0x4a] sm:$0xff] %vm199, %v2193
      %2226 = vst.msk [vmem:[#allocation2 + $0x52] sm:$0xff] %vm199, %v2194
      %2227 = vst.msk [vmem:[#allocation2 + $0x62] sm:$0xff] %vm199, %v2195
      %2228 = vst.msk [vmem:[#allocation2 + $0x6a] sm:$0xff] %vm199, %v2196
      %2229 = vst.msk [vmem:[#allocation2 + $0x7a] sm:$0xff] %vm199, %v2197
      %2230 = vst.msk [vmem:[#allocation2 + $0x82] sm:$0xff] %vm199, %v2198
      %2231 = vst.msk [vmem:[#allocation2 + $0x92] sm:$0xff] %vm199, %v2199
      %2232 = vst.msk [vmem:[#allocation2 + $0x9a] sm:$0xff] %vm199, %v2200
      %2233 = vst.msk [vmem:[#allocation2 + $0xaa] sm:$0xff] %vm199, %v2201
      %2234 = vst.msk [vmem:[#allocation2 + $0xb2] sm:$0xff] %vm199, %v2202
      %2235 = vst.msk [vmem:[#allocation2 + $0xc2] sm:$0xff] %vm199, %v2203
      %2236 = vst.msk [vmem:[#allocation2 + $0xca] sm:$0xff] %vm199, %v2204
      %2237 = vst.msk [vmem:[#allocation2 + $0xda] sm:$0xff] %vm199, %v2205
      %2238 = vst.msk [vmem:[#allocation2 + $0xe2] sm:$0xff] %vm199, %v2206
      %2239 = vst.msk [vmem:[#allocation2 + $0xf2] sm:$0xff] %vm199, %v2207
      %2240 = vst.msk [vmem:[#allocation2 + $0xfa] sm:$0xff] %vm199, %v2208
      %2241 = vst.msk [vmem:[#allocation2 + $0x10a] sm:$0xff] %vm199, %v2209
      %2242 = vst.msk [vmem:[#allocation2 + $0x112] sm:$0xff] %vm199, %v2210
      %2243 = vst.msk [vmem:[#allocation2 + $0x122] sm:$0xff] %vm199, %v2211
      %2244 = vst.msk [vmem:[#allocation2 + $0x12a] sm:$0xff] %vm199, %v2212
      %2245 = vst.msk [vmem:[#allocation2 + $0x13a] sm:$0xff] %vm199, %v2213
      %2246 = vst.msk [vmem:[#allocation2 + $0x142] sm:$0xff] %vm199, %v2214
      %2247 = vst.msk [vmem:[#allocation2 + $0x152] sm:$0xff] %vm199, %v2215
      %2248 = vst.msk [vmem:[#allocation2 + $0x15a] sm:$0xff] %vm199, %v2216
      %2249 = vst.msk [vmem:[#allocation2 + $0x16a] sm:$0xff] %vm199, %v2217
      %2250 = vst.msk [vmem:[#allocation2 + $0x172] sm:$0xff] %vm199, %v2218
      %s2251 = scalar_lea.vmem %s1, 14
      %v2252 = vld [vmem:[%s2251] sm:$0x3]
      %v2254 = vsel %vm416, %v2252, 0
      %2256 = vmatprep.subr.bf16.mxu0 0
      %2257 = vmatpush1.bf16.msra.mxu0 %v2254
      %2258 = vmatprep.subr.bf16.mxu0 0
      %2259 = vmatpush1.bf16.msra.mxu0 0
      %2260 = vmatprep.subr.bf16.mxu0 0
      %2261 = vmatpush1.bf16.msra.mxu0 0
      %2262 = vmatprep.subr.bf16.mxu0 0
      %2263 = vmatpush1.bf16.msra.mxu0 0
      %2264 = vmatprep.subr.bf16.mxu0 0
      %2265 = vmatpush1.bf16.msra.mxu0 0
      %2266 = vmatprep.subr.bf16.mxu0 0
      %2267 = vmatpush1.bf16.msra.mxu0 0
      %2268 = vmatprep.subr.bf16.mxu0 0
      %2269 = vmatpush1.bf16.msra.mxu0 0
      %2270 = vmatprep.subr.bf16.mxu0 0
      %2271 = vmatpush1.bf16.msra.mxu0 0
      %2272 = vmatprep.subr.bf16.mxu0 0
      %2273 = vmatpush1.bf16.msra.mxu0 0
      %2274 = vmatprep.subr.bf16.mxu0 0
      %2275 = vmatpush1.bf16.msra.mxu0 0
      %2276 = vmatprep.subr.bf16.mxu0 0
      %2277 = vmatpush1.bf16.msra.mxu0 0
      %2278 = vmatprep.subr.bf16.mxu0 0
      %2279 = vmatpush1.bf16.msra.mxu0 0
      %2280 = vmatprep.subr.bf16.mxu0 0
      %2281 = vmatpush1.bf16.msra.mxu0 0
      %2282 = vmatprep.subr.bf16.mxu0 0
      %2283 = vmatpush1.bf16.msra.mxu0 0
      %2284 = vmatprep.subr.bf16.mxu0 0
      %2285 = vmatpush1.bf16.msra.mxu0 0
      %2286 = vmatprep.subr.bf16.mxu0 0
      %2287 = vmatpush1.bf16.msra.mxu0 0
      %2288 = vmatprep.mubr.bf16.mxu0 0
      %2289 = vmatmul.mubr.bf16.gmra.mrb[0].mxu0 %v369
      %v2290 = vpop.f32.mrb[0].mxu0
      %v2291 = vadd.f32 0.0, %v2290
      %v2292 = vpop.f32.mrb[0].mxu0
      %v2293 = vpop.f32.mrb[0].mxu0
      %v2294 = vadd.f32 0.0, %v2293
      %v2295 = vpop.f32.mrb[0].mxu0
      %2296 = vmatprep.mubr.bf16.mxu0 0
      %2297 = vmatmul.mubr.bf16.gmra.mrb[0].mxu0 %v372
      %v2298 = vpop.f32.mrb[0].mxu0
      %v2299 = vadd.f32 0.0, %v2298
      %v2300 = vpop.f32.mrb[0].mxu0
      %v2301 = vpop.f32.mrb[0].mxu0
      %v2302 = vadd.f32 0.0, %v2301
      %v2303 = vpop.f32.mrb[0].mxu0
      %2304 = vmatprep.mubr.bf16.mxu0 0
      %2305 = vmatmul.mubr.bf16.gmra.mrb[0].mxu0 %v375
      %v2306 = vpop.f32.mrb[0].mxu0
      %v2307 = vadd.f32 0.0, %v2306
      %v2308 = vpop.f32.mrb[0].mxu0
      %v2309 = vpop.f32.mrb[0].mxu0
      %v2310 = vadd.f32 0.0, %v2309
      %v2311 = vpop.f32.mrb[0].mxu0
      %2312 = vmatprep.mubr.bf16.mxu0 0
      %2313 = vmatmul.mubr.bf16.gmra.mrb[0].mxu0 %v378
      %v2314 = vpop.f32.mrb[0].mxu0
      %v2315 = vadd.f32 0.0, %v2314
      %v2316 = vpop.f32.mrb[0].mxu0
      %v2317 = vpop.f32.mrb[0].mxu0
      %v2318 = vadd.f32 0.0, %v2317
      %v2319 = vpop.f32.mrb[0].mxu0
      %2320 = vmatprep.mubr.bf16.mxu0 0
      %2321 = vmatmul.mubr.bf16.gmra.mrb[0].mxu0 %v381
      %v2322 = vpop.f32.mrb[0].mxu0
      %v2323 = vadd.f32 0.0, %v2322
      %v2324 = vpop.f32.mrb[0].mxu0
      %v2325 = vpop.f32.mrb[0].mxu0
      %v2326 = vadd.f32 0.0, %v2325
      %v2327 = vpop.f32.mrb[0].mxu0
      %2328 = vmatprep.mubr.bf16.mxu0 0
      %2329 = vmatmul.mubr.bf16.gmra.mrb[0].mxu0 %v384
      %v2330 = vpop.f32.mrb[0].mxu0
      %v2331 = vadd.f32 0.0, %v2330
      %v2332 = vpop.f32.mrb[0].mxu0
      %v2333 = vpop.f32.mrb[0].mxu0
      %v2334 = vadd.f32 0.0, %v2333
      %v2335 = vpop.f32.mrb[0].mxu0
      %2336 = vmatprep.mubr.bf16.mxu0 0
      %2337 = vmatmul.mubr.bf16.gmra.mrb[0].mxu0 %v387
      %v2338 = vpop.f32.mrb[0].mxu0
      %v2339 = vadd.f32 0.0, %v2338
      %v2340 = vpop.f32.mrb[0].mxu0
      %v2341 = vpop.f32.mrb[0].mxu0
      %v2342 = vadd.f32 0.0, %v2341
      %v2343 = vpop.f32.mrb[0].mxu0
      %2344 = vmatprep.mubr.bf16.mxu0 0
      %2345 = vmatmul.mubr.bf16.gmra.mrb[0].mxu0 %v390
      %v2346 = vpop.f32.mrb[0].mxu0
      %v2347 = vadd.f32 0.0, %v2346
      %v2348 = vpop.f32.mrb[0].mxu0
      %v2349 = vpop.f32.mrb[0].mxu0
      %v2350 = vadd.f32 0.0, %v2349
      %v2351 = vpop.f32.mrb[0].mxu0
      %2352 = vmatprep.mubr.bf16.mxu0 0
      %2353 = vmatmul.mubr.bf16.gmra.mrb[0].mxu0 %v393
      %v2354 = vpop.f32.mrb[0].mxu0
      %v2355 = vadd.f32 0.0, %v2354
      %v2356 = vpop.f32.mrb[0].mxu0
      %v2357 = vpop.f32.mrb[0].mxu0
      %v2358 = vadd.f32 0.0, %v2357
      %v2359 = vpop.f32.mrb[0].mxu0
      %2360 = vmatprep.mubr.bf16.mxu0 0
      %2361 = vmatmul.mubr.bf16.gmra.mrb[0].mxu0 %v396
      %v2362 = vpop.f32.mrb[0].mxu0
      %v2363 = vadd.f32 0.0, %v2362
      %v2364 = vpop.f32.mrb[0].mxu0
      %v2365 = vpop.f32.mrb[0].mxu0
      %v2366 = vadd.f32 0.0, %v2365
      %v2367 = vpop.f32.mrb[0].mxu0
      %2368 = vmatprep.mubr.bf16.mxu0 0
      %2369 = vmatmul.mubr.bf16.gmra.mrb[0].mxu0 %v399
      %v2370 = vpop.f32.mrb[0].mxu0
      %v2371 = vadd.f32 0.0, %v2370
      %v2372 = vpop.f32.mrb[0].mxu0
      %v2373 = vpop.f32.mrb[0].mxu0
      %v2374 = vadd.f32 0.0, %v2373
      %v2375 = vpop.f32.mrb[0].mxu0
      %2376 = vmatprep.mubr.bf16.mxu0 0
      %2377 = vmatmul.mubr.bf16.gmra.mrb[0].mxu0 %v402
      %v2378 = vpop.f32.mrb[0].mxu0
      %v2379 = vadd.f32 0.0, %v2378
      %v2380 = vpop.f32.mrb[0].mxu0
      %v2381 = vpop.f32.mrb[0].mxu0
      %v2382 = vadd.f32 0.0, %v2381
      %v2383 = vpop.f32.mrb[0].mxu0
      %2384 = vmatprep.mubr.bf16.mxu0 0
      %2385 = vmatmul.mubr.bf16.gmra.mrb[0].mxu0 %v405
      %v2386 = vpop.f32.mrb[0].mxu0
      %v2387 = vadd.f32 0.0, %v2386
      %v2388 = vpop.f32.mrb[0].mxu0
      %v2389 = vpop.f32.mrb[0].mxu0
      %v2390 = vadd.f32 0.0, %v2389
      %v2391 = vpop.f32.mrb[0].mxu0
      %2392 = vmatprep.mubr.bf16.mxu0 0
      %2393 = vmatmul.mubr.bf16.gmra.mrb[0].mxu0 %v408
      %v2394 = vpop.f32.mrb[0].mxu0
      %v2395 = vadd.f32 0.0, %v2394
      %v2396 = vpop.f32.mrb[0].mxu0
      %v2397 = vpop.f32.mrb[0].mxu0
      %v2398 = vadd.f32 0.0, %v2397
      %v2399 = vpop.f32.mrb[0].mxu0
      %2400 = vmatprep.mubr.bf16.mxu0 0
      %2401 = vmatmul.mubr.bf16.gmra.mrb[0].mxu0 %v411
      %v2402 = vpop.f32.mrb[0].mxu0
      %v2403 = vadd.f32 0.0, %v2402
      %v2404 = vpop.f32.mrb[0].mxu0
      %v2405 = vpop.f32.mrb[0].mxu0
      %v2406 = vadd.f32 0.0, %v2405
      %v2407 = vpop.f32.mrb[0].mxu0
      %2408 = vmatprep.mubr.bf16.mxu0 0
      %2409 = vmatmul.mubr.bf16.gmra.mrb[0].mxu0 %v414
      %v2410 = vpop.f32.mrb[0].mxu0
      %v2411 = vadd.f32 0.0, %v2410
      %v2412 = vpop.f32.mrb[0].mxu0
      %v2413 = vpop.f32.mrb[0].mxu0
      %v2414 = vadd.f32 0.0, %v2413
      %v2415 = vpop.f32.mrb[0].mxu0
      %2416 = vdwg.mxu0
      %v2417 = vld [vmem:[#allocation2 + $0x1] sm:$0xff]
      %v2418 = vld [vmem:[#allocation2 + $0x9] sm:$0xff]
      %v2419 = vld [vmem:[#allocation2 + $0x19] sm:$0xff]
      %v2420 = vld [vmem:[#allocation2 + $0x21] sm:$0xff]
      %v2421 = vld [vmem:[#allocation2 + $0x31] sm:$0xff]
      %v2422 = vld [vmem:[#allocation2 + $0x39] sm:$0xff]
      %v2423 = vld [vmem:[#allocation2 + $0x49] sm:$0xff]
      %v2424 = vld [vmem:[#allocation2 + $0x51] sm:$0xff]
      %v2425 = vld [vmem:[#allocation2 + $0x61] sm:$0xff]
      %v2426 = vld [vmem:[#allocation2 + $0x69] sm:$0xff]
      %v2427 = vld [vmem:[#allocation2 + $0x79] sm:$0xff]
      %v2428 = vld [vmem:[#allocation2 + $0x81] sm:$0xff]
      %v2429 = vld [vmem:[#allocation2 + $0x91] sm:$0xff]
      %v2430 = vld [vmem:[#allocation2 + $0x99] sm:$0xff]
      %v2431 = vld [vmem:[#allocation2 + $0xa9] sm:$0xff]
      %v2432 = vld [vmem:[#allocation2 + $0xb1] sm:$0xff]
      %v2433 = vld [vmem:[#allocation2 + $0xc1] sm:$0xff]
      %v2434 = vld [vmem:[#allocation2 + $0xc9] sm:$0xff]
      %v2435 = vld [vmem:[#allocation2 + $0xd9] sm:$0xff]
      %v2436 = vld [vmem:[#allocation2 + $0xe1] sm:$0xff]
      %v2437 = vld [vmem:[#allocation2 + $0xf1] sm:$0xff]
      %v2438 = vld [vmem:[#allocation2 + $0xf9] sm:$0xff]
      %v2439 = vld [vmem:[#allocation2 + $0x109] sm:$0xff]
      %v2440 = vld [vmem:[#allocation2 + $0x111] sm:$0xff]
      %v2441 = vld [vmem:[#allocation2 + $0x121] sm:$0xff]
      %v2442 = vld [vmem:[#allocation2 + $0x129] sm:$0xff]
      %v2443 = vld [vmem:[#allocation2 + $0x139] sm:$0xff]
      %v2444 = vld [vmem:[#allocation2 + $0x141] sm:$0xff]
      %v2445 = vld [vmem:[#allocation2 + $0x151] sm:$0xff]
      %v2446 = vld [vmem:[#allocation2 + $0x159] sm:$0xff]
      %v2447 = vld [vmem:[#allocation2 + $0x169] sm:$0xff]
      %v2448 = vld [vmem:[#allocation2 + $0x171] sm:$0xff]
      %v2449 = vadd.f32 %v2417, %v2291
      %v2450 = vadd.f32 %v2418, %v2294
      %v2451 = vadd.f32 %v2419, %v2299
      %v2452 = vadd.f32 %v2420, %v2302
      %v2453 = vadd.f32 %v2421, %v2307
      %v2454 = vadd.f32 %v2422, %v2310
      %v2455 = vadd.f32 %v2423, %v2315
      %v2456 = vadd.f32 %v2424, %v2318
      %v2457 = vadd.f32 %v2425, %v2323
      %v2458 = vadd.f32 %v2426, %v2326
      %v2459 = vadd.f32 %v2427, %v2331
      %v2460 = vadd.f32 %v2428, %v2334
      %v2461 = vadd.f32 %v2429, %v2339
      %v2462 = vadd.f32 %v2430, %v2342
      %v2463 = vadd.f32 %v2431, %v2347
      %v2464 = vadd.f32 %v2432, %v2350
      %v2465 = vadd.f32 %v2433, %v2355
      %v2466 = vadd.f32 %v2434, %v2358
      %v2467 = vadd.f32 %v2435, %v2363
      %v2468 = vadd.f32 %v2436, %v2366
      %v2469 = vadd.f32 %v2437, %v2371
      %v2470 = vadd.f32 %v2438, %v2374
      %v2471 = vadd.f32 %v2439, %v2379
      %v2472 = vadd.f32 %v2440, %v2382
      %v2473 = vadd.f32 %v2441, %v2387
      %v2474 = vadd.f32 %v2442, %v2390
      %v2475 = vadd.f32 %v2443, %v2395
      %v2476 = vadd.f32 %v2444, %v2398
      %v2477 = vadd.f32 %v2445, %v2403
      %v2478 = vadd.f32 %v2446, %v2406
      %v2479 = vadd.f32 %v2447, %v2411
      %v2480 = vadd.f32 %v2448, %v2414
      %2481 = vst.msk [vmem:[#allocation2 + $0x1] sm:$0xff] %vm199, %v2449
      %2482 = vst.msk [vmem:[#allocation2 + $0x9] sm:$0xff] %vm199, %v2450
      %2483 = vst.msk [vmem:[#allocation2 + $0x19] sm:$0xff] %vm199, %v2451
      %2484 = vst.msk [vmem:[#allocation2 + $0x21] sm:$0xff] %vm199, %v2452
      %2485 = vst.msk [vmem:[#allocation2 + $0x31] sm:$0xff] %vm199, %v2453
      %2486 = vst.msk [vmem:[#allocation2 + $0x39] sm:$0xff] %vm199, %v2454
      %2487 = vst.msk [vmem:[#allocation2 + $0x49] sm:$0xff] %vm199, %v2455
      %2488 = vst.msk [vmem:[#allocation2 + $0x51] sm:$0xff] %vm199, %v2456
      %2489 = vst.msk [vmem:[#allocation2 + $0x61] sm:$0xff] %vm199, %v2457
      %2490 = vst.msk [vmem:[#allocation2 + $0x69] sm:$0xff] %vm199, %v2458
      %2491 = vst.msk [vmem:[#allocation2 + $0x79] sm:$0xff] %vm199, %v2459
      %2492 = vst.msk [vmem:[#allocation2 + $0x81] sm:$0xff] %vm199, %v2460
      %2493 = vst.msk [vmem:[#allocation2 + $0x91] sm:$0xff] %vm199, %v2461
      %2494 = vst.msk [vmem:[#allocation2 + $0x99] sm:$0xff] %vm199, %v2462
      %2495 = vst.msk [vmem:[#allocation2 + $0xa9] sm:$0xff] %vm199, %v2463
      %2496 = vst.msk [vmem:[#allocation2 + $0xb1] sm:$0xff] %vm199, %v2464
      %2497 = vst.msk [vmem:[#allocation2 + $0xc1] sm:$0xff] %vm199, %v2465
      %2498 = vst.msk [vmem:[#allocation2 + $0xc9] sm:$0xff] %vm199, %v2466
      %2499 = vst.msk [vmem:[#allocation2 + $0xd9] sm:$0xff] %vm199, %v2467
      %2500 = vst.msk [vmem:[#allocation2 + $0xe1] sm:$0xff] %vm199, %v2468
      %2501 = vst.msk [vmem:[#allocation2 + $0xf1] sm:$0xff] %vm199, %v2469
      %2502 = vst.msk [vmem:[#allocation2 + $0xf9] sm:$0xff] %vm199, %v2470
      %2503 = vst.msk [vmem:[#allocation2 + $0x109] sm:$0xff] %vm199, %v2471
      %2504 = vst.msk [vmem:[#allocation2 + $0x111] sm:$0xff] %vm199, %v2472
      %2505 = vst.msk [vmem:[#allocation2 + $0x121] sm:$0xff] %vm199, %v2473
      %2506 = vst.msk [vmem:[#allocation2 + $0x129] sm:$0xff] %vm199, %v2474
      %2507 = vst.msk [vmem:[#allocation2 + $0x139] sm:$0xff] %vm199, %v2475
      %2508 = vst.msk [vmem:[#allocation2 + $0x141] sm:$0xff] %vm199, %v2476
      %2509 = vst.msk [vmem:[#allocation2 + $0x151] sm:$0xff] %vm199, %v2477
      %2510 = vst.msk [vmem:[#allocation2 + $0x159] sm:$0xff] %vm199, %v2478
      %2511 = vst.msk [vmem:[#allocation2 + $0x169] sm:$0xff] %vm199, %v2479
      %2512 = vst.msk [vmem:[#allocation2 + $0x171] sm:$0xff] %vm199, %v2480
      %s2513 = scalar_lea.vmem %s1, 16
      %v2514 = vld [vmem:[%s2513] sm:$0x3]
      %v2516 = vsel %vm416, %v2514, 0
      %2518 = vmatprep.subr.bf16.mxu0 0
      %2519 = vmatpush1.bf16.msra.mxu0 %v2516
      %2520 = vmatprep.subr.bf16.mxu0 0
      %2521 = vmatpush1.bf16.msra.mxu0 0
      %2522 = vmatprep.subr.bf16.mxu0 0
      %2523 = vmatpush1.bf16.msra.mxu0 0
      %2524 = vmatprep.subr.bf16.mxu0 0
      %2525 = vmatpush1.bf16.msra.mxu0 0
      %2526 = vmatprep.subr.bf16.mxu0 0
      %2527 = vmatpush1.bf16.msra.mxu0 0
      %2528 = vmatprep.subr.bf16.mxu0 0
      %2529 = vmatpush1.bf16.msra.mxu0 0
      %2530 = vmatprep.subr.bf16.mxu0 0
      %2531 = vmatpush1.bf16.msra.mxu0 0
      %2532 = vmatprep.subr.bf16.mxu0 0
      %2533 = vmatpush1.bf16.msra.mxu0 0
      %2534 = vmatprep.subr.bf16.mxu0 0
      %2535 = vmatpush1.bf16.msra.mxu0 0
      %2536 = vmatprep.subr.bf16.mxu0 0
      %2537 = vmatpush1.bf16.msra.mxu0 0
      %2538 = vmatprep.subr.bf16.mxu0 0
      %2539 = vmatpush1.bf16.msra.mxu0 0
      %2540 = vmatprep.subr.bf16.mxu0 0
      %2541 = vmatpush1.bf16.msra.mxu0 0
      %2542 = vmatprep.subr.bf16.mxu0 0
      %2543 = vmatpush1.bf16.msra.mxu0 0
      %2544 = vmatprep.subr.bf16.mxu0 0
      %2545 = vmatpush1.bf16.msra.mxu0 0
      %2546 = vmatprep.subr.bf16.mxu0 0
      %2547 = vmatpush1.bf16.msra.mxu0 0
      %2548 = vmatprep.subr.bf16.mxu0 0
      %2549 = vmatpush1.bf16.msra.mxu0 0
      %2550 = vmatprep.mubr.bf16.mxu0 0
      %2551 = vmatmul.mubr.bf16.gmra.mrb[0].mxu0 %v369
      %v2552 = vpop.f32.mrb[0].mxu0
      %v2553 = vadd.f32 0.0, %v2552
      %v2554 = vpop.f32.mrb[0].mxu0
      %v2555 = vpop.f32.mrb[0].mxu0
      %v2556 = vadd.f32 0.0, %v2555
      %v2557 = vpop.f32.mrb[0].mxu0
      %2558 = vmatprep.mubr.bf16.mxu0 0
      %2559 = vmatmul.mubr.bf16.gmra.mrb[0].mxu0 %v372
      %v2560 = vpop.f32.mrb[0].mxu0
      %v2561 = vadd.f32 0.0, %v2560
      %v2562 = vpop.f32.mrb[0].mxu0
      %v2563 = vpop.f32.mrb[0].mxu0
      %v2564 = vadd.f32 0.0, %v2563
      %v2565 = vpop.f32.mrb[0].mxu0
      %2566 = vmatprep.mubr.bf16.mxu0 0
      %2567 = vmatmul.mubr.bf16.gmra.mrb[0].mxu0 %v375
      %v2568 = vpop.f32.mrb[0].mxu0
      %v2569 = vadd.f32 0.0, %v2568
      %v2570 = vpop.f32.mrb[0].mxu0
      %v2571 = vpop.f32.mrb[0].mxu0
      %v2572 = vadd.f32 0.0, %v2571
      %v2573 = vpop.f32.mrb[0].mxu0
      %2574 = vmatprep.mubr.bf16.mxu0 0
      %2575 = vmatmul.mubr.bf16.gmra.mrb[0].mxu0 %v378
      %v2576 = vpop.f32.mrb[0].mxu0
      %v2577 = vadd.f32 0.0, %v2576
      %v2578 = vpop.f32.mrb[0].mxu0
      %v2579 = vpop.f32.mrb[0].mxu0
      %v2580 = vadd.f32 0.0, %v2579
      %v2581 = vpop.f32.mrb[0].mxu0
      %2582 = vmatprep.mubr.bf16.mxu0 0
      %2583 = vmatmul.mubr.bf16.gmra.mrb[0].mxu0 %v381
      %v2584 = vpop.f32.mrb[0].mxu0
      %v2585 = vadd.f32 0.0, %v2584
      %v2586 = vpop.f32.mrb[0].mxu0
      %v2587 = vpop.f32.mrb[0].mxu0
      %v2588 = vadd.f32 0.0, %v2587
      %v2589 = vpop.f32.mrb[0].mxu0
      %2590 = vmatprep.mubr.bf16.mxu0 0
      %2591 = vmatmul.mubr.bf16.gmra.mrb[0].mxu0 %v384
      %v2592 = vpop.f32.mrb[0].mxu0
      %v2593 = vadd.f32 0.0, %v2592
      %v2594 = vpop.f32.mrb[0].mxu0
      %v2595 = vpop.f32.mrb[0].mxu0
      %v2596 = vadd.f32 0.0, %v2595
      %v2597 = vpop.f32.mrb[0].mxu0
      %2598 = vmatprep.mubr.bf16.mxu0 0
      %2599 = vmatmul.mubr.bf16.gmra.mrb[0].mxu0 %v387
      %v2600 = vpop.f32.mrb[0].mxu0
      %v2601 = vadd.f32 0.0, %v2600
      %v2602 = vpop.f32.mrb[0].mxu0
      %v2603 = vpop.f32.mrb[0].mxu0
      %v2604 = vadd.f32 0.0, %v2603
      %v2605 = vpop.f32.mrb[0].mxu0
      %2606 = vmatprep.mubr.bf16.mxu0 0
      %2607 = vmatmul.mubr.bf16.gmra.mrb[0].mxu0 %v390
      %v2608 = vpop.f32.mrb[0].mxu0
      %v2609 = vadd.f32 0.0, %v2608
      %v2610 = vpop.f32.mrb[0].mxu0
      %v2611 = vpop.f32.mrb[0].mxu0
      %v2612 = vadd.f32 0.0, %v2611
      %v2613 = vpop.f32.mrb[0].mxu0
      %2614 = vmatprep.mubr.bf16.mxu0 0
      %2615 = vmatmul.mubr.bf16.gmra.mrb[0].mxu0 %v393
      %v2616 = vpop.f32.mrb[0].mxu0
      %v2617 = vadd.f32 0.0, %v2616
      %v2618 = vpop.f32.mrb[0].mxu0
      %v2619 = vpop.f32.mrb[0].mxu0
      %v2620 = vadd.f32 0.0, %v2619
      %v2621 = vpop.f32.mrb[0].mxu0
      %2622 = vmatprep.mubr.bf16.mxu0 0
      %2623 = vmatmul.mubr.bf16.gmra.mrb[0].mxu0 %v396
      %v2624 = vpop.f32.mrb[0].mxu0
      %v2625 = vadd.f32 0.0, %v2624
      %v2626 = vpop.f32.mrb[0].mxu0
      %v2627 = vpop.f32.mrb[0].mxu0
      %v2628 = vadd.f32 0.0, %v2627
      %v2629 = vpop.f32.mrb[0].mxu0
      %2630 = vmatprep.mubr.bf16.mxu0 0
      %2631 = vmatmul.mubr.bf16.gmra.mrb[0].mxu0 %v399
      %v2632 = vpop.f32.mrb[0].mxu0
      %v2633 = vadd.f32 0.0, %v2632
      %v2634 = vpop.f32.mrb[0].mxu0
      %v2635 = vpop.f32.mrb[0].mxu0
      %v2636 = vadd.f32 0.0, %v2635
      %v2637 = vpop.f32.mrb[0].mxu0
      %2638 = vmatprep.mubr.bf16.mxu0 0
      %2639 = vmatmul.mubr.bf16.gmra.mrb[0].mxu0 %v402
      %v2640 = vpop.f32.mrb[0].mxu0
      %v2641 = vadd.f32 0.0, %v2640
      %v2642 = vpop.f32.mrb[0].mxu0
      %v2643 = vpop.f32.mrb[0].mxu0
      %v2644 = vadd.f32 0.0, %v2643
      %v2645 = vpop.f32.mrb[0].mxu0
      %2646 = vmatprep.mubr.bf16.mxu0 0
      %2647 = vmatmul.mubr.bf16.gmra.mrb[0].mxu0 %v405
      %v2648 = vpop.f32.mrb[0].mxu0
      %v2649 = vadd.f32 0.0, %v2648
      %v2650 = vpop.f32.mrb[0].mxu0
      %v2651 = vpop.f32.mrb[0].mxu0
      %v2652 = vadd.f32 0.0, %v2651
      %v2653 = vpop.f32.mrb[0].mxu0
      %2654 = vmatprep.mubr.bf16.mxu0 0
      %2655 = vmatmul.mubr.bf16.gmra.mrb[0].mxu0 %v408
      %v2656 = vpop.f32.mrb[0].mxu0
      %v2657 = vadd.f32 0.0, %v2656
      %v2658 = vpop.f32.mrb[0].mxu0
      %v2659 = vpop.f32.mrb[0].mxu0
      %v2660 = vadd.f32 0.0, %v2659
      %v2661 = vpop.f32.mrb[0].mxu0
      %2662 = vmatprep.mubr.bf16.mxu0 0
      %2663 = vmatmul.mubr.bf16.gmra.mrb[0].mxu0 %v411
      %v2664 = vpop.f32.mrb[0].mxu0
      %v2665 = vadd.f32 0.0, %v2664
      %v2666 = vpop.f32.mrb[0].mxu0
      %v2667 = vpop.f32.mrb[0].mxu0
      %v2668 = vadd.f32 0.0, %v2667
      %v2669 = vpop.f32.mrb[0].mxu0
      %2670 = vmatprep.mubr.bf16.mxu0 0
      %2671 = vmatmul.mubr.bf16.gmra.mrb[0].mxu0 %v414
      %v2672 = vpop.f32.mrb[0].mxu0
      %v2673 = vadd.f32 0.0, %v2672
      %v2674 = vpop.f32.mrb[0].mxu0
      %v2675 = vpop.f32.mrb[0].mxu0
      %v2676 = vadd.f32 0.0, %v2675
      %v2677 = vpop.f32.mrb[0].mxu0
      %2678 = vdwg.mxu0
      %v2679 = vld [vmem:[#allocation2] sm:$0xff]
      %v2680 = vld [vmem:[#allocation2 + $0x8] sm:$0xff]
      %v2681 = vld [vmem:[#allocation2 + $0x18] sm:$0xff]
      %v2682 = vld [vmem:[#allocation2 + $0x20] sm:$0xff]
      %v2683 = vld [vmem:[#allocation2 + $0x30] sm:$0xff]
      %v2684 = vld [vmem:[#allocation2 + $0x38] sm:$0xff]
      %v2685 = vld [vmem:[#allocation2 + $0x48] sm:$0xff]
      %v2686 = vld [vmem:[#allocation2 + $0x50] sm:$0xff]
      %v2687 = vld [vmem:[#allocation2 + $0x60] sm:$0xff]
      %v2688 = vld [vmem:[#allocation2 + $0x68] sm:$0xff]
      %v2689 = vld [vmem:[#allocation2 + $0x78] sm:$0xff]
      %v2690 = vld [vmem:[#allocation2 + $0x80] sm:$0xff]
      %v2691 = vld [vmem:[#allocation2 + $0x90] sm:$0xff]
      %v2692 = vld [vmem:[#allocation2 + $0x98] sm:$0xff]
      %v2693 = vld [vmem:[#allocation2 + $0xa8] sm:$0xff]
      %v2694 = vld [vmem:[#allocation2 + $0xb0] sm:$0xff]
      %v2695 = vld [vmem:[#allocation2 + $0xc0] sm:$0xff]
      %v2696 = vld [vmem:[#allocation2 + $0xc8] sm:$0xff]
      %v2697 = vld [vmem:[#allocation2 + $0xd8] sm:$0xff]
      %v2698 = vld [vmem:[#allocation2 + $0xe0] sm:$0xff]
      %v2699 = vld [vmem:[#allocation2 + $0xf0] sm:$0xff]
      %v2700 = vld [vmem:[#allocation2 + $0xf8] sm:$0xff]
      %v2701 = vld [vmem:[#allocation2 + $0x108] sm:$0xff]
      %v2702 = vld [vmem:[#allocation2 + $0x110] sm:$0xff]
      %v2703 = vld [vmem:[#allocation2 + $0x120] sm:$0xff]
      %v2704 = vld [vmem:[#allocation2 + $0x128] sm:$0xff]
      %v2705 = vld [vmem:[#allocation2 + $0x138] sm:$0xff]
      %v2706 = vld [vmem:[#allocation2 + $0x140] sm:$0xff]
      %v2707 = vld [vmem:[#allocation2 + $0x150] sm:$0xff]
      %v2708 = vld [vmem:[#allocation2 + $0x158] sm:$0xff]
      %v2709 = vld [vmem:[#allocation2 + $0x168] sm:$0xff]
      %v2710 = vld [vmem:[#allocation2 + $0x170] sm:$0xff]
      %v2711 = vadd.f32 %v2679, %v2553
      %v2712 = vadd.f32 %v2680, %v2556
      %v2713 = vadd.f32 %v2681, %v2561
      %v2714 = vadd.f32 %v2682, %v2564
      %v2715 = vadd.f32 %v2683, %v2569
      %v2716 = vadd.f32 %v2684, %v2572
      %v2717 = vadd.f32 %v2685, %v2577
      %v2718 = vadd.f32 %v2686, %v2580
      %v2719 = vadd.f32 %v2687, %v2585
      %v2720 = vadd.f32 %v2688, %v2588
      %v2721 = vadd.f32 %v2689, %v2593
      %v2722 = vadd.f32 %v2690, %v2596
      %v2723 = vadd.f32 %v2691, %v2601
      %v2724 = vadd.f32 %v2692, %v2604
      %v2725 = vadd.f32 %v2693, %v2609
      %v2726 = vadd.f32 %v2694, %v2612
      %v2727 = vadd.f32 %v2695, %v2617
      %v2728 = vadd.f32 %v2696, %v2620
      %v2729 = vadd.f32 %v2697, %v2625
      %v2730 = vadd.f32 %v2698, %v2628
      %v2731 = vadd.f32 %v2699, %v2633
      %v2732 = vadd.f32 %v2700, %v2636
      %v2733 = vadd.f32 %v2701, %v2641
      %v2734 = vadd.f32 %v2702, %v2644
      %v2735 = vadd.f32 %v2703, %v2649
      %v2736 = vadd.f32 %v2704, %v2652
      %v2737 = vadd.f32 %v2705, %v2657
      %v2738 = vadd.f32 %v2706, %v2660
      %v2739 = vadd.f32 %v2707, %v2665
      %v2740 = vadd.f32 %v2708, %v2668
      %v2741 = vadd.f32 %v2709, %v2673
      %v2742 = vadd.f32 %v2710, %v2676
      %2743 = vst.msk [vmem:[#allocation2] sm:$0xff] %vm199, %v2711
      %2744 = vst.msk [vmem:[#allocation2 + $0x8] sm:$0xff] %vm199, %v2712
      %2745 = vst.msk [vmem:[#allocation2 + $0x18] sm:$0xff] %vm199, %v2713
      %2746 = vst.msk [vmem:[#allocation2 + $0x20] sm:$0xff] %vm199, %v2714
      %2747 = vst.msk [vmem:[#allocation2 + $0x30] sm:$0xff] %vm199, %v2715
      %2748 = vst.msk [vmem:[#allocation2 + $0x38] sm:$0xff] %vm199, %v2716
      %2749 = vst.msk [vmem:[#allocation2 + $0x48] sm:$0xff] %vm199, %v2717
      %2750 = vst.msk [vmem:[#allocation2 + $0x50] sm:$0xff] %vm199, %v2718
      %2751 = vst.msk [vmem:[#allocation2 + $0x60] sm:$0xff] %vm199, %v2719
      %2752 = vst.msk [vmem:[#allocation2 + $0x68] sm:$0xff] %vm199, %v2720
      %2753 = vst.msk [vmem:[#allocation2 + $0x78] sm:$0xff] %vm199, %v2721
      %2754 = vst.msk [vmem:[#allocation2 + $0x80] sm:$0xff] %vm199, %v2722
      %2755 = vst.msk [vmem:[#allocation2 + $0x90] sm:$0xff] %vm199, %v2723
      %2756 = vst.msk [vmem:[#allocation2 + $0x98] sm:$0xff] %vm199, %v2724
      %2757 = vst.msk [vmem:[#allocation2 + $0xa8] sm:$0xff] %vm199, %v2725
      %2758 = vst.msk [vmem:[#allocation2 + $0xb0] sm:$0xff] %vm199, %v2726
      %2759 = vst.msk [vmem:[#allocation2 + $0xc0] sm:$0xff] %vm199, %v2727
      %2760 = vst.msk [vmem:[#allocation2 + $0xc8] sm:$0xff] %vm199, %v2728
      %2761 = vst.msk [vmem:[#allocation2 + $0xd8] sm:$0xff] %vm199, %v2729
      %2762 = vst.msk [vmem:[#allocation2 + $0xe0] sm:$0xff] %vm199, %v2730
      %2763 = vst.msk [vmem:[#allocation2 + $0xf0] sm:$0xff] %vm199, %v2731
      %2764 = vst.msk [vmem:[#allocation2 + $0xf8] sm:$0xff] %vm199, %v2732
      %2765 = vst.msk [vmem:[#allocation2 + $0x108] sm:$0xff] %vm199, %v2733
      %2766 = vst.msk [vmem:[#allocation2 + $0x110] sm:$0xff] %vm199, %v2734
      %2767 = vst.msk [vmem:[#allocation2 + $0x120] sm:$0xff] %vm199, %v2735
      %2768 = vst.msk [vmem:[#allocation2 + $0x128] sm:$0xff] %vm199, %v2736
      %2769 = vst.msk [vmem:[#allocation2 + $0x138] sm:$0xff] %vm199, %v2737
      %2770 = vst.msk [vmem:[#allocation2 + $0x140] sm:$0xff] %vm199, %v2738
      %2771 = vst.msk [vmem:[#allocation2 + $0x150] sm:$0xff] %vm199, %v2739
      %2772 = vst.msk [vmem:[#allocation2 + $0x158] sm:$0xff] %vm199, %v2740
      %2773 = vst.msk [vmem:[#allocation2 + $0x168] sm:$0xff] %vm199, %v2741
      %2774 = vst.msk [vmem:[#allocation2 + $0x170] sm:$0xff] %vm199, %v2742
      %v2775 = vld [vmem:[%s1368 + $0x1] sm:$0xff]
      %v2776 = vld [vmem:[%s1368 + $0x9] sm:$0xff]
      %v2777 = vld [vmem:[%s1368 + $0x19] sm:$0xff]
      %v2778 = vld [vmem:[%s1368 + $0x21] sm:$0xff]
      %v2779 = vld [vmem:[%s1368 + $0x31] sm:$0xff]
      %v2780 = vld [vmem:[%s1368 + $0x39] sm:$0xff]
      %v2781 = vld [vmem:[%s1368 + $0x49] sm:$0xff]
      %v2782 = vld [vmem:[%s1368 + $0x51] sm:$0xff]
      %v2783 = vld [vmem:[%s1368 + $0x61] sm:$0xff]
      %v2784 = vld [vmem:[%s1368 + $0x69] sm:$0xff]
      %v2785 = vld [vmem:[%s1368 + $0x79] sm:$0xff]
      %v2786 = vld [vmem:[%s1368 + $0x81] sm:$0xff]
      %v2787 = vld [vmem:[%s1368 + $0x91] sm:$0xff]
      %v2788 = vld [vmem:[%s1368 + $0x99] sm:$0xff]
      %v2789 = vld [vmem:[%s1368 + $0xa9] sm:$0xff]
      %v2790 = vld [vmem:[%s1368 + $0xb1] sm:$0xff]
      %v2791 = vld [vmem:[%s1368 + $0xc1] sm:$0xff]
      %v2792 = vld [vmem:[%s1368 + $0xc9] sm:$0xff]
      %v2793 = vld [vmem:[%s1368 + $0xd9] sm:$0xff]
      %v2794 = vld [vmem:[%s1368 + $0xe1] sm:$0xff]
      %v2795 = vld [vmem:[%s1368 + $0xf1] sm:$0xff]
      %v2796 = vld [vmem:[%s1368 + $0xf9] sm:$0xff]
      %v2797 = vld [vmem:[%s1368 + $0x109] sm:$0xff]
      %v2798 = vld [vmem:[%s1368 + $0x111] sm:$0xff]
      %v2799 = vld [vmem:[%s1368 + $0x121] sm:$0xff]
      %v2800 = vld [vmem:[%s1368 + $0x129] sm:$0xff]
      %v2801 = vld [vmem:[%s1368 + $0x139] sm:$0xff]
      %v2802 = vld [vmem:[%s1368 + $0x141] sm:$0xff]
      %v2803 = vld [vmem:[%s1368 + $0x151] sm:$0xff]
      %v2804 = vld [vmem:[%s1368 + $0x159] sm:$0xff]
      %v2805 = vld [vmem:[%s1368 + $0x169] sm:$0xff]
      %v2806 = vld [vmem:[%s1368 + $0x171] sm:$0xff]
      %v2807 = vld [vmem:[%s2] sm:$0x1]
      %v2809 = vlaneseq
      %v2810 = vshrl.u32 %v2809, 7
      %v2811 = vsub.s32 0, %v2810
      %v2812 = vrot.slane %v2807, %v2811
      %v2814 = vmul.f32 %v2775, %v2812
      %v2815 = vmul.f32 %v2776, %v2812
      %v2816 = vmul.f32 %v2777, %v2812
      %v2817 = vmul.f32 %v2778, %v2812
      %v2818 = vmul.f32 %v2779, %v2812
      %v2819 = vmul.f32 %v2780, %v2812
      %v2820 = vmul.f32 %v2781, %v2812
      %v2821 = vmul.f32 %v2782, %v2812
      %v2822 = vmul.f32 %v2783, %v2812
      %v2823 = vmul.f32 %v2784, %v2812
      %v2824 = vmul.f32 %v2785, %v2812
      %v2825 = vmul.f32 %v2786, %v2812
      %v2826 = vmul.f32 %v2787, %v2812
      %v2827 = vmul.f32 %v2788, %v2812
      %v2828 = vmul.f32 %v2789, %v2812
      %v2829 = vmul.f32 %v2790, %v2812
      %v2830 = vmul.f32 %v2791, %v2812
      %v2831 = vmul.f32 %v2792, %v2812
      %v2832 = vmul.f32 %v2793, %v2812
      %v2833 = vmul.f32 %v2794, %v2812
      %v2834 = vmul.f32 %v2795, %v2812
      %v2835 = vmul.f32 %v2796, %v2812
      %v2836 = vmul.f32 %v2797, %v2812
      %v2837 = vmul.f32 %v2798, %v2812
      %v2838 = vmul.f32 %v2799, %v2812
      %v2839 = vmul.f32 %v2800, %v2812
      %v2840 = vmul.f32 %v2801, %v2812
      %v2841 = vmul.f32 %v2802, %v2812
      %v2842 = vmul.f32 %v2803, %v2812
      %v2843 = vmul.f32 %v2804, %v2812
      %v2844 = vmul.f32 %v2805, %v2812
      %v2845 = vmul.f32 %v2806, %v2812
      %v2846 = vld [vmem:[%s3] sm:$0x1]
      %v2848 = vlaneseq
      %v2849 = vshrl.u32 %v2848, 7
      %v2850 = vsub.s32 0, %v2849
      %v2851 = vrot.slane %v2846, %v2850
      %v2853 = vadd.f32 %v2814, %v2851
      %v2854 = vadd.f32 %v2815, %v2851
      %v2855 = vadd.f32 %v2816, %v2851
      %v2856 = vadd.f32 %v2817, %v2851
      %v2857 = vadd.f32 %v2818, %v2851
      %v2858 = vadd.f32 %v2819, %v2851
      %v2859 = vadd.f32 %v2820, %v2851
      %v2860 = vadd.f32 %v2821, %v2851
      %v2861 = vadd.f32 %v2822, %v2851
      %v2862 = vadd.f32 %v2823, %v2851
      %v2863 = vadd.f32 %v2824, %v2851
      %v2864 = vadd.f32 %v2825, %v2851
      %v2865 = vadd.f32 %v2826, %v2851
      %v2866 = vadd.f32 %v2827, %v2851
      %v2867 = vadd.f32 %v2828, %v2851
      %v2868 = vadd.f32 %v2829, %v2851
      %v2869 = vadd.f32 %v2830, %v2851
      %v2870 = vadd.f32 %v2831, %v2851
      %v2871 = vadd.f32 %v2832, %v2851
      %v2872 = vadd.f32 %v2833, %v2851
      %v2873 = vadd.f32 %v2834, %v2851
      %v2874 = vadd.f32 %v2835, %v2851
      %v2875 = vadd.f32 %v2836, %v2851
      %v2876 = vadd.f32 %v2837, %v2851
      %v2877 = vadd.f32 %v2838, %v2851
      %v2878 = vadd.f32 %v2839, %v2851
      %v2879 = vadd.f32 %v2840, %v2851
      %v2880 = vadd.f32 %v2841, %v2851
      %v2881 = vadd.f32 %v2842, %v2851
      %v2882 = vadd.f32 %v2843, %v2851
      %v2883 = vadd.f32 %v2844, %v2851
      %v2884 = vadd.f32 %v2845, %v2851
      %v2885 = vmax.f32 %v2853, 0.0
      %v2886 = vmax.f32 %v2854, 0.0
      %v2887 = vmax.f32 %v2855, 0.0
      %v2888 = vmax.f32 %v2856, 0.0
      %v2889 = vmax.f32 %v2857, 0.0
      %v2890 = vmax.f32 %v2858, 0.0
      %v2891 = vmax.f32 %v2859, 0.0
      %v2892 = vmax.f32 %v2860, 0.0
      %v2893 = vmax.f32 %v2861, 0.0
      %v2894 = vmax.f32 %v2862, 0.0
      %v2895 = vmax.f32 %v2863, 0.0
      %v2896 = vmax.f32 %v2864, 0.0
      %v2897 = vmax.f32 %v2865, 0.0
      %v2898 = vmax.f32 %v2866, 0.0
      %v2899 = vmax.f32 %v2867, 0.0
      %v2900 = vmax.f32 %v2868, 0.0
      %v2901 = vmax.f32 %v2869, 0.0
      %v2902 = vmax.f32 %v2870, 0.0
      %v2903 = vmax.f32 %v2871, 0.0
      %v2904 = vmax.f32 %v2872, 0.0
      %v2905 = vmax.f32 %v2873, 0.0
      %v2906 = vmax.f32 %v2874, 0.0
      %v2907 = vmax.f32 %v2875, 0.0
      %v2908 = vmax.f32 %v2876, 0.0
      %v2909 = vmax.f32 %v2877, 0.0
      %v2910 = vmax.f32 %v2878, 0.0
      %v2911 = vmax.f32 %v2879, 0.0
      %v2912 = vmax.f32 %v2880, 0.0
      %v2913 = vmax.f32 %v2881, 0.0
      %v2914 = vmax.f32 %v2882, 0.0
      %v2915 = vmax.f32 %v2883, 0.0
      %v2916 = vmax.f32 %v2884, 0.0
      %2917 = vst.msk [vmem:[%s197] sm:$0xff] %vm199, %v2885
      %2918 = vst.msk [vmem:[%s197 + $0x8] sm:$0xff] %vm199, %v2886
      %2919 = vst.msk [vmem:[%s197 + $0x10] sm:$0xff] %vm199, %v2887
      %2920 = vst.msk [vmem:[%s197 + $0x18] sm:$0xff] %vm199, %v2888
      %2921 = vst.msk [vmem:[%s197 + $0x20] sm:$0xff] %vm199, %v2889
      %2922 = vst.msk [vmem:[%s197 + $0x28] sm:$0xff] %vm199, %v2890
      %2923 = vst.msk [vmem:[%s197 + $0x30] sm:$0xff] %vm199, %v2891
      %2924 = vst.msk [vmem:[%s197 + $0x38] sm:$0xff] %vm199, %v2892
      %2925 = vst.msk [vmem:[%s197 + $0x40] sm:$0xff] %vm199, %v2893
      %2926 = vst.msk [vmem:[%s197 + $0x48] sm:$0xff] %vm199, %v2894
      %2927 = vst.msk [vmem:[%s197 + $0x50] sm:$0xff] %vm199, %v2895
      %2928 = vst.msk [vmem:[%s197 + $0x58] sm:$0xff] %vm199, %v2896
      %2929 = vst.msk [vmem:[%s197 + $0x60] sm:$0xff] %vm199, %v2897
      %2930 = vst.msk [vmem:[%s197 + $0x68] sm:$0xff] %vm199, %v2898
      %2931 = vst.msk [vmem:[%s197 + $0x70] sm:$0xff] %vm199, %v2899
      %2932 = vst.msk [vmem:[%s197 + $0x78] sm:$0xff] %vm199, %v2900
      %2933 = vst.msk [vmem:[%s197 + $0x80] sm:$0xff] %vm199, %v2901
      %2934 = vst.msk [vmem:[%s197 + $0x88] sm:$0xff] %vm199, %v2902
      %2935 = vst.msk [vmem:[%s197 + $0x90] sm:$0xff] %vm199, %v2903
      %2936 = vst.msk [vmem:[%s197 + $0x98] sm:$0xff] %vm199, %v2904
      %2937 = vst.msk [vmem:[%s197 + $0xa0] sm:$0xff] %vm199, %v2905
      %2938 = vst.msk [vmem:[%s197 + $0xa8] sm:$0xff] %vm199, %v2906
      %2939 = vst.msk [vmem:[%s197 + $0xb0] sm:$0xff] %vm199, %v2907
      %2940 = vst.msk [vmem:[%s197 + $0xb8] sm:$0xff] %vm199, %v2908
      %2941 = vst.msk [vmem:[%s197 + $0xc0] sm:$0xff] %vm199, %v2909
      %2942 = vst.msk [vmem:[%s197 + $0xc8] sm:$0xff] %vm199, %v2910
      %2943 = vst.msk [vmem:[%s197 + $0xd0] sm:$0xff] %vm199, %v2911
      %2944 = vst.msk [vmem:[%s197 + $0xd8] sm:$0xff] %vm199, %v2912
      %2945 = vst.msk [vmem:[%s197 + $0xe0] sm:$0xff] %vm199, %v2913
      %2946 = vst.msk [vmem:[%s197 + $0xe8] sm:$0xff] %vm199, %v2914
      %2947 = vst.msk [vmem:[%s197 + $0xf0] sm:$0xff] %vm199, %v2915
      %2948 = vst.msk [vmem:[%s197 + $0xf8] sm:$0xff] %vm199, %v2916
      %p2949 = scmp.lt.s32.totalorder %s15, 1
      %s2950 = scalar_select %p2949, %s15, 1
      %s2951 = smul.addr %s2950, 32
      %s2952 = smul.addr %s2951, 8
      %s2953 = scalar_lea.vmem %s4, %s2952
      // Predicated region
      $region37: #{upsampling_forward.5} parent=35 // pred_check
        %p2954 = pneg %p122
      $region38: #{upsampling_forward.5} parent=35 // pred_check_branch
        %2956 = sbr.rel (%p2954) target = $region40
      $region39: #{upsampling_forward.5} parent=35 // pred_region
        _
      $region40: #{upsampling_forward.5} parent=35 // pred_fallthru
        _
    $region36: #{upsampling_forward.5} parent=5 // pred_fallthru
      _
    %p2957 = scmp.le.s32.totalorder 2, %s10
    // Predicated region
    $region41: #{upsampling_forward.5} parent=5 // pred_check
      %p2958 = pneg %p2957
    $region42: #{upsampling_forward.5} parent=5 // pred_check_branch
      %2960 = sbr.rel (%p2958) target = $region44
    $region43: #{upsampling_forward.5} parent=5 // pred_region
      %s2961 = ssub.s32 %s10, 2
      // Predicated region
      $region45: #{upsampling_forward.5} parent=43 // pred_check
        %p2962 = pneg %p128
      $region46: #{upsampling_forward.5} parent=43 // pred_check_branch
        %2964 = sbr.rel (%p2962) target = $region48
      $region47: #{upsampling_forward.5} parent=43 // pred_region
        %p2965 = scmp.lt.s32.totalorder %s16, 1
        %s2966 = scalar_select %p2965, %s16, 1
        %s2967 = smul.addr %s2966, 32
        %s2968 = smul.addr %s2967, 8
        %s2969 = scalar_lea.vmem %s4, %s2968
      $region48: #{upsampling_forward.5} parent=43 // pred_fallthru
        _
    $region44: #{upsampling_forward.5} parent=5 // pred_fallthru
      _
  $region6: #{upsampling_forward.5} parent=0 // loop_footer
    %s14 = sadd.s32 1, %s10
  $region7: #{upsampling_forward.5} parent=0 // loop_footer_branch
    %9 = sbr.rel target = $region3
  $region8: #{upsampling_forward.5} parent=0 // loop_exit
    _

// kernel: upsampling_forward.4
$region0: #{upsampling_forward.4}
  #allocation0 [shape = 'u32[]', space=smem, size = 0x4, offset = 0x4, fixed_abs, tag = 'smem constant byte address 0x4 - core index']
  #allocation1 [shape = 'u32[144,128]{1,0:T(1,128)}', space=vmem, size = 0x12000, scoped, tag = 'internal scratch']
  #allocation2 [shape = 'f32[18,18,4]{2,1,0:T(8,128)}', space=vmem, size = 0x36000, scoped, tag = 'scratch operand']
  %s0 = inlined_call_operand.vmem [shape: bf16[2,16,16,4], index: 0, kind: input, shape index: {}]
  %s1 = inlined_call_operand.vmem [shape: bf16[2,16,16,4], index: 1, kind: input, shape index: {}]
  %s2 = inlined_call_operand.vmem [shape: bf16[9,4,4], index: 2, kind: input, shape index: {}]
  %s3 = inlined_call_operand.vmem [shape: bf16[9,4,4], index: 3, kind: input, shape index: {}]
  %s4 = inlined_call_operand.vmem [shape: f32[1,1,4], index: 4, kind: input, shape index: {}]
  %s5 = inlined_call_operand.vmem [shape: f32[1,1,4], index: 5, kind: input, shape index: {}]
  %s6 = inlined_call_operand.vmem [shape: bf16[2,16,16,4], index: 6, kind: output, shape index: {}]
  %s7 = sld [smem:[#allocation0]]
  $region57: #{upsampling_forward.4} parent=0
    _
  %s9 = ssub.s32 1, %s7
  %s10 = scalar_select 0, %s9, %s7
  loop: start=0, step=1, limit=4
  $region2: #{upsampling_forward.4} parent=0 // loop_pre_header
    _
  $region3: #{upsampling_forward.4} parent=0 // loop_header
    %s12 = sphi 0, %s16
    %p13 = scmp.ge.s32.totalorder %s12, 4
    %s22 = sphi 0, %s24
    %s25 = sphi 0, %s22
    %s26 = sphi 0, %s25
    %s42 = sphi 0, %s26
    %s48 = sphi 0, %s50
    %s51 = sphi 0, %s48
    %s52 = sphi 0, %s51
    %s68 = sphi 0, %s52
    %s72 = sphi 0, %s72
    %s74 = sphi 0, %s72
    %s75 = sphi 0, %s74
    %s89 = sphi 0, %s75
    %s93 = sphi 0, %s93
    %s95 = sphi 0, %s93
    %s96 = sphi 0, %s95
    %s110 = sphi 0, %s96
    %s114 = sphi 0, %s114
    %s116 = sphi 0, %s114
    %s117 = sphi 0, %s116
    %s131 = sphi 0, %s117
    %s135 = sphi 0, %s135
    %s137 = sphi 0, %s135
    %s138 = sphi 0, %s137
    %s152 = sphi 0, %s138
    %s158 = sphi 0, %s160
    %s161 = sphi 0, %s158
    %s162 = sphi 0, %s161
    %s178 = sphi 0, %s162
  $region4: #{upsampling_forward.4} parent=0 // loop_header_branch
    %15 = sbr.rel (%p13) target = $region8
  $region5: #{upsampling_forward.4} parent=0 // loop_body
    %s17 = ssub.s32 %s12, 1
    %s18 = ssub.s32 %s12, 2
    %s19 = sadd.s32 %s12, 1
    %s20 = ssub.s32 %s12, %s19
    %p21 = scmp.eq.s32.totalorder %s20, 0
    %s23 = sadd.s32 %s22, 1
    %s24 = scalar_select %p21, %s22, %s23
    %p27 = pneg %p21
    %p28 = scmp.eq.s32.totalorder %s12, 1
    %p29 = por %p27, %p28
    %p30 = scmp.ne.s32.totalorder %s22, %s25
    %p31 = scmp.eq.s32.totalorder %s12, 0
    %p32 = por %p30, %p31
    %p33 = scmp.ne.s32.totalorder %s22, %s25
    %p34 = scmp.eq.s32.totalorder %s17, 1
    %p35 = por %p33, %p34
    %p36 = scmp.ne.s32.totalorder %s25, %s26
    %p37 = scmp.eq.s32.totalorder %s17, 0
    %p38 = por %p36, %p37
    %p39 = scmp.ne.s32.totalorder %s25, %s26
    %p40 = scmp.eq.s32.totalorder %s18, 1
    %p41 = por %p39, %p40
    %p43 = scmp.ne.s32.totalorder %s26, %s42
    %p44 = scmp.eq.s32.totalorder %s18, 0
    %p45 = por %p43, %p44
    %s46 = ssub.s32 %s12, %s19
    %p47 = scmp.eq.s32.totalorder %s46, 0
    %s49 = sadd.s32 %s48, 1
    %s50 = scalar_select %p47, %s48, %s49
    %p53 = pneg %p47
    %p54 = scmp.eq.s32.totalorder %s12, 1
    %p55 = por %p53, %p54
    %p56 = scmp.ne.s32.totalorder %s48, %s51
    %p57 = scmp.eq.s32.totalorder %s12, 0
    %p58 = por %p56, %p57
    %p59 = scmp.ne.s32.totalorder %s48, %s51
    %p60 = scmp.eq.s32.totalorder %s17, 1
    %p61 = por %p59, %p60
    %p62 = scmp.ne.s32.totalorder %s51, %s52
    %p63 = scmp.eq.s32.totalorder %s17, 0
    %p64 = por %p62, %p63
    %p65 = scmp.ne.s32.totalorder %s51, %s52
    %p66 = scmp.eq.s32.totalorder %s18, 1
    %p67 = por %p65, %p66
    %p69 = scmp.ne.s32.totalorder %s52, %s68
    %p70 = scmp.eq.s32.totalorder %s18, 0
    %p71 = por %p69, %p70
    %s73 = sadd.s32 %s72, 1
    %p76 = scmp.eq.s32.totalorder %s12, 1
    %p77 = scmp.ne.s32.totalorder %s72, %s74
    %p78 = scmp.eq.s32.totalorder %s12, 0
    %p79 = por %p77, %p78
    %p80 = scmp.ne.s32.totalorder %s72, %s74
    %p81 = scmp.eq.s32.totalorder %s17, 1
    %p82 = por %p80, %p81
    %p83 = scmp.ne.s32.totalorder %s74, %s75
    %p84 = scmp.eq.s32.totalorder %s17, 0
    %p85 = por %p83, %p84
    %p86 = scmp.ne.s32.totalorder %s74, %s75
    %p87 = scmp.eq.s32.totalorder %s18, 1
    %p88 = por %p86, %p87
    %p90 = scmp.ne.s32.totalorder %s75, %s89
    %p91 = scmp.eq.s32.totalorder %s18, 0
    %p92 = por %p90, %p91
    %s94 = sadd.s32 %s93, 1
    %p97 = scmp.eq.s32.totalorder %s12, 1
    %p98 = scmp.ne.s32.totalorder %s93, %s95
    %p99 = scmp.eq.s32.totalorder %s12, 0
    %p100 = por %p98, %p99
    %p101 = scmp.ne.s32.totalorder %s93, %s95
    %p102 = scmp.eq.s32.totalorder %s17, 1
    %p103 = por %p101, %p102
    %p104 = scmp.ne.s32.totalorder %s95, %s96
    %p105 = scmp.eq.s32.totalorder %s17, 0
    %p106 = por %p104, %p105
    %p107 = scmp.ne.s32.totalorder %s95, %s96
    %p108 = scmp.eq.s32.totalorder %s18, 1
    %p109 = por %p107, %p108
    %p111 = scmp.ne.s32.totalorder %s96, %s110
    %p112 = scmp.eq.s32.totalorder %s18, 0
    %p113 = por %p111, %p112
    %s115 = sadd.s32 %s114, 1
    %p118 = scmp.eq.s32.totalorder %s12, 1
    %p119 = scmp.ne.s32.totalorder %s114, %s116
    %p120 = scmp.eq.s32.totalorder %s12, 0
    %p121 = por %p119, %p120
    %p122 = scmp.ne.s32.totalorder %s114, %s116
    %p123 = scmp.eq.s32.totalorder %s17, 1
    %p124 = por %p122, %p123
    %p125 = scmp.ne.s32.totalorder %s116, %s117
    %p126 = scmp.eq.s32.totalorder %s17, 0
    %p127 = por %p125, %p126
    %p128 = scmp.ne.s32.totalorder %s116, %s117
    %p129 = scmp.eq.s32.totalorder %s18, 1
    %p130 = por %p128, %p129
    %p132 = scmp.ne.s32.totalorder %s117, %s131
    %p133 = scmp.eq.s32.totalorder %s18, 0
    %p134 = por %p132, %p133
    %s136 = sadd.s32 %s135, 1
    %p139 = scmp.eq.s32.totalorder %s12, 1
    %p140 = scmp.ne.s32.totalorder %s135, %s137
    %p141 = scmp.eq.s32.totalorder %s12, 0
    %p142 = por %p140, %p141
    %p143 = scmp.ne.s32.totalorder %s135, %s137
    %p144 = scmp.eq.s32.totalorder %s17, 1
    %p145 = por %p143, %p144
    %p146 = scmp.ne.s32.totalorder %s137, %s138
    %p147 = scmp.eq.s32.totalorder %s17, 0
    %p148 = por %p146, %p147
    %p149 = scmp.ne.s32.totalorder %s137, %s138
    %p150 = scmp.eq.s32.totalorder %s18, 1
    %p151 = por %p149, %p150
    %p153 = scmp.ne.s32.totalorder %s138, %s152
    %p154 = scmp.eq.s32.totalorder %s18, 0
    %p155 = por %p153, %p154
    %s156 = ssub.s32 %s12, %s19
    %p157 = scmp.eq.s32.totalorder %s156, 0
    %s159 = sadd.s32 %s158, 1
    %s160 = scalar_select %p157, %s158, %s159
    %p163 = pneg %p157
    %p164 = scmp.eq.s32.totalorder %s12, 1
    %p165 = por %p163, %p164
    %p166 = scmp.ne.s32.totalorder %s158, %s161
    %p167 = scmp.eq.s32.totalorder %s12, 0
    %p168 = por %p166, %p167
    %p169 = scmp.ne.s32.totalorder %s158, %s161
    %p170 = scmp.eq.s32.totalorder %s17, 1
    %p171 = por %p169, %p170
    %p172 = scmp.ne.s32.totalorder %s161, %s162
    %p173 = scmp.eq.s32.totalorder %s17, 0
    %p174 = por %p172, %p173
    %p175 = scmp.ne.s32.totalorder %s161, %s162
    %p176 = scmp.eq.s32.totalorder %s18, 1
    %p177 = por %p175, %p176
    %p179 = scmp.ne.s32.totalorder %s162, %s178
    %p180 = scmp.eq.s32.totalorder %s18, 0
    %p181 = por %p179, %p180
    %p182 = scmp.le.s32.totalorder 1, %s12
    %p183 = scmp.lt.s32.totalorder %s12, 3
    %p184 = pnand %p182, %p183
    %p185 = pneg %p184
    // Predicated region
    $region9: #{upsampling_forward.4} parent=5 // pred_check
      _
    $region10: #{upsampling_forward.4} parent=5 // pred_check_branch
      %187 = sbr.rel (%p184) target = $region12
    $region11: #{upsampling_forward.4} parent=5 // pred_region
      %s188 = ssub.s32 %s12, 1
      // Predicated region
      $region13: #{upsampling_forward.4} parent=11 // pred_check
        %p189 = pneg %p85
      $region14: #{upsampling_forward.4} parent=11 // pred_check_branch
        %191 = sbr.rel (%p189) target = $region16
      $region15: #{upsampling_forward.4} parent=11 // pred_region
        _
      $region16: #{upsampling_forward.4} parent=11 // pred_fallthru
        _
      // Predicated region
      $region17: #{upsampling_forward.4} parent=11 // pred_check
        %p192 = pneg %p106
      $region18: #{upsampling_forward.4} parent=11 // pred_check_branch
        %194 = sbr.rel (%p192) target = $region20
      $region19: #{upsampling_forward.4} parent=11 // pred_region
        _
      $region20: #{upsampling_forward.4} parent=11 // pred_fallthru
        _
      // Predicated region
      $region21: #{upsampling_forward.4} parent=11 // pred_check
        %p195 = pneg %p127
      $region22: #{upsampling_forward.4} parent=11 // pred_check_branch
        %197 = sbr.rel (%p195) target = $region24
      $region23: #{upsampling_forward.4} parent=11 // pred_region
        _
      $region24: #{upsampling_forward.4} parent=11 // pred_fallthru
        _
      // Predicated region
      $region25: #{upsampling_forward.4} parent=11 // pred_check
        %p198 = pneg %p148
      $region26: #{upsampling_forward.4} parent=11 // pred_check_branch
        %200 = sbr.rel (%p198) target = $region28
      $region27: #{upsampling_forward.4} parent=11 // pred_region
        _
      $region28: #{upsampling_forward.4} parent=11 // pred_fallthru
        _
    $region12: #{upsampling_forward.4} parent=5 // pred_fallthru
      _
    %p201 = scmp.lt.s32.totalorder %s12, 2
    // Predicated region
    $region29: #{upsampling_forward.4} parent=5 // pred_check
      %p202 = pneg %p201
    $region30: #{upsampling_forward.4} parent=5 // pred_check_branch
      %204 = sbr.rel (%p202) target = $region32
    $region31: #{upsampling_forward.4} parent=5 // pred_region
      // Predicated region
      $region33: #{upsampling_forward.4} parent=31 // pred_check
        %p205 = pneg %p32
      $region34: #{upsampling_forward.4} parent=31 // pred_check_branch
        %207 = sbr.rel (%p205) target = $region36
      $region35: #{upsampling_forward.4} parent=31 // pred_region
        %p208 = scmp.lt.s32.totalorder %s12, 1
        %s209 = scalar_select %p208, %s12, 1
        %s210 = smul.addr %s209, 32
        %s211 = smul.addr %s210, 4
        %s212 = scalar_lea.vmem %s0, %s211
      $region36: #{upsampling_forward.4} parent=31 // pred_fallthru
        _
      // Predicated region
      $region37: #{upsampling_forward.4} parent=31 // pred_check
        %p213 = pneg %p58
      $region38: #{upsampling_forward.4} parent=31 // pred_check_branch
        %215 = sbr.rel (%p213) target = $region40
      $region39: #{upsampling_forward.4} parent=31 // pred_region
        %p216 = scmp.lt.s32.totalorder %s12, 1
        %s217 = scalar_select %p216, %s12, 1
        %s218 = smul.addr %s217, 32
        %s219 = smul.addr %s218, 4
        %s220 = scalar_lea.vmem %s1, %s219
      $region40: #{upsampling_forward.4} parent=31 // pred_fallthru
        _
    $region32: #{upsampling_forward.4} parent=5 // pred_fallthru
      _
    %p221 = scmp.le.s32.totalorder 1, %s12
    %p222 = scmp.lt.s32.totalorder %s12, 3
    %p223 = pnand %p221, %p222
    %p224 = pneg %p223
    // Predicated region
    $region41: #{upsampling_forward.4} parent=5 // pred_check
      _
    $region42: #{upsampling_forward.4} parent=5 // pred_check_branch
      %226 = sbr.rel (%p223) target = $region44
    $region43: #{upsampling_forward.4} parent=5 // pred_region
      %s227 = ssub.s32 %s12, 1
      %p228 = scmp.lt.s32.totalorder %s17, 1
      %s229 = scalar_select %p228, %s17, 1
      %s230 = smul.addr %s229, 32
      %s231 = smul.addr %s230, 4
      %s232 = scalar_lea.vmem %s0, %s231
      %p233 = pneg %p38
      %p234 = pneg %p35
      %p235 = scmp.lt.s32.totalorder %s17, 1
      %s236 = scalar_select %p235, %s17, 1
      %s237 = smul.addr %s236, 32
      %s238 = smul.addr %s237, 4
      %s239 = scalar_lea.vmem %s1, %s238
      %p240 = pneg %p64
      %p241 = pneg %p61
      %p242 = pneg %p85
      %p243 = pneg %p82
      %p244 = pneg %p106
      %p245 = pneg %p103
      %p246 = pneg %p127
      %p247 = pneg %p124
      %p248 = pneg %p148
      %p249 = pneg %p145
      %p250 = pneg %p174
      %p251 = pneg %p171
      %p252 = scmp.lt.s32.totalorder %s17, 1
      %s253 = scalar_select %p252, %s17, 1
      %s254 = smul.addr %s253, 32
      %s255 = smul.addr %s254, 4
      %s256 = scalar_lea.vmem %s6, %s255
      %p257 = scmp.lt.s32.totalorder %s17, 1
      %s258 = scalar_select %p257, %s17, 1
      %s259 = smul.addr %s258, 32
      %s260 = smul.addr %s259, 4
      %s261 = scalar_lea.vmem %s0, %s260
      %p262 = scmp.lt.s32.totalorder %s17, 1
      %s263 = scalar_select %p262, %s17, 1
      %s264 = smul.addr %s263, 32
      %s265 = smul.addr %s264, 4
      %s266 = scalar_lea.vmem %s1, %s265
      %p267 = scmp.lt.s32.totalorder %s17, 1
      %s268 = scalar_select %p267, %s17, 1
      %s269 = smul.addr %s268, 32
      %s270 = smul.addr %s269, 4
      %s271 = scalar_lea.vmem %s6, %s270
      %vm273 = vcmask 31744
      %274 = vst.msk [vmem:[#allocation2] sm:$0xff] %vm273, 0.0
      %275 = vst.msk [vmem:[#allocation2 + $0x8] sm:$0xff] %vm273, 0.0
      %vm276 = vcmask 25600
      %277 = vst.msk [vmem:[#allocation2 + $0x10] sm:$0x3] %vm276, 0.0
      %278 = vst.msk [vmem:[#allocation2 + $0x18] sm:$0xff] %vm273, 0.0
      %279 = vst.msk [vmem:[#allocation2 + $0x20] sm:$0xff] %vm273, 0.0
      %280 = vst.msk [vmem:[#allocation2 + $0x28] sm:$0x3] %vm276, 0.0
      %281 = vst.msk [vmem:[#allocation2 + $0x30] sm:$0xff] %vm273, 0.0
      %282 = vst.msk [vmem:[#allocation2 + $0x38] sm:$0xff] %vm273, 0.0
      %283 = vst.msk [vmem:[#allocation2 + $0x40] sm:$0x3] %vm276, 0.0
      %284 = vst.msk [vmem:[#allocation2 + $0x48] sm:$0xff] %vm273, 0.0
      %285 = vst.msk [vmem:[#allocation2 + $0x50] sm:$0xff] %vm273, 0.0
      %286 = vst.msk [vmem:[#allocation2 + $0x58] sm:$0x3] %vm276, 0.0
      %287 = vst.msk [vmem:[#allocation2 + $0x60] sm:$0xff] %vm273, 0.0
      %288 = vst.msk [vmem:[#allocation2 + $0x68] sm:$0xff] %vm273, 0.0
      %289 = vst.msk [vmem:[#allocation2 + $0x70] sm:$0x3] %vm276, 0.0
      %290 = vst.msk [vmem:[#allocation2 + $0x78] sm:$0xff] %vm273, 0.0
      %291 = vst.msk [vmem:[#allocation2 + $0x80] sm:$0xff] %vm273, 0.0
      %292 = vst.msk [vmem:[#allocation2 + $0x88] sm:$0x3] %vm276, 0.0
      %293 = vst.msk [vmem:[#allocation2 + $0x90] sm:$0xff] %vm273, 0.0
      %294 = vst.msk [vmem:[#allocation2 + $0x98] sm:$0xff] %vm273, 0.0
      %295 = vst.msk [vmem:[#allocation2 + $0xa0] sm:$0x3] %vm276, 0.0
      %296 = vst.msk [vmem:[#allocation2 + $0xa8] sm:$0xff] %vm273, 0.0
      %297 = vst.msk [vmem:[#allocation2 + $0xb0] sm:$0xff] %vm273, 0.0
      %298 = vst.msk [vmem:[#allocation2 + $0xb8] sm:$0x3] %vm276, 0.0
      %299 = vst.msk [vmem:[#allocation2 + $0xc0] sm:$0xff] %vm273, 0.0
      %300 = vst.msk [vmem:[#allocation2 + $0xc8] sm:$0xff] %vm273, 0.0
      %301 = vst.msk [vmem:[#allocation2 + $0xd0] sm:$0x3] %vm276, 0.0
      %302 = vst.msk [vmem:[#allocation2 + $0xd8] sm:$0xff] %vm273, 0.0
      %303 = vst.msk [vmem:[#allocation2 + $0xe0] sm:$0xff] %vm273, 0.0
      %304 = vst.msk [vmem:[#allocation2 + $0xe8] sm:$0x3] %vm276, 0.0
      %305 = vst.msk [vmem:[#allocation2 + $0xf0] sm:$0xff] %vm273, 0.0
      %306 = vst.msk [vmem:[#allocation2 + $0xf8] sm:$0xff] %vm273, 0.0
      %307 = vst.msk [vmem:[#allocation2 + $0x100] sm:$0x3] %vm276, 0.0
      %308 = vst.msk [vmem:[#allocation2 + $0x108] sm:$0xff] %vm273, 0.0
      %309 = vst.msk [vmem:[#allocation2 + $0x110] sm:$0xff] %vm273, 0.0
      %310 = vst.msk [vmem:[#allocation2 + $0x118] sm:$0x3] %vm276, 0.0
      %311 = vst.msk [vmem:[#allocation2 + $0x120] sm:$0xff] %vm273, 0.0
      %312 = vst.msk [vmem:[#allocation2 + $0x128] sm:$0xff] %vm273, 0.0
      %313 = vst.msk [vmem:[#allocation2 + $0x130] sm:$0x3] %vm276, 0.0
      %314 = vst.msk [vmem:[#allocation2 + $0x138] sm:$0xff] %vm273, 0.0
      %315 = vst.msk [vmem:[#allocation2 + $0x140] sm:$0xff] %vm273, 0.0
      %316 = vst.msk [vmem:[#allocation2 + $0x148] sm:$0x3] %vm276, 0.0
      %317 = vst.msk [vmem:[#allocation2 + $0x150] sm:$0xff] %vm273, 0.0
      %318 = vst.msk [vmem:[#allocation2 + $0x158] sm:$0xff] %vm273, 0.0
      %319 = vst.msk [vmem:[#allocation2 + $0x160] sm:$0x3] %vm276, 0.0
      %320 = vst.msk [vmem:[#allocation2 + $0x168] sm:$0xff] %vm273, 0.0
      %321 = vst.msk [vmem:[#allocation2 + $0x170] sm:$0xff] %vm273, 0.0
      %322 = vst.msk [vmem:[#allocation2 + $0x178] sm:$0x3] %vm276, 0.0
      %323 = vst.msk [vmem:[#allocation2 + $0x180] sm:$0xff] %vm273, 0.0
      %324 = vst.msk [vmem:[#allocation2 + $0x188] sm:$0xff] %vm273, 0.0
      %325 = vst.msk [vmem:[#allocation2 + $0x190] sm:$0x3] %vm276, 0.0
      %326 = vst.msk [vmem:[#allocation2 + $0x198] sm:$0xff] %vm273, 0.0
      %327 = vst.msk [vmem:[#allocation2 + $0x1a0] sm:$0xff] %vm273, 0.0
      %328 = vst.msk [vmem:[#allocation2 + $0x1a8] sm:$0x3] %vm276, 0.0
      %v329 = vld [vmem:[%s261] sm:$0xf]
      %v330 = vld [vmem:[%s261 + $0x4] sm:$0xf]
      %v331 = vld [vmem:[%s261 + $0x8] sm:$0xf]
      %v332 = vld [vmem:[%s261 + $0xc] sm:$0xf]
      %v333 = vld [vmem:[%s261 + $0x10] sm:$0xf]
      %v334 = vld [vmem:[%s261 + $0x14] sm:$0xf]
      %v335 = vld [vmem:[%s261 + $0x18] sm:$0xf]
      %v336 = vld [vmem:[%s261 + $0x1c] sm:$0xf]
      %v337 = vld [vmem:[%s261 + $0x20] sm:$0xf]
      %v338 = vld [vmem:[%s261 + $0x24] sm:$0xf]
      %v339 = vld [vmem:[%s261 + $0x28] sm:$0xf]
      %v340 = vld [vmem:[%s261 + $0x2c] sm:$0xf]
      %v341 = vld [vmem:[%s261 + $0x30] sm:$0xf]
      %v342 = vld [vmem:[%s261 + $0x34] sm:$0xf]
      %v343 = vld [vmem:[%s261 + $0x38] sm:$0xf]
      %v344 = vld [vmem:[%s261 + $0x3c] sm:$0xf]
      %v345 = vld [vmem:[%s261 + $0x40] sm:$0xf]
      %v346 = vld [vmem:[%s261 + $0x44] sm:$0xf]
      %v347 = vld [vmem:[%s261 + $0x48] sm:$0xf]
      %v348 = vld [vmem:[%s261 + $0x4c] sm:$0xf]
      %v349 = vld [vmem:[%s261 + $0x50] sm:$0xf]
      %v350 = vld [vmem:[%s261 + $0x54] sm:$0xf]
      %v351 = vld [vmem:[%s261 + $0x58] sm:$0xf]
      %v352 = vld [vmem:[%s261 + $0x5c] sm:$0xf]
      %v353 = vld [vmem:[%s261 + $0x60] sm:$0xf]
      %v354 = vld [vmem:[%s261 + $0x64] sm:$0xf]
      %v355 = vld [vmem:[%s261 + $0x68] sm:$0xf]
      %v356 = vld [vmem:[%s261 + $0x6c] sm:$0xf]
      %v357 = vld [vmem:[%s261 + $0x70] sm:$0xf]
      %v358 = vld [vmem:[%s261 + $0x74] sm:$0xf]
      %v359 = vld [vmem:[%s261 + $0x78] sm:$0xf]
      %v360 = vld [vmem:[%s261 + $0x7c] sm:$0xf]
      %v361 = vld [vmem:[%s266] sm:$0xf]
      %v362 = vld [vmem:[%s266 + $0x4] sm:$0xf]
      %v363 = vld [vmem:[%s266 + $0x8] sm:$0xf]
      %v364 = vld [vmem:[%s266 + $0xc] sm:$0xf]
      %v365 = vld [vmem:[%s266 + $0x10] sm:$0xf]
      %v366 = vld [vmem:[%s266 + $0x14] sm:$0xf]
      %v367 = vld [vmem:[%s266 + $0x18] sm:$0xf]
      %v368 = vld [vmem:[%s266 + $0x1c] sm:$0xf]
      %v369 = vld [vmem:[%s266 + $0x20] sm:$0xf]
      %v370 = vld [vmem:[%s266 + $0x24] sm:$0xf]
      %v371 = vld [vmem:[%s266 + $0x28] sm:$0xf]
      %v372 = vld [vmem:[%s266 + $0x2c] sm:$0xf]
      %v373 = vld [vmem:[%s266 + $0x30] sm:$0xf]
      %v374 = vld [vmem:[%s266 + $0x34] sm:$0xf]
      %v375 = vld [vmem:[%s266 + $0x38] sm:$0xf]
      %v376 = vld [vmem:[%s266 + $0x3c] sm:$0xf]
      %v377 = vld [vmem:[%s266 + $0x40] sm:$0xf]
      %v378 = vld [vmem:[%s266 + $0x44] sm:$0xf]
      %v379 = vld [vmem:[%s266 + $0x48] sm:$0xf]
      %v380 = vld [vmem:[%s266 + $0x4c] sm:$0xf]
      %v381 = vld [vmem:[%s266 + $0x50] sm:$0xf]
      %v382 = vld [vmem:[%s266 + $0x54] sm:$0xf]
      %v383 = vld [vmem:[%s266 + $0x58] sm:$0xf]
      %v384 = vld [vmem:[%s266 + $0x5c] sm:$0xf]
      %v385 = vld [vmem:[%s266 + $0x60] sm:$0xf]
      %v386 = vld [vmem:[%s266 + $0x64] sm:$0xf]
      %v387 = vld [vmem:[%s266 + $0x68] sm:$0xf]
      %v388 = vld [vmem:[%s266 + $0x6c] sm:$0xf]
      %v389 = vld [vmem:[%s266 + $0x70] sm:$0xf]
      %v390 = vld [vmem:[%s266 + $0x74] sm:$0xf]
      %v391 = vld [vmem:[%s266 + $0x78] sm:$0xf]
      %v392 = vld [vmem:[%s266 + $0x7c] sm:$0xf]
      %v393 = vld [vmem:[%s2] sm:$0x3]
      %v394 = vld [vmem:[%s3] sm:$0x3]
      %v427 = vunpack.c.l.b16 %v361
      %v428 = vunpack.c.l.b16 %v362
      %v429 = vunpack.c.l.b16 %v363
      %v430 = vunpack.c.l.b16 %v364
      %v431 = vunpack.c.l.b16 %v365
      %v432 = vunpack.c.l.b16 %v366
      %v433 = vunpack.c.l.b16 %v367
      %v434 = vunpack.c.l.b16 %v368
      %v435 = vunpack.c.l.b16 %v369
      %v436 = vunpack.c.l.b16 %v370
      %v437 = vunpack.c.l.b16 %v371
      %v438 = vunpack.c.l.b16 %v372
      %v439 = vunpack.c.l.b16 %v373
      %v440 = vunpack.c.l.b16 %v374
      %v441 = vunpack.c.l.b16 %v375
      %v442 = vunpack.c.l.b16 %v376
      %v443 = vunpack.c.l.b16 %v377
      %v444 = vunpack.c.l.b16 %v378
      %v445 = vunpack.c.l.b16 %v379
      %v446 = vunpack.c.l.b16 %v380
      %v447 = vunpack.c.l.b16 %v381
      %v448 = vunpack.c.l.b16 %v382
      %v449 = vunpack.c.l.b16 %v383
      %v450 = vunpack.c.l.b16 %v384
      %v451 = vunpack.c.l.b16 %v385
      %v452 = vunpack.c.l.b16 %v386
      %v453 = vunpack.c.l.b16 %v387
      %v454 = vunpack.c.l.b16 %v388
      %v455 = vunpack.c.l.b16 %v389
      %v456 = vunpack.c.l.b16 %v390
      %v457 = vunpack.c.l.b16 %v391
      %v458 = vunpack.c.l.b16 %v392
      %v459 = vpack.c.b16 %v428, %v427
      %v460 = vpack.c.b16 %v430, %v429
      %v461 = vpack.c.b16 %v432, %v431
      %v462 = vpack.c.b16 %v434, %v433
      %v463 = vpack.c.b16 %v436, %v435
      %v464 = vpack.c.b16 %v438, %v437
      %v465 = vpack.c.b16 %v440, %v439
      %v466 = vpack.c.b16 %v442, %v441
      %v467 = vpack.c.b16 %v444, %v443
      %v468 = vpack.c.b16 %v446, %v445
      %v469 = vpack.c.b16 %v448, %v447
      %v470 = vpack.c.b16 %v450, %v449
      %v471 = vpack.c.b16 %v452, %v451
      %v472 = vpack.c.b16 %v454, %v453
      %v473 = vpack.c.b16 %v456, %v455
      %v474 = vpack.c.b16 %v458, %v457
      %v476 = vsel %vm273, %v459, 0
      %v479 = vsel %vm273, %v460, 0
      %v482 = vsel %vm273, %v461, 0
      %v485 = vsel %vm273, %v462, 0
      %v488 = vsel %vm273, %v463, 0
      %v491 = vsel %vm273, %v464, 0
      %v494 = vsel %vm273, %v465, 0
      %v497 = vsel %vm273, %v466, 0
      %v500 = vsel %vm273, %v467, 0
      %v503 = vsel %vm273, %v468, 0
      %v506 = vsel %vm273, %v469, 0
      %v509 = vsel %vm273, %v470, 0
      %v512 = vsel %vm273, %v471, 0
      %v515 = vsel %vm273, %v472, 0
      %v518 = vsel %vm273, %v473, 0
      %v521 = vsel %vm273, %v474, 0
      %vm523 = vcmask 1041408
      %v525 = vsel %vm523, %v394, 0
      %527 = vmatprep.subr.bf16.mxu0 0
      %528 = vmatpush1.bf16.msra.mxu0 %v525
      %529 = vmatprep.subr.bf16.mxu0 0
      %530 = vmatpush1.bf16.msra.mxu0 0
      %531 = vmatprep.subr.bf16.mxu0 0
      %532 = vmatpush1.bf16.msra.mxu0 0
      %533 = vmatprep.subr.bf16.mxu0 0
      %534 = vmatpush1.bf16.msra.mxu0 0
      %535 = vmatprep.subr.bf16.mxu0 0
      %536 = vmatpush1.bf16.msra.mxu0 0
      %537 = vmatprep.subr.bf16.mxu0 0
      %538 = vmatpush1.bf16.msra.mxu0 0
      %539 = vmatprep.subr.bf16.mxu0 0
      %540 = vmatpush1.bf16.msra.mxu0 0
      %541 = vmatprep.subr.bf16.mxu0 0
      %542 = vmatpush1.bf16.msra.mxu0 0
      %543 = vmatprep.subr.bf16.mxu0 0
      %544 = vmatpush1.bf16.msra.mxu0 0
      %545 = vmatprep.subr.bf16.mxu0 0
      %546 = vmatpush1.bf16.msra.mxu0 0
      %547 = vmatprep.subr.bf16.mxu0 0
      %548 = vmatpush1.bf16.msra.mxu0 0
      %549 = vmatprep.subr.bf16.mxu0 0
      %550 = vmatpush1.bf16.msra.mxu0 0
      %551 = vmatprep.subr.bf16.mxu0 0
      %552 = vmatpush1.bf16.msra.mxu0 0
      %553 = vmatprep.subr.bf16.mxu0 0
      %554 = vmatpush1.bf16.msra.mxu0 0
      %555 = vmatprep.subr.bf16.mxu0 0
      %556 = vmatpush1.bf16.msra.mxu0 0
      %557 = vmatprep.subr.bf16.mxu0 0
      %558 = vmatpush1.bf16.msra.mxu0 0
      %559 = vmatprep.mubr.bf16.mxu0 0
      %560 = vmatmul.mubr.bf16.gmra.mrb[0].mxu0 %v476
      %v561 = vpop.f32.mrb[0].mxu0
      %v562 = vadd.f32 0.0, %v561
      %v563 = vpop.f32.mrb[0].mxu0
      %v564 = vpop.f32.mrb[0].mxu0
      %v565 = vadd.f32 0.0, %v564
      %v566 = vpop.f32.mrb[0].mxu0
      %567 = vmatprep.mubr.bf16.mxu0 0
      %568 = vmatmul.mubr.bf16.gmra.mrb[0].mxu0 %v479
      %v569 = vpop.f32.mrb[0].mxu0
      %v570 = vadd.f32 0.0, %v569
      %v571 = vpop.f32.mrb[0].mxu0
      %v572 = vpop.f32.mrb[0].mxu0
      %v573 = vadd.f32 0.0, %v572
      %v574 = vpop.f32.mrb[0].mxu0
      %575 = vmatprep.mubr.bf16.mxu0 0
      %576 = vmatmul.mubr.bf16.gmra.mrb[0].mxu0 %v482
      %v577 = vpop.f32.mrb[0].mxu0
      %v578 = vadd.f32 0.0, %v577
      %v579 = vpop.f32.mrb[0].mxu0
      %v580 = vpop.f32.mrb[0].mxu0
      %v581 = vadd.f32 0.0, %v580
      %v582 = vpop.f32.mrb[0].mxu0
      %583 = vmatprep.mubr.bf16.mxu0 0
      %584 = vmatmul.mubr.bf16.gmra.mrb[0].mxu0 %v485
      %v585 = vpop.f32.mrb[0].mxu0
      %v586 = vadd.f32 0.0, %v585
      %v587 = vpop.f32.mrb[0].mxu0
      %v588 = vpop.f32.mrb[0].mxu0
      %v589 = vadd.f32 0.0, %v588
      %v590 = vpop.f32.mrb[0].mxu0
      %591 = vmatprep.mubr.bf16.mxu0 0
      %592 = vmatmul.mubr.bf16.gmra.mrb[0].mxu0 %v488
      %v593 = vpop.f32.mrb[0].mxu0
      %v594 = vadd.f32 0.0, %v593
      %v595 = vpop.f32.mrb[0].mxu0
      %v596 = vpop.f32.mrb[0].mxu0
      %v597 = vadd.f32 0.0, %v596
      %v598 = vpop.f32.mrb[0].mxu0
      %599 = vmatprep.mubr.bf16.mxu0 0
      %600 = vmatmul.mubr.bf16.gmra.mrb[0].mxu0 %v491
      %v601 = vpop.f32.mrb[0].mxu0
      %v602 = vadd.f32 0.0, %v601
      %v603 = vpop.f32.mrb[0].mxu0
      %v604 = vpop.f32.mrb[0].mxu0
      %v605 = vadd.f32 0.0, %v604
      %v606 = vpop.f32.mrb[0].mxu0
      %607 = vmatprep.mubr.bf16.mxu0 0
      %608 = vmatmul.mubr.bf16.gmra.mrb[0].mxu0 %v494
      %v609 = vpop.f32.mrb[0].mxu0
      %v610 = vadd.f32 0.0, %v609
      %v611 = vpop.f32.mrb[0].mxu0
      %v612 = vpop.f32.mrb[0].mxu0
      %v613 = vadd.f32 0.0, %v612
      %v614 = vpop.f32.mrb[0].mxu0
      %615 = vmatprep.mubr.bf16.mxu0 0
      %616 = vmatmul.mubr.bf16.gmra.mrb[0].mxu0 %v497
      %v617 = vpop.f32.mrb[0].mxu0
      %v618 = vadd.f32 0.0, %v617
      %v619 = vpop.f32.mrb[0].mxu0
      %v620 = vpop.f32.mrb[0].mxu0
      %v621 = vadd.f32 0.0, %v620
      %v622 = vpop.f32.mrb[0].mxu0
      %623 = vmatprep.mubr.bf16.mxu0 0
      %624 = vmatmul.mubr.bf16.gmra.mrb[0].mxu0 %v500
      %v625 = vpop.f32.mrb[0].mxu0
      %v626 = vadd.f32 0.0, %v625
      %v627 = vpop.f32.mrb[0].mxu0
      %v628 = vpop.f32.mrb[0].mxu0
      %v629 = vadd.f32 0.0, %v628
      %v630 = vpop.f32.mrb[0].mxu0
      %631 = vmatprep.mubr.bf16.mxu0 0
      %632 = vmatmul.mubr.bf16.gmra.mrb[0].mxu0 %v503
      %v633 = vpop.f32.mrb[0].mxu0
      %v634 = vadd.f32 0.0, %v633
      %v635 = vpop.f32.mrb[0].mxu0
      %v636 = vpop.f32.mrb[0].mxu0
      %v637 = vadd.f32 0.0, %v636
      %v638 = vpop.f32.mrb[0].mxu0
      %639 = vmatprep.mubr.bf16.mxu0 0
      %640 = vmatmul.mubr.bf16.gmra.mrb[0].mxu0 %v506
      %v641 = vpop.f32.mrb[0].mxu0
      %v642 = vadd.f32 0.0, %v641
      %v643 = vpop.f32.mrb[0].mxu0
      %v644 = vpop.f32.mrb[0].mxu0
      %v645 = vadd.f32 0.0, %v644
      %v646 = vpop.f32.mrb[0].mxu0
      %647 = vmatprep.mubr.bf16.mxu0 0
      %648 = vmatmul.mubr.bf16.gmra.mrb[0].mxu0 %v509
      %v649 = vpop.f32.mrb[0].mxu0
      %v650 = vadd.f32 0.0, %v649
      %v651 = vpop.f32.mrb[0].mxu0
      %v652 = vpop.f32.mrb[0].mxu0
      %v653 = vadd.f32 0.0, %v652
      %v654 = vpop.f32.mrb[0].mxu0
      %655 = vmatprep.mubr.bf16.mxu0 0
      %656 = vmatmul.mubr.bf16.gmra.mrb[0].mxu0 %v512
      %v657 = vpop.f32.mrb[0].mxu0
      %v658 = vadd.f32 0.0, %v657
      %v659 = vpop.f32.mrb[0].mxu0
      %v660 = vpop.f32.mrb[0].mxu0
      %v661 = vadd.f32 0.0, %v660
      %v662 = vpop.f32.mrb[0].mxu0
      %663 = vmatprep.mubr.bf16.mxu0 0
      %664 = vmatmul.mubr.bf16.gmra.mrb[0].mxu0 %v515
      %v665 = vpop.f32.mrb[0].mxu0
      %v666 = vadd.f32 0.0, %v665
      %v667 = vpop.f32.mrb[0].mxu0
      %v668 = vpop.f32.mrb[0].mxu0
      %v669 = vadd.f32 0.0, %v668
      %v670 = vpop.f32.mrb[0].mxu0
      %671 = vmatprep.mubr.bf16.mxu0 0
      %672 = vmatmul.mubr.bf16.gmra.mrb[0].mxu0 %v518
      %v673 = vpop.f32.mrb[0].mxu0
      %v674 = vadd.f32 0.0, %v673
      %v675 = vpop.f32.mrb[0].mxu0
      %v676 = vpop.f32.mrb[0].mxu0
      %v677 = vadd.f32 0.0, %v676
      %v678 = vpop.f32.mrb[0].mxu0
      %679 = vmatprep.mubr.bf16.mxu0 0
      %680 = vmatmul.mubr.bf16.gmra.mrb[0].mxu0 %v521
      %v681 = vpop.f32.mrb[0].mxu0
      %v682 = vadd.f32 0.0, %v681
      %v683 = vpop.f32.mrb[0].mxu0
      %v684 = vpop.f32.mrb[0].mxu0
      %v685 = vadd.f32 0.0, %v684
      %v686 = vpop.f32.mrb[0].mxu0
      %687 = vdwg.mxu0
      %v720 = vunpack.c.l.b16 %v329
      %v721 = vunpack.c.l.b16 %v330
      %v722 = vunpack.c.l.b16 %v331
      %v723 = vunpack.c.l.b16 %v332
      %v724 = vunpack.c.l.b16 %v333
      %v725 = vunpack.c.l.b16 %v334
      %v726 = vunpack.c.l.b16 %v335
      %v727 = vunpack.c.l.b16 %v336
      %v728 = vunpack.c.l.b16 %v337
      %v729 = vunpack.c.l.b16 %v338
      %v730 = vunpack.c.l.b16 %v339
      %v731 = vunpack.c.l.b16 %v340
      %v732 = vunpack.c.l.b16 %v341
      %v733 = vunpack.c.l.b16 %v342
      %v734 = vunpack.c.l.b16 %v343
      %v735 = vunpack.c.l.b16 %v344
      %v736 = vunpack.c.l.b16 %v345
      %v737 = vunpack.c.l.b16 %v346
      %v738 = vunpack.c.l.b16 %v347
      %v739 = vunpack.c.l.b16 %v348
      %v740 = vunpack.c.l.b16 %v349
      %v741 = vunpack.c.l.b16 %v350
      %v742 = vunpack.c.l.b16 %v351
      %v743 = vunpack.c.l.b16 %v352
      %v744 = vunpack.c.l.b16 %v353
      %v745 = vunpack.c.l.b16 %v354
      %v746 = vunpack.c.l.b16 %v355
      %v747 = vunpack.c.l.b16 %v356
      %v748 = vunpack.c.l.b16 %v357
      %v749 = vunpack.c.l.b16 %v358
      %v750 = vunpack.c.l.b16 %v359
      %v751 = vunpack.c.l.b16 %v360
      %v752 = vpack.c.b16 %v721, %v720
      %v753 = vpack.c.b16 %v723, %v722
      %v754 = vpack.c.b16 %v725, %v724
      %v755 = vpack.c.b16 %v727, %v726
      %v756 = vpack.c.b16 %v729, %v728
      %v757 = vpack.c.b16 %v731, %v730
      %v758 = vpack.c.b16 %v733, %v732
      %v759 = vpack.c.b16 %v735, %v734
      %v760 = vpack.c.b16 %v737, %v736
      %v761 = vpack.c.b16 %v739, %v738
      %v762 = vpack.c.b16 %v741, %v740
      %v763 = vpack.c.b16 %v743, %v742
      %v764 = vpack.c.b16 %v745, %v744
      %v765 = vpack.c.b16 %v747, %v746
      %v766 = vpack.c.b16 %v749, %v748
      %v767 = vpack.c.b16 %v751, %v750
      %v769 = vsel %vm273, %v752, 0
      %v772 = vsel %vm273, %v753, 0
      %v775 = vsel %vm273, %v754, 0
      %v778 = vsel %vm273, %v755, 0
      %v781 = vsel %vm273, %v756, 0
      %v784 = vsel %vm273, %v757, 0
      %v787 = vsel %vm273, %v758, 0
      %v790 = vsel %vm273, %v759, 0
      %v793 = vsel %vm273, %v760, 0
      %v796 = vsel %vm273, %v761, 0
      %v799 = vsel %vm273, %v762, 0
      %v802 = vsel %vm273, %v763, 0
      %v805 = vsel %vm273, %v764, 0
      %v808 = vsel %vm273, %v765, 0
      %v811 = vsel %vm273, %v766, 0
      %v814 = vsel %vm273, %v767, 0
      %v817 = vsel %vm523, %v393, 0
      %819 = vmatprep.subr.bf16.mxu0 0
      %820 = vmatpush1.bf16.msra.mxu0 %v817
      %821 = vmatprep.subr.bf16.mxu0 0
      %822 = vmatpush1.bf16.msra.mxu0 0
      %823 = vmatprep.subr.bf16.mxu0 0
      %824 = vmatpush1.bf16.msra.mxu0 0
      %825 = vmatprep.subr.bf16.mxu0 0
      %826 = vmatpush1.bf16.msra.mxu0 0
      %827 = vmatprep.subr.bf16.mxu0 0
      %828 = vmatpush1.bf16.msra.mxu0 0
      %829 = vmatprep.subr.bf16.mxu0 0
      %830 = vmatpush1.bf16.msra.mxu0 0
      %831 = vmatprep.subr.bf16.mxu0 0
      %832 = vmatpush1.bf16.msra.mxu0 0
      %833 = vmatprep.subr.bf16.mxu0 0
      %834 = vmatpush1.bf16.msra.mxu0 0
      %835 = vmatprep.subr.bf16.mxu0 0
      %836 = vmatpush1.bf16.msra.mxu0 0
      %837 = vmatprep.subr.bf16.mxu0 0
      %838 = vmatpush1.bf16.msra.mxu0 0
      %839 = vmatprep.subr.bf16.mxu0 0
      %840 = vmatpush1.bf16.msra.mxu0 0
      %841 = vmatprep.subr.bf16.mxu0 0
      %842 = vmatpush1.bf16.msra.mxu0 0
      %843 = vmatprep.subr.bf16.mxu0 0
      %844 = vmatpush1.bf16.msra.mxu0 0
      %845 = vmatprep.subr.bf16.mxu0 0
      %846 = vmatpush1.bf16.msra.mxu0 0
      %847 = vmatprep.subr.bf16.mxu0 0
      %848 = vmatpush1.bf16.msra.mxu0 0
      %849 = vmatprep.subr.bf16.mxu0 0
      %850 = vmatpush1.bf16.msra.mxu0 0
      %851 = vmatprep.mubr.bf16.mxu0 0
      %852 = vmatmul.mubr.bf16.gmra.mrb[0].mxu0 %v769
      %v853 = vpop.f32.mrb[0].mxu0
      %v854 = vadd.f32 %v562, %v853
      %v855 = vpop.f32.mrb[0].mxu0
      %v856 = vpop.f32.mrb[0].mxu0
      %v857 = vadd.f32 %v565, %v856
      %v858 = vpop.f32.mrb[0].mxu0
      %859 = vmatprep.mubr.bf16.mxu0 0
      %860 = vmatmul.mubr.bf16.gmra.mrb[0].mxu0 %v772
      %v861 = vpop.f32.mrb[0].mxu0
      %v862 = vadd.f32 %v570, %v861
      %v863 = vpop.f32.mrb[0].mxu0
      %v864 = vpop.f32.mrb[0].mxu0
      %v865 = vadd.f32 %v573, %v864
      %v866 = vpop.f32.mrb[0].mxu0
      %867 = vmatprep.mubr.bf16.mxu0 0
      %868 = vmatmul.mubr.bf16.gmra.mrb[0].mxu0 %v775
      %v869 = vpop.f32.mrb[0].mxu0
      %v870 = vadd.f32 %v578, %v869
      %v871 = vpop.f32.mrb[0].mxu0
      %v872 = vpop.f32.mrb[0].mxu0
      %v873 = vadd.f32 %v581, %v872
      %v874 = vpop.f32.mrb[0].mxu0
      %875 = vmatprep.mubr.bf16.mxu0 0
      %876 = vmatmul.mubr.bf16.gmra.mrb[0].mxu0 %v778
      %v877 = vpop.f32.mrb[0].mxu0
      %v878 = vadd.f32 %v586, %v877
      %v879 = vpop.f32.mrb[0].mxu0
      %v880 = vpop.f32.mrb[0].mxu0
      %v881 = vadd.f32 %v589, %v880
      %v882 = vpop.f32.mrb[0].mxu0
      %883 = vmatprep.mubr.bf16.mxu0 0
      %884 = vmatmul.mubr.bf16.gmra.mrb[0].mxu0 %v781
      %v885 = vpop.f32.mrb[0].mxu0
      %v886 = vadd.f32 %v594, %v885
      %v887 = vpop.f32.mrb[0].mxu0
      %v888 = vpop.f32.mrb[0].mxu0
      %v889 = vadd.f32 %v597, %v888
      %v890 = vpop.f32.mrb[0].mxu0
      %891 = vmatprep.mubr.bf16.mxu0 0
      %892 = vmatmul.mubr.bf16.gmra.mrb[0].mxu0 %v784
      %v893 = vpop.f32.mrb[0].mxu0
      %v894 = vadd.f32 %v602, %v893
      %v895 = vpop.f32.mrb[0].mxu0
      %v896 = vpop.f32.mrb[0].mxu0
      %v897 = vadd.f32 %v605, %v896
      %v898 = vpop.f32.mrb[0].mxu0
      %899 = vmatprep.mubr.bf16.mxu0 0
      %900 = vmatmul.mubr.bf16.gmra.mrb[0].mxu0 %v787
      %v901 = vpop.f32.mrb[0].mxu0
      %v902 = vadd.f32 %v610, %v901
      %v903 = vpop.f32.mrb[0].mxu0
      %v904 = vpop.f32.mrb[0].mxu0
      %v905 = vadd.f32 %v613, %v904
      %v906 = vpop.f32.mrb[0].mxu0
      %907 = vmatprep.mubr.bf16.mxu0 0
      %908 = vmatmul.mubr.bf16.gmra.mrb[0].mxu0 %v790
      %v909 = vpop.f32.mrb[0].mxu0
      %v910 = vadd.f32 %v618, %v909
      %v911 = vpop.f32.mrb[0].mxu0
      %v912 = vpop.f32.mrb[0].mxu0
      %v913 = vadd.f32 %v621, %v912
      %v914 = vpop.f32.mrb[0].mxu0
      %915 = vmatprep.mubr.bf16.mxu0 0
      %916 = vmatmul.mubr.bf16.gmra.mrb[0].mxu0 %v793
      %v917 = vpop.f32.mrb[0].mxu0
      %v918 = vadd.f32 %v626, %v917
      %v919 = vpop.f32.mrb[0].mxu0
      %v920 = vpop.f32.mrb[0].mxu0
      %v921 = vadd.f32 %v629, %v920
      %v922 = vpop.f32.mrb[0].mxu0
      %923 = vmatprep.mubr.bf16.mxu0 0
      %924 = vmatmul.mubr.bf16.gmra.mrb[0].mxu0 %v796
      %v925 = vpop.f32.mrb[0].mxu0
      %v926 = vadd.f32 %v634, %v925
      %v927 = vpop.f32.mrb[0].mxu0
      %v928 = vpop.f32.mrb[0].mxu0
      %v929 = vadd.f32 %v637, %v928
      %v930 = vpop.f32.mrb[0].mxu0
      %931 = vmatprep.mubr.bf16.mxu0 0
      %932 = vmatmul.mubr.bf16.gmra.mrb[0].mxu0 %v799
      %v933 = vpop.f32.mrb[0].mxu0
      %v934 = vadd.f32 %v642, %v933
      %v935 = vpop.f32.mrb[0].mxu0
      %v936 = vpop.f32.mrb[0].mxu0
      %v937 = vadd.f32 %v645, %v936
      %v938 = vpop.f32.mrb[0].mxu0
      %939 = vmatprep.mubr.bf16.mxu0 0
      %940 = vmatmul.mubr.bf16.gmra.mrb[0].mxu0 %v802
      %v941 = vpop.f32.mrb[0].mxu0
      %v942 = vadd.f32 %v650, %v941
      %v943 = vpop.f32.mrb[0].mxu0
      %v944 = vpop.f32.mrb[0].mxu0
      %v945 = vadd.f32 %v653, %v944
      %v946 = vpop.f32.mrb[0].mxu0
      %947 = vmatprep.mubr.bf16.mxu0 0
      %948 = vmatmul.mubr.bf16.gmra.mrb[0].mxu0 %v805
      %v949 = vpop.f32.mrb[0].mxu0
      %v950 = vadd.f32 %v658, %v949
      %v951 = vpop.f32.mrb[0].mxu0
      %v952 = vpop.f32.mrb[0].mxu0
      %v953 = vadd.f32 %v661, %v952
      %v954 = vpop.f32.mrb[0].mxu0
      %955 = vmatprep.mubr.bf16.mxu0 0
      %956 = vmatmul.mubr.bf16.gmra.mrb[0].mxu0 %v808
      %v957 = vpop.f32.mrb[0].mxu0
      %v958 = vadd.f32 %v666, %v957
      %v959 = vpop.f32.mrb[0].mxu0
      %v960 = vpop.f32.mrb[0].mxu0
      %v961 = vadd.f32 %v669, %v960
      %v962 = vpop.f32.mrb[0].mxu0
      %963 = vmatprep.mubr.bf16.mxu0 0
      %964 = vmatmul.mubr.bf16.gmra.mrb[0].mxu0 %v811
      %v965 = vpop.f32.mrb[0].mxu0
      %v966 = vadd.f32 %v674, %v965
      %v967 = vpop.f32.mrb[0].mxu0
      %v968 = vpop.f32.mrb[0].mxu0
      %v969 = vadd.f32 %v677, %v968
      %v970 = vpop.f32.mrb[0].mxu0
      %971 = vmatprep.mubr.bf16.mxu0 0
      %972 = vmatmul.mubr.bf16.gmra.mrb[0].mxu0 %v814
      %v973 = vpop.f32.mrb[0].mxu0
      %v974 = vadd.f32 %v682, %v973
      %v975 = vpop.f32.mrb[0].mxu0
      %v976 = vpop.f32.mrb[0].mxu0
      %v977 = vadd.f32 %v685, %v976
      %v978 = vpop.f32.mrb[0].mxu0
      %979 = vdwg.mxu0
      %s980 = scalar_lea.vmem [#allocation2], 48
      %v981 = vld [vmem:[%s980 + $0x2] sm:$0xff]
      %v982 = vld [vmem:[%s980 + $0xa] sm:$0xff]
      %v983 = vld [vmem:[%s980 + $0x1a] sm:$0xff]
      %v984 = vld [vmem:[%s980 + $0x22] sm:$0xff]
      %v985 = vld [vmem:[%s980 + $0x32] sm:$0xff]
      %v986 = vld [vmem:[%s980 + $0x3a] sm:$0xff]
      %v987 = vld [vmem:[%s980 + $0x4a] sm:$0xff]
      %v988 = vld [vmem:[%s980 + $0x52] sm:$0xff]
      %v989 = vld [vmem:[%s980 + $0x62] sm:$0xff]
      %v990 = vld [vmem:[%s980 + $0x6a] sm:$0xff]
      %v991 = vld [vmem:[%s980 + $0x7a] sm:$0xff]
      %v992 = vld [vmem:[%s980 + $0x82] sm:$0xff]
      %v993 = vld [vmem:[%s980 + $0x92] sm:$0xff]
      %v994 = vld [vmem:[%s980 + $0x9a] sm:$0xff]
      %v995 = vld [vmem:[%s980 + $0xaa] sm:$0xff]
      %v996 = vld [vmem:[%s980 + $0xb2] sm:$0xff]
      %v997 = vld [vmem:[%s980 + $0xc2] sm:$0xff]
      %v998 = vld [vmem:[%s980 + $0xca] sm:$0xff]
      %v999 = vld [vmem:[%s980 + $0xda] sm:$0xff]
      %v1000 = vld [vmem:[%s980 + $0xe2] sm:$0xff]
      %v1001 = vld [vmem:[%s980 + $0xf2] sm:$0xff]
      %v1002 = vld [vmem:[%s980 + $0xfa] sm:$0xff]
      %v1003 = vld [vmem:[%s980 + $0x10a] sm:$0xff]
      %v1004 = vld [vmem:[%s980 + $0x112] sm:$0xff]
      %v1005 = vld [vmem:[%s980 + $0x122] sm:$0xff]
      %v1006 = vld [vmem:[%s980 + $0x12a] sm:$0xff]
      %v1007 = vld [vmem:[%s980 + $0x13a] sm:$0xff]
      %v1008 = vld [vmem:[%s980 + $0x142] sm:$0xff]
      %v1009 = vld [vmem:[%s980 + $0x152] sm:$0xff]
      %v1010 = vld [vmem:[%s980 + $0x15a] sm:$0xff]
      %v1011 = vld [vmem:[%s980 + $0x16a] sm:$0xff]
      %v1012 = vld [vmem:[%s980 + $0x172] sm:$0xff]
      %v1013 = vadd.f32 %v981, %v854
      %v1014 = vadd.f32 %v982, %v857
      %v1015 = vadd.f32 %v983, %v862
      %v1016 = vadd.f32 %v984, %v865
      %v1017 = vadd.f32 %v985, %v870
      %v1018 = vadd.f32 %v986, %v873
      %v1019 = vadd.f32 %v987, %v878
      %v1020 = vadd.f32 %v988, %v881
      %v1021 = vadd.f32 %v989, %v886
      %v1022 = vadd.f32 %v990, %v889
      %v1023 = vadd.f32 %v991, %v894
      %v1024 = vadd.f32 %v992, %v897
      %v1025 = vadd.f32 %v993, %v902
      %v1026 = vadd.f32 %v994, %v905
      %v1027 = vadd.f32 %v995, %v910
      %v1028 = vadd.f32 %v996, %v913
      %v1029 = vadd.f32 %v997, %v918
      %v1030 = vadd.f32 %v998, %v921
      %v1031 = vadd.f32 %v999, %v926
      %v1032 = vadd.f32 %v1000, %v929
      %v1033 = vadd.f32 %v1001, %v934
      %v1034 = vadd.f32 %v1002, %v937
      %v1035 = vadd.f32 %v1003, %v942
      %v1036 = vadd.f32 %v1004, %v945
      %v1037 = vadd.f32 %v1005, %v950
      %v1038 = vadd.f32 %v1006, %v953
      %v1039 = vadd.f32 %v1007, %v958
      %v1040 = vadd.f32 %v1008, %v961
      %v1041 = vadd.f32 %v1009, %v966
      %v1042 = vadd.f32 %v1010, %v969
      %v1043 = vadd.f32 %v1011, %v974
      %v1044 = vadd.f32 %v1012, %v977
      %1045 = vst.msk [vmem:[%s980 + $0x2] sm:$0xff] %vm273, %v1013
      %1046 = vst.msk [vmem:[%s980 + $0xa] sm:$0xff] %vm273, %v1014
      %1047 = vst.msk [vmem:[%s980 + $0x1a] sm:$0xff] %vm273, %v1015
      %1048 = vst.msk [vmem:[%s980 + $0x22] sm:$0xff] %vm273, %v1016
      %1049 = vst.msk [vmem:[%s980 + $0x32] sm:$0xff] %vm273, %v1017
      %1050 = vst.msk [vmem:[%s980 + $0x3a] sm:$0xff] %vm273, %v1018
      %1051 = vst.msk [vmem:[%s980 + $0x4a] sm:$0xff] %vm273, %v1019
      %1052 = vst.msk [vmem:[%s980 + $0x52] sm:$0xff] %vm273, %v1020
      %1053 = vst.msk [vmem:[%s980 + $0x62] sm:$0xff] %vm273, %v1021
      %1054 = vst.msk [vmem:[%s980 + $0x6a] sm:$0xff] %vm273, %v1022
      %1055 = vst.msk [vmem:[%s980 + $0x7a] sm:$0xff] %vm273, %v1023
      %1056 = vst.msk [vmem:[%s980 + $0x82] sm:$0xff] %vm273, %v1024
      %1057 = vst.msk [vmem:[%s980 + $0x92] sm:$0xff] %vm273, %v1025
      %1058 = vst.msk [vmem:[%s980 + $0x9a] sm:$0xff] %vm273, %v1026
      %1059 = vst.msk [vmem:[%s980 + $0xaa] sm:$0xff] %vm273, %v1027
      %1060 = vst.msk [vmem:[%s980 + $0xb2] sm:$0xff] %vm273, %v1028
      %1061 = vst.msk [vmem:[%s980 + $0xc2] sm:$0xff] %vm273, %v1029
      %1062 = vst.msk [vmem:[%s980 + $0xca] sm:$0xff] %vm273, %v1030
      %1063 = vst.msk [vmem:[%s980 + $0xda] sm:$0xff] %vm273, %v1031
      %1064 = vst.msk [vmem:[%s980 + $0xe2] sm:$0xff] %vm273, %v1032
      %1065 = vst.msk [vmem:[%s980 + $0xf2] sm:$0xff] %vm273, %v1033
      %1066 = vst.msk [vmem:[%s980 + $0xfa] sm:$0xff] %vm273, %v1034
      %1067 = vst.msk [vmem:[%s980 + $0x10a] sm:$0xff] %vm273, %v1035
      %1068 = vst.msk [vmem:[%s980 + $0x112] sm:$0xff] %vm273, %v1036
      %1069 = vst.msk [vmem:[%s980 + $0x122] sm:$0xff] %vm273, %v1037
      %1070 = vst.msk [vmem:[%s980 + $0x12a] sm:$0xff] %vm273, %v1038
      %1071 = vst.msk [vmem:[%s980 + $0x13a] sm:$0xff] %vm273, %v1039
      %1072 = vst.msk [vmem:[%s980 + $0x142] sm:$0xff] %vm273, %v1040
      %1073 = vst.msk [vmem:[%s980 + $0x152] sm:$0xff] %vm273, %v1041
      %1074 = vst.msk [vmem:[%s980 + $0x15a] sm:$0xff] %vm273, %v1042
      %1075 = vst.msk [vmem:[%s980 + $0x16a] sm:$0xff] %vm273, %v1043
      %1076 = vst.msk [vmem:[%s980 + $0x172] sm:$0xff] %vm273, %v1044
      %s1077 = scalar_lea.vmem %s2, 2
      %v1078 = vld [vmem:[%s1077] sm:$0x3]
      %s1079 = scalar_lea.vmem %s3, 2
      %v1080 = vld [vmem:[%s1079] sm:$0x3]
      %v1082 = vsel %vm523, %v1080, 0
      %1084 = vmatprep.subr.bf16.mxu0 0
      %1085 = vmatpush1.bf16.msra.mxu0 %v1082
      %1086 = vmatprep.subr.bf16.mxu0 0
      %1087 = vmatpush1.bf16.msra.mxu0 0
      %1088 = vmatprep.subr.bf16.mxu0 0
      %1089 = vmatpush1.bf16.msra.mxu0 0
      %1090 = vmatprep.subr.bf16.mxu0 0
      %1091 = vmatpush1.bf16.msra.mxu0 0
      %1092 = vmatprep.subr.bf16.mxu0 0
      %1093 = vmatpush1.bf16.msra.mxu0 0
      %1094 = vmatprep.subr.bf16.mxu0 0
      %1095 = vmatpush1.bf16.msra.mxu0 0
      %1096 = vmatprep.subr.bf16.mxu0 0
      %1097 = vmatpush1.bf16.msra.mxu0 0
      %1098 = vmatprep.subr.bf16.mxu0 0
      %1099 = vmatpush1.bf16.msra.mxu0 0
      %1100 = vmatprep.subr.bf16.mxu0 0
      %1101 = vmatpush1.bf16.msra.mxu0 0
      %1102 = vmatprep.subr.bf16.mxu0 0
      %1103 = vmatpush1.bf16.msra.mxu0 0
      %1104 = vmatprep.subr.bf16.mxu0 0
      %1105 = vmatpush1.bf16.msra.mxu0 0
      %1106 = vmatprep.subr.bf16.mxu0 0
      %1107 = vmatpush1.bf16.msra.mxu0 0
      %1108 = vmatprep.subr.bf16.mxu0 0
      %1109 = vmatpush1.bf16.msra.mxu0 0
      %1110 = vmatprep.subr.bf16.mxu0 0
      %1111 = vmatpush1.bf16.msra.mxu0 0
      %1112 = vmatprep.subr.bf16.mxu0 0
      %1113 = vmatpush1.bf16.msra.mxu0 0
      %1114 = vmatprep.subr.bf16.mxu0 0
      %1115 = vmatpush1.bf16.msra.mxu0 0
      %1116 = vmatprep.mubr.bf16.mxu0 0
      %1117 = vmatmul.mubr.bf16.gmra.mrb[0].mxu0 %v476
      %v1118 = vpop.f32.mrb[0].mxu0
      %v1119 = vadd.f32 0.0, %v1118
      %v1120 = vpop.f32.mrb[0].mxu0
      %v1121 = vpop.f32.mrb[0].mxu0
      %v1122 = vadd.f32 0.0, %v1121
      %v1123 = vpop.f32.mrb[0].mxu0
      %1124 = vmatprep.mubr.bf16.mxu0 0
      %1125 = vmatmul.mubr.bf16.gmra.mrb[0].mxu0 %v479
      %v1126 = vpop.f32.mrb[0].mxu0
      %v1127 = vadd.f32 0.0, %v1126
      %v1128 = vpop.f32.mrb[0].mxu0
      %v1129 = vpop.f32.mrb[0].mxu0
      %v1130 = vadd.f32 0.0, %v1129
      %v1131 = vpop.f32.mrb[0].mxu0
      %1132 = vmatprep.mubr.bf16.mxu0 0
      %1133 = vmatmul.mubr.bf16.gmra.mrb[0].mxu0 %v482
      %v1134 = vpop.f32.mrb[0].mxu0
      %v1135 = vadd.f32 0.0, %v1134
      %v1136 = vpop.f32.mrb[0].mxu0
      %v1137 = vpop.f32.mrb[0].mxu0
      %v1138 = vadd.f32 0.0, %v1137
      %v1139 = vpop.f32.mrb[0].mxu0
      %1140 = vmatprep.mubr.bf16.mxu0 0
      %1141 = vmatmul.mubr.bf16.gmra.mrb[0].mxu0 %v485
      %v1142 = vpop.f32.mrb[0].mxu0
      %v1143 = vadd.f32 0.0, %v1142
      %v1144 = vpop.f32.mrb[0].mxu0
      %v1145 = vpop.f32.mrb[0].mxu0
      %v1146 = vadd.f32 0.0, %v1145
      %v1147 = vpop.f32.mrb[0].mxu0
      %1148 = vmatprep.mubr.bf16.mxu0 0
      %1149 = vmatmul.mubr.bf16.gmra.mrb[0].mxu0 %v488
      %v1150 = vpop.f32.mrb[0].mxu0
      %v1151 = vadd.f32 0.0, %v1150
      %v1152 = vpop.f32.mrb[0].mxu0
      %v1153 = vpop.f32.mrb[0].mxu0
      %v1154 = vadd.f32 0.0, %v1153
      %v1155 = vpop.f32.mrb[0].mxu0
      %1156 = vmatprep.mubr.bf16.mxu0 0
      %1157 = vmatmul.mubr.bf16.gmra.mrb[0].mxu0 %v491
      %v1158 = vpop.f32.mrb[0].mxu0
      %v1159 = vadd.f32 0.0, %v1158
      %v1160 = vpop.f32.mrb[0].mxu0
      %v1161 = vpop.f32.mrb[0].mxu0
      %v1162 = vadd.f32 0.0, %v1161
      %v1163 = vpop.f32.mrb[0].mxu0
      %1164 = vmatprep.mubr.bf16.mxu0 0
      %1165 = vmatmul.mubr.bf16.gmra.mrb[0].mxu0 %v494
      %v1166 = vpop.f32.mrb[0].mxu0
      %v1167 = vadd.f32 0.0, %v1166
      %v1168 = vpop.f32.mrb[0].mxu0
      %v1169 = vpop.f32.mrb[0].mxu0
      %v1170 = vadd.f32 0.0, %v1169
      %v1171 = vpop.f32.mrb[0].mxu0
      %1172 = vmatprep.mubr.bf16.mxu0 0
      %1173 = vmatmul.mubr.bf16.gmra.mrb[0].mxu0 %v497
      %v1174 = vpop.f32.mrb[0].mxu0
      %v1175 = vadd.f32 0.0, %v1174
      %v1176 = vpop.f32.mrb[0].mxu0
      %v1177 = vpop.f32.mrb[0].mxu0
      %v1178 = vadd.f32 0.0, %v1177
      %v1179 = vpop.f32.mrb[0].mxu0
      %1180 = vmatprep.mubr.bf16.mxu0 0
      %1181 = vmatmul.mubr.bf16.gmra.mrb[0].mxu0 %v500
      %v1182 = vpop.f32.mrb[0].mxu0
      %v1183 = vadd.f32 0.0, %v1182
      %v1184 = vpop.f32.mrb[0].mxu0
      %v1185 = vpop.f32.mrb[0].mxu0
      %v1186 = vadd.f32 0.0, %v1185
      %v1187 = vpop.f32.mrb[0].mxu0
      %1188 = vmatprep.mubr.bf16.mxu0 0
      %1189 = vmatmul.mubr.bf16.gmra.mrb[0].mxu0 %v503
      %v1190 = vpop.f32.mrb[0].mxu0
      %v1191 = vadd.f32 0.0, %v1190
      %v1192 = vpop.f32.mrb[0].mxu0
      %v1193 = vpop.f32.mrb[0].mxu0
      %v1194 = vadd.f32 0.0, %v1193
      %v1195 = vpop.f32.mrb[0].mxu0
      %1196 = vmatprep.mubr.bf16.mxu0 0
      %1197 = vmatmul.mubr.bf16.gmra.mrb[0].mxu0 %v506
      %v1198 = vpop.f32.mrb[0].mxu0
      %v1199 = vadd.f32 0.0, %v1198
      %v1200 = vpop.f32.mrb[0].mxu0
      %v1201 = vpop.f32.mrb[0].mxu0
      %v1202 = vadd.f32 0.0, %v1201
      %v1203 = vpop.f32.mrb[0].mxu0
      %1204 = vmatprep.mubr.bf16.mxu0 0
      %1205 = vmatmul.mubr.bf16.gmra.mrb[0].mxu0 %v509
      %v1206 = vpop.f32.mrb[0].mxu0
      %v1207 = vadd.f32 0.0, %v1206
      %v1208 = vpop.f32.mrb[0].mxu0
      %v1209 = vpop.f32.mrb[0].mxu0
      %v1210 = vadd.f32 0.0, %v1209
      %v1211 = vpop.f32.mrb[0].mxu0
      %1212 = vmatprep.mubr.bf16.mxu0 0
      %1213 = vmatmul.mubr.bf16.gmra.mrb[0].mxu0 %v512
      %v1214 = vpop.f32.mrb[0].mxu0
      %v1215 = vadd.f32 0.0, %v1214
      %v1216 = vpop.f32.mrb[0].mxu0
      %v1217 = vpop.f32.mrb[0].mxu0
      %v1218 = vadd.f32 0.0, %v1217
      %v1219 = vpop.f32.mrb[0].mxu0
      %1220 = vmatprep.mubr.bf16.mxu0 0
      %1221 = vmatmul.mubr.bf16.gmra.mrb[0].mxu0 %v515
      %v1222 = vpop.f32.mrb[0].mxu0
      %v1223 = vadd.f32 0.0, %v1222
      %v1224 = vpop.f32.mrb[0].mxu0
      %v1225 = vpop.f32.mrb[0].mxu0
      %v1226 = vadd.f32 0.0, %v1225
      %v1227 = vpop.f32.mrb[0].mxu0
      %1228 = vmatprep.mubr.bf16.mxu0 0
      %1229 = vmatmul.mubr.bf16.gmra.mrb[0].mxu0 %v518
      %v1230 = vpop.f32.mrb[0].mxu0
      %v1231 = vadd.f32 0.0, %v1230
      %v1232 = vpop.f32.mrb[0].mxu0
      %v1233 = vpop.f32.mrb[0].mxu0
      %v1234 = vadd.f32 0.0, %v1233
      %v1235 = vpop.f32.mrb[0].mxu0
      %1236 = vmatprep.mubr.bf16.mxu0 0
      %1237 = vmatmul.mubr.bf16.gmra.mrb[0].mxu0 %v521
      %v1238 = vpop.f32.mrb[0].mxu0
      %v1239 = vadd.f32 0.0, %v1238
      %v1240 = vpop.f32.mrb[0].mxu0
      %v1241 = vpop.f32.mrb[0].mxu0
      %v1242 = vadd.f32 0.0, %v1241
      %v1243 = vpop.f32.mrb[0].mxu0
      %1244 = vdwg.mxu0
      %v1246 = vsel %vm523, %v1078, 0
      %1248 = vmatprep.subr.bf16.mxu0 0
      %1249 = vmatpush1.bf16.msra.mxu0 %v1246
      %1250 = vmatprep.subr.bf16.mxu0 0
      %1251 = vmatpush1.bf16.msra.mxu0 0
      %1252 = vmatprep.subr.bf16.mxu0 0
      %1253 = vmatpush1.bf16.msra.mxu0 0
      %1254 = vmatprep.subr.bf16.mxu0 0
      %1255 = vmatpush1.bf16.msra.mxu0 0
      %1256 = vmatprep.subr.bf16.mxu0 0
      %1257 = vmatpush1.bf16.msra.mxu0 0
      %1258 = vmatprep.subr.bf16.mxu0 0
      %1259 = vmatpush1.bf16.msra.mxu0 0
      %1260 = vmatprep.subr.bf16.mxu0 0
      %1261 = vmatpush1.bf16.msra.mxu0 0
      %1262 = vmatprep.subr.bf16.mxu0 0
      %1263 = vmatpush1.bf16.msra.mxu0 0
      %1264 = vmatprep.subr.bf16.mxu0 0
      %1265 = vmatpush1.bf16.msra.mxu0 0
      %1266 = vmatprep.subr.bf16.mxu0 0
      %1267 = vmatpush1.bf16.msra.mxu0 0
      %1268 = vmatprep.subr.bf16.mxu0 0
      %1269 = vmatpush1.bf16.msra.mxu0 0
      %1270 = vmatprep.subr.bf16.mxu0 0
      %1271 = vmatpush1.bf16.msra.mxu0 0
      %1272 = vmatprep.subr.bf16.mxu0 0
      %1273 = vmatpush1.bf16.msra.mxu0 0
      %1274 = vmatprep.subr.bf16.mxu0 0
      %1275 = vmatpush1.bf16.msra.mxu0 0
      %1276 = vmatprep.subr.bf16.mxu0 0
      %1277 = vmatpush1.bf16.msra.mxu0 0
      %1278 = vmatprep.subr.bf16.mxu0 0
      %1279 = vmatpush1.bf16.msra.mxu0 0
      %1280 = vmatprep.mubr.bf16.mxu0 0
      %1281 = vmatmul.mubr.bf16.gmra.mrb[0].mxu0 %v769
      %v1282 = vpop.f32.mrb[0].mxu0
      %v1283 = vadd.f32 %v1119, %v1282
      %v1284 = vpop.f32.mrb[0].mxu0
      %v1285 = vpop.f32.mrb[0].mxu0
      %v1286 = vadd.f32 %v1122, %v1285
      %v1287 = vpop.f32.mrb[0].mxu0
      %1288 = vmatprep.mubr.bf16.mxu0 0
      %1289 = vmatmul.mubr.bf16.gmra.mrb[0].mxu0 %v772
      %v1290 = vpop.f32.mrb[0].mxu0
      %v1291 = vadd.f32 %v1127, %v1290
      %v1292 = vpop.f32.mrb[0].mxu0
      %v1293 = vpop.f32.mrb[0].mxu0
      %v1294 = vadd.f32 %v1130, %v1293
      %v1295 = vpop.f32.mrb[0].mxu0
      %1296 = vmatprep.mubr.bf16.mxu0 0
      %1297 = vmatmul.mubr.bf16.gmra.mrb[0].mxu0 %v775
      %v1298 = vpop.f32.mrb[0].mxu0
      %v1299 = vadd.f32 %v1135, %v1298
      %v1300 = vpop.f32.mrb[0].mxu0
      %v1301 = vpop.f32.mrb[0].mxu0
      %v1302 = vadd.f32 %v1138, %v1301
      %v1303 = vpop.f32.mrb[0].mxu0
      %1304 = vmatprep.mubr.bf16.mxu0 0
      %1305 = vmatmul.mubr.bf16.gmra.mrb[0].mxu0 %v778
      %v1306 = vpop.f32.mrb[0].mxu0
      %v1307 = vadd.f32 %v1143, %v1306
      %v1308 = vpop.f32.mrb[0].mxu0
      %v1309 = vpop.f32.mrb[0].mxu0
      %v1310 = vadd.f32 %v1146, %v1309
      %v1311 = vpop.f32.mrb[0].mxu0
      %1312 = vmatprep.mubr.bf16.mxu0 0
      %1313 = vmatmul.mubr.bf16.gmra.mrb[0].mxu0 %v781
      %v1314 = vpop.f32.mrb[0].mxu0
      %v1315 = vadd.f32 %v1151, %v1314
      %v1316 = vpop.f32.mrb[0].mxu0
      %v1317 = vpop.f32.mrb[0].mxu0
      %v1318 = vadd.f32 %v1154, %v1317
      %v1319 = vpop.f32.mrb[0].mxu0
      %1320 = vmatprep.mubr.bf16.mxu0 0
      %1321 = vmatmul.mubr.bf16.gmra.mrb[0].mxu0 %v784
      %v1322 = vpop.f32.mrb[0].mxu0
      %v1323 = vadd.f32 %v1159, %v1322
      %v1324 = vpop.f32.mrb[0].mxu0
      %v1325 = vpop.f32.mrb[0].mxu0
      %v1326 = vadd.f32 %v1162, %v1325
      %v1327 = vpop.f32.mrb[0].mxu0
      %1328 = vmatprep.mubr.bf16.mxu0 0
      %1329 = vmatmul.mubr.bf16.gmra.mrb[0].mxu0 %v787
      %v1330 = vpop.f32.mrb[0].mxu0
      %v1331 = vadd.f32 %v1167, %v1330
      %v1332 = vpop.f32.mrb[0].mxu0
      %v1333 = vpop.f32.mrb[0].mxu0
      %v1334 = vadd.f32 %v1170, %v1333
      %v1335 = vpop.f32.mrb[0].mxu0
      %1336 = vmatprep.mubr.bf16.mxu0 0
      %1337 = vmatmul.mubr.bf16.gmra.mrb[0].mxu0 %v790
      %v1338 = vpop.f32.mrb[0].mxu0
      %v1339 = vadd.f32 %v1175, %v1338
      %v1340 = vpop.f32.mrb[0].mxu0
      %v1341 = vpop.f32.mrb[0].mxu0
      %v1342 = vadd.f32 %v1178, %v1341
      %v1343 = vpop.f32.mrb[0].mxu0
      %1344 = vmatprep.mubr.bf16.mxu0 0
      %1345 = vmatmul.mubr.bf16.gmra.mrb[0].mxu0 %v793
      %v1346 = vpop.f32.mrb[0].mxu0
      %v1347 = vadd.f32 %v1183, %v1346
      %v1348 = vpop.f32.mrb[0].mxu0
      %v1349 = vpop.f32.mrb[0].mxu0
      %v1350 = vadd.f32 %v1186, %v1349
      %v1351 = vpop.f32.mrb[0].mxu0
      %1352 = vmatprep.mubr.bf16.mxu0 0
      %1353 = vmatmul.mubr.bf16.gmra.mrb[0].mxu0 %v796
      %v1354 = vpop.f32.mrb[0].mxu0
      %v1355 = vadd.f32 %v1191, %v1354
      %v1356 = vpop.f32.mrb[0].mxu0
      %v1357 = vpop.f32.mrb[0].mxu0
      %v1358 = vadd.f32 %v1194, %v1357
      %v1359 = vpop.f32.mrb[0].mxu0
      %1360 = vmatprep.mubr.bf16.mxu0 0
      %1361 = vmatmul.mubr.bf16.gmra.mrb[0].mxu0 %v799
      %v1362 = vpop.f32.mrb[0].mxu0
      %v1363 = vadd.f32 %v1199, %v1362
      %v1364 = vpop.f32.mrb[0].mxu0
      %v1365 = vpop.f32.mrb[0].mxu0
      %v1366 = vadd.f32 %v1202, %v1365
      %v1367 = vpop.f32.mrb[0].mxu0
      %1368 = vmatprep.mubr.bf16.mxu0 0
      %1369 = vmatmul.mubr.bf16.gmra.mrb[0].mxu0 %v802
      %v1370 = vpop.f32.mrb[0].mxu0
      %v1371 = vadd.f32 %v1207, %v1370
      %v1372 = vpop.f32.mrb[0].mxu0
      %v1373 = vpop.f32.mrb[0].mxu0
      %v1374 = vadd.f32 %v1210, %v1373
      %v1375 = vpop.f32.mrb[0].mxu0
      %1376 = vmatprep.mubr.bf16.mxu0 0
      %1377 = vmatmul.mubr.bf16.gmra.mrb[0].mxu0 %v805
      %v1378 = vpop.f32.mrb[0].mxu0
      %v1379 = vadd.f32 %v1215, %v1378
      %v1380 = vpop.f32.mrb[0].mxu0
      %v1381 = vpop.f32.mrb[0].mxu0
      %v1382 = vadd.f32 %v1218, %v1381
      %v1383 = vpop.f32.mrb[0].mxu0
      %1384 = vmatprep.mubr.bf16.mxu0 0
      %1385 = vmatmul.mubr.bf16.gmra.mrb[0].mxu0 %v808
      %v1386 = vpop.f32.mrb[0].mxu0
      %v1387 = vadd.f32 %v1223, %v1386
      %v1388 = vpop.f32.mrb[0].mxu0
      %v1389 = vpop.f32.mrb[0].mxu0
      %v1390 = vadd.f32 %v1226, %v1389
      %v1391 = vpop.f32.mrb[0].mxu0
      %1392 = vmatprep.mubr.bf16.mxu0 0
      %1393 = vmatmul.mubr.bf16.gmra.mrb[0].mxu0 %v811
      %v1394 = vpop.f32.mrb[0].mxu0
      %v1395 = vadd.f32 %v1231, %v1394
      %v1396 = vpop.f32.mrb[0].mxu0
      %v1397 = vpop.f32.mrb[0].mxu0
      %v1398 = vadd.f32 %v1234, %v1397
      %v1399 = vpop.f32.mrb[0].mxu0
      %1400 = vmatprep.mubr.bf16.mxu0 0
      %1401 = vmatmul.mubr.bf16.gmra.mrb[0].mxu0 %v814
      %v1402 = vpop.f32.mrb[0].mxu0
      %v1403 = vadd.f32 %v1239, %v1402
      %v1404 = vpop.f32.mrb[0].mxu0
      %v1405 = vpop.f32.mrb[0].mxu0
      %v1406 = vadd.f32 %v1242, %v1405
      %v1407 = vpop.f32.mrb[0].mxu0
      %1408 = vdwg.mxu0
      %v1409 = vld [vmem:[%s980 + $0x1] sm:$0xff]
      %v1410 = vld [vmem:[%s980 + $0x9] sm:$0xff]
      %v1411 = vld [vmem:[%s980 + $0x19] sm:$0xff]
      %v1412 = vld [vmem:[%s980 + $0x21] sm:$0xff]
      %v1413 = vld [vmem:[%s980 + $0x31] sm:$0xff]
      %v1414 = vld [vmem:[%s980 + $0x39] sm:$0xff]
      %v1415 = vld [vmem:[%s980 + $0x49] sm:$0xff]
      %v1416 = vld [vmem:[%s980 + $0x51] sm:$0xff]
      %v1417 = vld [vmem:[%s980 + $0x61] sm:$0xff]
      %v1418 = vld [vmem:[%s980 + $0x69] sm:$0xff]
      %v1419 = vld [vmem:[%s980 + $0x79] sm:$0xff]
      %v1420 = vld [vmem:[%s980 + $0x81] sm:$0xff]
      %v1421 = vld [vmem:[%s980 + $0x91] sm:$0xff]
      %v1422 = vld [vmem:[%s980 + $0x99] sm:$0xff]
      %v1423 = vld [vmem:[%s980 + $0xa9] sm:$0xff]
      %v1424 = vld [vmem:[%s980 + $0xb1] sm:$0xff]
      %v1425 = vld [vmem:[%s980 + $0xc1] sm:$0xff]
      %v1426 = vld [vmem:[%s980 + $0xc9] sm:$0xff]
      %v1427 = vld [vmem:[%s980 + $0xd9] sm:$0xff]
      %v1428 = vld [vmem:[%s980 + $0xe1] sm:$0xff]
      %v1429 = vld [vmem:[%s980 + $0xf1] sm:$0xff]
      %v1430 = vld [vmem:[%s980 + $0xf9] sm:$0xff]
      %v1431 = vld [vmem:[%s980 + $0x109] sm:$0xff]
      %v1432 = vld [vmem:[%s980 + $0x111] sm:$0xff]
      %v1433 = vld [vmem:[%s980 + $0x121] sm:$0xff]
      %v1434 = vld [vmem:[%s980 + $0x129] sm:$0xff]
      %v1435 = vld [vmem:[%s980 + $0x139] sm:$0xff]
      %v1436 = vld [vmem:[%s980 + $0x141] sm:$0xff]
      %v1437 = vld [vmem:[%s980 + $0x151] sm:$0xff]
      %v1438 = vld [vmem:[%s980 + $0x159] sm:$0xff]
      %v1439 = vld [vmem:[%s980 + $0x169] sm:$0xff]
      %v1440 = vld [vmem:[%s980 + $0x171] sm:$0xff]
      %v1441 = vadd.f32 %v1409, %v1283
      %v1442 = vadd.f32 %v1410, %v1286
      %v1443 = vadd.f32 %v1411, %v1291
      %v1444 = vadd.f32 %v1412, %v1294
      %v1445 = vadd.f32 %v1413, %v1299
      %v1446 = vadd.f32 %v1414, %v1302
      %v1447 = vadd.f32 %v1415, %v1307
      %v1448 = vadd.f32 %v1416, %v1310
      %v1449 = vadd.f32 %v1417, %v1315
      %v1450 = vadd.f32 %v1418, %v1318
      %v1451 = vadd.f32 %v1419, %v1323
      %v1452 = vadd.f32 %v1420, %v1326
      %v1453 = vadd.f32 %v1421, %v1331
      %v1454 = vadd.f32 %v1422, %v1334
      %v1455 = vadd.f32 %v1423, %v1339
      %v1456 = vadd.f32 %v1424, %v1342
      %v1457 = vadd.f32 %v1425, %v1347
      %v1458 = vadd.f32 %v1426, %v1350
      %v1459 = vadd.f32 %v1427, %v1355
      %v1460 = vadd.f32 %v1428, %v1358
      %v1461 = vadd.f32 %v1429, %v1363
      %v1462 = vadd.f32 %v1430, %v1366
      %v1463 = vadd.f32 %v1431, %v1371
      %v1464 = vadd.f32 %v1432, %v1374
      %v1465 = vadd.f32 %v1433, %v1379
      %v1466 = vadd.f32 %v1434, %v1382
      %v1467 = vadd.f32 %v1435, %v1387
      %v1468 = vadd.f32 %v1436, %v1390
      %v1469 = vadd.f32 %v1437, %v1395
      %v1470 = vadd.f32 %v1438, %v1398
      %v1471 = vadd.f32 %v1439, %v1403
      %v1472 = vadd.f32 %v1440, %v1406
      %1473 = vst.msk [vmem:[%s980 + $0x1] sm:$0xff] %vm273, %v1441
      %1474 = vst.msk [vmem:[%s980 + $0x9] sm:$0xff] %vm273, %v1442
      %1475 = vst.msk [vmem:[%s980 + $0x19] sm:$0xff] %vm273, %v1443
      %1476 = vst.msk [vmem:[%s980 + $0x21] sm:$0xff] %vm273, %v1444
      %1477 = vst.msk [vmem:[%s980 + $0x31] sm:$0xff] %vm273, %v1445
      %1478 = vst.msk [vmem:[%s980 + $0x39] sm:$0xff] %vm273, %v1446
      %1479 = vst.msk [vmem:[%s980 + $0x49] sm:$0xff] %vm273, %v1447
      %1480 = vst.msk [vmem:[%s980 + $0x51] sm:$0xff] %vm273, %v1448
      %1481 = vst.msk [vmem:[%s980 + $0x61] sm:$0xff] %vm273, %v1449
      %1482 = vst.msk [vmem:[%s980 + $0x69] sm:$0xff] %vm273, %v1450
      %1483 = vst.msk [vmem:[%s980 + $0x79] sm:$0xff] %vm273, %v1451
      %1484 = vst.msk [vmem:[%s980 + $0x81] sm:$0xff] %vm273, %v1452
      %1485 = vst.msk [vmem:[%s980 + $0x91] sm:$0xff] %vm273, %v1453
      %1486 = vst.msk [vmem:[%s980 + $0x99] sm:$0xff] %vm273, %v1454
      %1487 = vst.msk [vmem:[%s980 + $0xa9] sm:$0xff] %vm273, %v1455
      %1488 = vst.msk [vmem:[%s980 + $0xb1] sm:$0xff] %vm273, %v1456
      %1489 = vst.msk [vmem:[%s980 + $0xc1] sm:$0xff] %vm273, %v1457
      %1490 = vst.msk [vmem:[%s980 + $0xc9] sm:$0xff] %vm273, %v1458
      %1491 = vst.msk [vmem:[%s980 + $0xd9] sm:$0xff] %vm273, %v1459
      %1492 = vst.msk [vmem:[%s980 + $0xe1] sm:$0xff] %vm273, %v1460
      %1493 = vst.msk [vmem:[%s980 + $0xf1] sm:$0xff] %vm273, %v1461
      %1494 = vst.msk [vmem:[%s980 + $0xf9] sm:$0xff] %vm273, %v1462
      %1495 = vst.msk [vmem:[%s980 + $0x109] sm:$0xff] %vm273, %v1463
      %1496 = vst.msk [vmem:[%s980 + $0x111] sm:$0xff] %vm273, %v1464
      %1497 = vst.msk [vmem:[%s980 + $0x121] sm:$0xff] %vm273, %v1465
      %1498 = vst.msk [vmem:[%s980 + $0x129] sm:$0xff] %vm273, %v1466
      %1499 = vst.msk [vmem:[%s980 + $0x139] sm:$0xff] %vm273, %v1467
      %1500 = vst.msk [vmem:[%s980 + $0x141] sm:$0xff] %vm273, %v1468
      %1501 = vst.msk [vmem:[%s980 + $0x151] sm:$0xff] %vm273, %v1469
      %1502 = vst.msk [vmem:[%s980 + $0x159] sm:$0xff] %vm273, %v1470
      %1503 = vst.msk [vmem:[%s980 + $0x169] sm:$0xff] %vm273, %v1471
      %1504 = vst.msk [vmem:[%s980 + $0x171] sm:$0xff] %vm273, %v1472
      %s1505 = scalar_lea.vmem %s2, 4
      %v1506 = vld [vmem:[%s1505] sm:$0x3]
      %s1507 = scalar_lea.vmem %s3, 4
      %v1508 = vld [vmem:[%s1507] sm:$0x3]
      %v1510 = vsel %vm523, %v1508, 0
      %1512 = vmatprep.subr.bf16.mxu0 0
      %1513 = vmatpush1.bf16.msra.mxu0 %v1510
      %1514 = vmatprep.subr.bf16.mxu0 0
      %1515 = vmatpush1.bf16.msra.mxu0 0
      %1516 = vmatprep.subr.bf16.mxu0 0
      %1517 = vmatpush1.bf16.msra.mxu0 0
      %1518 = vmatprep.subr.bf16.mxu0 0
      %1519 = vmatpush1.bf16.msra.mxu0 0
      %1520 = vmatprep.subr.bf16.mxu0 0
      %1521 = vmatpush1.bf16.msra.mxu0 0
      %1522 = vmatprep.subr.bf16.mxu0 0
      %1523 = vmatpush1.bf16.msra.mxu0 0
      %1524 = vmatprep.subr.bf16.mxu0 0
      %1525 = vmatpush1.bf16.msra.mxu0 0
      %1526 = vmatprep.subr.bf16.mxu0 0
      %1527 = vmatpush1.bf16.msra.mxu0 0
      %1528 = vmatprep.subr.bf16.mxu0 0
      %1529 = vmatpush1.bf16.msra.mxu0 0
      %1530 = vmatprep.subr.bf16.mxu0 0
      %1531 = vmatpush1.bf16.msra.mxu0 0
      %1532 = vmatprep.subr.bf16.mxu0 0
      %1533 = vmatpush1.bf16.msra.mxu0 0
      %1534 = vmatprep.subr.bf16.mxu0 0
      %1535 = vmatpush1.bf16.msra.mxu0 0
      %1536 = vmatprep.subr.bf16.mxu0 0
      %1537 = vmatpush1.bf16.msra.mxu0 0
      %1538 = vmatprep.subr.bf16.mxu0 0
      %1539 = vmatpush1.bf16.msra.mxu0 0
      %1540 = vmatprep.subr.bf16.mxu0 0
      %1541 = vmatpush1.bf16.msra.mxu0 0
      %1542 = vmatprep.subr.bf16.mxu0 0
      %1543 = vmatpush1.bf16.msra.mxu0 0
      %1544 = vmatprep.mubr.bf16.mxu0 0
      %1545 = vmatmul.mubr.bf16.gmra.mrb[0].mxu0 %v476
      %v1546 = vpop.f32.mrb[0].mxu0
      %v1547 = vadd.f32 0.0, %v1546
      %v1548 = vpop.f32.mrb[0].mxu0
      %v1549 = vpop.f32.mrb[0].mxu0
      %v1550 = vadd.f32 0.0, %v1549
      %v1551 = vpop.f32.mrb[0].mxu0
      %1552 = vmatprep.mubr.bf16.mxu0 0
      %1553 = vmatmul.mubr.bf16.gmra.mrb[0].mxu0 %v479
      %v1554 = vpop.f32.mrb[0].mxu0
      %v1555 = vadd.f32 0.0, %v1554
      %v1556 = vpop.f32.mrb[0].mxu0
      %v1557 = vpop.f32.mrb[0].mxu0
      %v1558 = vadd.f32 0.0, %v1557
      %v1559 = vpop.f32.mrb[0].mxu0
      %1560 = vmatprep.mubr.bf16.mxu0 0
      %1561 = vmatmul.mubr.bf16.gmra.mrb[0].mxu0 %v482
      %v1562 = vpop.f32.mrb[0].mxu0
      %v1563 = vadd.f32 0.0, %v1562
      %v1564 = vpop.f32.mrb[0].mxu0
      %v1565 = vpop.f32.mrb[0].mxu0
      %v1566 = vadd.f32 0.0, %v1565
      %v1567 = vpop.f32.mrb[0].mxu0
      %1568 = vmatprep.mubr.bf16.mxu0 0
      %1569 = vmatmul.mubr.bf16.gmra.mrb[0].mxu0 %v485
      %v1570 = vpop.f32.mrb[0].mxu0
      %v1571 = vadd.f32 0.0, %v1570
      %v1572 = vpop.f32.mrb[0].mxu0
      %v1573 = vpop.f32.mrb[0].mxu0
      %v1574 = vadd.f32 0.0, %v1573
      %v1575 = vpop.f32.mrb[0].mxu0
      %1576 = vmatprep.mubr.bf16.mxu0 0
      %1577 = vmatmul.mubr.bf16.gmra.mrb[0].mxu0 %v488
      %v1578 = vpop.f32.mrb[0].mxu0
      %v1579 = vadd.f32 0.0, %v1578
      %v1580 = vpop.f32.mrb[0].mxu0
      %v1581 = vpop.f32.mrb[0].mxu0
      %v1582 = vadd.f32 0.0, %v1581
      %v1583 = vpop.f32.mrb[0].mxu0
      %1584 = vmatprep.mubr.bf16.mxu0 0
      %1585 = vmatmul.mubr.bf16.gmra.mrb[0].mxu0 %v491
      %v1586 = vpop.f32.mrb[0].mxu0
      %v1587 = vadd.f32 0.0, %v1586
      %v1588 = vpop.f32.mrb[0].mxu0
      %v1589 = vpop.f32.mrb[0].mxu0
      %v1590 = vadd.f32 0.0, %v1589
      %v1591 = vpop.f32.mrb[0].mxu0
      %1592 = vmatprep.mubr.bf16.mxu0 0
      %1593 = vmatmul.mubr.bf16.gmra.mrb[0].mxu0 %v494
      %v1594 = vpop.f32.mrb[0].mxu0
      %v1595 = vadd.f32 0.0, %v1594
      %v1596 = vpop.f32.mrb[0].mxu0
      %v1597 = vpop.f32.mrb[0].mxu0
      %v1598 = vadd.f32 0.0, %v1597
      %v1599 = vpop.f32.mrb[0].mxu0
      %1600 = vmatprep.mubr.bf16.mxu0 0
      %1601 = vmatmul.mubr.bf16.gmra.mrb[0].mxu0 %v497
      %v1602 = vpop.f32.mrb[0].mxu0
      %v1603 = vadd.f32 0.0, %v1602
      %v1604 = vpop.f32.mrb[0].mxu0
      %v1605 = vpop.f32.mrb[0].mxu0
      %v1606 = vadd.f32 0.0, %v1605
      %v1607 = vpop.f32.mrb[0].mxu0
      %1608 = vmatprep.mubr.bf16.mxu0 0
      %1609 = vmatmul.mubr.bf16.gmra.mrb[0].mxu0 %v500
      %v1610 = vpop.f32.mrb[0].mxu0
      %v1611 = vadd.f32 0.0, %v1610
      %v1612 = vpop.f32.mrb[0].mxu0
      %v1613 = vpop.f32.mrb[0].mxu0
      %v1614 = vadd.f32 0.0, %v1613
      %v1615 = vpop.f32.mrb[0].mxu0
      %1616 = vmatprep.mubr.bf16.mxu0 0
      %1617 = vmatmul.mubr.bf16.gmra.mrb[0].mxu0 %v503
      %v1618 = vpop.f32.mrb[0].mxu0
      %v1619 = vadd.f32 0.0, %v1618
      %v1620 = vpop.f32.mrb[0].mxu0
      %v1621 = vpop.f32.mrb[0].mxu0
      %v1622 = vadd.f32 0.0, %v1621
      %v1623 = vpop.f32.mrb[0].mxu0
      %1624 = vmatprep.mubr.bf16.mxu0 0
      %1625 = vmatmul.mubr.bf16.gmra.mrb[0].mxu0 %v506
      %v1626 = vpop.f32.mrb[0].mxu0
      %v1627 = vadd.f32 0.0, %v1626
      %v1628 = vpop.f32.mrb[0].mxu0
      %v1629 = vpop.f32.mrb[0].mxu0
      %v1630 = vadd.f32 0.0, %v1629
      %v1631 = vpop.f32.mrb[0].mxu0
      %1632 = vmatprep.mubr.bf16.mxu0 0
      %1633 = vmatmul.mubr.bf16.gmra.mrb[0].mxu0 %v509
      %v1634 = vpop.f32.mrb[0].mxu0
      %v1635 = vadd.f32 0.0, %v1634
      %v1636 = vpop.f32.mrb[0].mxu0
      %v1637 = vpop.f32.mrb[0].mxu0
      %v1638 = vadd.f32 0.0, %v1637
      %v1639 = vpop.f32.mrb[0].mxu0
      %1640 = vmatprep.mubr.bf16.mxu0 0
      %1641 = vmatmul.mubr.bf16.gmra.mrb[0].mxu0 %v512
      %v1642 = vpop.f32.mrb[0].mxu0
      %v1643 = vadd.f32 0.0, %v1642
      %v1644 = vpop.f32.mrb[0].mxu0
      %v1645 = vpop.f32.mrb[0].mxu0
      %v1646 = vadd.f32 0.0, %v1645
      %v1647 = vpop.f32.mrb[0].mxu0
      %1648 = vmatprep.mubr.bf16.mxu0 0
      %1649 = vmatmul.mubr.bf16.gmra.mrb[0].mxu0 %v515
      %v1650 = vpop.f32.mrb[0].mxu0
      %v1651 = vadd.f32 0.0, %v1650
      %v1652 = vpop.f32.mrb[0].mxu0
      %v1653 = vpop.f32.mrb[0].mxu0
      %v1654 = vadd.f32 0.0, %v1653
      %v1655 = vpop.f32.mrb[0].mxu0
      %1656 = vmatprep.mubr.bf16.mxu0 0
      %1657 = vmatmul.mubr.bf16.gmra.mrb[0].mxu0 %v518
      %v1658 = vpop.f32.mrb[0].mxu0
      %v1659 = vadd.f32 0.0, %v1658
      %v1660 = vpop.f32.mrb[0].mxu0
      %v1661 = vpop.f32.mrb[0].mxu0
      %v1662 = vadd.f32 0.0, %v1661
      %v1663 = vpop.f32.mrb[0].mxu0
      %1664 = vmatprep.mubr.bf16.mxu0 0
      %1665 = vmatmul.mubr.bf16.gmra.mrb[0].mxu0 %v521
      %v1666 = vpop.f32.mrb[0].mxu0
      %v1667 = vadd.f32 0.0, %v1666
      %v1668 = vpop.f32.mrb[0].mxu0
      %v1669 = vpop.f32.mrb[0].mxu0
      %v1670 = vadd.f32 0.0, %v1669
      %v1671 = vpop.f32.mrb[0].mxu0
      %1672 = vdwg.mxu0
      %v1674 = vsel %vm523, %v1506, 0
      %1676 = vmatprep.subr.bf16.mxu0 0
      %1677 = vmatpush1.bf16.msra.mxu0 %v1674
      %1678 = vmatprep.subr.bf16.mxu0 0
      %1679 = vmatpush1.bf16.msra.mxu0 0
      %1680 = vmatprep.subr.bf16.mxu0 0
      %1681 = vmatpush1.bf16.msra.mxu0 0
      %1682 = vmatprep.subr.bf16.mxu0 0
      %1683 = vmatpush1.bf16.msra.mxu0 0
      %1684 = vmatprep.subr.bf16.mxu0 0
      %1685 = vmatpush1.bf16.msra.mxu0 0
      %1686 = vmatprep.subr.bf16.mxu0 0
      %1687 = vmatpush1.bf16.msra.mxu0 0
      %1688 = vmatprep.subr.bf16.mxu0 0
      %1689 = vmatpush1.bf16.msra.mxu0 0
      %1690 = vmatprep.subr.bf16.mxu0 0
      %1691 = vmatpush1.bf16.msra.mxu0 0
      %1692 = vmatprep.subr.bf16.mxu0 0
      %1693 = vmatpush1.bf16.msra.mxu0 0
      %1694 = vmatprep.subr.bf16.mxu0 0
      %1695 = vmatpush1.bf16.msra.mxu0 0
      %1696 = vmatprep.subr.bf16.mxu0 0
      %1697 = vmatpush1.bf16.msra.mxu0 0
      %1698 = vmatprep.subr.bf16.mxu0 0
      %1699 = vmatpush1.bf16.msra.mxu0 0
      %1700 = vmatprep.subr.bf16.mxu0 0
      %1701 = vmatpush1.bf16.msra.mxu0 0
      %1702 = vmatprep.subr.bf16.mxu0 0
      %1703 = vmatpush1.bf16.msra.mxu0 0
      %1704 = vmatprep.subr.bf16.mxu0 0
      %1705 = vmatpush1.bf16.msra.mxu0 0
      %1706 = vmatprep.subr.bf16.mxu0 0
      %1707 = vmatpush1.bf16.msra.mxu0 0
      %1708 = vmatprep.mubr.bf16.mxu0 0
      %1709 = vmatmul.mubr.bf16.gmra.mrb[0].mxu0 %v769
      %v1710 = vpop.f32.mrb[0].mxu0
      %v1711 = vadd.f32 %v1547, %v1710
      %v1712 = vpop.f32.mrb[0].mxu0
      %v1713 = vpop.f32.mrb[0].mxu0
      %v1714 = vadd.f32 %v1550, %v1713
      %v1715 = vpop.f32.mrb[0].mxu0
      %1716 = vmatprep.mubr.bf16.mxu0 0
      %1717 = vmatmul.mubr.bf16.gmra.mrb[0].mxu0 %v772
      %v1718 = vpop.f32.mrb[0].mxu0
      %v1719 = vadd.f32 %v1555, %v1718
      %v1720 = vpop.f32.mrb[0].mxu0
      %v1721 = vpop.f32.mrb[0].mxu0
      %v1722 = vadd.f32 %v1558, %v1721
      %v1723 = vpop.f32.mrb[0].mxu0
      %1724 = vmatprep.mubr.bf16.mxu0 0
      %1725 = vmatmul.mubr.bf16.gmra.mrb[0].mxu0 %v775
      %v1726 = vpop.f32.mrb[0].mxu0
      %v1727 = vadd.f32 %v1563, %v1726
      %v1728 = vpop.f32.mrb[0].mxu0
      %v1729 = vpop.f32.mrb[0].mxu0
      %v1730 = vadd.f32 %v1566, %v1729
      %v1731 = vpop.f32.mrb[0].mxu0
      %1732 = vmatprep.mubr.bf16.mxu0 0
      %1733 = vmatmul.mubr.bf16.gmra.mrb[0].mxu0 %v778
      %v1734 = vpop.f32.mrb[0].mxu0
      %v1735 = vadd.f32 %v1571, %v1734
      %v1736 = vpop.f32.mrb[0].mxu0
      %v1737 = vpop.f32.mrb[0].mxu0
      %v1738 = vadd.f32 %v1574, %v1737
      %v1739 = vpop.f32.mrb[0].mxu0
      %1740 = vmatprep.mubr.bf16.mxu0 0
      %1741 = vmatmul.mubr.bf16.gmra.mrb[0].mxu0 %v781
      %v1742 = vpop.f32.mrb[0].mxu0
      %v1743 = vadd.f32 %v1579, %v1742
      %v1744 = vpop.f32.mrb[0].mxu0
      %v1745 = vpop.f32.mrb[0].mxu0
      %v1746 = vadd.f32 %v1582, %v1745
      %v1747 = vpop.f32.mrb[0].mxu0
      %1748 = vmatprep.mubr.bf16.mxu0 0
      %1749 = vmatmul.mubr.bf16.gmra.mrb[0].mxu0 %v784
      %v1750 = vpop.f32.mrb[0].mxu0
      %v1751 = vadd.f32 %v1587, %v1750
      %v1752 = vpop.f32.mrb[0].mxu0
      %v1753 = vpop.f32.mrb[0].mxu0
      %v1754 = vadd.f32 %v1590, %v1753
      %v1755 = vpop.f32.mrb[0].mxu0
      %1756 = vmatprep.mubr.bf16.mxu0 0
      %1757 = vmatmul.mubr.bf16.gmra.mrb[0].mxu0 %v787
      %v1758 = vpop.f32.mrb[0].mxu0
      %v1759 = vadd.f32 %v1595, %v1758
      %v1760 = vpop.f32.mrb[0].mxu0
      %v1761 = vpop.f32.mrb[0].mxu0
      %v1762 = vadd.f32 %v1598, %v1761
      %v1763 = vpop.f32.mrb[0].mxu0
      %1764 = vmatprep.mubr.bf16.mxu0 0
      %1765 = vmatmul.mubr.bf16.gmra.mrb[0].mxu0 %v790
      %v1766 = vpop.f32.mrb[0].mxu0
      %v1767 = vadd.f32 %v1603, %v1766
      %v1768 = vpop.f32.mrb[0].mxu0
      %v1769 = vpop.f32.mrb[0].mxu0
      %v1770 = vadd.f32 %v1606, %v1769
      %v1771 = vpop.f32.mrb[0].mxu0
      %1772 = vmatprep.mubr.bf16.mxu0 0
      %1773 = vmatmul.mubr.bf16.gmra.mrb[0].mxu0 %v793
      %v1774 = vpop.f32.mrb[0].mxu0
      %v1775 = vadd.f32 %v1611, %v1774
      %v1776 = vpop.f32.mrb[0].mxu0
      %v1777 = vpop.f32.mrb[0].mxu0
      %v1778 = vadd.f32 %v1614, %v1777
      %v1779 = vpop.f32.mrb[0].mxu0
      %1780 = vmatprep.mubr.bf16.mxu0 0
      %1781 = vmatmul.mubr.bf16.gmra.mrb[0].mxu0 %v796
      %v1782 = vpop.f32.mrb[0].mxu0
      %v1783 = vadd.f32 %v1619, %v1782
      %v1784 = vpop.f32.mrb[0].mxu0
      %v1785 = vpop.f32.mrb[0].mxu0
      %v1786 = vadd.f32 %v1622, %v1785
      %v1787 = vpop.f32.mrb[0].mxu0
      %1788 = vmatprep.mubr.bf16.mxu0 0
      %1789 = vmatmul.mubr.bf16.gmra.mrb[0].mxu0 %v799
      %v1790 = vpop.f32.mrb[0].mxu0
      %v1791 = vadd.f32 %v1627, %v1790
      %v1792 = vpop.f32.mrb[0].mxu0
      %v1793 = vpop.f32.mrb[0].mxu0
      %v1794 = vadd.f32 %v1630, %v1793
      %v1795 = vpop.f32.mrb[0].mxu0
      %1796 = vmatprep.mubr.bf16.mxu0 0
      %1797 = vmatmul.mubr.bf16.gmra.mrb[0].mxu0 %v802
      %v1798 = vpop.f32.mrb[0].mxu0
      %v1799 = vadd.f32 %v1635, %v1798
      %v1800 = vpop.f32.mrb[0].mxu0
      %v1801 = vpop.f32.mrb[0].mxu0
      %v1802 = vadd.f32 %v1638, %v1801
      %v1803 = vpop.f32.mrb[0].mxu0
      %1804 = vmatprep.mubr.bf16.mxu0 0
      %1805 = vmatmul.mubr.bf16.gmra.mrb[0].mxu0 %v805
      %v1806 = vpop.f32.mrb[0].mxu0
      %v1807 = vadd.f32 %v1643, %v1806
      %v1808 = vpop.f32.mrb[0].mxu0
      %v1809 = vpop.f32.mrb[0].mxu0
      %v1810 = vadd.f32 %v1646, %v1809
      %v1811 = vpop.f32.mrb[0].mxu0
      %1812 = vmatprep.mubr.bf16.mxu0 0
      %1813 = vmatmul.mubr.bf16.gmra.mrb[0].mxu0 %v808
      %v1814 = vpop.f32.mrb[0].mxu0
      %v1815 = vadd.f32 %v1651, %v1814
      %v1816 = vpop.f32.mrb[0].mxu0
      %v1817 = vpop.f32.mrb[0].mxu0
      %v1818 = vadd.f32 %v1654, %v1817
      %v1819 = vpop.f32.mrb[0].mxu0
      %1820 = vmatprep.mubr.bf16.mxu0 0
      %1821 = vmatmul.mubr.bf16.gmra.mrb[0].mxu0 %v811
      %v1822 = vpop.f32.mrb[0].mxu0
      %v1823 = vadd.f32 %v1659, %v1822
      %v1824 = vpop.f32.mrb[0].mxu0
      %v1825 = vpop.f32.mrb[0].mxu0
      %v1826 = vadd.f32 %v1662, %v1825
      %v1827 = vpop.f32.mrb[0].mxu0
      %1828 = vmatprep.mubr.bf16.mxu0 0
      %1829 = vmatmul.mubr.bf16.gmra.mrb[0].mxu0 %v814
      %v1830 = vpop.f32.mrb[0].mxu0
      %v1831 = vadd.f32 %v1667, %v1830
      %v1832 = vpop.f32.mrb[0].mxu0
      %v1833 = vpop.f32.mrb[0].mxu0
      %v1834 = vadd.f32 %v1670, %v1833
      %v1835 = vpop.f32.mrb[0].mxu0
      %1836 = vdwg.mxu0
      %v1837 = vld [vmem:[%s980] sm:$0xff]
      %v1838 = vld [vmem:[%s980 + $0x8] sm:$0xff]
      %v1839 = vld [vmem:[%s980 + $0x18] sm:$0xff]
      %v1840 = vld [vmem:[%s980 + $0x20] sm:$0xff]
      %v1841 = vld [vmem:[%s980 + $0x30] sm:$0xff]
      %v1842 = vld [vmem:[%s980 + $0x38] sm:$0xff]
      %v1843 = vld [vmem:[%s980 + $0x48] sm:$0xff]
      %v1844 = vld [vmem:[%s980 + $0x50] sm:$0xff]
      %v1845 = vld [vmem:[%s980 + $0x60] sm:$0xff]
      %v1846 = vld [vmem:[%s980 + $0x68] sm:$0xff]
      %v1847 = vld [vmem:[%s980 + $0x78] sm:$0xff]
      %v1848 = vld [vmem:[%s980 + $0x80] sm:$0xff]
      %v1849 = vld [vmem:[%s980 + $0x90] sm:$0xff]
      %v1850 = vld [vmem:[%s980 + $0x98] sm:$0xff]
      %v1851 = vld [vmem:[%s980 + $0xa8] sm:$0xff]
      %v1852 = vld [vmem:[%s980 + $0xb0] sm:$0xff]
      %v1853 = vld [vmem:[%s980 + $0xc0] sm:$0xff]
      %v1854 = vld [vmem:[%s980 + $0xc8] sm:$0xff]
      %v1855 = vld [vmem:[%s980 + $0xd8] sm:$0xff]
      %v1856 = vld [vmem:[%s980 + $0xe0] sm:$0xff]
      %v1857 = vld [vmem:[%s980 + $0xf0] sm:$0xff]
      %v1858 = vld [vmem:[%s980 + $0xf8] sm:$0xff]
      %v1859 = vld [vmem:[%s980 + $0x108] sm:$0xff]
      %v1860 = vld [vmem:[%s980 + $0x110] sm:$0xff]
      %v1861 = vld [vmem:[%s980 + $0x120] sm:$0xff]
      %v1862 = vld [vmem:[%s980 + $0x128] sm:$0xff]
      %v1863 = vld [vmem:[%s980 + $0x138] sm:$0xff]
      %v1864 = vld [vmem:[%s980 + $0x140] sm:$0xff]
      %v1865 = vld [vmem:[%s980 + $0x150] sm:$0xff]
      %v1866 = vld [vmem:[%s980 + $0x158] sm:$0xff]
      %v1867 = vld [vmem:[%s980 + $0x168] sm:$0xff]
      %v1868 = vld [vmem:[%s980 + $0x170] sm:$0xff]
      %v1869 = vadd.f32 %v1837, %v1711
      %v1870 = vadd.f32 %v1838, %v1714
      %v1871 = vadd.f32 %v1839, %v1719
      %v1872 = vadd.f32 %v1840, %v1722
      %v1873 = vadd.f32 %v1841, %v1727
      %v1874 = vadd.f32 %v1842, %v1730
      %v1875 = vadd.f32 %v1843, %v1735
      %v1876 = vadd.f32 %v1844, %v1738
      %v1877 = vadd.f32 %v1845, %v1743
      %v1878 = vadd.f32 %v1846, %v1746
      %v1879 = vadd.f32 %v1847, %v1751
      %v1880 = vadd.f32 %v1848, %v1754
      %v1881 = vadd.f32 %v1849, %v1759
      %v1882 = vadd.f32 %v1850, %v1762
      %v1883 = vadd.f32 %v1851, %v1767
      %v1884 = vadd.f32 %v1852, %v1770
      %v1885 = vadd.f32 %v1853, %v1775
      %v1886 = vadd.f32 %v1854, %v1778
      %v1887 = vadd.f32 %v1855, %v1783
      %v1888 = vadd.f32 %v1856, %v1786
      %v1889 = vadd.f32 %v1857, %v1791
      %v1890 = vadd.f32 %v1858, %v1794
      %v1891 = vadd.f32 %v1859, %v1799
      %v1892 = vadd.f32 %v1860, %v1802
      %v1893 = vadd.f32 %v1861, %v1807
      %v1894 = vadd.f32 %v1862, %v1810
      %v1895 = vadd.f32 %v1863, %v1815
      %v1896 = vadd.f32 %v1864, %v1818
      %v1897 = vadd.f32 %v1865, %v1823
      %v1898 = vadd.f32 %v1866, %v1826
      %v1899 = vadd.f32 %v1867, %v1831
      %v1900 = vadd.f32 %v1868, %v1834
      %1901 = vst.msk [vmem:[%s980] sm:$0xff] %vm273, %v1869
      %1902 = vst.msk [vmem:[%s980 + $0x8] sm:$0xff] %vm273, %v1870
      %1903 = vst.msk [vmem:[%s980 + $0x18] sm:$0xff] %vm273, %v1871
      %1904 = vst.msk [vmem:[%s980 + $0x20] sm:$0xff] %vm273, %v1872
      %1905 = vst.msk [vmem:[%s980 + $0x30] sm:$0xff] %vm273, %v1873
      %1906 = vst.msk [vmem:[%s980 + $0x38] sm:$0xff] %vm273, %v1874
      %1907 = vst.msk [vmem:[%s980 + $0x48] sm:$0xff] %vm273, %v1875
      %1908 = vst.msk [vmem:[%s980 + $0x50] sm:$0xff] %vm273, %v1876
      %1909 = vst.msk [vmem:[%s980 + $0x60] sm:$0xff] %vm273, %v1877
      %1910 = vst.msk [vmem:[%s980 + $0x68] sm:$0xff] %vm273, %v1878
      %1911 = vst.msk [vmem:[%s980 + $0x78] sm:$0xff] %vm273, %v1879
      %1912 = vst.msk [vmem:[%s980 + $0x80] sm:$0xff] %vm273, %v1880
      %1913 = vst.msk [vmem:[%s980 + $0x90] sm:$0xff] %vm273, %v1881
      %1914 = vst.msk [vmem:[%s980 + $0x98] sm:$0xff] %vm273, %v1882
      %1915 = vst.msk [vmem:[%s980 + $0xa8] sm:$0xff] %vm273, %v1883
      %1916 = vst.msk [vmem:[%s980 + $0xb0] sm:$0xff] %vm273, %v1884
      %1917 = vst.msk [vmem:[%s980 + $0xc0] sm:$0xff] %vm273, %v1885
      %1918 = vst.msk [vmem:[%s980 + $0xc8] sm:$0xff] %vm273, %v1886
      %1919 = vst.msk [vmem:[%s980 + $0xd8] sm:$0xff] %vm273, %v1887
      %1920 = vst.msk [vmem:[%s980 + $0xe0] sm:$0xff] %vm273, %v1888
      %1921 = vst.msk [vmem:[%s980 + $0xf0] sm:$0xff] %vm273, %v1889
      %1922 = vst.msk [vmem:[%s980 + $0xf8] sm:$0xff] %vm273, %v1890
      %1923 = vst.msk [vmem:[%s980 + $0x108] sm:$0xff] %vm273, %v1891
      %1924 = vst.msk [vmem:[%s980 + $0x110] sm:$0xff] %vm273, %v1892
      %1925 = vst.msk [vmem:[%s980 + $0x120] sm:$0xff] %vm273, %v1893
      %1926 = vst.msk [vmem:[%s980 + $0x128] sm:$0xff] %vm273, %v1894
      %1927 = vst.msk [vmem:[%s980 + $0x138] sm:$0xff] %vm273, %v1895
      %1928 = vst.msk [vmem:[%s980 + $0x140] sm:$0xff] %vm273, %v1896
      %1929 = vst.msk [vmem:[%s980 + $0x150] sm:$0xff] %vm273, %v1897
      %1930 = vst.msk [vmem:[%s980 + $0x158] sm:$0xff] %vm273, %v1898
      %1931 = vst.msk [vmem:[%s980 + $0x168] sm:$0xff] %vm273, %v1899
      %1932 = vst.msk [vmem:[%s980 + $0x170] sm:$0xff] %vm273, %v1900
      %s1933 = scalar_lea.vmem %s2, 6
      %v1934 = vld [vmem:[%s1933] sm:$0x3]
      %s1935 = scalar_lea.vmem %s3, 6
      %v1936 = vld [vmem:[%s1935] sm:$0x3]
      %v1938 = vsel %vm523, %v1936, 0
      %1940 = vmatprep.subr.bf16.mxu0 0
      %1941 = vmatpush1.bf16.msra.mxu0 %v1938
      %1942 = vmatprep.subr.bf16.mxu0 0
      %1943 = vmatpush1.bf16.msra.mxu0 0
      %1944 = vmatprep.subr.bf16.mxu0 0
      %1945 = vmatpush1.bf16.msra.mxu0 0
      %1946 = vmatprep.subr.bf16.mxu0 0
      %1947 = vmatpush1.bf16.msra.mxu0 0
      %1948 = vmatprep.subr.bf16.mxu0 0
      %1949 = vmatpush1.bf16.msra.mxu0 0
      %1950 = vmatprep.subr.bf16.mxu0 0
      %1951 = vmatpush1.bf16.msra.mxu0 0
      %1952 = vmatprep.subr.bf16.mxu0 0
      %1953 = vmatpush1.bf16.msra.mxu0 0
      %1954 = vmatprep.subr.bf16.mxu0 0
      %1955 = vmatpush1.bf16.msra.mxu0 0
      %1956 = vmatprep.subr.bf16.mxu0 0
      %1957 = vmatpush1.bf16.msra.mxu0 0
      %1958 = vmatprep.subr.bf16.mxu0 0
      %1959 = vmatpush1.bf16.msra.mxu0 0
      %1960 = vmatprep.subr.bf16.mxu0 0
      %1961 = vmatpush1.bf16.msra.mxu0 0
      %1962 = vmatprep.subr.bf16.mxu0 0
      %1963 = vmatpush1.bf16.msra.mxu0 0
      %1964 = vmatprep.subr.bf16.mxu0 0
      %1965 = vmatpush1.bf16.msra.mxu0 0
      %1966 = vmatprep.subr.bf16.mxu0 0
      %1967 = vmatpush1.bf16.msra.mxu0 0
      %1968 = vmatprep.subr.bf16.mxu0 0
      %1969 = vmatpush1.bf16.msra.mxu0 0
      %1970 = vmatprep.subr.bf16.mxu0 0
      %1971 = vmatpush1.bf16.msra.mxu0 0
      %1972 = vmatprep.mubr.bf16.mxu0 0
      %1973 = vmatmul.mubr.bf16.gmra.mrb[0].mxu0 %v476
      %v1974 = vpop.f32.mrb[0].mxu0
      %v1975 = vadd.f32 0.0, %v1974
      %v1976 = vpop.f32.mrb[0].mxu0
      %v1977 = vpop.f32.mrb[0].mxu0
      %v1978 = vadd.f32 0.0, %v1977
      %v1979 = vpop.f32.mrb[0].mxu0
      %1980 = vmatprep.mubr.bf16.mxu0 0
      %1981 = vmatmul.mubr.bf16.gmra.mrb[0].mxu0 %v479
      %v1982 = vpop.f32.mrb[0].mxu0
      %v1983 = vadd.f32 0.0, %v1982
      %v1984 = vpop.f32.mrb[0].mxu0
      %v1985 = vpop.f32.mrb[0].mxu0
      %v1986 = vadd.f32 0.0, %v1985
      %v1987 = vpop.f32.mrb[0].mxu0
      %1988 = vmatprep.mubr.bf16.mxu0 0
      %1989 = vmatmul.mubr.bf16.gmra.mrb[0].mxu0 %v482
      %v1990 = vpop.f32.mrb[0].mxu0
      %v1991 = vadd.f32 0.0, %v1990
      %v1992 = vpop.f32.mrb[0].mxu0
      %v1993 = vpop.f32.mrb[0].mxu0
      %v1994 = vadd.f32 0.0, %v1993
      %v1995 = vpop.f32.mrb[0].mxu0
      %1996 = vmatprep.mubr.bf16.mxu0 0
      %1997 = vmatmul.mubr.bf16.gmra.mrb[0].mxu0 %v485
      %v1998 = vpop.f32.mrb[0].mxu0
      %v1999 = vadd.f32 0.0, %v1998
      %v2000 = vpop.f32.mrb[0].mxu0
      %v2001 = vpop.f32.mrb[0].mxu0
      %v2002 = vadd.f32 0.0, %v2001
      %v2003 = vpop.f32.mrb[0].mxu0
      %2004 = vmatprep.mubr.bf16.mxu0 0
      %2005 = vmatmul.mubr.bf16.gmra.mrb[0].mxu0 %v488
      %v2006 = vpop.f32.mrb[0].mxu0
      %v2007 = vadd.f32 0.0, %v2006
      %v2008 = vpop.f32.mrb[0].mxu0
      %v2009 = vpop.f32.mrb[0].mxu0
      %v2010 = vadd.f32 0.0, %v2009
      %v2011 = vpop.f32.mrb[0].mxu0
      %2012 = vmatprep.mubr.bf16.mxu0 0
      %2013 = vmatmul.mubr.bf16.gmra.mrb[0].mxu0 %v491
      %v2014 = vpop.f32.mrb[0].mxu0
      %v2015 = vadd.f32 0.0, %v2014
      %v2016 = vpop.f32.mrb[0].mxu0
      %v2017 = vpop.f32.mrb[0].mxu0
      %v2018 = vadd.f32 0.0, %v2017
      %v2019 = vpop.f32.mrb[0].mxu0
      %2020 = vmatprep.mubr.bf16.mxu0 0
      %2021 = vmatmul.mubr.bf16.gmra.mrb[0].mxu0 %v494
      %v2022 = vpop.f32.mrb[0].mxu0
      %v2023 = vadd.f32 0.0, %v2022
      %v2024 = vpop.f32.mrb[0].mxu0
      %v2025 = vpop.f32.mrb[0].mxu0
      %v2026 = vadd.f32 0.0, %v2025
      %v2027 = vpop.f32.mrb[0].mxu0
      %2028 = vmatprep.mubr.bf16.mxu0 0
      %2029 = vmatmul.mubr.bf16.gmra.mrb[0].mxu0 %v497
      %v2030 = vpop.f32.mrb[0].mxu0
      %v2031 = vadd.f32 0.0, %v2030
      %v2032 = vpop.f32.mrb[0].mxu0
      %v2033 = vpop.f32.mrb[0].mxu0
      %v2034 = vadd.f32 0.0, %v2033
      %v2035 = vpop.f32.mrb[0].mxu0
      %2036 = vmatprep.mubr.bf16.mxu0 0
      %2037 = vmatmul.mubr.bf16.gmra.mrb[0].mxu0 %v500
      %v2038 = vpop.f32.mrb[0].mxu0
      %v2039 = vadd.f32 0.0, %v2038
      %v2040 = vpop.f32.mrb[0].mxu0
      %v2041 = vpop.f32.mrb[0].mxu0
      %v2042 = vadd.f32 0.0, %v2041
      %v2043 = vpop.f32.mrb[0].mxu0
      %2044 = vmatprep.mubr.bf16.mxu0 0
      %2045 = vmatmul.mubr.bf16.gmra.mrb[0].mxu0 %v503
      %v2046 = vpop.f32.mrb[0].mxu0
      %v2047 = vadd.f32 0.0, %v2046
      %v2048 = vpop.f32.mrb[0].mxu0
      %v2049 = vpop.f32.mrb[0].mxu0
      %v2050 = vadd.f32 0.0, %v2049
      %v2051 = vpop.f32.mrb[0].mxu0
      %2052 = vmatprep.mubr.bf16.mxu0 0
      %2053 = vmatmul.mubr.bf16.gmra.mrb[0].mxu0 %v506
      %v2054 = vpop.f32.mrb[0].mxu0
      %v2055 = vadd.f32 0.0, %v2054
      %v2056 = vpop.f32.mrb[0].mxu0
      %v2057 = vpop.f32.mrb[0].mxu0
      %v2058 = vadd.f32 0.0, %v2057
      %v2059 = vpop.f32.mrb[0].mxu0
      %2060 = vmatprep.mubr.bf16.mxu0 0
      %2061 = vmatmul.mubr.bf16.gmra.mrb[0].mxu0 %v509
      %v2062 = vpop.f32.mrb[0].mxu0
      %v2063 = vadd.f32 0.0, %v2062
      %v2064 = vpop.f32.mrb[0].mxu0
      %v2065 = vpop.f32.mrb[0].mxu0
      %v2066 = vadd.f32 0.0, %v2065
      %v2067 = vpop.f32.mrb[0].mxu0
      %2068 = vmatprep.mubr.bf16.mxu0 0
      %2069 = vmatmul.mubr.bf16.gmra.mrb[0].mxu0 %v512
      %v2070 = vpop.f32.mrb[0].mxu0
      %v2071 = vadd.f32 0.0, %v2070
      %v2072 = vpop.f32.mrb[0].mxu0
      %v2073 = vpop.f32.mrb[0].mxu0
      %v2074 = vadd.f32 0.0, %v2073
      %v2075 = vpop.f32.mrb[0].mxu0
      %2076 = vmatprep.mubr.bf16.mxu0 0
      %2077 = vmatmul.mubr.bf16.gmra.mrb[0].mxu0 %v515
      %v2078 = vpop.f32.mrb[0].mxu0
      %v2079 = vadd.f32 0.0, %v2078
      %v2080 = vpop.f32.mrb[0].mxu0
      %v2081 = vpop.f32.mrb[0].mxu0
      %v2082 = vadd.f32 0.0, %v2081
      %v2083 = vpop.f32.mrb[0].mxu0
      %2084 = vmatprep.mubr.bf16.mxu0 0
      %2085 = vmatmul.mubr.bf16.gmra.mrb[0].mxu0 %v518
      %v2086 = vpop.f32.mrb[0].mxu0
      %v2087 = vadd.f32 0.0, %v2086
      %v2088 = vpop.f32.mrb[0].mxu0
      %v2089 = vpop.f32.mrb[0].mxu0
      %v2090 = vadd.f32 0.0, %v2089
      %v2091 = vpop.f32.mrb[0].mxu0
      %2092 = vmatprep.mubr.bf16.mxu0 0
      %2093 = vmatmul.mubr.bf16.gmra.mrb[0].mxu0 %v521
      %v2094 = vpop.f32.mrb[0].mxu0
      %v2095 = vadd.f32 0.0, %v2094
      %v2096 = vpop.f32.mrb[0].mxu0
      %v2097 = vpop.f32.mrb[0].mxu0
      %v2098 = vadd.f32 0.0, %v2097
      %v2099 = vpop.f32.mrb[0].mxu0
      %2100 = vdwg.mxu0
      %v2102 = vsel %vm523, %v1934, 0
      %2104 = vmatprep.subr.bf16.mxu0 0
      %2105 = vmatpush1.bf16.msra.mxu0 %v2102
      %2106 = vmatprep.subr.bf16.mxu0 0
      %2107 = vmatpush1.bf16.msra.mxu0 0
      %2108 = vmatprep.subr.bf16.mxu0 0
      %2109 = vmatpush1.bf16.msra.mxu0 0
      %2110 = vmatprep.subr.bf16.mxu0 0
      %2111 = vmatpush1.bf16.msra.mxu0 0
      %2112 = vmatprep.subr.bf16.mxu0 0
      %2113 = vmatpush1.bf16.msra.mxu0 0
      %2114 = vmatprep.subr.bf16.mxu0 0
      %2115 = vmatpush1.bf16.msra.mxu0 0
      %2116 = vmatprep.subr.bf16.mxu0 0
      %2117 = vmatpush1.bf16.msra.mxu0 0
      %2118 = vmatprep.subr.bf16.mxu0 0
      %2119 = vmatpush1.bf16.msra.mxu0 0
      %2120 = vmatprep.subr.bf16.mxu0 0
      %2121 = vmatpush1.bf16.msra.mxu0 0
      %2122 = vmatprep.subr.bf16.mxu0 0
      %2123 = vmatpush1.bf16.msra.mxu0 0
      %2124 = vmatprep.subr.bf16.mxu0 0
      %2125 = vmatpush1.bf16.msra.mxu0 0
      %2126 = vmatprep.subr.bf16.mxu0 0
      %2127 = vmatpush1.bf16.msra.mxu0 0
      %2128 = vmatprep.subr.bf16.mxu0 0
      %2129 = vmatpush1.bf16.msra.mxu0 0
      %2130 = vmatprep.subr.bf16.mxu0 0
      %2131 = vmatpush1.bf16.msra.mxu0 0
      %2132 = vmatprep.subr.bf16.mxu0 0
      %2133 = vmatpush1.bf16.msra.mxu0 0
      %2134 = vmatprep.subr.bf16.mxu0 0
      %2135 = vmatpush1.bf16.msra.mxu0 0
      %2136 = vmatprep.mubr.bf16.mxu0 0
      %2137 = vmatmul.mubr.bf16.gmra.mrb[0].mxu0 %v769
      %v2138 = vpop.f32.mrb[0].mxu0
      %v2139 = vadd.f32 %v1975, %v2138
      %v2140 = vpop.f32.mrb[0].mxu0
      %v2141 = vpop.f32.mrb[0].mxu0
      %v2142 = vadd.f32 %v1978, %v2141
      %v2143 = vpop.f32.mrb[0].mxu0
      %2144 = vmatprep.mubr.bf16.mxu0 0
      %2145 = vmatmul.mubr.bf16.gmra.mrb[0].mxu0 %v772
      %v2146 = vpop.f32.mrb[0].mxu0
      %v2147 = vadd.f32 %v1983, %v2146
      %v2148 = vpop.f32.mrb[0].mxu0
      %v2149 = vpop.f32.mrb[0].mxu0
      %v2150 = vadd.f32 %v1986, %v2149
      %v2151 = vpop.f32.mrb[0].mxu0
      %2152 = vmatprep.mubr.bf16.mxu0 0
      %2153 = vmatmul.mubr.bf16.gmra.mrb[0].mxu0 %v775
      %v2154 = vpop.f32.mrb[0].mxu0
      %v2155 = vadd.f32 %v1991, %v2154
      %v2156 = vpop.f32.mrb[0].mxu0
      %v2157 = vpop.f32.mrb[0].mxu0
      %v2158 = vadd.f32 %v1994, %v2157
      %v2159 = vpop.f32.mrb[0].mxu0
      %2160 = vmatprep.mubr.bf16.mxu0 0
      %2161 = vmatmul.mubr.bf16.gmra.mrb[0].mxu0 %v778
      %v2162 = vpop.f32.mrb[0].mxu0
      %v2163 = vadd.f32 %v1999, %v2162
      %v2164 = vpop.f32.mrb[0].mxu0
      %v2165 = vpop.f32.mrb[0].mxu0
      %v2166 = vadd.f32 %v2002, %v2165
      %v2167 = vpop.f32.mrb[0].mxu0
      %2168 = vmatprep.mubr.bf16.mxu0 0
      %2169 = vmatmul.mubr.bf16.gmra.mrb[0].mxu0 %v781
      %v2170 = vpop.f32.mrb[0].mxu0
      %v2171 = vadd.f32 %v2007, %v2170
      %v2172 = vpop.f32.mrb[0].mxu0
      %v2173 = vpop.f32.mrb[0].mxu0
      %v2174 = vadd.f32 %v2010, %v2173
      %v2175 = vpop.f32.mrb[0].mxu0
      %2176 = vmatprep.mubr.bf16.mxu0 0
      %2177 = vmatmul.mubr.bf16.gmra.mrb[0].mxu0 %v784
      %v2178 = vpop.f32.mrb[0].mxu0
      %v2179 = vadd.f32 %v2015, %v2178
      %v2180 = vpop.f32.mrb[0].mxu0
      %v2181 = vpop.f32.mrb[0].mxu0
      %v2182 = vadd.f32 %v2018, %v2181
      %v2183 = vpop.f32.mrb[0].mxu0
      %2184 = vmatprep.mubr.bf16.mxu0 0
      %2185 = vmatmul.mubr.bf16.gmra.mrb[0].mxu0 %v787
      %v2186 = vpop.f32.mrb[0].mxu0
      %v2187 = vadd.f32 %v2023, %v2186
      %v2188 = vpop.f32.mrb[0].mxu0
      %v2189 = vpop.f32.mrb[0].mxu0
      %v2190 = vadd.f32 %v2026, %v2189
      %v2191 = vpop.f32.mrb[0].mxu0
      %2192 = vmatprep.mubr.bf16.mxu0 0
      %2193 = vmatmul.mubr.bf16.gmra.mrb[0].mxu0 %v790
      %v2194 = vpop.f32.mrb[0].mxu0
      %v2195 = vadd.f32 %v2031, %v2194
      %v2196 = vpop.f32.mrb[0].mxu0
      %v2197 = vpop.f32.mrb[0].mxu0
      %v2198 = vadd.f32 %v2034, %v2197
      %v2199 = vpop.f32.mrb[0].mxu0
      %2200 = vmatprep.mubr.bf16.mxu0 0
      %2201 = vmatmul.mubr.bf16.gmra.mrb[0].mxu0 %v793
      %v2202 = vpop.f32.mrb[0].mxu0
      %v2203 = vadd.f32 %v2039, %v2202
      %v2204 = vpop.f32.mrb[0].mxu0
      %v2205 = vpop.f32.mrb[0].mxu0
      %v2206 = vadd.f32 %v2042, %v2205
      %v2207 = vpop.f32.mrb[0].mxu0
      %2208 = vmatprep.mubr.bf16.mxu0 0
      %2209 = vmatmul.mubr.bf16.gmra.mrb[0].mxu0 %v796
      %v2210 = vpop.f32.mrb[0].mxu0
      %v2211 = vadd.f32 %v2047, %v2210
      %v2212 = vpop.f32.mrb[0].mxu0
      %v2213 = vpop.f32.mrb[0].mxu0
      %v2214 = vadd.f32 %v2050, %v2213
      %v2215 = vpop.f32.mrb[0].mxu0
      %2216 = vmatprep.mubr.bf16.mxu0 0
      %2217 = vmatmul.mubr.bf16.gmra.mrb[0].mxu0 %v799
      %v2218 = vpop.f32.mrb[0].mxu0
      %v2219 = vadd.f32 %v2055, %v2218
      %v2220 = vpop.f32.mrb[0].mxu0
      %v2221 = vpop.f32.mrb[0].mxu0
      %v2222 = vadd.f32 %v2058, %v2221
      %v2223 = vpop.f32.mrb[0].mxu0
      %2224 = vmatprep.mubr.bf16.mxu0 0
      %2225 = vmatmul.mubr.bf16.gmra.mrb[0].mxu0 %v802
      %v2226 = vpop.f32.mrb[0].mxu0
      %v2227 = vadd.f32 %v2063, %v2226
      %v2228 = vpop.f32.mrb[0].mxu0
      %v2229 = vpop.f32.mrb[0].mxu0
      %v2230 = vadd.f32 %v2066, %v2229
      %v2231 = vpop.f32.mrb[0].mxu0
      %2232 = vmatprep.mubr.bf16.mxu0 0
      %2233 = vmatmul.mubr.bf16.gmra.mrb[0].mxu0 %v805
      %v2234 = vpop.f32.mrb[0].mxu0
      %v2235 = vadd.f32 %v2071, %v2234
      %v2236 = vpop.f32.mrb[0].mxu0
      %v2237 = vpop.f32.mrb[0].mxu0
      %v2238 = vadd.f32 %v2074, %v2237
      %v2239 = vpop.f32.mrb[0].mxu0
      %2240 = vmatprep.mubr.bf16.mxu0 0
      %2241 = vmatmul.mubr.bf16.gmra.mrb[0].mxu0 %v808
      %v2242 = vpop.f32.mrb[0].mxu0
      %v2243 = vadd.f32 %v2079, %v2242
      %v2244 = vpop.f32.mrb[0].mxu0
      %v2245 = vpop.f32.mrb[0].mxu0
      %v2246 = vadd.f32 %v2082, %v2245
      %v2247 = vpop.f32.mrb[0].mxu0
      %2248 = vmatprep.mubr.bf16.mxu0 0
      %2249 = vmatmul.mubr.bf16.gmra.mrb[0].mxu0 %v811
      %v2250 = vpop.f32.mrb[0].mxu0
      %v2251 = vadd.f32 %v2087, %v2250
      %v2252 = vpop.f32.mrb[0].mxu0
      %v2253 = vpop.f32.mrb[0].mxu0
      %v2254 = vadd.f32 %v2090, %v2253
      %v2255 = vpop.f32.mrb[0].mxu0
      %2256 = vmatprep.mubr.bf16.mxu0 0
      %2257 = vmatmul.mubr.bf16.gmra.mrb[0].mxu0 %v814
      %v2258 = vpop.f32.mrb[0].mxu0
      %v2259 = vadd.f32 %v2095, %v2258
      %v2260 = vpop.f32.mrb[0].mxu0
      %v2261 = vpop.f32.mrb[0].mxu0
      %v2262 = vadd.f32 %v2098, %v2261
      %v2263 = vpop.f32.mrb[0].mxu0
      %2264 = vdwg.mxu0
      %s2265 = scalar_lea.vmem [#allocation2], 24
      %v2266 = vld [vmem:[%s2265 + $0x2] sm:$0xff]
      %v2267 = vld [vmem:[%s2265 + $0xa] sm:$0xff]
      %v2268 = vld [vmem:[%s2265 + $0x1a] sm:$0xff]
      %v2269 = vld [vmem:[%s2265 + $0x22] sm:$0xff]
      %v2270 = vld [vmem:[%s2265 + $0x32] sm:$0xff]
      %v2271 = vld [vmem:[%s2265 + $0x3a] sm:$0xff]
      %v2272 = vld [vmem:[%s2265 + $0x4a] sm:$0xff]
      %v2273 = vld [vmem:[%s2265 + $0x52] sm:$0xff]
      %v2274 = vld [vmem:[%s2265 + $0x62] sm:$0xff]
      %v2275 = vld [vmem:[%s2265 + $0x6a] sm:$0xff]
      %v2276 = vld [vmem:[%s2265 + $0x7a] sm:$0xff]
      %v2277 = vld [vmem:[%s2265 + $0x82] sm:$0xff]
      %v2278 = vld [vmem:[%s2265 + $0x92] sm:$0xff]
      %v2279 = vld [vmem:[%s2265 + $0x9a] sm:$0xff]
      %v2280 = vld [vmem:[%s2265 + $0xaa] sm:$0xff]
      %v2281 = vld [vmem:[%s2265 + $0xb2] sm:$0xff]
      %v2282 = vld [vmem:[%s2265 + $0xc2] sm:$0xff]
      %v2283 = vld [vmem:[%s2265 + $0xca] sm:$0xff]
      %v2284 = vld [vmem:[%s2265 + $0xda] sm:$0xff]
      %v2285 = vld [vmem:[%s2265 + $0xe2] sm:$0xff]
      %v2286 = vld [vmem:[%s2265 + $0xf2] sm:$0xff]
      %v2287 = vld [vmem:[%s2265 + $0xfa] sm:$0xff]
      %v2288 = vld [vmem:[%s2265 + $0x10a] sm:$0xff]
      %v2289 = vld [vmem:[%s2265 + $0x112] sm:$0xff]
      %v2290 = vld [vmem:[%s2265 + $0x122] sm:$0xff]
      %v2291 = vld [vmem:[%s2265 + $0x12a] sm:$0xff]
      %v2292 = vld [vmem:[%s2265 + $0x13a] sm:$0xff]
      %v2293 = vld [vmem:[%s2265 + $0x142] sm:$0xff]
      %v2294 = vld [vmem:[%s2265 + $0x152] sm:$0xff]
      %v2295 = vld [vmem:[%s2265 + $0x15a] sm:$0xff]
      %v2296 = vld [vmem:[%s2265 + $0x16a] sm:$0xff]
      %v2297 = vld [vmem:[%s2265 + $0x172] sm:$0xff]
      %v2298 = vadd.f32 %v2266, %v2139
      %v2299 = vadd.f32 %v2267, %v2142
      %v2300 = vadd.f32 %v2268, %v2147
      %v2301 = vadd.f32 %v2269, %v2150
      %v2302 = vadd.f32 %v2270, %v2155
      %v2303 = vadd.f32 %v2271, %v2158
      %v2304 = vadd.f32 %v2272, %v2163
      %v2305 = vadd.f32 %v2273, %v2166
      %v2306 = vadd.f32 %v2274, %v2171
      %v2307 = vadd.f32 %v2275, %v2174
      %v2308 = vadd.f32 %v2276, %v2179
      %v2309 = vadd.f32 %v2277, %v2182
      %v2310 = vadd.f32 %v2278, %v2187
      %v2311 = vadd.f32 %v2279, %v2190
      %v2312 = vadd.f32 %v2280, %v2195
      %v2313 = vadd.f32 %v2281, %v2198
      %v2314 = vadd.f32 %v2282, %v2203
      %v2315 = vadd.f32 %v2283, %v2206
      %v2316 = vadd.f32 %v2284, %v2211
      %v2317 = vadd.f32 %v2285, %v2214
      %v2318 = vadd.f32 %v2286, %v2219
      %v2319 = vadd.f32 %v2287, %v2222
      %v2320 = vadd.f32 %v2288, %v2227
      %v2321 = vadd.f32 %v2289, %v2230
      %v2322 = vadd.f32 %v2290, %v2235
      %v2323 = vadd.f32 %v2291, %v2238
      %v2324 = vadd.f32 %v2292, %v2243
      %v2325 = vadd.f32 %v2293, %v2246
      %v2326 = vadd.f32 %v2294, %v2251
      %v2327 = vadd.f32 %v2295, %v2254
      %v2328 = vadd.f32 %v2296, %v2259
      %v2329 = vadd.f32 %v2297, %v2262
      %2330 = vst.msk [vmem:[%s2265 + $0x2] sm:$0xff] %vm273, %v2298
      %2331 = vst.msk [vmem:[%s2265 + $0xa] sm:$0xff] %vm273, %v2299
      %2332 = vst.msk [vmem:[%s2265 + $0x1a] sm:$0xff] %vm273, %v2300
      %2333 = vst.msk [vmem:[%s2265 + $0x22] sm:$0xff] %vm273, %v2301
      %2334 = vst.msk [vmem:[%s2265 + $0x32] sm:$0xff] %vm273, %v2302
      %2335 = vst.msk [vmem:[%s2265 + $0x3a] sm:$0xff] %vm273, %v2303
      %2336 = vst.msk [vmem:[%s2265 + $0x4a] sm:$0xff] %vm273, %v2304
      %2337 = vst.msk [vmem:[%s2265 + $0x52] sm:$0xff] %vm273, %v2305
      %2338 = vst.msk [vmem:[%s2265 + $0x62] sm:$0xff] %vm273, %v2306
      %2339 = vst.msk [vmem:[%s2265 + $0x6a] sm:$0xff] %vm273, %v2307
      %2340 = vst.msk [vmem:[%s2265 + $0x7a] sm:$0xff] %vm273, %v2308
      %2341 = vst.msk [vmem:[%s2265 + $0x82] sm:$0xff] %vm273, %v2309
      %2342 = vst.msk [vmem:[%s2265 + $0x92] sm:$0xff] %vm273, %v2310
      %2343 = vst.msk [vmem:[%s2265 + $0x9a] sm:$0xff] %vm273, %v2311
      %2344 = vst.msk [vmem:[%s2265 + $0xaa] sm:$0xff] %vm273, %v2312
      %2345 = vst.msk [vmem:[%s2265 + $0xb2] sm:$0xff] %vm273, %v2313
      %2346 = vst.msk [vmem:[%s2265 + $0xc2] sm:$0xff] %vm273, %v2314
      %2347 = vst.msk [vmem:[%s2265 + $0xca] sm:$0xff] %vm273, %v2315
      %2348 = vst.msk [vmem:[%s2265 + $0xda] sm:$0xff] %vm273, %v2316
      %2349 = vst.msk [vmem:[%s2265 + $0xe2] sm:$0xff] %vm273, %v2317
      %2350 = vst.msk [vmem:[%s2265 + $0xf2] sm:$0xff] %vm273, %v2318
      %2351 = vst.msk [vmem:[%s2265 + $0xfa] sm:$0xff] %vm273, %v2319
      %2352 = vst.msk [vmem:[%s2265 + $0x10a] sm:$0xff] %vm273, %v2320
      %2353 = vst.msk [vmem:[%s2265 + $0x112] sm:$0xff] %vm273, %v2321
      %2354 = vst.msk [vmem:[%s2265 + $0x122] sm:$0xff] %vm273, %v2322
      %2355 = vst.msk [vmem:[%s2265 + $0x12a] sm:$0xff] %vm273, %v2323
      %2356 = vst.msk [vmem:[%s2265 + $0x13a] sm:$0xff] %vm273, %v2324
      %2357 = vst.msk [vmem:[%s2265 + $0x142] sm:$0xff] %vm273, %v2325
      %2358 = vst.msk [vmem:[%s2265 + $0x152] sm:$0xff] %vm273, %v2326
      %2359 = vst.msk [vmem:[%s2265 + $0x15a] sm:$0xff] %vm273, %v2327
      %2360 = vst.msk [vmem:[%s2265 + $0x16a] sm:$0xff] %vm273, %v2328
      %2361 = vst.msk [vmem:[%s2265 + $0x172] sm:$0xff] %vm273, %v2329
      %s2362 = scalar_lea.vmem %s2, 8
      %v2363 = vld [vmem:[%s2362] sm:$0x3]
      %s2364 = scalar_lea.vmem %s3, 8
      %v2365 = vld [vmem:[%s2364] sm:$0x3]
      %v2367 = vsel %vm523, %v2365, 0
      %2369 = vmatprep.subr.bf16.mxu0 0
      %2370 = vmatpush1.bf16.msra.mxu0 %v2367
      %2371 = vmatprep.subr.bf16.mxu0 0
      %2372 = vmatpush1.bf16.msra.mxu0 0
      %2373 = vmatprep.subr.bf16.mxu0 0
      %2374 = vmatpush1.bf16.msra.mxu0 0
      %2375 = vmatprep.subr.bf16.mxu0 0
      %2376 = vmatpush1.bf16.msra.mxu0 0
      %2377 = vmatprep.subr.bf16.mxu0 0
      %2378 = vmatpush1.bf16.msra.mxu0 0
      %2379 = vmatprep.subr.bf16.mxu0 0
      %2380 = vmatpush1.bf16.msra.mxu0 0
      %2381 = vmatprep.subr.bf16.mxu0 0
      %2382 = vmatpush1.bf16.msra.mxu0 0
      %2383 = vmatprep.subr.bf16.mxu0 0
      %2384 = vmatpush1.bf16.msra.mxu0 0
      %2385 = vmatprep.subr.bf16.mxu0 0
      %2386 = vmatpush1.bf16.msra.mxu0 0
      %2387 = vmatprep.subr.bf16.mxu0 0
      %2388 = vmatpush1.bf16.msra.mxu0 0
      %2389 = vmatprep.subr.bf16.mxu0 0
      %2390 = vmatpush1.bf16.msra.mxu0 0
      %2391 = vmatprep.subr.bf16.mxu0 0
      %2392 = vmatpush1.bf16.msra.mxu0 0
      %2393 = vmatprep.subr.bf16.mxu0 0
      %2394 = vmatpush1.bf16.msra.mxu0 0
      %2395 = vmatprep.subr.bf16.mxu0 0
      %2396 = vmatpush1.bf16.msra.mxu0 0
      %2397 = vmatprep.subr.bf16.mxu0 0
      %2398 = vmatpush1.bf16.msra.mxu0 0
      %2399 = vmatprep.subr.bf16.mxu0 0
      %2400 = vmatpush1.bf16.msra.mxu0 0
      %2401 = vmatprep.mubr.bf16.mxu0 0
      %2402 = vmatmul.mubr.bf16.gmra.mrb[0].mxu0 %v476
      %v2403 = vpop.f32.mrb[0].mxu0
      %v2404 = vadd.f32 0.0, %v2403
      %v2405 = vpop.f32.mrb[0].mxu0
      %v2406 = vpop.f32.mrb[0].mxu0
      %v2407 = vadd.f32 0.0, %v2406
      %v2408 = vpop.f32.mrb[0].mxu0
      %2409 = vmatprep.mubr.bf16.mxu0 0
      %2410 = vmatmul.mubr.bf16.gmra.mrb[0].mxu0 %v479
      %v2411 = vpop.f32.mrb[0].mxu0
      %v2412 = vadd.f32 0.0, %v2411
      %v2413 = vpop.f32.mrb[0].mxu0
      %v2414 = vpop.f32.mrb[0].mxu0
      %v2415 = vadd.f32 0.0, %v2414
      %v2416 = vpop.f32.mrb[0].mxu0
      %2417 = vmatprep.mubr.bf16.mxu0 0
      %2418 = vmatmul.mubr.bf16.gmra.mrb[0].mxu0 %v482
      %v2419 = vpop.f32.mrb[0].mxu0
      %v2420 = vadd.f32 0.0, %v2419
      %v2421 = vpop.f32.mrb[0].mxu0
      %v2422 = vpop.f32.mrb[0].mxu0
      %v2423 = vadd.f32 0.0, %v2422
      %v2424 = vpop.f32.mrb[0].mxu0
      %2425 = vmatprep.mubr.bf16.mxu0 0
      %2426 = vmatmul.mubr.bf16.gmra.mrb[0].mxu0 %v485
      %v2427 = vpop.f32.mrb[0].mxu0
      %v2428 = vadd.f32 0.0, %v2427
      %v2429 = vpop.f32.mrb[0].mxu0
      %v2430 = vpop.f32.mrb[0].mxu0
      %v2431 = vadd.f32 0.0, %v2430
      %v2432 = vpop.f32.mrb[0].mxu0
      %2433 = vmatprep.mubr.bf16.mxu0 0
      %2434 = vmatmul.mubr.bf16.gmra.mrb[0].mxu0 %v488
      %v2435 = vpop.f32.mrb[0].mxu0
      %v2436 = vadd.f32 0.0, %v2435
      %v2437 = vpop.f32.mrb[0].mxu0
      %v2438 = vpop.f32.mrb[0].mxu0
      %v2439 = vadd.f32 0.0, %v2438
      %v2440 = vpop.f32.mrb[0].mxu0
      %2441 = vmatprep.mubr.bf16.mxu0 0
      %2442 = vmatmul.mubr.bf16.gmra.mrb[0].mxu0 %v491
      %v2443 = vpop.f32.mrb[0].mxu0
      %v2444 = vadd.f32 0.0, %v2443
      %v2445 = vpop.f32.mrb[0].mxu0
      %v2446 = vpop.f32.mrb[0].mxu0
      %v2447 = vadd.f32 0.0, %v2446
      %v2448 = vpop.f32.mrb[0].mxu0
      %2449 = vmatprep.mubr.bf16.mxu0 0
      %2450 = vmatmul.mubr.bf16.gmra.mrb[0].mxu0 %v494
      %v2451 = vpop.f32.mrb[0].mxu0
      %v2452 = vadd.f32 0.0, %v2451
      %v2453 = vpop.f32.mrb[0].mxu0
      %v2454 = vpop.f32.mrb[0].mxu0
      %v2455 = vadd.f32 0.0, %v2454
      %v2456 = vpop.f32.mrb[0].mxu0
      %2457 = vmatprep.mubr.bf16.mxu0 0
      %2458 = vmatmul.mubr.bf16.gmra.mrb[0].mxu0 %v497
      %v2459 = vpop.f32.mrb[0].mxu0
      %v2460 = vadd.f32 0.0, %v2459
      %v2461 = vpop.f32.mrb[0].mxu0
      %v2462 = vpop.f32.mrb[0].mxu0
      %v2463 = vadd.f32 0.0, %v2462
      %v2464 = vpop.f32.mrb[0].mxu0
      %2465 = vmatprep.mubr.bf16.mxu0 0
      %2466 = vmatmul.mubr.bf16.gmra.mrb[0].mxu0 %v500
      %v2467 = vpop.f32.mrb[0].mxu0
      %v2468 = vadd.f32 0.0, %v2467
      %v2469 = vpop.f32.mrb[0].mxu0
      %v2470 = vpop.f32.mrb[0].mxu0
      %v2471 = vadd.f32 0.0, %v2470
      %v2472 = vpop.f32.mrb[0].mxu0
      %2473 = vmatprep.mubr.bf16.mxu0 0
      %2474 = vmatmul.mubr.bf16.gmra.mrb[0].mxu0 %v503
      %v2475 = vpop.f32.mrb[0].mxu0
      %v2476 = vadd.f32 0.0, %v2475
      %v2477 = vpop.f32.mrb[0].mxu0
      %v2478 = vpop.f32.mrb[0].mxu0
      %v2479 = vadd.f32 0.0, %v2478
      %v2480 = vpop.f32.mrb[0].mxu0
      %2481 = vmatprep.mubr.bf16.mxu0 0
      %2482 = vmatmul.mubr.bf16.gmra.mrb[0].mxu0 %v506
      %v2483 = vpop.f32.mrb[0].mxu0
      %v2484 = vadd.f32 0.0, %v2483
      %v2485 = vpop.f32.mrb[0].mxu0
      %v2486 = vpop.f32.mrb[0].mxu0
      %v2487 = vadd.f32 0.0, %v2486
      %v2488 = vpop.f32.mrb[0].mxu0
      %2489 = vmatprep.mubr.bf16.mxu0 0
      %2490 = vmatmul.mubr.bf16.gmra.mrb[0].mxu0 %v509
      %v2491 = vpop.f32.mrb[0].mxu0
      %v2492 = vadd.f32 0.0, %v2491
      %v2493 = vpop.f32.mrb[0].mxu0
      %v2494 = vpop.f32.mrb[0].mxu0
      %v2495 = vadd.f32 0.0, %v2494
      %v2496 = vpop.f32.mrb[0].mxu0
      %2497 = vmatprep.mubr.bf16.mxu0 0
      %2498 = vmatmul.mubr.bf16.gmra.mrb[0].mxu0 %v512
      %v2499 = vpop.f32.mrb[0].mxu0
      %v2500 = vadd.f32 0.0, %v2499
      %v2501 = vpop.f32.mrb[0].mxu0
      %v2502 = vpop.f32.mrb[0].mxu0
      %v2503 = vadd.f32 0.0, %v2502
      %v2504 = vpop.f32.mrb[0].mxu0
      %2505 = vmatprep.mubr.bf16.mxu0 0
      %2506 = vmatmul.mubr.bf16.gmra.mrb[0].mxu0 %v515
      %v2507 = vpop.f32.mrb[0].mxu0
      %v2508 = vadd.f32 0.0, %v2507
      %v2509 = vpop.f32.mrb[0].mxu0
      %v2510 = vpop.f32.mrb[0].mxu0
      %v2511 = vadd.f32 0.0, %v2510
      %v2512 = vpop.f32.mrb[0].mxu0
      %2513 = vmatprep.mubr.bf16.mxu0 0
      %2514 = vmatmul.mubr.bf16.gmra.mrb[0].mxu0 %v518
      %v2515 = vpop.f32.mrb[0].mxu0
      %v2516 = vadd.f32 0.0, %v2515
      %v2517 = vpop.f32.mrb[0].mxu0
      %v2518 = vpop.f32.mrb[0].mxu0
      %v2519 = vadd.f32 0.0, %v2518
      %v2520 = vpop.f32.mrb[0].mxu0
      %2521 = vmatprep.mubr.bf16.mxu0 0
      %2522 = vmatmul.mubr.bf16.gmra.mrb[0].mxu0 %v521
      %v2523 = vpop.f32.mrb[0].mxu0
      %v2524 = vadd.f32 0.0, %v2523
      %v2525 = vpop.f32.mrb[0].mxu0
      %v2526 = vpop.f32.mrb[0].mxu0
      %v2527 = vadd.f32 0.0, %v2526
      %v2528 = vpop.f32.mrb[0].mxu0
      %2529 = vdwg.mxu0
      %v2531 = vsel %vm523, %v2363, 0
      %2533 = vmatprep.subr.bf16.mxu0 0
      %2534 = vmatpush1.bf16.msra.mxu0 %v2531
      %2535 = vmatprep.subr.bf16.mxu0 0
      %2536 = vmatpush1.bf16.msra.mxu0 0
      %2537 = vmatprep.subr.bf16.mxu0 0
      %2538 = vmatpush1.bf16.msra.mxu0 0
      %2539 = vmatprep.subr.bf16.mxu0 0
      %2540 = vmatpush1.bf16.msra.mxu0 0
      %2541 = vmatprep.subr.bf16.mxu0 0
      %2542 = vmatpush1.bf16.msra.mxu0 0
      %2543 = vmatprep.subr.bf16.mxu0 0
      %2544 = vmatpush1.bf16.msra.mxu0 0
      %2545 = vmatprep.subr.bf16.mxu0 0
      %2546 = vmatpush1.bf16.msra.mxu0 0
      %2547 = vmatprep.subr.bf16.mxu0 0
      %2548 = vmatpush1.bf16.msra.mxu0 0
      %2549 = vmatprep.subr.bf16.mxu0 0
      %2550 = vmatpush1.bf16.msra.mxu0 0
      %2551 = vmatprep.subr.bf16.mxu0 0
      %2552 = vmatpush1.bf16.msra.mxu0 0
      %2553 = vmatprep.subr.bf16.mxu0 0
      %2554 = vmatpush1.bf16.msra.mxu0 0
      %2555 = vmatprep.subr.bf16.mxu0 0
      %2556 = vmatpush1.bf16.msra.mxu0 0
      %2557 = vmatprep.subr.bf16.mxu0 0
      %2558 = vmatpush1.bf16.msra.mxu0 0
      %2559 = vmatprep.subr.bf16.mxu0 0
      %2560 = vmatpush1.bf16.msra.mxu0 0
      %2561 = vmatprep.subr.bf16.mxu0 0
      %2562 = vmatpush1.bf16.msra.mxu0 0
      %2563 = vmatprep.subr.bf16.mxu0 0
      %2564 = vmatpush1.bf16.msra.mxu0 0
      %2565 = vmatprep.mubr.bf16.mxu0 0
      %2566 = vmatmul.mubr.bf16.gmra.mrb[0].mxu0 %v769
      %v2567 = vpop.f32.mrb[0].mxu0
      %v2568 = vadd.f32 %v2404, %v2567
      %v2569 = vpop.f32.mrb[0].mxu0
      %v2570 = vpop.f32.mrb[0].mxu0
      %v2571 = vadd.f32 %v2407, %v2570
      %v2572 = vpop.f32.mrb[0].mxu0
      %2573 = vmatprep.mubr.bf16.mxu0 0
      %2574 = vmatmul.mubr.bf16.gmra.mrb[0].mxu0 %v772
      %v2575 = vpop.f32.mrb[0].mxu0
      %v2576 = vadd.f32 %v2412, %v2575
      %v2577 = vpop.f32.mrb[0].mxu0
      %v2578 = vpop.f32.mrb[0].mxu0
      %v2579 = vadd.f32 %v2415, %v2578
      %v2580 = vpop.f32.mrb[0].mxu0
      %2581 = vmatprep.mubr.bf16.mxu0 0
      %2582 = vmatmul.mubr.bf16.gmra.mrb[0].mxu0 %v775
      %v2583 = vpop.f32.mrb[0].mxu0
      %v2584 = vadd.f32 %v2420, %v2583
      %v2585 = vpop.f32.mrb[0].mxu0
      %v2586 = vpop.f32.mrb[0].mxu0
      %v2587 = vadd.f32 %v2423, %v2586
      %v2588 = vpop.f32.mrb[0].mxu0
      %2589 = vmatprep.mubr.bf16.mxu0 0
      %2590 = vmatmul.mubr.bf16.gmra.mrb[0].mxu0 %v778
      %v2591 = vpop.f32.mrb[0].mxu0
      %v2592 = vadd.f32 %v2428, %v2591
      %v2593 = vpop.f32.mrb[0].mxu0
      %v2594 = vpop.f32.mrb[0].mxu0
      %v2595 = vadd.f32 %v2431, %v2594
      %v2596 = vpop.f32.mrb[0].mxu0
      %2597 = vmatprep.mubr.bf16.mxu0 0
      %2598 = vmatmul.mubr.bf16.gmra.mrb[0].mxu0 %v781
      %v2599 = vpop.f32.mrb[0].mxu0
      %v2600 = vadd.f32 %v2436, %v2599
      %v2601 = vpop.f32.mrb[0].mxu0
      %v2602 = vpop.f32.mrb[0].mxu0
      %v2603 = vadd.f32 %v2439, %v2602
      %v2604 = vpop.f32.mrb[0].mxu0
      %2605 = vmatprep.mubr.bf16.mxu0 0
      %2606 = vmatmul.mubr.bf16.gmra.mrb[0].mxu0 %v784
      %v2607 = vpop.f32.mrb[0].mxu0
      %v2608 = vadd.f32 %v2444, %v2607
      %v2609 = vpop.f32.mrb[0].mxu0
      %v2610 = vpop.f32.mrb[0].mxu0
      %v2611 = vadd.f32 %v2447, %v2610
      %v2612 = vpop.f32.mrb[0].mxu0
      %2613 = vmatprep.mubr.bf16.mxu0 0
      %2614 = vmatmul.mubr.bf16.gmra.mrb[0].mxu0 %v787
      %v2615 = vpop.f32.mrb[0].mxu0
      %v2616 = vadd.f32 %v2452, %v2615
      %v2617 = vpop.f32.mrb[0].mxu0
      %v2618 = vpop.f32.mrb[0].mxu0
      %v2619 = vadd.f32 %v2455, %v2618
      %v2620 = vpop.f32.mrb[0].mxu0
      %2621 = vmatprep.mubr.bf16.mxu0 0
      %2622 = vmatmul.mubr.bf16.gmra.mrb[0].mxu0 %v790
      %v2623 = vpop.f32.mrb[0].mxu0
      %v2624 = vadd.f32 %v2460, %v2623
      %v2625 = vpop.f32.mrb[0].mxu0
      %v2626 = vpop.f32.mrb[0].mxu0
      %v2627 = vadd.f32 %v2463, %v2626
      %v2628 = vpop.f32.mrb[0].mxu0
      %2629 = vmatprep.mubr.bf16.mxu0 0
      %2630 = vmatmul.mubr.bf16.gmra.mrb[0].mxu0 %v793
      %v2631 = vpop.f32.mrb[0].mxu0
      %v2632 = vadd.f32 %v2468, %v2631
      %v2633 = vpop.f32.mrb[0].mxu0
      %v2634 = vpop.f32.mrb[0].mxu0
      %v2635 = vadd.f32 %v2471, %v2634
      %v2636 = vpop.f32.mrb[0].mxu0
      %2637 = vmatprep.mubr.bf16.mxu0 0
      %2638 = vmatmul.mubr.bf16.gmra.mrb[0].mxu0 %v796
      %v2639 = vpop.f32.mrb[0].mxu0
      %v2640 = vadd.f32 %v2476, %v2639
      %v2641 = vpop.f32.mrb[0].mxu0
      %v2642 = vpop.f32.mrb[0].mxu0
      %v2643 = vadd.f32 %v2479, %v2642
      %v2644 = vpop.f32.mrb[0].mxu0
      %2645 = vmatprep.mubr.bf16.mxu0 0
      %2646 = vmatmul.mubr.bf16.gmra.mrb[0].mxu0 %v799
      %v2647 = vpop.f32.mrb[0].mxu0
      %v2648 = vadd.f32 %v2484, %v2647
      %v2649 = vpop.f32.mrb[0].mxu0
      %v2650 = vpop.f32.mrb[0].mxu0
      %v2651 = vadd.f32 %v2487, %v2650
      %v2652 = vpop.f32.mrb[0].mxu0
      %2653 = vmatprep.mubr.bf16.mxu0 0
      %2654 = vmatmul.mubr.bf16.gmra.mrb[0].mxu0 %v802
      %v2655 = vpop.f32.mrb[0].mxu0
      %v2656 = vadd.f32 %v2492, %v2655
      %v2657 = vpop.f32.mrb[0].mxu0
      %v2658 = vpop.f32.mrb[0].mxu0
      %v2659 = vadd.f32 %v2495, %v2658
      %v2660 = vpop.f32.mrb[0].mxu0
      %2661 = vmatprep.mubr.bf16.mxu0 0
      %2662 = vmatmul.mubr.bf16.gmra.mrb[0].mxu0 %v805
      %v2663 = vpop.f32.mrb[0].mxu0
      %v2664 = vadd.f32 %v2500, %v2663
      %v2665 = vpop.f32.mrb[0].mxu0
      %v2666 = vpop.f32.mrb[0].mxu0
      %v2667 = vadd.f32 %v2503, %v2666
      %v2668 = vpop.f32.mrb[0].mxu0
      %2669 = vmatprep.mubr.bf16.mxu0 0
      %2670 = vmatmul.mubr.bf16.gmra.mrb[0].mxu0 %v808
      %v2671 = vpop.f32.mrb[0].mxu0
      %v2672 = vadd.f32 %v2508, %v2671
      %v2673 = vpop.f32.mrb[0].mxu0
      %v2674 = vpop.f32.mrb[0].mxu0
      %v2675 = vadd.f32 %v2511, %v2674
      %v2676 = vpop.f32.mrb[0].mxu0
      %2677 = vmatprep.mubr.bf16.mxu0 0
      %2678 = vmatmul.mubr.bf16.gmra.mrb[0].mxu0 %v811
      %v2679 = vpop.f32.mrb[0].mxu0
      %v2680 = vadd.f32 %v2516, %v2679
      %v2681 = vpop.f32.mrb[0].mxu0
      %v2682 = vpop.f32.mrb[0].mxu0
      %v2683 = vadd.f32 %v2519, %v2682
      %v2684 = vpop.f32.mrb[0].mxu0
      %2685 = vmatprep.mubr.bf16.mxu0 0
      %2686 = vmatmul.mubr.bf16.gmra.mrb[0].mxu0 %v814
      %v2687 = vpop.f32.mrb[0].mxu0
      %v2688 = vadd.f32 %v2524, %v2687
      %v2689 = vpop.f32.mrb[0].mxu0
      %v2690 = vpop.f32.mrb[0].mxu0
      %v2691 = vadd.f32 %v2527, %v2690
      %v2692 = vpop.f32.mrb[0].mxu0
      %2693 = vdwg.mxu0
      %v2694 = vld [vmem:[%s2265 + $0x1] sm:$0xff]
      %v2695 = vld [vmem:[%s2265 + $0x9] sm:$0xff]
      %v2696 = vld [vmem:[%s2265 + $0x19] sm:$0xff]
      %v2697 = vld [vmem:[%s2265 + $0x21] sm:$0xff]
      %v2698 = vld [vmem:[%s2265 + $0x31] sm:$0xff]
      %v2699 = vld [vmem:[%s2265 + $0x39] sm:$0xff]
      %v2700 = vld [vmem:[%s2265 + $0x49] sm:$0xff]
      %v2701 = vld [vmem:[%s2265 + $0x51] sm:$0xff]
      %v2702 = vld [vmem:[%s2265 + $0x61] sm:$0xff]
      %v2703 = vld [vmem:[%s2265 + $0x69] sm:$0xff]
      %v2704 = vld [vmem:[%s2265 + $0x79] sm:$0xff]
      %v2705 = vld [vmem:[%s2265 + $0x81] sm:$0xff]
      %v2706 = vld [vmem:[%s2265 + $0x91] sm:$0xff]
      %v2707 = vld [vmem:[%s2265 + $0x99] sm:$0xff]
      %v2708 = vld [vmem:[%s2265 + $0xa9] sm:$0xff]
      %v2709 = vld [vmem:[%s2265 + $0xb1] sm:$0xff]
      %v2710 = vld [vmem:[%s2265 + $0xc1] sm:$0xff]
      %v2711 = vld [vmem:[%s2265 + $0xc9] sm:$0xff]
      %v2712 = vld [vmem:[%s2265 + $0xd9] sm:$0xff]
      %v2713 = vld [vmem:[%s2265 + $0xe1] sm:$0xff]
      %v2714 = vld [vmem:[%s2265 + $0xf1] sm:$0xff]
      %v2715 = vld [vmem:[%s2265 + $0xf9] sm:$0xff]
      %v2716 = vld [vmem:[%s2265 + $0x109] sm:$0xff]
      %v2717 = vld [vmem:[%s2265 + $0x111] sm:$0xff]
      %v2718 = vld [vmem:[%s2265 + $0x121] sm:$0xff]
      %v2719 = vld [vmem:[%s2265 + $0x129] sm:$0xff]
      %v2720 = vld [vmem:[%s2265 + $0x139] sm:$0xff]
      %v2721 = vld [vmem:[%s2265 + $0x141] sm:$0xff]
      %v2722 = vld [vmem:[%s2265 + $0x151] sm:$0xff]
      %v2723 = vld [vmem:[%s2265 + $0x159] sm:$0xff]
      %v2724 = vld [vmem:[%s2265 + $0x169] sm:$0xff]
      %v2725 = vld [vmem:[%s2265 + $0x171] sm:$0xff]
      %v2726 = vadd.f32 %v2694, %v2568
      %v2727 = vadd.f32 %v2695, %v2571
      %v2728 = vadd.f32 %v2696, %v2576
      %v2729 = vadd.f32 %v2697, %v2579
      %v2730 = vadd.f32 %v2698, %v2584
      %v2731 = vadd.f32 %v2699, %v2587
      %v2732 = vadd.f32 %v2700, %v2592
      %v2733 = vadd.f32 %v2701, %v2595
      %v2734 = vadd.f32 %v2702, %v2600
      %v2735 = vadd.f32 %v2703, %v2603
      %v2736 = vadd.f32 %v2704, %v2608
      %v2737 = vadd.f32 %v2705, %v2611
      %v2738 = vadd.f32 %v2706, %v2616
      %v2739 = vadd.f32 %v2707, %v2619
      %v2740 = vadd.f32 %v2708, %v2624
      %v2741 = vadd.f32 %v2709, %v2627
      %v2742 = vadd.f32 %v2710, %v2632
      %v2743 = vadd.f32 %v2711, %v2635
      %v2744 = vadd.f32 %v2712, %v2640
      %v2745 = vadd.f32 %v2713, %v2643
      %v2746 = vadd.f32 %v2714, %v2648
      %v2747 = vadd.f32 %v2715, %v2651
      %v2748 = vadd.f32 %v2716, %v2656
      %v2749 = vadd.f32 %v2717, %v2659
      %v2750 = vadd.f32 %v2718, %v2664
      %v2751 = vadd.f32 %v2719, %v2667
      %v2752 = vadd.f32 %v2720, %v2672
      %v2753 = vadd.f32 %v2721, %v2675
      %v2754 = vadd.f32 %v2722, %v2680
      %v2755 = vadd.f32 %v2723, %v2683
      %v2756 = vadd.f32 %v2724, %v2688
      %v2757 = vadd.f32 %v2725, %v2691
      %2758 = vst.msk [vmem:[%s2265 + $0x1] sm:$0xff] %vm273, %v2726
      %2759 = vst.msk [vmem:[%s2265 + $0x9] sm:$0xff] %vm273, %v2727
      %2760 = vst.msk [vmem:[%s2265 + $0x19] sm:$0xff] %vm273, %v2728
      %2761 = vst.msk [vmem:[%s2265 + $0x21] sm:$0xff] %vm273, %v2729
      %2762 = vst.msk [vmem:[%s2265 + $0x31] sm:$0xff] %vm273, %v2730
      %2763 = vst.msk [vmem:[%s2265 + $0x39] sm:$0xff] %vm273, %v2731
      %2764 = vst.msk [vmem:[%s2265 + $0x49] sm:$0xff] %vm273, %v2732
      %2765 = vst.msk [vmem:[%s2265 + $0x51] sm:$0xff] %vm273, %v2733
      %2766 = vst.msk [vmem:[%s2265 + $0x61] sm:$0xff] %vm273, %v2734
      %2767 = vst.msk [vmem:[%s2265 + $0x69] sm:$0xff] %vm273, %v2735
      %2768 = vst.msk [vmem:[%s2265 + $0x79] sm:$0xff] %vm273, %v2736
      %2769 = vst.msk [vmem:[%s2265 + $0x81] sm:$0xff] %vm273, %v2737
      %2770 = vst.msk [vmem:[%s2265 + $0x91] sm:$0xff] %vm273, %v2738
      %2771 = vst.msk [vmem:[%s2265 + $0x99] sm:$0xff] %vm273, %v2739
      %2772 = vst.msk [vmem:[%s2265 + $0xa9] sm:$0xff] %vm273, %v2740
      %2773 = vst.msk [vmem:[%s2265 + $0xb1] sm:$0xff] %vm273, %v2741
      %2774 = vst.msk [vmem:[%s2265 + $0xc1] sm:$0xff] %vm273, %v2742
      %2775 = vst.msk [vmem:[%s2265 + $0xc9] sm:$0xff] %vm273, %v2743
      %2776 = vst.msk [vmem:[%s2265 + $0xd9] sm:$0xff] %vm273, %v2744
      %2777 = vst.msk [vmem:[%s2265 + $0xe1] sm:$0xff] %vm273, %v2745
      %2778 = vst.msk [vmem:[%s2265 + $0xf1] sm:$0xff] %vm273, %v2746
      %2779 = vst.msk [vmem:[%s2265 + $0xf9] sm:$0xff] %vm273, %v2747
      %2780 = vst.msk [vmem:[%s2265 + $0x109] sm:$0xff] %vm273, %v2748
      %2781 = vst.msk [vmem:[%s2265 + $0x111] sm:$0xff] %vm273, %v2749
      %2782 = vst.msk [vmem:[%s2265 + $0x121] sm:$0xff] %vm273, %v2750
      %2783 = vst.msk [vmem:[%s2265 + $0x129] sm:$0xff] %vm273, %v2751
      %2784 = vst.msk [vmem:[%s2265 + $0x139] sm:$0xff] %vm273, %v2752
      %2785 = vst.msk [vmem:[%s2265 + $0x141] sm:$0xff] %vm273, %v2753
      %2786 = vst.msk [vmem:[%s2265 + $0x151] sm:$0xff] %vm273, %v2754
      %2787 = vst.msk [vmem:[%s2265 + $0x159] sm:$0xff] %vm273, %v2755
      %2788 = vst.msk [vmem:[%s2265 + $0x169] sm:$0xff] %vm273, %v2756
      %2789 = vst.msk [vmem:[%s2265 + $0x171] sm:$0xff] %vm273, %v2757
      %s2790 = scalar_lea.vmem %s2, 10
      %v2791 = vld [vmem:[%s2790] sm:$0x3]
      %s2792 = scalar_lea.vmem %s3, 10
      %v2793 = vld [vmem:[%s2792] sm:$0x3]
      %v2795 = vsel %vm523, %v2793, 0
      %2797 = vmatprep.subr.bf16.mxu0 0
      %2798 = vmatpush1.bf16.msra.mxu0 %v2795
      %2799 = vmatprep.subr.bf16.mxu0 0
      %2800 = vmatpush1.bf16.msra.mxu0 0
      %2801 = vmatprep.subr.bf16.mxu0 0
      %2802 = vmatpush1.bf16.msra.mxu0 0
      %2803 = vmatprep.subr.bf16.mxu0 0
      %2804 = vmatpush1.bf16.msra.mxu0 0
      %2805 = vmatprep.subr.bf16.mxu0 0
      %2806 = vmatpush1.bf16.msra.mxu0 0
      %2807 = vmatprep.subr.bf16.mxu0 0
      %2808 = vmatpush1.bf16.msra.mxu0 0
      %2809 = vmatprep.subr.bf16.mxu0 0
      %2810 = vmatpush1.bf16.msra.mxu0 0
      %2811 = vmatprep.subr.bf16.mxu0 0
      %2812 = vmatpush1.bf16.msra.mxu0 0
      %2813 = vmatprep.subr.bf16.mxu0 0
      %2814 = vmatpush1.bf16.msra.mxu0 0
      %2815 = vmatprep.subr.bf16.mxu0 0
      %2816 = vmatpush1.bf16.msra.mxu0 0
      %2817 = vmatprep.subr.bf16.mxu0 0
      %2818 = vmatpush1.bf16.msra.mxu0 0
      %2819 = vmatprep.subr.bf16.mxu0 0
      %2820 = vmatpush1.bf16.msra.mxu0 0
      %2821 = vmatprep.subr.bf16.mxu0 0
      %2822 = vmatpush1.bf16.msra.mxu0 0
      %2823 = vmatprep.subr.bf16.mxu0 0
      %2824 = vmatpush1.bf16.msra.mxu0 0
      %2825 = vmatprep.subr.bf16.mxu0 0
      %2826 = vmatpush1.bf16.msra.mxu0 0
      %2827 = vmatprep.subr.bf16.mxu0 0
      %2828 = vmatpush1.bf16.msra.mxu0 0
      %2829 = vmatprep.mubr.bf16.mxu0 0
      %2830 = vmatmul.mubr.bf16.gmra.mrb[0].mxu0 %v476
      %v2831 = vpop.f32.mrb[0].mxu0
      %v2832 = vadd.f32 0.0, %v2831
      %v2833 = vpop.f32.mrb[0].mxu0
      %v2834 = vpop.f32.mrb[0].mxu0
      %v2835 = vadd.f32 0.0, %v2834
      %v2836 = vpop.f32.mrb[0].mxu0
      %2837 = vmatprep.mubr.bf16.mxu0 0
      %2838 = vmatmul.mubr.bf16.gmra.mrb[0].mxu0 %v479
      %v2839 = vpop.f32.mrb[0].mxu0
      %v2840 = vadd.f32 0.0, %v2839
      %v2841 = vpop.f32.mrb[0].mxu0
      %v2842 = vpop.f32.mrb[0].mxu0
      %v2843 = vadd.f32 0.0, %v2842
      %v2844 = vpop.f32.mrb[0].mxu0
      %2845 = vmatprep.mubr.bf16.mxu0 0
      %2846 = vmatmul.mubr.bf16.gmra.mrb[0].mxu0 %v482
      %v2847 = vpop.f32.mrb[0].mxu0
      %v2848 = vadd.f32 0.0, %v2847
      %v2849 = vpop.f32.mrb[0].mxu0
      %v2850 = vpop.f32.mrb[0].mxu0
      %v2851 = vadd.f32 0.0, %v2850
      %v2852 = vpop.f32.mrb[0].mxu0
      %2853 = vmatprep.mubr.bf16.mxu0 0
      %2854 = vmatmul.mubr.bf16.gmra.mrb[0].mxu0 %v485
      %v2855 = vpop.f32.mrb[0].mxu0
      %v2856 = vadd.f32 0.0, %v2855
      %v2857 = vpop.f32.mrb[0].mxu0
      %v2858 = vpop.f32.mrb[0].mxu0
      %v2859 = vadd.f32 0.0, %v2858
      %v2860 = vpop.f32.mrb[0].mxu0
      %2861 = vmatprep.mubr.bf16.mxu0 0
      %2862 = vmatmul.mubr.bf16.gmra.mrb[0].mxu0 %v488
      %v2863 = vpop.f32.mrb[0].mxu0
      %v2864 = vadd.f32 0.0, %v2863
      %v2865 = vpop.f32.mrb[0].mxu0
      %v2866 = vpop.f32.mrb[0].mxu0
      %v2867 = vadd.f32 0.0, %v2866
      %v2868 = vpop.f32.mrb[0].mxu0
      %2869 = vmatprep.mubr.bf16.mxu0 0
      %2870 = vmatmul.mubr.bf16.gmra.mrb[0].mxu0 %v491
      %v2871 = vpop.f32.mrb[0].mxu0
      %v2872 = vadd.f32 0.0, %v2871
      %v2873 = vpop.f32.mrb[0].mxu0
      %v2874 = vpop.f32.mrb[0].mxu0
      %v2875 = vadd.f32 0.0, %v2874
      %v2876 = vpop.f32.mrb[0].mxu0
      %2877 = vmatprep.mubr.bf16.mxu0 0
      %2878 = vmatmul.mubr.bf16.gmra.mrb[0].mxu0 %v494
      %v2879 = vpop.f32.mrb[0].mxu0
      %v2880 = vadd.f32 0.0, %v2879
      %v2881 = vpop.f32.mrb[0].mxu0
      %v2882 = vpop.f32.mrb[0].mxu0
      %v2883 = vadd.f32 0.0, %v2882
      %v2884 = vpop.f32.mrb[0].mxu0
      %2885 = vmatprep.mubr.bf16.mxu0 0
      %2886 = vmatmul.mubr.bf16.gmra.mrb[0].mxu0 %v497
      %v2887 = vpop.f32.mrb[0].mxu0
      %v2888 = vadd.f32 0.0, %v2887
      %v2889 = vpop.f32.mrb[0].mxu0
      %v2890 = vpop.f32.mrb[0].mxu0
      %v2891 = vadd.f32 0.0, %v2890
      %v2892 = vpop.f32.mrb[0].mxu0
      %2893 = vmatprep.mubr.bf16.mxu0 0
      %2894 = vmatmul.mubr.bf16.gmra.mrb[0].mxu0 %v500
      %v2895 = vpop.f32.mrb[0].mxu0
      %v2896 = vadd.f32 0.0, %v2895
      %v2897 = vpop.f32.mrb[0].mxu0
      %v2898 = vpop.f32.mrb[0].mxu0
      %v2899 = vadd.f32 0.0, %v2898
      %v2900 = vpop.f32.mrb[0].mxu0
      %2901 = vmatprep.mubr.bf16.mxu0 0
      %2902 = vmatmul.mubr.bf16.gmra.mrb[0].mxu0 %v503
      %v2903 = vpop.f32.mrb[0].mxu0
      %v2904 = vadd.f32 0.0, %v2903
      %v2905 = vpop.f32.mrb[0].mxu0
      %v2906 = vpop.f32.mrb[0].mxu0
      %v2907 = vadd.f32 0.0, %v2906
      %v2908 = vpop.f32.mrb[0].mxu0
      %2909 = vmatprep.mubr.bf16.mxu0 0
      %2910 = vmatmul.mubr.bf16.gmra.mrb[0].mxu0 %v506
      %v2911 = vpop.f32.mrb[0].mxu0
      %v2912 = vadd.f32 0.0, %v2911
      %v2913 = vpop.f32.mrb[0].mxu0
      %v2914 = vpop.f32.mrb[0].mxu0
      %v2915 = vadd.f32 0.0, %v2914
      %v2916 = vpop.f32.mrb[0].mxu0
      %2917 = vmatprep.mubr.bf16.mxu0 0
      %2918 = vmatmul.mubr.bf16.gmra.mrb[0].mxu0 %v509
      %v2919 = vpop.f32.mrb[0].mxu0
      %v2920 = vadd.f32 0.0, %v2919
      %v2921 = vpop.f32.mrb[0].mxu0
      %v2922 = vpop.f32.mrb[0].mxu0
      %v2923 = vadd.f32 0.0, %v2922
      %v2924 = vpop.f32.mrb[0].mxu0
      %2925 = vmatprep.mubr.bf16.mxu0 0
      %2926 = vmatmul.mubr.bf16.gmra.mrb[0].mxu0 %v512
      %v2927 = vpop.f32.mrb[0].mxu0
      %v2928 = vadd.f32 0.0, %v2927
      %v2929 = vpop.f32.mrb[0].mxu0
      %v2930 = vpop.f32.mrb[0].mxu0
      %v2931 = vadd.f32 0.0, %v2930
      %v2932 = vpop.f32.mrb[0].mxu0
      %2933 = vmatprep.mubr.bf16.mxu0 0
      %2934 = vmatmul.mubr.bf16.gmra.mrb[0].mxu0 %v515
      %v2935 = vpop.f32.mrb[0].mxu0
      %v2936 = vadd.f32 0.0, %v2935
      %v2937 = vpop.f32.mrb[0].mxu0
      %v2938 = vpop.f32.mrb[0].mxu0
      %v2939 = vadd.f32 0.0, %v2938
      %v2940 = vpop.f32.mrb[0].mxu0
      %2941 = vmatprep.mubr.bf16.mxu0 0
      %2942 = vmatmul.mubr.bf16.gmra.mrb[0].mxu0 %v518
      %v2943 = vpop.f32.mrb[0].mxu0
      %v2944 = vadd.f32 0.0, %v2943
      %v2945 = vpop.f32.mrb[0].mxu0
      %v2946 = vpop.f32.mrb[0].mxu0
      %v2947 = vadd.f32 0.0, %v2946
      %v2948 = vpop.f32.mrb[0].mxu0
      %2949 = vmatprep.mubr.bf16.mxu0 0
      %2950 = vmatmul.mubr.bf16.gmra.mrb[0].mxu0 %v521
      %v2951 = vpop.f32.mrb[0].mxu0
      %v2952 = vadd.f32 0.0, %v2951
      %v2953 = vpop.f32.mrb[0].mxu0
      %v2954 = vpop.f32.mrb[0].mxu0
      %v2955 = vadd.f32 0.0, %v2954
      %v2956 = vpop.f32.mrb[0].mxu0
      %2957 = vdwg.mxu0
      %v2959 = vsel %vm523, %v2791, 0
      %2961 = vmatprep.subr.bf16.mxu0 0
      %2962 = vmatpush1.bf16.msra.mxu0 %v2959
      %2963 = vmatprep.subr.bf16.mxu0 0
      %2964 = vmatpush1.bf16.msra.mxu0 0
      %2965 = vmatprep.subr.bf16.mxu0 0
      %2966 = vmatpush1.bf16.msra.mxu0 0
      %2967 = vmatprep.subr.bf16.mxu0 0
      %2968 = vmatpush1.bf16.msra.mxu0 0
      %2969 = vmatprep.subr.bf16.mxu0 0
      %2970 = vmatpush1.bf16.msra.mxu0 0
      %2971 = vmatprep.subr.bf16.mxu0 0
      %2972 = vmatpush1.bf16.msra.mxu0 0
      %2973 = vmatprep.subr.bf16.mxu0 0
      %2974 = vmatpush1.bf16.msra.mxu0 0
      %2975 = vmatprep.subr.bf16.mxu0 0
      %2976 = vmatpush1.bf16.msra.mxu0 0
      %2977 = vmatprep.subr.bf16.mxu0 0
      %2978 = vmatpush1.bf16.msra.mxu0 0
      %2979 = vmatprep.subr.bf16.mxu0 0
      %2980 = vmatpush1.bf16.msra.mxu0 0
      %2981 = vmatprep.subr.bf16.mxu0 0
      %2982 = vmatpush1.bf16.msra.mxu0 0
      %2983 = vmatprep.subr.bf16.mxu0 0
      %2984 = vmatpush1.bf16.msra.mxu0 0
      %2985 = vmatprep.subr.bf16.mxu0 0
      %2986 = vmatpush1.bf16.msra.mxu0 0
      %2987 = vmatprep.subr.bf16.mxu0 0
      %2988 = vmatpush1.bf16.msra.mxu0 0
      %2989 = vmatprep.subr.bf16.mxu0 0
      %2990 = vmatpush1.bf16.msra.mxu0 0
      %2991 = vmatprep.subr.bf16.mxu0 0
      %2992 = vmatpush1.bf16.msra.mxu0 0
      %2993 = vmatprep.mubr.bf16.mxu0 0
      %2994 = vmatmul.mubr.bf16.gmra.mrb[0].mxu0 %v769
      %v2995 = vpop.f32.mrb[0].mxu0
      %v2996 = vadd.f32 %v2832, %v2995
      %v2997 = vpop.f32.mrb[0].mxu0
      %v2998 = vpop.f32.mrb[0].mxu0
      %v2999 = vadd.f32 %v2835, %v2998
      %v3000 = vpop.f32.mrb[0].mxu0
      %3001 = vmatprep.mubr.bf16.mxu0 0
      %3002 = vmatmul.mubr.bf16.gmra.mrb[0].mxu0 %v772
      %v3003 = vpop.f32.mrb[0].mxu0
      %v3004 = vadd.f32 %v2840, %v3003
      %v3005 = vpop.f32.mrb[0].mxu0
      %v3006 = vpop.f32.mrb[0].mxu0
      %v3007 = vadd.f32 %v2843, %v3006
      %v3008 = vpop.f32.mrb[0].mxu0
      %3009 = vmatprep.mubr.bf16.mxu0 0
      %3010 = vmatmul.mubr.bf16.gmra.mrb[0].mxu0 %v775
      %v3011 = vpop.f32.mrb[0].mxu0
      %v3012 = vadd.f32 %v2848, %v3011
      %v3013 = vpop.f32.mrb[0].mxu0
      %v3014 = vpop.f32.mrb[0].mxu0
      %v3015 = vadd.f32 %v2851, %v3014
      %v3016 = vpop.f32.mrb[0].mxu0
      %3017 = vmatprep.mubr.bf16.mxu0 0
      %3018 = vmatmul.mubr.bf16.gmra.mrb[0].mxu0 %v778
      %v3019 = vpop.f32.mrb[0].mxu0
      %v3020 = vadd.f32 %v2856, %v3019
      %v3021 = vpop.f32.mrb[0].mxu0
      %v3022 = vpop.f32.mrb[0].mxu0
      %v3023 = vadd.f32 %v2859, %v3022
      %v3024 = vpop.f32.mrb[0].mxu0
      %3025 = vmatprep.mubr.bf16.mxu0 0
      %3026 = vmatmul.mubr.bf16.gmra.mrb[0].mxu0 %v781
      %v3027 = vpop.f32.mrb[0].mxu0
      %v3028 = vadd.f32 %v2864, %v3027
      %v3029 = vpop.f32.mrb[0].mxu0
      %v3030 = vpop.f32.mrb[0].mxu0
      %v3031 = vadd.f32 %v2867, %v3030
      %v3032 = vpop.f32.mrb[0].mxu0
      %3033 = vmatprep.mubr.bf16.mxu0 0
      %3034 = vmatmul.mubr.bf16.gmra.mrb[0].mxu0 %v784
      %v3035 = vpop.f32.mrb[0].mxu0
      %v3036 = vadd.f32 %v2872, %v3035
      %v3037 = vpop.f32.mrb[0].mxu0
      %v3038 = vpop.f32.mrb[0].mxu0
      %v3039 = vadd.f32 %v2875, %v3038
      %v3040 = vpop.f32.mrb[0].mxu0
      %3041 = vmatprep.mubr.bf16.mxu0 0
      %3042 = vmatmul.mubr.bf16.gmra.mrb[0].mxu0 %v787
      %v3043 = vpop.f32.mrb[0].mxu0
      %v3044 = vadd.f32 %v2880, %v3043
      %v3045 = vpop.f32.mrb[0].mxu0
      %v3046 = vpop.f32.mrb[0].mxu0
      %v3047 = vadd.f32 %v2883, %v3046
      %v3048 = vpop.f32.mrb[0].mxu0
      %3049 = vmatprep.mubr.bf16.mxu0 0
      %3050 = vmatmul.mubr.bf16.gmra.mrb[0].mxu0 %v790
      %v3051 = vpop.f32.mrb[0].mxu0
      %v3052 = vadd.f32 %v2888, %v3051
      %v3053 = vpop.f32.mrb[0].mxu0
      %v3054 = vpop.f32.mrb[0].mxu0
      %v3055 = vadd.f32 %v2891, %v3054
      %v3056 = vpop.f32.mrb[0].mxu0
      %3057 = vmatprep.mubr.bf16.mxu0 0
      %3058 = vmatmul.mubr.bf16.gmra.mrb[0].mxu0 %v793
      %v3059 = vpop.f32.mrb[0].mxu0
      %v3060 = vadd.f32 %v2896, %v3059
      %v3061 = vpop.f32.mrb[0].mxu0
      %v3062 = vpop.f32.mrb[0].mxu0
      %v3063 = vadd.f32 %v2899, %v3062
      %v3064 = vpop.f32.mrb[0].mxu0
      %3065 = vmatprep.mubr.bf16.mxu0 0
      %3066 = vmatmul.mubr.bf16.gmra.mrb[0].mxu0 %v796
      %v3067 = vpop.f32.mrb[0].mxu0
      %v3068 = vadd.f32 %v2904, %v3067
      %v3069 = vpop.f32.mrb[0].mxu0
      %v3070 = vpop.f32.mrb[0].mxu0
      %v3071 = vadd.f32 %v2907, %v3070
      %v3072 = vpop.f32.mrb[0].mxu0
      %3073 = vmatprep.mubr.bf16.mxu0 0
      %3074 = vmatmul.mubr.bf16.gmra.mrb[0].mxu0 %v799
      %v3075 = vpop.f32.mrb[0].mxu0
      %v3076 = vadd.f32 %v2912, %v3075
      %v3077 = vpop.f32.mrb[0].mxu0
      %v3078 = vpop.f32.mrb[0].mxu0
      %v3079 = vadd.f32 %v2915, %v3078
      %v3080 = vpop.f32.mrb[0].mxu0
      %3081 = vmatprep.mubr.bf16.mxu0 0
      %3082 = vmatmul.mubr.bf16.gmra.mrb[0].mxu0 %v802
      %v3083 = vpop.f32.mrb[0].mxu0
      %v3084 = vadd.f32 %v2920, %v3083
      %v3085 = vpop.f32.mrb[0].mxu0
      %v3086 = vpop.f32.mrb[0].mxu0
      %v3087 = vadd.f32 %v2923, %v3086
      %v3088 = vpop.f32.mrb[0].mxu0
      %3089 = vmatprep.mubr.bf16.mxu0 0
      %3090 = vmatmul.mubr.bf16.gmra.mrb[0].mxu0 %v805
      %v3091 = vpop.f32.mrb[0].mxu0
      %v3092 = vadd.f32 %v2928, %v3091
      %v3093 = vpop.f32.mrb[0].mxu0
      %v3094 = vpop.f32.mrb[0].mxu0
      %v3095 = vadd.f32 %v2931, %v3094
      %v3096 = vpop.f32.mrb[0].mxu0
      %3097 = vmatprep.mubr.bf16.mxu0 0
      %3098 = vmatmul.mubr.bf16.gmra.mrb[0].mxu0 %v808
      %v3099 = vpop.f32.mrb[0].mxu0
      %v3100 = vadd.f32 %v2936, %v3099
      %v3101 = vpop.f32.mrb[0].mxu0
      %v3102 = vpop.f32.mrb[0].mxu0
      %v3103 = vadd.f32 %v2939, %v3102
      %v3104 = vpop.f32.mrb[0].mxu0
      %3105 = vmatprep.mubr.bf16.mxu0 0
      %3106 = vmatmul.mubr.bf16.gmra.mrb[0].mxu0 %v811
      %v3107 = vpop.f32.mrb[0].mxu0
      %v3108 = vadd.f32 %v2944, %v3107
      %v3109 = vpop.f32.mrb[0].mxu0
      %v3110 = vpop.f32.mrb[0].mxu0
      %v3111 = vadd.f32 %v2947, %v3110
      %v3112 = vpop.f32.mrb[0].mxu0
      %3113 = vmatprep.mubr.bf16.mxu0 0
      %3114 = vmatmul.mubr.bf16.gmra.mrb[0].mxu0 %v814
      %v3115 = vpop.f32.mrb[0].mxu0
      %v3116 = vadd.f32 %v2952, %v3115
      %v3117 = vpop.f32.mrb[0].mxu0
      %v3118 = vpop.f32.mrb[0].mxu0
      %v3119 = vadd.f32 %v2955, %v3118
      %v3120 = vpop.f32.mrb[0].mxu0
      %3121 = vdwg.mxu0
      %v3122 = vld [vmem:[%s2265] sm:$0xff]
      %v3123 = vld [vmem:[%s2265 + $0x8] sm:$0xff]
      %v3124 = vld [vmem:[%s2265 + $0x18] sm:$0xff]
      %v3125 = vld [vmem:[%s2265 + $0x20] sm:$0xff]
      %v3126 = vld [vmem:[%s2265 + $0x30] sm:$0xff]
      %v3127 = vld [vmem:[%s2265 + $0x38] sm:$0xff]
      %v3128 = vld [vmem:[%s2265 + $0x48] sm:$0xff]
      %v3129 = vld [vmem:[%s2265 + $0x50] sm:$0xff]
      %v3130 = vld [vmem:[%s2265 + $0x60] sm:$0xff]
      %v3131 = vld [vmem:[%s2265 + $0x68] sm:$0xff]
      %v3132 = vld [vmem:[%s2265 + $0x78] sm:$0xff]
      %v3133 = vld [vmem:[%s2265 + $0x80] sm:$0xff]
      %v3134 = vld [vmem:[%s2265 + $0x90] sm:$0xff]
      %v3135 = vld [vmem:[%s2265 + $0x98] sm:$0xff]
      %v3136 = vld [vmem:[%s2265 + $0xa8] sm:$0xff]
      %v3137 = vld [vmem:[%s2265 + $0xb0] sm:$0xff]
      %v3138 = vld [vmem:[%s2265 + $0xc0] sm:$0xff]
      %v3139 = vld [vmem:[%s2265 + $0xc8] sm:$0xff]
      %v3140 = vld [vmem:[%s2265 + $0xd8] sm:$0xff]
      %v3141 = vld [vmem:[%s2265 + $0xe0] sm:$0xff]
      %v3142 = vld [vmem:[%s2265 + $0xf0] sm:$0xff]
      %v3143 = vld [vmem:[%s2265 + $0xf8] sm:$0xff]
      %v3144 = vld [vmem:[%s2265 + $0x108] sm:$0xff]
      %v3145 = vld [vmem:[%s2265 + $0x110] sm:$0xff]
      %v3146 = vld [vmem:[%s2265 + $0x120] sm:$0xff]
      %v3147 = vld [vmem:[%s2265 + $0x128] sm:$0xff]
      %v3148 = vld [vmem:[%s2265 + $0x138] sm:$0xff]
      %v3149 = vld [vmem:[%s2265 + $0x140] sm:$0xff]
      %v3150 = vld [vmem:[%s2265 + $0x150] sm:$0xff]
      %v3151 = vld [vmem:[%s2265 + $0x158] sm:$0xff]
      %v3152 = vld [vmem:[%s2265 + $0x168] sm:$0xff]
      %v3153 = vld [vmem:[%s2265 + $0x170] sm:$0xff]
      %v3154 = vadd.f32 %v3122, %v2996
      %v3155 = vadd.f32 %v3123, %v2999
      %v3156 = vadd.f32 %v3124, %v3004
      %v3157 = vadd.f32 %v3125, %v3007
      %v3158 = vadd.f32 %v3126, %v3012
      %v3159 = vadd.f32 %v3127, %v3015
      %v3160 = vadd.f32 %v3128, %v3020
      %v3161 = vadd.f32 %v3129, %v3023
      %v3162 = vadd.f32 %v3130, %v3028
      %v3163 = vadd.f32 %v3131, %v3031
      %v3164 = vadd.f32 %v3132, %v3036
      %v3165 = vadd.f32 %v3133, %v3039
      %v3166 = vadd.f32 %v3134, %v3044
      %v3167 = vadd.f32 %v3135, %v3047
      %v3168 = vadd.f32 %v3136, %v3052
      %v3169 = vadd.f32 %v3137, %v3055
      %v3170 = vadd.f32 %v3138, %v3060
      %v3171 = vadd.f32 %v3139, %v3063
      %v3172 = vadd.f32 %v3140, %v3068
      %v3173 = vadd.f32 %v3141, %v3071
      %v3174 = vadd.f32 %v3142, %v3076
      %v3175 = vadd.f32 %v3143, %v3079
      %v3176 = vadd.f32 %v3144, %v3084
      %v3177 = vadd.f32 %v3145, %v3087
      %v3178 = vadd.f32 %v3146, %v3092
      %v3179 = vadd.f32 %v3147, %v3095
      %v3180 = vadd.f32 %v3148, %v3100
      %v3181 = vadd.f32 %v3149, %v3103
      %v3182 = vadd.f32 %v3150, %v3108
      %v3183 = vadd.f32 %v3151, %v3111
      %v3184 = vadd.f32 %v3152, %v3116
      %v3185 = vadd.f32 %v3153, %v3119
      %3186 = vst.msk [vmem:[%s2265] sm:$0xff] %vm273, %v3154
      %3187 = vst.msk [vmem:[%s2265 + $0x8] sm:$0xff] %vm273, %v3155
      %3188 = vst.msk [vmem:[%s2265 + $0x18] sm:$0xff] %vm273, %v3156
      %3189 = vst.msk [vmem:[%s2265 + $0x20] sm:$0xff] %vm273, %v3157
      %3190 = vst.msk [vmem:[%s2265 + $0x30] sm:$0xff] %vm273, %v3158
      %3191 = vst.msk [vmem:[%s2265 + $0x38] sm:$0xff] %vm273, %v3159
      %3192 = vst.msk [vmem:[%s2265 + $0x48] sm:$0xff] %vm273, %v3160
      %3193 = vst.msk [vmem:[%s2265 + $0x50] sm:$0xff] %vm273, %v3161
      %3194 = vst.msk [vmem:[%s2265 + $0x60] sm:$0xff] %vm273, %v3162
      %3195 = vst.msk [vmem:[%s2265 + $0x68] sm:$0xff] %vm273, %v3163
      %3196 = vst.msk [vmem:[%s2265 + $0x78] sm:$0xff] %vm273, %v3164
      %3197 = vst.msk [vmem:[%s2265 + $0x80] sm:$0xff] %vm273, %v3165
      %3198 = vst.msk [vmem:[%s2265 + $0x90] sm:$0xff] %vm273, %v3166
      %3199 = vst.msk [vmem:[%s2265 + $0x98] sm:$0xff] %vm273, %v3167
      %3200 = vst.msk [vmem:[%s2265 + $0xa8] sm:$0xff] %vm273, %v3168
      %3201 = vst.msk [vmem:[%s2265 + $0xb0] sm:$0xff] %vm273, %v3169
      %3202 = vst.msk [vmem:[%s2265 + $0xc0] sm:$0xff] %vm273, %v3170
      %3203 = vst.msk [vmem:[%s2265 + $0xc8] sm:$0xff] %vm273, %v3171
      %3204 = vst.msk [vmem:[%s2265 + $0xd8] sm:$0xff] %vm273, %v3172
      %3205 = vst.msk [vmem:[%s2265 + $0xe0] sm:$0xff] %vm273, %v3173
      %3206 = vst.msk [vmem:[%s2265 + $0xf0] sm:$0xff] %vm273, %v3174
      %3207 = vst.msk [vmem:[%s2265 + $0xf8] sm:$0xff] %vm273, %v3175
      %3208 = vst.msk [vmem:[%s2265 + $0x108] sm:$0xff] %vm273, %v3176
      %3209 = vst.msk [vmem:[%s2265 + $0x110] sm:$0xff] %vm273, %v3177
      %3210 = vst.msk [vmem:[%s2265 + $0x120] sm:$0xff] %vm273, %v3178
      %3211 = vst.msk [vmem:[%s2265 + $0x128] sm:$0xff] %vm273, %v3179
      %3212 = vst.msk [vmem:[%s2265 + $0x138] sm:$0xff] %vm273, %v3180
      %3213 = vst.msk [vmem:[%s2265 + $0x140] sm:$0xff] %vm273, %v3181
      %3214 = vst.msk [vmem:[%s2265 + $0x150] sm:$0xff] %vm273, %v3182
      %3215 = vst.msk [vmem:[%s2265 + $0x158] sm:$0xff] %vm273, %v3183
      %3216 = vst.msk [vmem:[%s2265 + $0x168] sm:$0xff] %vm273, %v3184
      %3217 = vst.msk [vmem:[%s2265 + $0x170] sm:$0xff] %vm273, %v3185
      %s3218 = scalar_lea.vmem %s2, 12
      %v3219 = vld [vmem:[%s3218] sm:$0x3]
      %s3220 = scalar_lea.vmem %s3, 12
      %v3221 = vld [vmem:[%s3220] sm:$0x3]
      %v3223 = vsel %vm523, %v3221, 0
      %3225 = vmatprep.subr.bf16.mxu0 0
      %3226 = vmatpush1.bf16.msra.mxu0 %v3223
      %3227 = vmatprep.subr.bf16.mxu0 0
      %3228 = vmatpush1.bf16.msra.mxu0 0
      %3229 = vmatprep.subr.bf16.mxu0 0
      %3230 = vmatpush1.bf16.msra.mxu0 0
      %3231 = vmatprep.subr.bf16.mxu0 0
      %3232 = vmatpush1.bf16.msra.mxu0 0
      %3233 = vmatprep.subr.bf16.mxu0 0
      %3234 = vmatpush1.bf16.msra.mxu0 0
      %3235 = vmatprep.subr.bf16.mxu0 0
      %3236 = vmatpush1.bf16.msra.mxu0 0
      %3237 = vmatprep.subr.bf16.mxu0 0
      %3238 = vmatpush1.bf16.msra.mxu0 0
      %3239 = vmatprep.subr.bf16.mxu0 0
      %3240 = vmatpush1.bf16.msra.mxu0 0
      %3241 = vmatprep.subr.bf16.mxu0 0
      %3242 = vmatpush1.bf16.msra.mxu0 0
      %3243 = vmatprep.subr.bf16.mxu0 0
      %3244 = vmatpush1.bf16.msra.mxu0 0
      %3245 = vmatprep.subr.bf16.mxu0 0
      %3246 = vmatpush1.bf16.msra.mxu0 0
      %3247 = vmatprep.subr.bf16.mxu0 0
      %3248 = vmatpush1.bf16.msra.mxu0 0
      %3249 = vmatprep.subr.bf16.mxu0 0
      %3250 = vmatpush1.bf16.msra.mxu0 0
      %3251 = vmatprep.subr.bf16.mxu0 0
      %3252 = vmatpush1.bf16.msra.mxu0 0
      %3253 = vmatprep.subr.bf16.mxu0 0
      %3254 = vmatpush1.bf16.msra.mxu0 0
      %3255 = vmatprep.subr.bf16.mxu0 0
      %3256 = vmatpush1.bf16.msra.mxu0 0
      %3257 = vmatprep.mubr.bf16.mxu0 0
      %3258 = vmatmul.mubr.bf16.gmra.mrb[0].mxu0 %v476
      %v3259 = vpop.f32.mrb[0].mxu0
      %v3260 = vadd.f32 0.0, %v3259
      %v3261 = vpop.f32.mrb[0].mxu0
      %v3262 = vpop.f32.mrb[0].mxu0
      %v3263 = vadd.f32 0.0, %v3262
      %v3264 = vpop.f32.mrb[0].mxu0
      %3265 = vmatprep.mubr.bf16.mxu0 0
      %3266 = vmatmul.mubr.bf16.gmra.mrb[0].mxu0 %v479
      %v3267 = vpop.f32.mrb[0].mxu0
      %v3268 = vadd.f32 0.0, %v3267
      %v3269 = vpop.f32.mrb[0].mxu0
      %v3270 = vpop.f32.mrb[0].mxu0
      %v3271 = vadd.f32 0.0, %v3270
      %v3272 = vpop.f32.mrb[0].mxu0
      %3273 = vmatprep.mubr.bf16.mxu0 0
      %3274 = vmatmul.mubr.bf16.gmra.mrb[0].mxu0 %v482
      %v3275 = vpop.f32.mrb[0].mxu0
      %v3276 = vadd.f32 0.0, %v3275
      %v3277 = vpop.f32.mrb[0].mxu0
      %v3278 = vpop.f32.mrb[0].mxu0
      %v3279 = vadd.f32 0.0, %v3278
      %v3280 = vpop.f32.mrb[0].mxu0
      %3281 = vmatprep.mubr.bf16.mxu0 0
      %3282 = vmatmul.mubr.bf16.gmra.mrb[0].mxu0 %v485
      %v3283 = vpop.f32.mrb[0].mxu0
      %v3284 = vadd.f32 0.0, %v3283
      %v3285 = vpop.f32.mrb[0].mxu0
      %v3286 = vpop.f32.mrb[0].mxu0
      %v3287 = vadd.f32 0.0, %v3286
      %v3288 = vpop.f32.mrb[0].mxu0
      %3289 = vmatprep.mubr.bf16.mxu0 0
      %3290 = vmatmul.mubr.bf16.gmra.mrb[0].mxu0 %v488
      %v3291 = vpop.f32.mrb[0].mxu0
      %v3292 = vadd.f32 0.0, %v3291
      %v3293 = vpop.f32.mrb[0].mxu0
      %v3294 = vpop.f32.mrb[0].mxu0
      %v3295 = vadd.f32 0.0, %v3294
      %v3296 = vpop.f32.mrb[0].mxu0
      %3297 = vmatprep.mubr.bf16.mxu0 0
      %3298 = vmatmul.mubr.bf16.gmra.mrb[0].mxu0 %v491
      %v3299 = vpop.f32.mrb[0].mxu0
      %v3300 = vadd.f32 0.0, %v3299
      %v3301 = vpop.f32.mrb[0].mxu0
      %v3302 = vpop.f32.mrb[0].mxu0
      %v3303 = vadd.f32 0.0, %v3302
      %v3304 = vpop.f32.mrb[0].mxu0
      %3305 = vmatprep.mubr.bf16.mxu0 0
      %3306 = vmatmul.mubr.bf16.gmra.mrb[0].mxu0 %v494
      %v3307 = vpop.f32.mrb[0].mxu0
      %v3308 = vadd.f32 0.0, %v3307
      %v3309 = vpop.f32.mrb[0].mxu0
      %v3310 = vpop.f32.mrb[0].mxu0
      %v3311 = vadd.f32 0.0, %v3310
      %v3312 = vpop.f32.mrb[0].mxu0
      %3313 = vmatprep.mubr.bf16.mxu0 0
      %3314 = vmatmul.mubr.bf16.gmra.mrb[0].mxu0 %v497
      %v3315 = vpop.f32.mrb[0].mxu0
      %v3316 = vadd.f32 0.0, %v3315
      %v3317 = vpop.f32.mrb[0].mxu0
      %v3318 = vpop.f32.mrb[0].mxu0
      %v3319 = vadd.f32 0.0, %v3318
      %v3320 = vpop.f32.mrb[0].mxu0
      %3321 = vmatprep.mubr.bf16.mxu0 0
      %3322 = vmatmul.mubr.bf16.gmra.mrb[0].mxu0 %v500
      %v3323 = vpop.f32.mrb[0].mxu0
      %v3324 = vadd.f32 0.0, %v3323
      %v3325 = vpop.f32.mrb[0].mxu0
      %v3326 = vpop.f32.mrb[0].mxu0
      %v3327 = vadd.f32 0.0, %v3326
      %v3328 = vpop.f32.mrb[0].mxu0
      %3329 = vmatprep.mubr.bf16.mxu0 0
      %3330 = vmatmul.mubr.bf16.gmra.mrb[0].mxu0 %v503
      %v3331 = vpop.f32.mrb[0].mxu0
      %v3332 = vadd.f32 0.0, %v3331
      %v3333 = vpop.f32.mrb[0].mxu0
      %v3334 = vpop.f32.mrb[0].mxu0
      %v3335 = vadd.f32 0.0, %v3334
      %v3336 = vpop.f32.mrb[0].mxu0
      %3337 = vmatprep.mubr.bf16.mxu0 0
      %3338 = vmatmul.mubr.bf16.gmra.mrb[0].mxu0 %v506
      %v3339 = vpop.f32.mrb[0].mxu0
      %v3340 = vadd.f32 0.0, %v3339
      %v3341 = vpop.f32.mrb[0].mxu0
      %v3342 = vpop.f32.mrb[0].mxu0
      %v3343 = vadd.f32 0.0, %v3342
      %v3344 = vpop.f32.mrb[0].mxu0
      %3345 = vmatprep.mubr.bf16.mxu0 0
      %3346 = vmatmul.mubr.bf16.gmra.mrb[0].mxu0 %v509
      %v3347 = vpop.f32.mrb[0].mxu0
      %v3348 = vadd.f32 0.0, %v3347
      %v3349 = vpop.f32.mrb[0].mxu0
      %v3350 = vpop.f32.mrb[0].mxu0
      %v3351 = vadd.f32 0.0, %v3350
      %v3352 = vpop.f32.mrb[0].mxu0
      %3353 = vmatprep.mubr.bf16.mxu0 0
      %3354 = vmatmul.mubr.bf16.gmra.mrb[0].mxu0 %v512
      %v3355 = vpop.f32.mrb[0].mxu0
      %v3356 = vadd.f32 0.0, %v3355
      %v3357 = vpop.f32.mrb[0].mxu0
      %v3358 = vpop.f32.mrb[0].mxu0
      %v3359 = vadd.f32 0.0, %v3358
      %v3360 = vpop.f32.mrb[0].mxu0
      %3361 = vmatprep.mubr.bf16.mxu0 0
      %3362 = vmatmul.mubr.bf16.gmra.mrb[0].mxu0 %v515
      %v3363 = vpop.f32.mrb[0].mxu0
      %v3364 = vadd.f32 0.0, %v3363
      %v3365 = vpop.f32.mrb[0].mxu0
      %v3366 = vpop.f32.mrb[0].mxu0
      %v3367 = vadd.f32 0.0, %v3366
      %v3368 = vpop.f32.mrb[0].mxu0
      %3369 = vmatprep.mubr.bf16.mxu0 0
      %3370 = vmatmul.mubr.bf16.gmra.mrb[0].mxu0 %v518
      %v3371 = vpop.f32.mrb[0].mxu0
      %v3372 = vadd.f32 0.0, %v3371
      %v3373 = vpop.f32.mrb[0].mxu0
      %v3374 = vpop.f32.mrb[0].mxu0
      %v3375 = vadd.f32 0.0, %v3374
      %v3376 = vpop.f32.mrb[0].mxu0
      %3377 = vmatprep.mubr.bf16.mxu0 0
      %3378 = vmatmul.mubr.bf16.gmra.mrb[0].mxu0 %v521
      %v3379 = vpop.f32.mrb[0].mxu0
      %v3380 = vadd.f32 0.0, %v3379
      %v3381 = vpop.f32.mrb[0].mxu0
      %v3382 = vpop.f32.mrb[0].mxu0
      %v3383 = vadd.f32 0.0, %v3382
      %v3384 = vpop.f32.mrb[0].mxu0
      %3385 = vdwg.mxu0
      %v3387 = vsel %vm523, %v3219, 0
      %3389 = vmatprep.subr.bf16.mxu0 0
      %3390 = vmatpush1.bf16.msra.mxu0 %v3387
      %3391 = vmatprep.subr.bf16.mxu0 0
      %3392 = vmatpush1.bf16.msra.mxu0 0
      %3393 = vmatprep.subr.bf16.mxu0 0
      %3394 = vmatpush1.bf16.msra.mxu0 0
      %3395 = vmatprep.subr.bf16.mxu0 0
      %3396 = vmatpush1.bf16.msra.mxu0 0
      %3397 = vmatprep.subr.bf16.mxu0 0
      %3398 = vmatpush1.bf16.msra.mxu0 0
      %3399 = vmatprep.subr.bf16.mxu0 0
      %3400 = vmatpush1.bf16.msra.mxu0 0
      %3401 = vmatprep.subr.bf16.mxu0 0
      %3402 = vmatpush1.bf16.msra.mxu0 0
      %3403 = vmatprep.subr.bf16.mxu0 0
      %3404 = vmatpush1.bf16.msra.mxu0 0
      %3405 = vmatprep.subr.bf16.mxu0 0
      %3406 = vmatpush1.bf16.msra.mxu0 0
      %3407 = vmatprep.subr.bf16.mxu0 0
      %3408 = vmatpush1.bf16.msra.mxu0 0
      %3409 = vmatprep.subr.bf16.mxu0 0
      %3410 = vmatpush1.bf16.msra.mxu0 0
      %3411 = vmatprep.subr.bf16.mxu0 0
      %3412 = vmatpush1.bf16.msra.mxu0 0
      %3413 = vmatprep.subr.bf16.mxu0 0
      %3414 = vmatpush1.bf16.msra.mxu0 0
      %3415 = vmatprep.subr.bf16.mxu0 0
      %3416 = vmatpush1.bf16.msra.mxu0 0
      %3417 = vmatprep.subr.bf16.mxu0 0
      %3418 = vmatpush1.bf16.msra.mxu0 0
      %3419 = vmatprep.subr.bf16.mxu0 0
      %3420 = vmatpush1.bf16.msra.mxu0 0
      %3421 = vmatprep.mubr.bf16.mxu0 0
      %3422 = vmatmul.mubr.bf16.gmra.mrb[0].mxu0 %v769
      %v3423 = vpop.f32.mrb[0].mxu0
      %v3424 = vadd.f32 %v3260, %v3423
      %v3425 = vpop.f32.mrb[0].mxu0
      %v3426 = vpop.f32.mrb[0].mxu0
      %v3427 = vadd.f32 %v3263, %v3426
      %v3428 = vpop.f32.mrb[0].mxu0
      %3429 = vmatprep.mubr.bf16.mxu0 0
      %3430 = vmatmul.mubr.bf16.gmra.mrb[0].mxu0 %v772
      %v3431 = vpop.f32.mrb[0].mxu0
      %v3432 = vadd.f32 %v3268, %v3431
      %v3433 = vpop.f32.mrb[0].mxu0
      %v3434 = vpop.f32.mrb[0].mxu0
      %v3435 = vadd.f32 %v3271, %v3434
      %v3436 = vpop.f32.mrb[0].mxu0
      %3437 = vmatprep.mubr.bf16.mxu0 0
      %3438 = vmatmul.mubr.bf16.gmra.mrb[0].mxu0 %v775
      %v3439 = vpop.f32.mrb[0].mxu0
      %v3440 = vadd.f32 %v3276, %v3439
      %v3441 = vpop.f32.mrb[0].mxu0
      %v3442 = vpop.f32.mrb[0].mxu0
      %v3443 = vadd.f32 %v3279, %v3442
      %v3444 = vpop.f32.mrb[0].mxu0
      %3445 = vmatprep.mubr.bf16.mxu0 0
      %3446 = vmatmul.mubr.bf16.gmra.mrb[0].mxu0 %v778
      %v3447 = vpop.f32.mrb[0].mxu0
      %v3448 = vadd.f32 %v3284, %v3447
      %v3449 = vpop.f32.mrb[0].mxu0
      %v3450 = vpop.f32.mrb[0].mxu0
      %v3451 = vadd.f32 %v3287, %v3450
      %v3452 = vpop.f32.mrb[0].mxu0
      %3453 = vmatprep.mubr.bf16.mxu0 0
      %3454 = vmatmul.mubr.bf16.gmra.mrb[0].mxu0 %v781
      %v3455 = vpop.f32.mrb[0].mxu0
      %v3456 = vadd.f32 %v3292, %v3455
      %v3457 = vpop.f32.mrb[0].mxu0
      %v3458 = vpop.f32.mrb[0].mxu0
      %v3459 = vadd.f32 %v3295, %v3458
      %v3460 = vpop.f32.mrb[0].mxu0
      %3461 = vmatprep.mubr.bf16.mxu0 0
      %3462 = vmatmul.mubr.bf16.gmra.mrb[0].mxu0 %v784
      %v3463 = vpop.f32.mrb[0].mxu0
      %v3464 = vadd.f32 %v3300, %v3463
      %v3465 = vpop.f32.mrb[0].mxu0
      %v3466 = vpop.f32.mrb[0].mxu0
      %v3467 = vadd.f32 %v3303, %v3466
      %v3468 = vpop.f32.mrb[0].mxu0
      %3469 = vmatprep.mubr.bf16.mxu0 0
      %3470 = vmatmul.mubr.bf16.gmra.mrb[0].mxu0 %v787
      %v3471 = vpop.f32.mrb[0].mxu0
      %v3472 = vadd.f32 %v3308, %v3471
      %v3473 = vpop.f32.mrb[0].mxu0
      %v3474 = vpop.f32.mrb[0].mxu0
      %v3475 = vadd.f32 %v3311, %v3474
      %v3476 = vpop.f32.mrb[0].mxu0
      %3477 = vmatprep.mubr.bf16.mxu0 0
      %3478 = vmatmul.mubr.bf16.gmra.mrb[0].mxu0 %v790
      %v3479 = vpop.f32.mrb[0].mxu0
      %v3480 = vadd.f32 %v3316, %v3479
      %v3481 = vpop.f32.mrb[0].mxu0
      %v3482 = vpop.f32.mrb[0].mxu0
      %v3483 = vadd.f32 %v3319, %v3482
      %v3484 = vpop.f32.mrb[0].mxu0
      %3485 = vmatprep.mubr.bf16.mxu0 0
      %3486 = vmatmul.mubr.bf16.gmra.mrb[0].mxu0 %v793
      %v3487 = vpop.f32.mrb[0].mxu0
      %v3488 = vadd.f32 %v3324, %v3487
      %v3489 = vpop.f32.mrb[0].mxu0
      %v3490 = vpop.f32.mrb[0].mxu0
      %v3491 = vadd.f32 %v3327, %v3490
      %v3492 = vpop.f32.mrb[0].mxu0
      %3493 = vmatprep.mubr.bf16.mxu0 0
      %3494 = vmatmul.mubr.bf16.gmra.mrb[0].mxu0 %v796
      %v3495 = vpop.f32.mrb[0].mxu0
      %v3496 = vadd.f32 %v3332, %v3495
      %v3497 = vpop.f32.mrb[0].mxu0
      %v3498 = vpop.f32.mrb[0].mxu0
      %v3499 = vadd.f32 %v3335, %v3498
      %v3500 = vpop.f32.mrb[0].mxu0
      %3501 = vmatprep.mubr.bf16.mxu0 0
      %3502 = vmatmul.mubr.bf16.gmra.mrb[0].mxu0 %v799
      %v3503 = vpop.f32.mrb[0].mxu0
      %v3504 = vadd.f32 %v3340, %v3503
      %v3505 = vpop.f32.mrb[0].mxu0
      %v3506 = vpop.f32.mrb[0].mxu0
      %v3507 = vadd.f32 %v3343, %v3506
      %v3508 = vpop.f32.mrb[0].mxu0
      %3509 = vmatprep.mubr.bf16.mxu0 0
      %3510 = vmatmul.mubr.bf16.gmra.mrb[0].mxu0 %v802
      %v3511 = vpop.f32.mrb[0].mxu0
      %v3512 = vadd.f32 %v3348, %v3511
      %v3513 = vpop.f32.mrb[0].mxu0
      %v3514 = vpop.f32.mrb[0].mxu0
      %v3515 = vadd.f32 %v3351, %v3514
      %v3516 = vpop.f32.mrb[0].mxu0
      %3517 = vmatprep.mubr.bf16.mxu0 0
      %3518 = vmatmul.mubr.bf16.gmra.mrb[0].mxu0 %v805
      %v3519 = vpop.f32.mrb[0].mxu0
      %v3520 = vadd.f32 %v3356, %v3519
      %v3521 = vpop.f32.mrb[0].mxu0
      %v3522 = vpop.f32.mrb[0].mxu0
      %v3523 = vadd.f32 %v3359, %v3522
      %v3524 = vpop.f32.mrb[0].mxu0
      %3525 = vmatprep.mubr.bf16.mxu0 0
      %3526 = vmatmul.mubr.bf16.gmra.mrb[0].mxu0 %v808
      %v3527 = vpop.f32.mrb[0].mxu0
      %v3528 = vadd.f32 %v3364, %v3527
      %v3529 = vpop.f32.mrb[0].mxu0
      %v3530 = vpop.f32.mrb[0].mxu0
      %v3531 = vadd.f32 %v3367, %v3530
      %v3532 = vpop.f32.mrb[0].mxu0
      %3533 = vmatprep.mubr.bf16.mxu0 0
      %3534 = vmatmul.mubr.bf16.gmra.mrb[0].mxu0 %v811
      %v3535 = vpop.f32.mrb[0].mxu0
      %v3536 = vadd.f32 %v3372, %v3535
      %v3537 = vpop.f32.mrb[0].mxu0
      %v3538 = vpop.f32.mrb[0].mxu0
      %v3539 = vadd.f32 %v3375, %v3538
      %v3540 = vpop.f32.mrb[0].mxu0
      %3541 = vmatprep.mubr.bf16.mxu0 0
      %3542 = vmatmul.mubr.bf16.gmra.mrb[0].mxu0 %v814
      %v3543 = vpop.f32.mrb[0].mxu0
      %v3544 = vadd.f32 %v3380, %v3543
      %v3545 = vpop.f32.mrb[0].mxu0
      %v3546 = vpop.f32.mrb[0].mxu0
      %v3547 = vadd.f32 %v3383, %v3546
      %v3548 = vpop.f32.mrb[0].mxu0
      %3549 = vdwg.mxu0
      %v3550 = vld [vmem:[#allocation2 + $0x2] sm:$0xff]
      %v3551 = vld [vmem:[#allocation2 + $0xa] sm:$0xff]
      %v3552 = vld [vmem:[#allocation2 + $0x1a] sm:$0xff]
      %v3553 = vld [vmem:[#allocation2 + $0x22] sm:$0xff]
      %v3554 = vld [vmem:[#allocation2 + $0x32] sm:$0xff]
      %v3555 = vld [vmem:[#allocation2 + $0x3a] sm:$0xff]
      %v3556 = vld [vmem:[#allocation2 + $0x4a] sm:$0xff]
      %v3557 = vld [vmem:[#allocation2 + $0x52] sm:$0xff]
      %v3558 = vld [vmem:[#allocation2 + $0x62] sm:$0xff]
      %v3559 = vld [vmem:[#allocation2 + $0x6a] sm:$0xff]
      %v3560 = vld [vmem:[#allocation2 + $0x7a] sm:$0xff]
      %v3561 = vld [vmem:[#allocation2 + $0x82] sm:$0xff]
      %v3562 = vld [vmem:[#allocation2 + $0x92] sm:$0xff]
      %v3563 = vld [vmem:[#allocation2 + $0x9a] sm:$0xff]
      %v3564 = vld [vmem:[#allocation2 + $0xaa] sm:$0xff]
      %v3565 = vld [vmem:[#allocation2 + $0xb2] sm:$0xff]
      %v3566 = vld [vmem:[#allocation2 + $0xc2] sm:$0xff]
      %v3567 = vld [vmem:[#allocation2 + $0xca] sm:$0xff]
      %v3568 = vld [vmem:[#allocation2 + $0xda] sm:$0xff]
      %v3569 = vld [vmem:[#allocation2 + $0xe2] sm:$0xff]
      %v3570 = vld [vmem:[#allocation2 + $0xf2] sm:$0xff]
      %v3571 = vld [vmem:[#allocation2 + $0xfa] sm:$0xff]
      %v3572 = vld [vmem:[#allocation2 + $0x10a] sm:$0xff]
      %v3573 = vld [vmem:[#allocation2 + $0x112] sm:$0xff]
      %v3574 = vld [vmem:[#allocation2 + $0x122] sm:$0xff]
      %v3575 = vld [vmem:[#allocation2 + $0x12a] sm:$0xff]
      %v3576 = vld [vmem:[#allocation2 + $0x13a] sm:$0xff]
      %v3577 = vld [vmem:[#allocation2 + $0x142] sm:$0xff]
      %v3578 = vld [vmem:[#allocation2 + $0x152] sm:$0xff]
      %v3579 = vld [vmem:[#allocation2 + $0x15a] sm:$0xff]
      %v3580 = vld [vmem:[#allocation2 + $0x16a] sm:$0xff]
      %v3581 = vld [vmem:[#allocation2 + $0x172] sm:$0xff]
      %v3582 = vadd.f32 %v3550, %v3424
      %v3583 = vadd.f32 %v3551, %v3427
      %v3584 = vadd.f32 %v3552, %v3432
      %v3585 = vadd.f32 %v3553, %v3435
      %v3586 = vadd.f32 %v3554, %v3440
      %v3587 = vadd.f32 %v3555, %v3443
      %v3588 = vadd.f32 %v3556, %v3448
      %v3589 = vadd.f32 %v3557, %v3451
      %v3590 = vadd.f32 %v3558, %v3456
      %v3591 = vadd.f32 %v3559, %v3459
      %v3592 = vadd.f32 %v3560, %v3464
      %v3593 = vadd.f32 %v3561, %v3467
      %v3594 = vadd.f32 %v3562, %v3472
      %v3595 = vadd.f32 %v3563, %v3475
      %v3596 = vadd.f32 %v3564, %v3480
      %v3597 = vadd.f32 %v3565, %v3483
      %v3598 = vadd.f32 %v3566, %v3488
      %v3599 = vadd.f32 %v3567, %v3491
      %v3600 = vadd.f32 %v3568, %v3496
      %v3601 = vadd.f32 %v3569, %v3499
      %v3602 = vadd.f32 %v3570, %v3504
      %v3603 = vadd.f32 %v3571, %v3507
      %v3604 = vadd.f32 %v3572, %v3512
      %v3605 = vadd.f32 %v3573, %v3515
      %v3606 = vadd.f32 %v3574, %v3520
      %v3607 = vadd.f32 %v3575, %v3523
      %v3608 = vadd.f32 %v3576, %v3528
      %v3609 = vadd.f32 %v3577, %v3531
      %v3610 = vadd.f32 %v3578, %v3536
      %v3611 = vadd.f32 %v3579, %v3539
      %v3612 = vadd.f32 %v3580, %v3544
      %v3613 = vadd.f32 %v3581, %v3547
      %3614 = vst.msk [vmem:[#allocation2 + $0x2] sm:$0xff] %vm273, %v3582
      %3615 = vst.msk [vmem:[#allocation2 + $0xa] sm:$0xff] %vm273, %v3583
      %3616 = vst.msk [vmem:[#allocation2 + $0x1a] sm:$0xff] %vm273, %v3584
      %3617 = vst.msk [vmem:[#allocation2 + $0x22] sm:$0xff] %vm273, %v3585
      %3618 = vst.msk [vmem:[#allocation2 + $0x32] sm:$0xff] %vm273, %v3586
      %3619 = vst.msk [vmem:[#allocation2 + $0x3a] sm:$0xff] %vm273, %v3587
      %3620 = vst.msk [vmem:[#allocation2 + $0x4a] sm:$0xff] %vm273, %v3588
      %3621 = vst.msk [vmem:[#allocation2 + $0x52] sm:$0xff] %vm273, %v3589
      %3622 = vst.msk [vmem:[#allocation2 + $0x62] sm:$0xff] %vm273, %v3590
      %3623 = vst.msk [vmem:[#allocation2 + $0x6a] sm:$0xff] %vm273, %v3591
      %3624 = vst.msk [vmem:[#allocation2 + $0x7a] sm:$0xff] %vm273, %v3592
      %3625 = vst.msk [vmem:[#allocation2 + $0x82] sm:$0xff] %vm273, %v3593
      %3626 = vst.msk [vmem:[#allocation2 + $0x92] sm:$0xff] %vm273, %v3594
      %3627 = vst.msk [vmem:[#allocation2 + $0x9a] sm:$0xff] %vm273, %v3595
      %3628 = vst.msk [vmem:[#allocation2 + $0xaa] sm:$0xff] %vm273, %v3596
      %3629 = vst.msk [vmem:[#allocation2 + $0xb2] sm:$0xff] %vm273, %v3597
      %3630 = vst.msk [vmem:[#allocation2 + $0xc2] sm:$0xff] %vm273, %v3598
      %3631 = vst.msk [vmem:[#allocation2 + $0xca] sm:$0xff] %vm273, %v3599
      %3632 = vst.msk [vmem:[#allocation2 + $0xda] sm:$0xff] %vm273, %v3600
      %3633 = vst.msk [vmem:[#allocation2 + $0xe2] sm:$0xff] %vm273, %v3601
      %3634 = vst.msk [vmem:[#allocation2 + $0xf2] sm:$0xff] %vm273, %v3602
      %3635 = vst.msk [vmem:[#allocation2 + $0xfa] sm:$0xff] %vm273, %v3603
      %3636 = vst.msk [vmem:[#allocation2 + $0x10a] sm:$0xff] %vm273, %v3604
      %3637 = vst.msk [vmem:[#allocation2 + $0x112] sm:$0xff] %vm273, %v3605
      %3638 = vst.msk [vmem:[#allocation2 + $0x122] sm:$0xff] %vm273, %v3606
      %3639 = vst.msk [vmem:[#allocation2 + $0x12a] sm:$0xff] %vm273, %v3607
      %3640 = vst.msk [vmem:[#allocation2 + $0x13a] sm:$0xff] %vm273, %v3608
      %3641 = vst.msk [vmem:[#allocation2 + $0x142] sm:$0xff] %vm273, %v3609
      %3642 = vst.msk [vmem:[#allocation2 + $0x152] sm:$0xff] %vm273, %v3610
      %3643 = vst.msk [vmem:[#allocation2 + $0x15a] sm:$0xff] %vm273, %v3611
      %3644 = vst.msk [vmem:[#allocation2 + $0x16a] sm:$0xff] %vm273, %v3612
      %3645 = vst.msk [vmem:[#allocation2 + $0x172] sm:$0xff] %vm273, %v3613
      %s3646 = scalar_lea.vmem %s2, 14
      %v3647 = vld [vmem:[%s3646] sm:$0x3]
      %s3648 = scalar_lea.vmem %s3, 14
      %v3649 = vld [vmem:[%s3648] sm:$0x3]
      %v3651 = vsel %vm523, %v3649, 0
      %3653 = vmatprep.subr.bf16.mxu0 0
      %3654 = vmatpush1.bf16.msra.mxu0 %v3651
      %3655 = vmatprep.subr.bf16.mxu0 0
      %3656 = vmatpush1.bf16.msra.mxu0 0
      %3657 = vmatprep.subr.bf16.mxu0 0
      %3658 = vmatpush1.bf16.msra.mxu0 0
      %3659 = vmatprep.subr.bf16.mxu0 0
      %3660 = vmatpush1.bf16.msra.mxu0 0
      %3661 = vmatprep.subr.bf16.mxu0 0
      %3662 = vmatpush1.bf16.msra.mxu0 0
      %3663 = vmatprep.subr.bf16.mxu0 0
      %3664 = vmatpush1.bf16.msra.mxu0 0
      %3665 = vmatprep.subr.bf16.mxu0 0
      %3666 = vmatpush1.bf16.msra.mxu0 0
      %3667 = vmatprep.subr.bf16.mxu0 0
      %3668 = vmatpush1.bf16.msra.mxu0 0
      %3669 = vmatprep.subr.bf16.mxu0 0
      %3670 = vmatpush1.bf16.msra.mxu0 0
      %3671 = vmatprep.subr.bf16.mxu0 0
      %3672 = vmatpush1.bf16.msra.mxu0 0
      %3673 = vmatprep.subr.bf16.mxu0 0
      %3674 = vmatpush1.bf16.msra.mxu0 0
      %3675 = vmatprep.subr.bf16.mxu0 0
      %3676 = vmatpush1.bf16.msra.mxu0 0
      %3677 = vmatprep.subr.bf16.mxu0 0
      %3678 = vmatpush1.bf16.msra.mxu0 0
      %3679 = vmatprep.subr.bf16.mxu0 0
      %3680 = vmatpush1.bf16.msra.mxu0 0
      %3681 = vmatprep.subr.bf16.mxu0 0
      %3682 = vmatpush1.bf16.msra.mxu0 0
      %3683 = vmatprep.subr.bf16.mxu0 0
      %3684 = vmatpush1.bf16.msra.mxu0 0
      %3685 = vmatprep.mubr.bf16.mxu0 0
      %3686 = vmatmul.mubr.bf16.gmra.mrb[0].mxu0 %v476
      %v3687 = vpop.f32.mrb[0].mxu0
      %v3688 = vadd.f32 0.0, %v3687
      %v3689 = vpop.f32.mrb[0].mxu0
      %v3690 = vpop.f32.mrb[0].mxu0
      %v3691 = vadd.f32 0.0, %v3690
      %v3692 = vpop.f32.mrb[0].mxu0
      %3693 = vmatprep.mubr.bf16.mxu0 0
      %3694 = vmatmul.mubr.bf16.gmra.mrb[0].mxu0 %v479
      %v3695 = vpop.f32.mrb[0].mxu0
      %v3696 = vadd.f32 0.0, %v3695
      %v3697 = vpop.f32.mrb[0].mxu0
      %v3698 = vpop.f32.mrb[0].mxu0
      %v3699 = vadd.f32 0.0, %v3698
      %v3700 = vpop.f32.mrb[0].mxu0
      %3701 = vmatprep.mubr.bf16.mxu0 0
      %3702 = vmatmul.mubr.bf16.gmra.mrb[0].mxu0 %v482
      %v3703 = vpop.f32.mrb[0].mxu0
      %v3704 = vadd.f32 0.0, %v3703
      %v3705 = vpop.f32.mrb[0].mxu0
      %v3706 = vpop.f32.mrb[0].mxu0
      %v3707 = vadd.f32 0.0, %v3706
      %v3708 = vpop.f32.mrb[0].mxu0
      %3709 = vmatprep.mubr.bf16.mxu0 0
      %3710 = vmatmul.mubr.bf16.gmra.mrb[0].mxu0 %v485
      %v3711 = vpop.f32.mrb[0].mxu0
      %v3712 = vadd.f32 0.0, %v3711
      %v3713 = vpop.f32.mrb[0].mxu0
      %v3714 = vpop.f32.mrb[0].mxu0
      %v3715 = vadd.f32 0.0, %v3714
      %v3716 = vpop.f32.mrb[0].mxu0
      %3717 = vmatprep.mubr.bf16.mxu0 0
      %3718 = vmatmul.mubr.bf16.gmra.mrb[0].mxu0 %v488
      %v3719 = vpop.f32.mrb[0].mxu0
      %v3720 = vadd.f32 0.0, %v3719
      %v3721 = vpop.f32.mrb[0].mxu0
      %v3722 = vpop.f32.mrb[0].mxu0
      %v3723 = vadd.f32 0.0, %v3722
      %v3724 = vpop.f32.mrb[0].mxu0
      %3725 = vmatprep.mubr.bf16.mxu0 0
      %3726 = vmatmul.mubr.bf16.gmra.mrb[0].mxu0 %v491
      %v3727 = vpop.f32.mrb[0].mxu0
      %v3728 = vadd.f32 0.0, %v3727
      %v3729 = vpop.f32.mrb[0].mxu0
      %v3730 = vpop.f32.mrb[0].mxu0
      %v3731 = vadd.f32 0.0, %v3730
      %v3732 = vpop.f32.mrb[0].mxu0
      %3733 = vmatprep.mubr.bf16.mxu0 0
      %3734 = vmatmul.mubr.bf16.gmra.mrb[0].mxu0 %v494
      %v3735 = vpop.f32.mrb[0].mxu0
      %v3736 = vadd.f32 0.0, %v3735
      %v3737 = vpop.f32.mrb[0].mxu0
      %v3738 = vpop.f32.mrb[0].mxu0
      %v3739 = vadd.f32 0.0, %v3738
      %v3740 = vpop.f32.mrb[0].mxu0
      %3741 = vmatprep.mubr.bf16.mxu0 0
      %3742 = vmatmul.mubr.bf16.gmra.mrb[0].mxu0 %v497
      %v3743 = vpop.f32.mrb[0].mxu0
      %v3744 = vadd.f32 0.0, %v3743
      %v3745 = vpop.f32.mrb[0].mxu0
      %v3746 = vpop.f32.mrb[0].mxu0
      %v3747 = vadd.f32 0.0, %v3746
      %v3748 = vpop.f32.mrb[0].mxu0
      %3749 = vmatprep.mubr.bf16.mxu0 0
      %3750 = vmatmul.mubr.bf16.gmra.mrb[0].mxu0 %v500
      %v3751 = vpop.f32.mrb[0].mxu0
      %v3752 = vadd.f32 0.0, %v3751
      %v3753 = vpop.f32.mrb[0].mxu0
      %v3754 = vpop.f32.mrb[0].mxu0
      %v3755 = vadd.f32 0.0, %v3754
      %v3756 = vpop.f32.mrb[0].mxu0
      %3757 = vmatprep.mubr.bf16.mxu0 0
      %3758 = vmatmul.mubr.bf16.gmra.mrb[0].mxu0 %v503
      %v3759 = vpop.f32.mrb[0].mxu0
      %v3760 = vadd.f32 0.0, %v3759
      %v3761 = vpop.f32.mrb[0].mxu0
      %v3762 = vpop.f32.mrb[0].mxu0
      %v3763 = vadd.f32 0.0, %v3762
      %v3764 = vpop.f32.mrb[0].mxu0
      %3765 = vmatprep.mubr.bf16.mxu0 0
      %3766 = vmatmul.mubr.bf16.gmra.mrb[0].mxu0 %v506
      %v3767 = vpop.f32.mrb[0].mxu0
      %v3768 = vadd.f32 0.0, %v3767
      %v3769 = vpop.f32.mrb[0].mxu0
      %v3770 = vpop.f32.mrb[0].mxu0
      %v3771 = vadd.f32 0.0, %v3770
      %v3772 = vpop.f32.mrb[0].mxu0
      %3773 = vmatprep.mubr.bf16.mxu0 0
      %3774 = vmatmul.mubr.bf16.gmra.mrb[0].mxu0 %v509
      %v3775 = vpop.f32.mrb[0].mxu0
      %v3776 = vadd.f32 0.0, %v3775
      %v3777 = vpop.f32.mrb[0].mxu0
      %v3778 = vpop.f32.mrb[0].mxu0
      %v3779 = vadd.f32 0.0, %v3778
      %v3780 = vpop.f32.mrb[0].mxu0
      %3781 = vmatprep.mubr.bf16.mxu0 0
      %3782 = vmatmul.mubr.bf16.gmra.mrb[0].mxu0 %v512
      %v3783 = vpop.f32.mrb[0].mxu0
      %v3784 = vadd.f32 0.0, %v3783
      %v3785 = vpop.f32.mrb[0].mxu0
      %v3786 = vpop.f32.mrb[0].mxu0
      %v3787 = vadd.f32 0.0, %v3786
      %v3788 = vpop.f32.mrb[0].mxu0
      %3789 = vmatprep.mubr.bf16.mxu0 0
      %3790 = vmatmul.mubr.bf16.gmra.mrb[0].mxu0 %v515
      %v3791 = vpop.f32.mrb[0].mxu0
      %v3792 = vadd.f32 0.0, %v3791
      %v3793 = vpop.f32.mrb[0].mxu0
      %v3794 = vpop.f32.mrb[0].mxu0
      %v3795 = vadd.f32 0.0, %v3794
      %v3796 = vpop.f32.mrb[0].mxu0
      %3797 = vmatprep.mubr.bf16.mxu0 0
      %3798 = vmatmul.mubr.bf16.gmra.mrb[0].mxu0 %v518
      %v3799 = vpop.f32.mrb[0].mxu0
      %v3800 = vadd.f32 0.0, %v3799
      %v3801 = vpop.f32.mrb[0].mxu0
      %v3802 = vpop.f32.mrb[0].mxu0
      %v3803 = vadd.f32 0.0, %v3802
      %v3804 = vpop.f32.mrb[0].mxu0
      %3805 = vmatprep.mubr.bf16.mxu0 0
      %3806 = vmatmul.mubr.bf16.gmra.mrb[0].mxu0 %v521
      %v3807 = vpop.f32.mrb[0].mxu0
      %v3808 = vadd.f32 0.0, %v3807
      %v3809 = vpop.f32.mrb[0].mxu0
      %v3810 = vpop.f32.mrb[0].mxu0
      %v3811 = vadd.f32 0.0, %v3810
      %v3812 = vpop.f32.mrb[0].mxu0
      %3813 = vdwg.mxu0
      %v3815 = vsel %vm523, %v3647, 0
      %3817 = vmatprep.subr.bf16.mxu0 0
      %3818 = vmatpush1.bf16.msra.mxu0 %v3815
      %3819 = vmatprep.subr.bf16.mxu0 0
      %3820 = vmatpush1.bf16.msra.mxu0 0
      %3821 = vmatprep.subr.bf16.mxu0 0
      %3822 = vmatpush1.bf16.msra.mxu0 0
      %3823 = vmatprep.subr.bf16.mxu0 0
      %3824 = vmatpush1.bf16.msra.mxu0 0
      %3825 = vmatprep.subr.bf16.mxu0 0
      %3826 = vmatpush1.bf16.msra.mxu0 0
      %3827 = vmatprep.subr.bf16.mxu0 0
      %3828 = vmatpush1.bf16.msra.mxu0 0
      %3829 = vmatprep.subr.bf16.mxu0 0
      %3830 = vmatpush1.bf16.msra.mxu0 0
      %3831 = vmatprep.subr.bf16.mxu0 0
      %3832 = vmatpush1.bf16.msra.mxu0 0
      %3833 = vmatprep.subr.bf16.mxu0 0
      %3834 = vmatpush1.bf16.msra.mxu0 0
      %3835 = vmatprep.subr.bf16.mxu0 0
      %3836 = vmatpush1.bf16.msra.mxu0 0
      %3837 = vmatprep.subr.bf16.mxu0 0
      %3838 = vmatpush1.bf16.msra.mxu0 0
      %3839 = vmatprep.subr.bf16.mxu0 0
      %3840 = vmatpush1.bf16.msra.mxu0 0
      %3841 = vmatprep.subr.bf16.mxu0 0
      %3842 = vmatpush1.bf16.msra.mxu0 0
      %3843 = vmatprep.subr.bf16.mxu0 0
      %3844 = vmatpush1.bf16.msra.mxu0 0
      %3845 = vmatprep.subr.bf16.mxu0 0
      %3846 = vmatpush1.bf16.msra.mxu0 0
      %3847 = vmatprep.subr.bf16.mxu0 0
      %3848 = vmatpush1.bf16.msra.mxu0 0
      %3849 = vmatprep.mubr.bf16.mxu0 0
      %3850 = vmatmul.mubr.bf16.gmra.mrb[0].mxu0 %v769
      %v3851 = vpop.f32.mrb[0].mxu0
      %v3852 = vadd.f32 %v3688, %v3851
      %v3853 = vpop.f32.mrb[0].mxu0
      %v3854 = vpop.f32.mrb[0].mxu0
      %v3855 = vadd.f32 %v3691, %v3854
      %v3856 = vpop.f32.mrb[0].mxu0
      %3857 = vmatprep.mubr.bf16.mxu0 0
      %3858 = vmatmul.mubr.bf16.gmra.mrb[0].mxu0 %v772
      %v3859 = vpop.f32.mrb[0].mxu0
      %v3860 = vadd.f32 %v3696, %v3859
      %v3861 = vpop.f32.mrb[0].mxu0
      %v3862 = vpop.f32.mrb[0].mxu0
      %v3863 = vadd.f32 %v3699, %v3862
      %v3864 = vpop.f32.mrb[0].mxu0
      %3865 = vmatprep.mubr.bf16.mxu0 0
      %3866 = vmatmul.mubr.bf16.gmra.mrb[0].mxu0 %v775
      %v3867 = vpop.f32.mrb[0].mxu0
      %v3868 = vadd.f32 %v3704, %v3867
      %v3869 = vpop.f32.mrb[0].mxu0
      %v3870 = vpop.f32.mrb[0].mxu0
      %v3871 = vadd.f32 %v3707, %v3870
      %v3872 = vpop.f32.mrb[0].mxu0
      %3873 = vmatprep.mubr.bf16.mxu0 0
      %3874 = vmatmul.mubr.bf16.gmra.mrb[0].mxu0 %v778
      %v3875 = vpop.f32.mrb[0].mxu0
      %v3876 = vadd.f32 %v3712, %v3875
      %v3877 = vpop.f32.mrb[0].mxu0
      %v3878 = vpop.f32.mrb[0].mxu0
      %v3879 = vadd.f32 %v3715, %v3878
      %v3880 = vpop.f32.mrb[0].mxu0
      %3881 = vmatprep.mubr.bf16.mxu0 0
      %3882 = vmatmul.mubr.bf16.gmra.mrb[0].mxu0 %v781
      %v3883 = vpop.f32.mrb[0].mxu0
      %v3884 = vadd.f32 %v3720, %v3883
      %v3885 = vpop.f32.mrb[0].mxu0
      %v3886 = vpop.f32.mrb[0].mxu0
      %v3887 = vadd.f32 %v3723, %v3886
      %v3888 = vpop.f32.mrb[0].mxu0
      %3889 = vmatprep.mubr.bf16.mxu0 0
      %3890 = vmatmul.mubr.bf16.gmra.mrb[0].mxu0 %v784
      %v3891 = vpop.f32.mrb[0].mxu0
      %v3892 = vadd.f32 %v3728, %v3891
      %v3893 = vpop.f32.mrb[0].mxu0
      %v3894 = vpop.f32.mrb[0].mxu0
      %v3895 = vadd.f32 %v3731, %v3894
      %v3896 = vpop.f32.mrb[0].mxu0
      %3897 = vmatprep.mubr.bf16.mxu0 0
      %3898 = vmatmul.mubr.bf16.gmra.mrb[0].mxu0 %v787
      %v3899 = vpop.f32.mrb[0].mxu0
      %v3900 = vadd.f32 %v3736, %v3899
      %v3901 = vpop.f32.mrb[0].mxu0
      %v3902 = vpop.f32.mrb[0].mxu0
      %v3903 = vadd.f32 %v3739, %v3902
      %v3904 = vpop.f32.mrb[0].mxu0
      %3905 = vmatprep.mubr.bf16.mxu0 0
      %3906 = vmatmul.mubr.bf16.gmra.mrb[0].mxu0 %v790
      %v3907 = vpop.f32.mrb[0].mxu0
      %v3908 = vadd.f32 %v3744, %v3907
      %v3909 = vpop.f32.mrb[0].mxu0
      %v3910 = vpop.f32.mrb[0].mxu0
      %v3911 = vadd.f32 %v3747, %v3910
      %v3912 = vpop.f32.mrb[0].mxu0
      %3913 = vmatprep.mubr.bf16.mxu0 0
      %3914 = vmatmul.mubr.bf16.gmra.mrb[0].mxu0 %v793
      %v3915 = vpop.f32.mrb[0].mxu0
      %v3916 = vadd.f32 %v3752, %v3915
      %v3917 = vpop.f32.mrb[0].mxu0
      %v3918 = vpop.f32.mrb[0].mxu0
      %v3919 = vadd.f32 %v3755, %v3918
      %v3920 = vpop.f32.mrb[0].mxu0
      %3921 = vmatprep.mubr.bf16.mxu0 0
      %3922 = vmatmul.mubr.bf16.gmra.mrb[0].mxu0 %v796
      %v3923 = vpop.f32.mrb[0].mxu0
      %v3924 = vadd.f32 %v3760, %v3923
      %v3925 = vpop.f32.mrb[0].mxu0
      %v3926 = vpop.f32.mrb[0].mxu0
      %v3927 = vadd.f32 %v3763, %v3926
      %v3928 = vpop.f32.mrb[0].mxu0
      %3929 = vmatprep.mubr.bf16.mxu0 0
      %3930 = vmatmul.mubr.bf16.gmra.mrb[0].mxu0 %v799
      %v3931 = vpop.f32.mrb[0].mxu0
      %v3932 = vadd.f32 %v3768, %v3931
      %v3933 = vpop.f32.mrb[0].mxu0
      %v3934 = vpop.f32.mrb[0].mxu0
      %v3935 = vadd.f32 %v3771, %v3934
      %v3936 = vpop.f32.mrb[0].mxu0
      %3937 = vmatprep.mubr.bf16.mxu0 0
      %3938 = vmatmul.mubr.bf16.gmra.mrb[0].mxu0 %v802
      %v3939 = vpop.f32.mrb[0].mxu0
      %v3940 = vadd.f32 %v3776, %v3939
      %v3941 = vpop.f32.mrb[0].mxu0
      %v3942 = vpop.f32.mrb[0].mxu0
      %v3943 = vadd.f32 %v3779, %v3942
      %v3944 = vpop.f32.mrb[0].mxu0
      %3945 = vmatprep.mubr.bf16.mxu0 0
      %3946 = vmatmul.mubr.bf16.gmra.mrb[0].mxu0 %v805
      %v3947 = vpop.f32.mrb[0].mxu0
      %v3948 = vadd.f32 %v3784, %v3947
      %v3949 = vpop.f32.mrb[0].mxu0
      %v3950 = vpop.f32.mrb[0].mxu0
      %v3951 = vadd.f32 %v3787, %v3950
      %v3952 = vpop.f32.mrb[0].mxu0
      %3953 = vmatprep.mubr.bf16.mxu0 0
      %3954 = vmatmul.mubr.bf16.gmra.mrb[0].mxu0 %v808
      %v3955 = vpop.f32.mrb[0].mxu0
      %v3956 = vadd.f32 %v3792, %v3955
      %v3957 = vpop.f32.mrb[0].mxu0
      %v3958 = vpop.f32.mrb[0].mxu0
      %v3959 = vadd.f32 %v3795, %v3958
      %v3960 = vpop.f32.mrb[0].mxu0
      %3961 = vmatprep.mubr.bf16.mxu0 0
      %3962 = vmatmul.mubr.bf16.gmra.mrb[0].mxu0 %v811
      %v3963 = vpop.f32.mrb[0].mxu0
      %v3964 = vadd.f32 %v3800, %v3963
      %v3965 = vpop.f32.mrb[0].mxu0
      %v3966 = vpop.f32.mrb[0].mxu0
      %v3967 = vadd.f32 %v3803, %v3966
      %v3968 = vpop.f32.mrb[0].mxu0
      %3969 = vmatprep.mubr.bf16.mxu0 0
      %3970 = vmatmul.mubr.bf16.gmra.mrb[0].mxu0 %v814
      %v3971 = vpop.f32.mrb[0].mxu0
      %v3972 = vadd.f32 %v3808, %v3971
      %v3973 = vpop.f32.mrb[0].mxu0
      %v3974 = vpop.f32.mrb[0].mxu0
      %v3975 = vadd.f32 %v3811, %v3974
      %v3976 = vpop.f32.mrb[0].mxu0
      %3977 = vdwg.mxu0
      %v3978 = vld [vmem:[#allocation2 + $0x1] sm:$0xff]
      %v3979 = vld [vmem:[#allocation2 + $0x9] sm:$0xff]
      %v3980 = vld [vmem:[#allocation2 + $0x19] sm:$0xff]
      %v3981 = vld [vmem:[#allocation2 + $0x21] sm:$0xff]
      %v3982 = vld [vmem:[#allocation2 + $0x31] sm:$0xff]
      %v3983 = vld [vmem:[#allocation2 + $0x39] sm:$0xff]
      %v3984 = vld [vmem:[#allocation2 + $0x49] sm:$0xff]
      %v3985 = vld [vmem:[#allocation2 + $0x51] sm:$0xff]
      %v3986 = vld [vmem:[#allocation2 + $0x61] sm:$0xff]
      %v3987 = vld [vmem:[#allocation2 + $0x69] sm:$0xff]
      %v3988 = vld [vmem:[#allocation2 + $0x79] sm:$0xff]
      %v3989 = vld [vmem:[#allocation2 + $0x81] sm:$0xff]
      %v3990 = vld [vmem:[#allocation2 + $0x91] sm:$0xff]
      %v3991 = vld [vmem:[#allocation2 + $0x99] sm:$0xff]
      %v3992 = vld [vmem:[#allocation2 + $0xa9] sm:$0xff]
      %v3993 = vld [vmem:[#allocation2 + $0xb1] sm:$0xff]
      %v3994 = vld [vmem:[#allocation2 + $0xc1] sm:$0xff]
      %v3995 = vld [vmem:[#allocation2 + $0xc9] sm:$0xff]
      %v3996 = vld [vmem:[#allocation2 + $0xd9] sm:$0xff]
      %v3997 = vld [vmem:[#allocation2 + $0xe1] sm:$0xff]
      %v3998 = vld [vmem:[#allocation2 + $0xf1] sm:$0xff]
      %v3999 = vld [vmem:[#allocation2 + $0xf9] sm:$0xff]
      %v4000 = vld [vmem:[#allocation2 + $0x109] sm:$0xff]
      %v4001 = vld [vmem:[#allocation2 + $0x111] sm:$0xff]
      %v4002 = vld [vmem:[#allocation2 + $0x121] sm:$0xff]
      %v4003 = vld [vmem:[#allocation2 + $0x129] sm:$0xff]
      %v4004 = vld [vmem:[#allocation2 + $0x139] sm:$0xff]
      %v4005 = vld [vmem:[#allocation2 + $0x141] sm:$0xff]
      %v4006 = vld [vmem:[#allocation2 + $0x151] sm:$0xff]
      %v4007 = vld [vmem:[#allocation2 + $0x159] sm:$0xff]
      %v4008 = vld [vmem:[#allocation2 + $0x169] sm:$0xff]
      %v4009 = vld [vmem:[#allocation2 + $0x171] sm:$0xff]
      %v4010 = vadd.f32 %v3978, %v3852
      %v4011 = vadd.f32 %v3979, %v3855
      %v4012 = vadd.f32 %v3980, %v3860
      %v4013 = vadd.f32 %v3981, %v3863
      %v4014 = vadd.f32 %v3982, %v3868
      %v4015 = vadd.f32 %v3983, %v3871
      %v4016 = vadd.f32 %v3984, %v3876
      %v4017 = vadd.f32 %v3985, %v3879
      %v4018 = vadd.f32 %v3986, %v3884
      %v4019 = vadd.f32 %v3987, %v3887
      %v4020 = vadd.f32 %v3988, %v3892
      %v4021 = vadd.f32 %v3989, %v3895
      %v4022 = vadd.f32 %v3990, %v3900
      %v4023 = vadd.f32 %v3991, %v3903
      %v4024 = vadd.f32 %v3992, %v3908
      %v4025 = vadd.f32 %v3993, %v3911
      %v4026 = vadd.f32 %v3994, %v3916
      %v4027 = vadd.f32 %v3995, %v3919
      %v4028 = vadd.f32 %v3996, %v3924
      %v4029 = vadd.f32 %v3997, %v3927
      %v4030 = vadd.f32 %v3998, %v3932
      %v4031 = vadd.f32 %v3999, %v3935
      %v4032 = vadd.f32 %v4000, %v3940
      %v4033 = vadd.f32 %v4001, %v3943
      %v4034 = vadd.f32 %v4002, %v3948
      %v4035 = vadd.f32 %v4003, %v3951
      %v4036 = vadd.f32 %v4004, %v3956
      %v4037 = vadd.f32 %v4005, %v3959
      %v4038 = vadd.f32 %v4006, %v3964
      %v4039 = vadd.f32 %v4007, %v3967
      %v4040 = vadd.f32 %v4008, %v3972
      %v4041 = vadd.f32 %v4009, %v3975
      %4042 = vst.msk [vmem:[#allocation2 + $0x1] sm:$0xff] %vm273, %v4010
      %4043 = vst.msk [vmem:[#allocation2 + $0x9] sm:$0xff] %vm273, %v4011
      %4044 = vst.msk [vmem:[#allocation2 + $0x19] sm:$0xff] %vm273, %v4012
      %4045 = vst.msk [vmem:[#allocation2 + $0x21] sm:$0xff] %vm273, %v4013
      %4046 = vst.msk [vmem:[#allocation2 + $0x31] sm:$0xff] %vm273, %v4014
      %4047 = vst.msk [vmem:[#allocation2 + $0x39] sm:$0xff] %vm273, %v4015
      %4048 = vst.msk [vmem:[#allocation2 + $0x49] sm:$0xff] %vm273, %v4016
      %4049 = vst.msk [vmem:[#allocation2 + $0x51] sm:$0xff] %vm273, %v4017
      %4050 = vst.msk [vmem:[#allocation2 + $0x61] sm:$0xff] %vm273, %v4018
      %4051 = vst.msk [vmem:[#allocation2 + $0x69] sm:$0xff] %vm273, %v4019
      %4052 = vst.msk [vmem:[#allocation2 + $0x79] sm:$0xff] %vm273, %v4020
      %4053 = vst.msk [vmem:[#allocation2 + $0x81] sm:$0xff] %vm273, %v4021
      %4054 = vst.msk [vmem:[#allocation2 + $0x91] sm:$0xff] %vm273, %v4022
      %4055 = vst.msk [vmem:[#allocation2 + $0x99] sm:$0xff] %vm273, %v4023
      %4056 = vst.msk [vmem:[#allocation2 + $0xa9] sm:$0xff] %vm273, %v4024
      %4057 = vst.msk [vmem:[#allocation2 + $0xb1] sm:$0xff] %vm273, %v4025
      %4058 = vst.msk [vmem:[#allocation2 + $0xc1] sm:$0xff] %vm273, %v4026
      %4059 = vst.msk [vmem:[#allocation2 + $0xc9] sm:$0xff] %vm273, %v4027
      %4060 = vst.msk [vmem:[#allocation2 + $0xd9] sm:$0xff] %vm273, %v4028
      %4061 = vst.msk [vmem:[#allocation2 + $0xe1] sm:$0xff] %vm273, %v4029
      %4062 = vst.msk [vmem:[#allocation2 + $0xf1] sm:$0xff] %vm273, %v4030
      %4063 = vst.msk [vmem:[#allocation2 + $0xf9] sm:$0xff] %vm273, %v4031
      %4064 = vst.msk [vmem:[#allocation2 + $0x109] sm:$0xff] %vm273, %v4032
      %4065 = vst.msk [vmem:[#allocation2 + $0x111] sm:$0xff] %vm273, %v4033
      %4066 = vst.msk [vmem:[#allocation2 + $0x121] sm:$0xff] %vm273, %v4034
      %4067 = vst.msk [vmem:[#allocation2 + $0x129] sm:$0xff] %vm273, %v4035
      %4068 = vst.msk [vmem:[#allocation2 + $0x139] sm:$0xff] %vm273, %v4036
      %4069 = vst.msk [vmem:[#allocation2 + $0x141] sm:$0xff] %vm273, %v4037
      %4070 = vst.msk [vmem:[#allocation2 + $0x151] sm:$0xff] %vm273, %v4038
      %4071 = vst.msk [vmem:[#allocation2 + $0x159] sm:$0xff] %vm273, %v4039
      %4072 = vst.msk [vmem:[#allocation2 + $0x169] sm:$0xff] %vm273, %v4040
      %4073 = vst.msk [vmem:[#allocation2 + $0x171] sm:$0xff] %vm273, %v4041
      %s4074 = scalar_lea.vmem %s2, 16
      %v4075 = vld [vmem:[%s4074] sm:$0x3]
      %s4076 = scalar_lea.vmem %s3, 16
      %v4077 = vld [vmem:[%s4076] sm:$0x3]
      %v4079 = vsel %vm523, %v4077, 0
      %4081 = vmatprep.subr.bf16.mxu0 0
      %4082 = vmatpush1.bf16.msra.mxu0 %v4079
      %4083 = vmatprep.subr.bf16.mxu0 0
      %4084 = vmatpush1.bf16.msra.mxu0 0
      %4085 = vmatprep.subr.bf16.mxu0 0
      %4086 = vmatpush1.bf16.msra.mxu0 0
      %4087 = vmatprep.subr.bf16.mxu0 0
      %4088 = vmatpush1.bf16.msra.mxu0 0
      %4089 = vmatprep.subr.bf16.mxu0 0
      %4090 = vmatpush1.bf16.msra.mxu0 0
      %4091 = vmatprep.subr.bf16.mxu0 0
      %4092 = vmatpush1.bf16.msra.mxu0 0
      %4093 = vmatprep.subr.bf16.mxu0 0
      %4094 = vmatpush1.bf16.msra.mxu0 0
      %4095 = vmatprep.subr.bf16.mxu0 0
      %4096 = vmatpush1.bf16.msra.mxu0 0
      %4097 = vmatprep.subr.bf16.mxu0 0
      %4098 = vmatpush1.bf16.msra.mxu0 0
      %4099 = vmatprep.subr.bf16.mxu0 0
      %4100 = vmatpush1.bf16.msra.mxu0 0
      %4101 = vmatprep.subr.bf16.mxu0 0
      %4102 = vmatpush1.bf16.msra.mxu0 0
      %4103 = vmatprep.subr.bf16.mxu0 0
      %4104 = vmatpush1.bf16.msra.mxu0 0
      %4105 = vmatprep.subr.bf16.mxu0 0
      %4106 = vmatpush1.bf16.msra.mxu0 0
      %4107 = vmatprep.subr.bf16.mxu0 0
      %4108 = vmatpush1.bf16.msra.mxu0 0
      %4109 = vmatprep.subr.bf16.mxu0 0
      %4110 = vmatpush1.bf16.msra.mxu0 0
      %4111 = vmatprep.subr.bf16.mxu0 0
      %4112 = vmatpush1.bf16.msra.mxu0 0
      %4113 = vmatprep.mubr.bf16.mxu0 0
      %4114 = vmatmul.mubr.bf16.gmra.mrb[0].mxu0 %v476
      %v4115 = vpop.f32.mrb[0].mxu0
      %v4116 = vadd.f32 0.0, %v4115
      %v4117 = vpop.f32.mrb[0].mxu0
      %v4118 = vpop.f32.mrb[0].mxu0
      %v4119 = vadd.f32 0.0, %v4118
      %v4120 = vpop.f32.mrb[0].mxu0
      %4121 = vmatprep.mubr.bf16.mxu0 0
      %4122 = vmatmul.mubr.bf16.gmra.mrb[0].mxu0 %v479
      %v4123 = vpop.f32.mrb[0].mxu0
      %v4124 = vadd.f32 0.0, %v4123
      %v4125 = vpop.f32.mrb[0].mxu0
      %v4126 = vpop.f32.mrb[0].mxu0
      %v4127 = vadd.f32 0.0, %v4126
      %v4128 = vpop.f32.mrb[0].mxu0
      %4129 = vmatprep.mubr.bf16.mxu0 0
      %4130 = vmatmul.mubr.bf16.gmra.mrb[0].mxu0 %v482
      %v4131 = vpop.f32.mrb[0].mxu0
      %v4132 = vadd.f32 0.0, %v4131
      %v4133 = vpop.f32.mrb[0].mxu0
      %v4134 = vpop.f32.mrb[0].mxu0
      %v4135 = vadd.f32 0.0, %v4134
      %v4136 = vpop.f32.mrb[0].mxu0
      %4137 = vmatprep.mubr.bf16.mxu0 0
      %4138 = vmatmul.mubr.bf16.gmra.mrb[0].mxu0 %v485
      %v4139 = vpop.f32.mrb[0].mxu0
      %v4140 = vadd.f32 0.0, %v4139
      %v4141 = vpop.f32.mrb[0].mxu0
      %v4142 = vpop.f32.mrb[0].mxu0
      %v4143 = vadd.f32 0.0, %v4142
      %v4144 = vpop.f32.mrb[0].mxu0
      %4145 = vmatprep.mubr.bf16.mxu0 0
      %4146 = vmatmul.mubr.bf16.gmra.mrb[0].mxu0 %v488
      %v4147 = vpop.f32.mrb[0].mxu0
      %v4148 = vadd.f32 0.0, %v4147
      %v4149 = vpop.f32.mrb[0].mxu0
      %v4150 = vpop.f32.mrb[0].mxu0
      %v4151 = vadd.f32 0.0, %v4150
      %v4152 = vpop.f32.mrb[0].mxu0
      %4153 = vmatprep.mubr.bf16.mxu0 0
      %4154 = vmatmul.mubr.bf16.gmra.mrb[0].mxu0 %v491
      %v4155 = vpop.f32.mrb[0].mxu0
      %v4156 = vadd.f32 0.0, %v4155
      %v4157 = vpop.f32.mrb[0].mxu0
      %v4158 = vpop.f32.mrb[0].mxu0
      %v4159 = vadd.f32 0.0, %v4158
      %v4160 = vpop.f32.mrb[0].mxu0
      %4161 = vmatprep.mubr.bf16.mxu0 0
      %4162 = vmatmul.mubr.bf16.gmra.mrb[0].mxu0 %v494
      %v4163 = vpop.f32.mrb[0].mxu0
      %v4164 = vadd.f32 0.0, %v4163
      %v4165 = vpop.f32.mrb[0].mxu0
      %v4166 = vpop.f32.mrb[0].mxu0
      %v4167 = vadd.f32 0.0, %v4166
      %v4168 = vpop.f32.mrb[0].mxu0
      %4169 = vmatprep.mubr.bf16.mxu0 0
      %4170 = vmatmul.mubr.bf16.gmra.mrb[0].mxu0 %v497
      %v4171 = vpop.f32.mrb[0].mxu0
      %v4172 = vadd.f32 0.0, %v4171
      %v4173 = vpop.f32.mrb[0].mxu0
      %v4174 = vpop.f32.mrb[0].mxu0
      %v4175 = vadd.f32 0.0, %v4174
      %v4176 = vpop.f32.mrb[0].mxu0
      %4177 = vmatprep.mubr.bf16.mxu0 0
      %4178 = vmatmul.mubr.bf16.gmra.mrb[0].mxu0 %v500
      %v4179 = vpop.f32.mrb[0].mxu0
      %v4180 = vadd.f32 0.0, %v4179
      %v4181 = vpop.f32.mrb[0].mxu0
      %v4182 = vpop.f32.mrb[0].mxu0
      %v4183 = vadd.f32 0.0, %v4182
      %v4184 = vpop.f32.mrb[0].mxu0
      %4185 = vmatprep.mubr.bf16.mxu0 0
      %4186 = vmatmul.mubr.bf16.gmra.mrb[0].mxu0 %v503
      %v4187 = vpop.f32.mrb[0].mxu0
      %v4188 = vadd.f32 0.0, %v4187
      %v4189 = vpop.f32.mrb[0].mxu0
      %v4190 = vpop.f32.mrb[0].mxu0
      %v4191 = vadd.f32 0.0, %v4190
      %v4192 = vpop.f32.mrb[0].mxu0
      %4193 = vmatprep.mubr.bf16.mxu0 0
      %4194 = vmatmul.mubr.bf16.gmra.mrb[0].mxu0 %v506
      %v4195 = vpop.f32.mrb[0].mxu0
      %v4196 = vadd.f32 0.0, %v4195
      %v4197 = vpop.f32.mrb[0].mxu0
      %v4198 = vpop.f32.mrb[0].mxu0
      %v4199 = vadd.f32 0.0, %v4198
      %v4200 = vpop.f32.mrb[0].mxu0
      %4201 = vmatprep.mubr.bf16.mxu0 0
      %4202 = vmatmul.mubr.bf16.gmra.mrb[0].mxu0 %v509
      %v4203 = vpop.f32.mrb[0].mxu0
      %v4204 = vadd.f32 0.0, %v4203
      %v4205 = vpop.f32.mrb[0].mxu0
      %v4206 = vpop.f32.mrb[0].mxu0
      %v4207 = vadd.f32 0.0, %v4206
      %v4208 = vpop.f32.mrb[0].mxu0
      %4209 = vmatprep.mubr.bf16.mxu0 0
      %4210 = vmatmul.mubr.bf16.gmra.mrb[0].mxu0 %v512
      %v4211 = vpop.f32.mrb[0].mxu0
      %v4212 = vadd.f32 0.0, %v4211
      %v4213 = vpop.f32.mrb[0].mxu0
      %v4214 = vpop.f32.mrb[0].mxu0
      %v4215 = vadd.f32 0.0, %v4214
      %v4216 = vpop.f32.mrb[0].mxu0
      %4217 = vmatprep.mubr.bf16.mxu0 0
      %4218 = vmatmul.mubr.bf16.gmra.mrb[0].mxu0 %v515
      %v4219 = vpop.f32.mrb[0].mxu0
      %v4220 = vadd.f32 0.0, %v4219
      %v4221 = vpop.f32.mrb[0].mxu0
      %v4222 = vpop.f32.mrb[0].mxu0
      %v4223 = vadd.f32 0.0, %v4222
      %v4224 = vpop.f32.mrb[0].mxu0
      %4225 = vmatprep.mubr.bf16.mxu0 0
      %4226 = vmatmul.mubr.bf16.gmra.mrb[0].mxu0 %v518
      %v4227 = vpop.f32.mrb[0].mxu0
      %v4228 = vadd.f32 0.0, %v4227
      %v4229 = vpop.f32.mrb[0].mxu0
      %v4230 = vpop.f32.mrb[0].mxu0
      %v4231 = vadd.f32 0.0, %v4230
      %v4232 = vpop.f32.mrb[0].mxu0
      %4233 = vmatprep.mubr.bf16.mxu0 0
      %4234 = vmatmul.mubr.bf16.gmra.mrb[0].mxu0 %v521
      %v4235 = vpop.f32.mrb[0].mxu0
      %v4236 = vadd.f32 0.0, %v4235
      %v4237 = vpop.f32.mrb[0].mxu0
      %v4238 = vpop.f32.mrb[0].mxu0
      %v4239 = vadd.f32 0.0, %v4238
      %v4240 = vpop.f32.mrb[0].mxu0
      %4241 = vdwg.mxu0
      %v4243 = vsel %vm523, %v4075, 0
      %4245 = vmatprep.subr.bf16.mxu0 0
      %4246 = vmatpush1.bf16.msra.mxu0 %v4243
      %4247 = vmatprep.subr.bf16.mxu0 0
      %4248 = vmatpush1.bf16.msra.mxu0 0
      %4249 = vmatprep.subr.bf16.mxu0 0
      %4250 = vmatpush1.bf16.msra.mxu0 0
      %4251 = vmatprep.subr.bf16.mxu0 0
      %4252 = vmatpush1.bf16.msra.mxu0 0
      %4253 = vmatprep.subr.bf16.mxu0 0
      %4254 = vmatpush1.bf16.msra.mxu0 0
      %4255 = vmatprep.subr.bf16.mxu0 0
      %4256 = vmatpush1.bf16.msra.mxu0 0
      %4257 = vmatprep.subr.bf16.mxu0 0
      %4258 = vmatpush1.bf16.msra.mxu0 0
      %4259 = vmatprep.subr.bf16.mxu0 0
      %4260 = vmatpush1.bf16.msra.mxu0 0
      %4261 = vmatprep.subr.bf16.mxu0 0
      %4262 = vmatpush1.bf16.msra.mxu0 0
      %4263 = vmatprep.subr.bf16.mxu0 0
      %4264 = vmatpush1.bf16.msra.mxu0 0
      %4265 = vmatprep.subr.bf16.mxu0 0
      %4266 = vmatpush1.bf16.msra.mxu0 0
      %4267 = vmatprep.subr.bf16.mxu0 0
      %4268 = vmatpush1.bf16.msra.mxu0 0
      %4269 = vmatprep.subr.bf16.mxu0 0
      %4270 = vmatpush1.bf16.msra.mxu0 0
      %4271 = vmatprep.subr.bf16.mxu0 0
      %4272 = vmatpush1.bf16.msra.mxu0 0
      %4273 = vmatprep.subr.bf16.mxu0 0
      %4274 = vmatpush1.bf16.msra.mxu0 0
      %4275 = vmatprep.subr.bf16.mxu0 0
      %4276 = vmatpush1.bf16.msra.mxu0 0
      %4277 = vmatprep.mubr.bf16.mxu0 0
      %4278 = vmatmul.mubr.bf16.gmra.mrb[0].mxu0 %v769
      %v4279 = vpop.f32.mrb[0].mxu0
      %v4280 = vadd.f32 %v4116, %v4279
      %v4281 = vpop.f32.mrb[0].mxu0
      %v4282 = vpop.f32.mrb[0].mxu0
      %v4283 = vadd.f32 %v4119, %v4282
      %v4284 = vpop.f32.mrb[0].mxu0
      %4285 = vmatprep.mubr.bf16.mxu0 0
      %4286 = vmatmul.mubr.bf16.gmra.mrb[0].mxu0 %v772
      %v4287 = vpop.f32.mrb[0].mxu0
      %v4288 = vadd.f32 %v4124, %v4287
      %v4289 = vpop.f32.mrb[0].mxu0
      %v4290 = vpop.f32.mrb[0].mxu0
      %v4291 = vadd.f32 %v4127, %v4290
      %v4292 = vpop.f32.mrb[0].mxu0
      %4293 = vmatprep.mubr.bf16.mxu0 0
      %4294 = vmatmul.mubr.bf16.gmra.mrb[0].mxu0 %v775
      %v4295 = vpop.f32.mrb[0].mxu0
      %v4296 = vadd.f32 %v4132, %v4295
      %v4297 = vpop.f32.mrb[0].mxu0
      %v4298 = vpop.f32.mrb[0].mxu0
      %v4299 = vadd.f32 %v4135, %v4298
      %v4300 = vpop.f32.mrb[0].mxu0
      %4301 = vmatprep.mubr.bf16.mxu0 0
      %4302 = vmatmul.mubr.bf16.gmra.mrb[0].mxu0 %v778
      %v4303 = vpop.f32.mrb[0].mxu0
      %v4304 = vadd.f32 %v4140, %v4303
      %v4305 = vpop.f32.mrb[0].mxu0
      %v4306 = vpop.f32.mrb[0].mxu0
      %v4307 = vadd.f32 %v4143, %v4306
      %v4308 = vpop.f32.mrb[0].mxu0
      %4309 = vmatprep.mubr.bf16.mxu0 0
      %4310 = vmatmul.mubr.bf16.gmra.mrb[0].mxu0 %v781
      %v4311 = vpop.f32.mrb[0].mxu0
      %v4312 = vadd.f32 %v4148, %v4311
      %v4313 = vpop.f32.mrb[0].mxu0
      %v4314 = vpop.f32.mrb[0].mxu0
      %v4315 = vadd.f32 %v4151, %v4314
      %v4316 = vpop.f32.mrb[0].mxu0
      %4317 = vmatprep.mubr.bf16.mxu0 0
      %4318 = vmatmul.mubr.bf16.gmra.mrb[0].mxu0 %v784
      %v4319 = vpop.f32.mrb[0].mxu0
      %v4320 = vadd.f32 %v4156, %v4319
      %v4321 = vpop.f32.mrb[0].mxu0
      %v4322 = vpop.f32.mrb[0].mxu0
      %v4323 = vadd.f32 %v4159, %v4322
      %v4324 = vpop.f32.mrb[0].mxu0
      %4325 = vmatprep.mubr.bf16.mxu0 0
      %4326 = vmatmul.mubr.bf16.gmra.mrb[0].mxu0 %v787
      %v4327 = vpop.f32.mrb[0].mxu0
      %v4328 = vadd.f32 %v4164, %v4327
      %v4329 = vpop.f32.mrb[0].mxu0
      %v4330 = vpop.f32.mrb[0].mxu0
      %v4331 = vadd.f32 %v4167, %v4330
      %v4332 = vpop.f32.mrb[0].mxu0
      %4333 = vmatprep.mubr.bf16.mxu0 0
      %4334 = vmatmul.mubr.bf16.gmra.mrb[0].mxu0 %v790
      %v4335 = vpop.f32.mrb[0].mxu0
      %v4336 = vadd.f32 %v4172, %v4335
      %v4337 = vpop.f32.mrb[0].mxu0
      %v4338 = vpop.f32.mrb[0].mxu0
      %v4339 = vadd.f32 %v4175, %v4338
      %v4340 = vpop.f32.mrb[0].mxu0
      %4341 = vmatprep.mubr.bf16.mxu0 0
      %4342 = vmatmul.mubr.bf16.gmra.mrb[0].mxu0 %v793
      %v4343 = vpop.f32.mrb[0].mxu0
      %v4344 = vadd.f32 %v4180, %v4343
      %v4345 = vpop.f32.mrb[0].mxu0
      %v4346 = vpop.f32.mrb[0].mxu0
      %v4347 = vadd.f32 %v4183, %v4346
      %v4348 = vpop.f32.mrb[0].mxu0
      %4349 = vmatprep.mubr.bf16.mxu0 0
      %4350 = vmatmul.mubr.bf16.gmra.mrb[0].mxu0 %v796
      %v4351 = vpop.f32.mrb[0].mxu0
      %v4352 = vadd.f32 %v4188, %v4351
      %v4353 = vpop.f32.mrb[0].mxu0
      %v4354 = vpop.f32.mrb[0].mxu0
      %v4355 = vadd.f32 %v4191, %v4354
      %v4356 = vpop.f32.mrb[0].mxu0
      %4357 = vmatprep.mubr.bf16.mxu0 0
      %4358 = vmatmul.mubr.bf16.gmra.mrb[0].mxu0 %v799
      %v4359 = vpop.f32.mrb[0].mxu0
      %v4360 = vadd.f32 %v4196, %v4359
      %v4361 = vpop.f32.mrb[0].mxu0
      %v4362 = vpop.f32.mrb[0].mxu0
      %v4363 = vadd.f32 %v4199, %v4362
      %v4364 = vpop.f32.mrb[0].mxu0
      %4365 = vmatprep.mubr.bf16.mxu0 0
      %4366 = vmatmul.mubr.bf16.gmra.mrb[0].mxu0 %v802
      %v4367 = vpop.f32.mrb[0].mxu0
      %v4368 = vadd.f32 %v4204, %v4367
      %v4369 = vpop.f32.mrb[0].mxu0
      %v4370 = vpop.f32.mrb[0].mxu0
      %v4371 = vadd.f32 %v4207, %v4370
      %v4372 = vpop.f32.mrb[0].mxu0
      %4373 = vmatprep.mubr.bf16.mxu0 0
      %4374 = vmatmul.mubr.bf16.gmra.mrb[0].mxu0 %v805
      %v4375 = vpop.f32.mrb[0].mxu0
      %v4376 = vadd.f32 %v4212, %v4375
      %v4377 = vpop.f32.mrb[0].mxu0
      %v4378 = vpop.f32.mrb[0].mxu0
      %v4379 = vadd.f32 %v4215, %v4378
      %v4380 = vpop.f32.mrb[0].mxu0
      %4381 = vmatprep.mubr.bf16.mxu0 0
      %4382 = vmatmul.mubr.bf16.gmra.mrb[0].mxu0 %v808
      %v4383 = vpop.f32.mrb[0].mxu0
      %v4384 = vadd.f32 %v4220, %v4383
      %v4385 = vpop.f32.mrb[0].mxu0
      %v4386 = vpop.f32.mrb[0].mxu0
      %v4387 = vadd.f32 %v4223, %v4386
      %v4388 = vpop.f32.mrb[0].mxu0
      %4389 = vmatprep.mubr.bf16.mxu0 0
      %4390 = vmatmul.mubr.bf16.gmra.mrb[0].mxu0 %v811
      %v4391 = vpop.f32.mrb[0].mxu0
      %v4392 = vadd.f32 %v4228, %v4391
      %v4393 = vpop.f32.mrb[0].mxu0
      %v4394 = vpop.f32.mrb[0].mxu0
      %v4395 = vadd.f32 %v4231, %v4394
      %v4396 = vpop.f32.mrb[0].mxu0
      %4397 = vmatprep.mubr.bf16.mxu0 0
      %4398 = vmatmul.mubr.bf16.gmra.mrb[0].mxu0 %v814
      %v4399 = vpop.f32.mrb[0].mxu0
      %v4400 = vadd.f32 %v4236, %v4399
      %v4401 = vpop.f32.mrb[0].mxu0
      %v4402 = vpop.f32.mrb[0].mxu0
      %v4403 = vadd.f32 %v4239, %v4402
      %v4404 = vpop.f32.mrb[0].mxu0
      %4405 = vdwg.mxu0
      %v4406 = vld [vmem:[#allocation2] sm:$0xff]
      %v4407 = vld [vmem:[#allocation2 + $0x8] sm:$0xff]
      %v4408 = vld [vmem:[#allocation2 + $0x18] sm:$0xff]
      %v4409 = vld [vmem:[#allocation2 + $0x20] sm:$0xff]
      %v4410 = vld [vmem:[#allocation2 + $0x30] sm:$0xff]
      %v4411 = vld [vmem:[#allocation2 + $0x38] sm:$0xff]
      %v4412 = vld [vmem:[#allocation2 + $0x48] sm:$0xff]
      %v4413 = vld [vmem:[#allocation2 + $0x50] sm:$0xff]
      %v4414 = vld [vmem:[#allocation2 + $0x60] sm:$0xff]
      %v4415 = vld [vmem:[#allocation2 + $0x68] sm:$0xff]
      %v4416 = vld [vmem:[#allocation2 + $0x78] sm:$0xff]
      %v4417 = vld [vmem:[#allocation2 + $0x80] sm:$0xff]
      %v4418 = vld [vmem:[#allocation2 + $0x90] sm:$0xff]
      %v4419 = vld [vmem:[#allocation2 + $0x98] sm:$0xff]
      %v4420 = vld [vmem:[#allocation2 + $0xa8] sm:$0xff]
      %v4421 = vld [vmem:[#allocation2 + $0xb0] sm:$0xff]
      %v4422 = vld [vmem:[#allocation2 + $0xc0] sm:$0xff]
      %v4423 = vld [vmem:[#allocation2 + $0xc8] sm:$0xff]
      %v4424 = vld [vmem:[#allocation2 + $0xd8] sm:$0xff]
      %v4425 = vld [vmem:[#allocation2 + $0xe0] sm:$0xff]
      %v4426 = vld [vmem:[#allocation2 + $0xf0] sm:$0xff]
      %v4427 = vld [vmem:[#allocation2 + $0xf8] sm:$0xff]
      %v4428 = vld [vmem:[#allocation2 + $0x108] sm:$0xff]
      %v4429 = vld [vmem:[#allocation2 + $0x110] sm:$0xff]
      %v4430 = vld [vmem:[#allocation2 + $0x120] sm:$0xff]
      %v4431 = vld [vmem:[#allocation2 + $0x128] sm:$0xff]
      %v4432 = vld [vmem:[#allocation2 + $0x138] sm:$0xff]
      %v4433 = vld [vmem:[#allocation2 + $0x140] sm:$0xff]
      %v4434 = vld [vmem:[#allocation2 + $0x150] sm:$0xff]
      %v4435 = vld [vmem:[#allocation2 + $0x158] sm:$0xff]
      %v4436 = vld [vmem:[#allocation2 + $0x168] sm:$0xff]
      %v4437 = vld [vmem:[#allocation2 + $0x170] sm:$0xff]
      %v4438 = vadd.f32 %v4406, %v4280
      %v4439 = vadd.f32 %v4407, %v4283
      %v4440 = vadd.f32 %v4408, %v4288
      %v4441 = vadd.f32 %v4409, %v4291
      %v4442 = vadd.f32 %v4410, %v4296
      %v4443 = vadd.f32 %v4411, %v4299
      %v4444 = vadd.f32 %v4412, %v4304
      %v4445 = vadd.f32 %v4413, %v4307
      %v4446 = vadd.f32 %v4414, %v4312
      %v4447 = vadd.f32 %v4415, %v4315
      %v4448 = vadd.f32 %v4416, %v4320
      %v4449 = vadd.f32 %v4417, %v4323
      %v4450 = vadd.f32 %v4418, %v4328
      %v4451 = vadd.f32 %v4419, %v4331
      %v4452 = vadd.f32 %v4420, %v4336
      %v4453 = vadd.f32 %v4421, %v4339
      %v4454 = vadd.f32 %v4422, %v4344
      %v4455 = vadd.f32 %v4423, %v4347
      %v4456 = vadd.f32 %v4424, %v4352
      %v4457 = vadd.f32 %v4425, %v4355
      %v4458 = vadd.f32 %v4426, %v4360
      %v4459 = vadd.f32 %v4427, %v4363
      %v4460 = vadd.f32 %v4428, %v4368
      %v4461 = vadd.f32 %v4429, %v4371
      %v4462 = vadd.f32 %v4430, %v4376
      %v4463 = vadd.f32 %v4431, %v4379
      %v4464 = vadd.f32 %v4432, %v4384
      %v4465 = vadd.f32 %v4433, %v4387
      %v4466 = vadd.f32 %v4434, %v4392
      %v4467 = vadd.f32 %v4435, %v4395
      %v4468 = vadd.f32 %v4436, %v4400
      %v4469 = vadd.f32 %v4437, %v4403
      %4470 = vst.msk [vmem:[#allocation2] sm:$0xff] %vm273, %v4438
      %4471 = vst.msk [vmem:[#allocation2 + $0x8] sm:$0xff] %vm273, %v4439
      %4472 = vst.msk [vmem:[#allocation2 + $0x18] sm:$0xff] %vm273, %v4440
      %4473 = vst.msk [vmem:[#allocation2 + $0x20] sm:$0xff] %vm273, %v4441
      %4474 = vst.msk [vmem:[#allocation2 + $0x30] sm:$0xff] %vm273, %v4442
      %4475 = vst.msk [vmem:[#allocation2 + $0x38] sm:$0xff] %vm273, %v4443
      %4476 = vst.msk [vmem:[#allocation2 + $0x48] sm:$0xff] %vm273, %v4444
      %4477 = vst.msk [vmem:[#allocation2 + $0x50] sm:$0xff] %vm273, %v4445
      %4478 = vst.msk [vmem:[#allocation2 + $0x60] sm:$0xff] %vm273, %v4446
      %4479 = vst.msk [vmem:[#allocation2 + $0x68] sm:$0xff] %vm273, %v4447
      %4480 = vst.msk [vmem:[#allocation2 + $0x78] sm:$0xff] %vm273, %v4448
      %4481 = vst.msk [vmem:[#allocation2 + $0x80] sm:$0xff] %vm273, %v4449
      %4482 = vst.msk [vmem:[#allocation2 + $0x90] sm:$0xff] %vm273, %v4450
      %4483 = vst.msk [vmem:[#allocation2 + $0x98] sm:$0xff] %vm273, %v4451
      %4484 = vst.msk [vmem:[#allocation2 + $0xa8] sm:$0xff] %vm273, %v4452
      %4485 = vst.msk [vmem:[#allocation2 + $0xb0] sm:$0xff] %vm273, %v4453
      %4486 = vst.msk [vmem:[#allocation2 + $0xc0] sm:$0xff] %vm273, %v4454
      %4487 = vst.msk [vmem:[#allocation2 + $0xc8] sm:$0xff] %vm273, %v4455
      %4488 = vst.msk [vmem:[#allocation2 + $0xd8] sm:$0xff] %vm273, %v4456
      %4489 = vst.msk [vmem:[#allocation2 + $0xe0] sm:$0xff] %vm273, %v4457
      %4490 = vst.msk [vmem:[#allocation2 + $0xf0] sm:$0xff] %vm273, %v4458
      %4491 = vst.msk [vmem:[#allocation2 + $0xf8] sm:$0xff] %vm273, %v4459
      %4492 = vst.msk [vmem:[#allocation2 + $0x108] sm:$0xff] %vm273, %v4460
      %4493 = vst.msk [vmem:[#allocation2 + $0x110] sm:$0xff] %vm273, %v4461
      %4494 = vst.msk [vmem:[#allocation2 + $0x120] sm:$0xff] %vm273, %v4462
      %4495 = vst.msk [vmem:[#allocation2 + $0x128] sm:$0xff] %vm273, %v4463
      %4496 = vst.msk [vmem:[#allocation2 + $0x138] sm:$0xff] %vm273, %v4464
      %4497 = vst.msk [vmem:[#allocation2 + $0x140] sm:$0xff] %vm273, %v4465
      %4498 = vst.msk [vmem:[#allocation2 + $0x150] sm:$0xff] %vm273, %v4466
      %4499 = vst.msk [vmem:[#allocation2 + $0x158] sm:$0xff] %vm273, %v4467
      %4500 = vst.msk [vmem:[#allocation2 + $0x168] sm:$0xff] %vm273, %v4468
      %4501 = vst.msk [vmem:[#allocation2 + $0x170] sm:$0xff] %vm273, %v4469
      %v4502 = vld [vmem:[%s2265 + $0x1] sm:$0xff]
      %v4503 = vld [vmem:[%s2265 + $0x9] sm:$0xff]
      %v4504 = vld [vmem:[%s2265 + $0x19] sm:$0xff]
      %v4505 = vld [vmem:[%s2265 + $0x21] sm:$0xff]
      %v4506 = vld [vmem:[%s2265 + $0x31] sm:$0xff]
      %v4507 = vld [vmem:[%s2265 + $0x39] sm:$0xff]
      %v4508 = vld [vmem:[%s2265 + $0x49] sm:$0xff]
      %v4509 = vld [vmem:[%s2265 + $0x51] sm:$0xff]
      %v4510 = vld [vmem:[%s2265 + $0x61] sm:$0xff]
      %v4511 = vld [vmem:[%s2265 + $0x69] sm:$0xff]
      %v4512 = vld [vmem:[%s2265 + $0x79] sm:$0xff]
      %v4513 = vld [vmem:[%s2265 + $0x81] sm:$0xff]
      %v4514 = vld [vmem:[%s2265 + $0x91] sm:$0xff]
      %v4515 = vld [vmem:[%s2265 + $0x99] sm:$0xff]
      %v4516 = vld [vmem:[%s2265 + $0xa9] sm:$0xff]
      %v4517 = vld [vmem:[%s2265 + $0xb1] sm:$0xff]
      %v4518 = vld [vmem:[%s2265 + $0xc1] sm:$0xff]
      %v4519 = vld [vmem:[%s2265 + $0xc9] sm:$0xff]
      %v4520 = vld [vmem:[%s2265 + $0xd9] sm:$0xff]
      %v4521 = vld [vmem:[%s2265 + $0xe1] sm:$0xff]
      %v4522 = vld [vmem:[%s2265 + $0xf1] sm:$0xff]
      %v4523 = vld [vmem:[%s2265 + $0xf9] sm:$0xff]
      %v4524 = vld [vmem:[%s2265 + $0x109] sm:$0xff]
      %v4525 = vld [vmem:[%s2265 + $0x111] sm:$0xff]
      %v4526 = vld [vmem:[%s2265 + $0x121] sm:$0xff]
      %v4527 = vld [vmem:[%s2265 + $0x129] sm:$0xff]
      %v4528 = vld [vmem:[%s2265 + $0x139] sm:$0xff]
      %v4529 = vld [vmem:[%s2265 + $0x141] sm:$0xff]
      %v4530 = vld [vmem:[%s2265 + $0x151] sm:$0xff]
      %v4531 = vld [vmem:[%s2265 + $0x159] sm:$0xff]
      %v4532 = vld [vmem:[%s2265 + $0x169] sm:$0xff]
      %v4533 = vld [vmem:[%s2265 + $0x171] sm:$0xff]
      %v4534 = vld [vmem:[%s4] sm:$0x1]
      %v4536 = vlaneseq
      %v4537 = vshrl.u32 %v4536, 7
      %v4538 = vsub.s32 0, %v4537
      %v4539 = vrot.slane %v4534, %v4538
      %v4541 = vmul.f32 %v4502, %v4539
      %v4542 = vmul.f32 %v4503, %v4539
      %v4543 = vmul.f32 %v4504, %v4539
      %v4544 = vmul.f32 %v4505, %v4539
      %v4545 = vmul.f32 %v4506, %v4539
      %v4546 = vmul.f32 %v4507, %v4539
      %v4547 = vmul.f32 %v4508, %v4539
      %v4548 = vmul.f32 %v4509, %v4539
      %v4549 = vmul.f32 %v4510, %v4539
      %v4550 = vmul.f32 %v4511, %v4539
      %v4551 = vmul.f32 %v4512, %v4539
      %v4552 = vmul.f32 %v4513, %v4539
      %v4553 = vmul.f32 %v4514, %v4539
      %v4554 = vmul.f32 %v4515, %v4539
      %v4555 = vmul.f32 %v4516, %v4539
      %v4556 = vmul.f32 %v4517, %v4539
      %v4557 = vmul.f32 %v4518, %v4539
      %v4558 = vmul.f32 %v4519, %v4539
      %v4559 = vmul.f32 %v4520, %v4539
      %v4560 = vmul.f32 %v4521, %v4539
      %v4561 = vmul.f32 %v4522, %v4539
      %v4562 = vmul.f32 %v4523, %v4539
      %v4563 = vmul.f32 %v4524, %v4539
      %v4564 = vmul.f32 %v4525, %v4539
      %v4565 = vmul.f32 %v4526, %v4539
      %v4566 = vmul.f32 %v4527, %v4539
      %v4567 = vmul.f32 %v4528, %v4539
      %v4568 = vmul.f32 %v4529, %v4539
      %v4569 = vmul.f32 %v4530, %v4539
      %v4570 = vmul.f32 %v4531, %v4539
      %v4571 = vmul.f32 %v4532, %v4539
      %v4572 = vmul.f32 %v4533, %v4539
      %v4573 = vld [vmem:[%s5] sm:$0x1]
      %v4575 = vlaneseq
      %v4576 = vshrl.u32 %v4575, 7
      %v4577 = vsub.s32 0, %v4576
      %v4578 = vrot.slane %v4573, %v4577
      %v4580 = vadd.f32 %v4541, %v4578
      %v4581 = vadd.f32 %v4542, %v4578
      %v4582 = vadd.f32 %v4543, %v4578
      %v4583 = vadd.f32 %v4544, %v4578
      %v4584 = vadd.f32 %v4545, %v4578
      %v4585 = vadd.f32 %v4546, %v4578
      %v4586 = vadd.f32 %v4547, %v4578
      %v4587 = vadd.f32 %v4548, %v4578
      %v4588 = vadd.f32 %v4549, %v4578
      %v4589 = vadd.f32 %v4550, %v4578
      %v4590 = vadd.f32 %v4551, %v4578
      %v4591 = vadd.f32 %v4552, %v4578
      %v4592 = vadd.f32 %v4553, %v4578
      %v4593 = vadd.f32 %v4554, %v4578
      %v4594 = vadd.f32 %v4555, %v4578
      %v4595 = vadd.f32 %v4556, %v4578
      %v4596 = vadd.f32 %v4557, %v4578
      %v4597 = vadd.f32 %v4558, %v4578
      %v4598 = vadd.f32 %v4559, %v4578
      %v4599 = vadd.f32 %v4560, %v4578
      %v4600 = vadd.f32 %v4561, %v4578
      %v4601 = vadd.f32 %v4562, %v4578
      %v4602 = vadd.f32 %v4563, %v4578
      %v4603 = vadd.f32 %v4564, %v4578
      %v4604 = vadd.f32 %v4565, %v4578
      %v4605 = vadd.f32 %v4566, %v4578
      %v4606 = vadd.f32 %v4567, %v4578
      %v4607 = vadd.f32 %v4568, %v4578
      %v4608 = vadd.f32 %v4569, %v4578
      %v4609 = vadd.f32 %v4570, %v4578
      %v4610 = vadd.f32 %v4571, %v4578
      %v4611 = vadd.f32 %v4572, %v4578
      %v4612 = vmax.f32 %v4580, 0.0
      %v4613 = vmax.f32 %v4581, 0.0
      %v4614 = vmax.f32 %v4582, 0.0
      %v4615 = vmax.f32 %v4583, 0.0
      %v4616 = vmax.f32 %v4584, 0.0
      %v4617 = vmax.f32 %v4585, 0.0
      %v4618 = vmax.f32 %v4586, 0.0
      %v4619 = vmax.f32 %v4587, 0.0
      %v4620 = vmax.f32 %v4588, 0.0
      %v4621 = vmax.f32 %v4589, 0.0
      %v4622 = vmax.f32 %v4590, 0.0
      %v4623 = vmax.f32 %v4591, 0.0
      %v4624 = vmax.f32 %v4592, 0.0
      %v4625 = vmax.f32 %v4593, 0.0
      %v4626 = vmax.f32 %v4594, 0.0
      %v4627 = vmax.f32 %v4595, 0.0
      %v4628 = vmax.f32 %v4596, 0.0
      %v4629 = vmax.f32 %v4597, 0.0
      %v4630 = vmax.f32 %v4598, 0.0
      %v4631 = vmax.f32 %v4599, 0.0
      %v4632 = vmax.f32 %v4600, 0.0
      %v4633 = vmax.f32 %v4601, 0.0
      %v4634 = vmax.f32 %v4602, 0.0
      %v4635 = vmax.f32 %v4603, 0.0
      %v4636 = vmax.f32 %v4604, 0.0
      %v4637 = vmax.f32 %v4605, 0.0
      %v4638 = vmax.f32 %v4606, 0.0
      %v4639 = vmax.f32 %v4607, 0.0
      %v4640 = vmax.f32 %v4608, 0.0
      %v4641 = vmax.f32 %v4609, 0.0
      %v4642 = vmax.f32 %v4610, 0.0
      %v4643 = vmax.f32 %v4611, 0.0
      %v4644 = vpack.c.bf16 %v4613, %v4612
      %v4645 = vpack.c.bf16 %v4615, %v4614
      %v4646 = vpack.c.bf16 %v4617, %v4616
      %v4647 = vpack.c.bf16 %v4619, %v4618
      %v4648 = vpack.c.bf16 %v4621, %v4620
      %v4649 = vpack.c.bf16 %v4623, %v4622
      %v4650 = vpack.c.bf16 %v4625, %v4624
      %v4651 = vpack.c.bf16 %v4627, %v4626
      %v4652 = vpack.c.bf16 %v4629, %v4628
      %v4653 = vpack.c.bf16 %v4631, %v4630
      %v4654 = vpack.c.bf16 %v4633, %v4632
      %v4655 = vpack.c.bf16 %v4635, %v4634
      %v4656 = vpack.c.bf16 %v4637, %v4636
      %v4657 = vpack.c.bf16 %v4639, %v4638
      %v4658 = vpack.c.bf16 %v4641, %v4640
      %v4659 = vpack.c.bf16 %v4643, %v4642
      %v4676 = vunpack.c.l.b16 %v4644
      %v4677 = vunpack.c.h.b16 %v4644
      %v4678 = vunpack.c.l.b16 %v4645
      %v4679 = vunpack.c.h.b16 %v4645
      %v4680 = vunpack.c.l.b16 %v4646
      %v4681 = vunpack.c.h.b16 %v4646
      %v4682 = vunpack.c.l.b16 %v4647
      %v4683 = vunpack.c.h.b16 %v4647
      %v4684 = vunpack.c.l.b16 %v4648
      %v4685 = vunpack.c.h.b16 %v4648
      %v4686 = vunpack.c.l.b16 %v4649
      %v4687 = vunpack.c.h.b16 %v4649
      %v4688 = vunpack.c.l.b16 %v4650
      %v4689 = vunpack.c.h.b16 %v4650
      %v4690 = vunpack.c.l.b16 %v4651
      %v4691 = vunpack.c.h.b16 %v4651
      %v4692 = vunpack.c.l.b16 %v4652
      %v4693 = vunpack.c.h.b16 %v4652
      %v4694 = vunpack.c.l.b16 %v4653
      %v4695 = vunpack.c.h.b16 %v4653
      %v4696 = vunpack.c.l.b16 %v4654
      %v4697 = vunpack.c.h.b16 %v4654
      %v4698 = vunpack.c.l.b16 %v4655
      %v4699 = vunpack.c.h.b16 %v4655
      %v4700 = vunpack.c.l.b16 %v4656
      %v4701 = vunpack.c.h.b16 %v4656
      %v4702 = vunpack.c.l.b16 %v4657
      %v4703 = vunpack.c.h.b16 %v4657
      %v4704 = vunpack.c.l.b16 %v4658
      %v4705 = vunpack.c.h.b16 %v4658
      %v4706 = vunpack.c.l.b16 %v4659
      %v4707 = vunpack.c.h.b16 %v4659
      %v4708 = vpack.c.b16 %v4676, %v4676
      %v4709 = vpack.c.b16 %v4677, %v4677
      %v4710 = vpack.c.b16 %v4678, %v4678
      %v4711 = vpack.c.b16 %v4679, %v4679
      %v4712 = vpack.c.b16 %v4680, %v4680
      %v4713 = vpack.c.b16 %v4681, %v4681
      %v4714 = vpack.c.b16 %v4682, %v4682
      %v4715 = vpack.c.b16 %v4683, %v4683
      %v4716 = vpack.c.b16 %v4684, %v4684
      %v4717 = vpack.c.b16 %v4685, %v4685
      %v4718 = vpack.c.b16 %v4686, %v4686
      %v4719 = vpack.c.b16 %v4687, %v4687
      %v4720 = vpack.c.b16 %v4688, %v4688
      %v4721 = vpack.c.b16 %v4689, %v4689
      %v4722 = vpack.c.b16 %v4690, %v4690
      %v4723 = vpack.c.b16 %v4691, %v4691
      %v4724 = vpack.c.b16 %v4692, %v4692
      %v4725 = vpack.c.b16 %v4693, %v4693
      %v4726 = vpack.c.b16 %v4694, %v4694
      %v4727 = vpack.c.b16 %v4695, %v4695
      %v4728 = vpack.c.b16 %v4696, %v4696
      %v4729 = vpack.c.b16 %v4697, %v4697
      %v4730 = vpack.c.b16 %v4698, %v4698
      %v4731 = vpack.c.b16 %v4699, %v4699
      %v4732 = vpack.c.b16 %v4700, %v4700
      %v4733 = vpack.c.b16 %v4701, %v4701
      %v4734 = vpack.c.b16 %v4702, %v4702
      %v4735 = vpack.c.b16 %v4703, %v4703
      %v4736 = vpack.c.b16 %v4704, %v4704
      %v4737 = vpack.c.b16 %v4705, %v4705
      %v4738 = vpack.c.b16 %v4706, %v4706
      %v4739 = vpack.c.b16 %v4707, %v4707
      %vm4772 = vcmask 27648
      %4773 = vst.msk [vmem:[%s271] sm:$0xf] %vm4772, %v4708
      %4774 = vst.msk [vmem:[%s271 + $0x4] sm:$0xf] %vm4772, %v4709
      %4775 = vst.msk [vmem:[%s271 + $0x8] sm:$0xf] %vm4772, %v4710
      %4776 = vst.msk [vmem:[%s271 + $0xc] sm:$0xf] %vm4772, %v4711
      %4777 = vst.msk [vmem:[%s271 + $0x10] sm:$0xf] %vm4772, %v4712
      %4778 = vst.msk [vmem:[%s271 + $0x14] sm:$0xf] %vm4772, %v4713
      %4779 = vst.msk [vmem:[%s271 + $0x18] sm:$0xf] %vm4772, %v4714
      %4780 = vst.msk [vmem:[%s271 + $0x1c] sm:$0xf] %vm4772, %v4715
      %4781 = vst.msk [vmem:[%s271 + $0x20] sm:$0xf] %vm4772, %v4716
      %4782 = vst.msk [vmem:[%s271 + $0x24] sm:$0xf] %vm4772, %v4717
      %4783 = vst.msk [vmem:[%s271 + $0x28] sm:$0xf] %vm4772, %v4718
      %4784 = vst.msk [vmem:[%s271 + $0x2c] sm:$0xf] %vm4772, %v4719
      %4785 = vst.msk [vmem:[%s271 + $0x30] sm:$0xf] %vm4772, %v4720
      %4786 = vst.msk [vmem:[%s271 + $0x34] sm:$0xf] %vm4772, %v4721
      %4787 = vst.msk [vmem:[%s271 + $0x38] sm:$0xf] %vm4772, %v4722
      %4788 = vst.msk [vmem:[%s271 + $0x3c] sm:$0xf] %vm4772, %v4723
      %4789 = vst.msk [vmem:[%s271 + $0x40] sm:$0xf] %vm4772, %v4724
      %4790 = vst.msk [vmem:[%s271 + $0x44] sm:$0xf] %vm4772, %v4725
      %4791 = vst.msk [vmem:[%s271 + $0x48] sm:$0xf] %vm4772, %v4726
      %4792 = vst.msk [vmem:[%s271 + $0x4c] sm:$0xf] %vm4772, %v4727
      %4793 = vst.msk [vmem:[%s271 + $0x50] sm:$0xf] %vm4772, %v4728
      %4794 = vst.msk [vmem:[%s271 + $0x54] sm:$0xf] %vm4772, %v4729
      %4795 = vst.msk [vmem:[%s271 + $0x58] sm:$0xf] %vm4772, %v4730
      %4796 = vst.msk [vmem:[%s271 + $0x5c] sm:$0xf] %vm4772, %v4731
      %4797 = vst.msk [vmem:[%s271 + $0x60] sm:$0xf] %vm4772, %v4732
      %4798 = vst.msk [vmem:[%s271 + $0x64] sm:$0xf] %vm4772, %v4733
      %4799 = vst.msk [vmem:[%s271 + $0x68] sm:$0xf] %vm4772, %v4734
      %4800 = vst.msk [vmem:[%s271 + $0x6c] sm:$0xf] %vm4772, %v4735
      %4801 = vst.msk [vmem:[%s271 + $0x70] sm:$0xf] %vm4772, %v4736
      %4802 = vst.msk [vmem:[%s271 + $0x74] sm:$0xf] %vm4772, %v4737
      %4803 = vst.msk [vmem:[%s271 + $0x78] sm:$0xf] %vm4772, %v4738
      %4804 = vst.msk [vmem:[%s271 + $0x7c] sm:$0xf] %vm4772, %v4739
      %p4805 = scmp.lt.s32.totalorder %s17, 1
      %s4806 = scalar_select %p4805, %s17, 1
      %s4807 = smul.addr %s4806, 32
      %s4808 = smul.addr %s4807, 4
      %s4809 = scalar_lea.vmem %s6, %s4808
      // Predicated region
      $region45: #{upsampling_forward.4} parent=43 // pred_check
        %p4810 = pneg %p171
      $region46: #{upsampling_forward.4} parent=43 // pred_check_branch
        %4812 = sbr.rel (%p4810) target = $region48
      $region47: #{upsampling_forward.4} parent=43 // pred_region
        _
      $region48: #{upsampling_forward.4} parent=43 // pred_fallthru
        _
    $region44: #{upsampling_forward.4} parent=5 // pred_fallthru
      _
    %p4813 = scmp.le.s32.totalorder 2, %s12
    // Predicated region
    $region49: #{upsampling_forward.4} parent=5 // pred_check
      %p4814 = pneg %p4813
    $region50: #{upsampling_forward.4} parent=5 // pred_check_branch
      %4816 = sbr.rel (%p4814) target = $region52
    $region51: #{upsampling_forward.4} parent=5 // pred_region
      %s4817 = ssub.s32 %s12, 2
      // Predicated region
      $region53: #{upsampling_forward.4} parent=51 // pred_check
        %p4818 = pneg %p177
      $region54: #{upsampling_forward.4} parent=51 // pred_check_branch
        %4820 = sbr.rel (%p4818) target = $region56
      $region55: #{upsampling_forward.4} parent=51 // pred_region
        %p4821 = scmp.lt.s32.totalorder %s18, 1
        %s4822 = scalar_select %p4821, %s18, 1
        %s4823 = smul.addr %s4822, 32
        %s4824 = smul.addr %s4823, 4
        %s4825 = scalar_lea.vmem %s6, %s4824
      $region56: #{upsampling_forward.4} parent=51 // pred_fallthru
        _
    $region52: #{upsampling_forward.4} parent=5 // pred_fallthru
      _
  $region6: #{upsampling_forward.4} parent=0 // loop_footer
    %s16 = sadd.s32 1, %s12
  $region7: #{upsampling_forward.4} parent=0 // loop_footer_branch
    %11 = sbr.rel target = $region3
  $region8: #{upsampling_forward.4} parent=0 // loop_exit
    _

</llo_original>
